<compile_context>
chip_gen: v7x
topology: tpu7x:2x2x1
jax: 0.10.0
libtpu: 0.0.40
codegen_flags: <defaults>
</compile_context>

<pallas_src>
import jax
import jax.numpy as jnp
from jax import lax
from jax.experimental import pallas as pl
from jax.experimental.pallas import tpu as pltpu


PARAM_KEYS = ("u1blk", "u2", "u3blk", "be", "ve",
              "w1", "w2", "w3blk", "bs", "vs",
              "chebT", "theta_cat", "wt", "bt",
              "rw", "rb", "gamma", "beta")
NPARAM = len(PARAM_KEYS)


# ----------------------------------------------------------------------------
# in-kernel helpers
# ----------------------------------------------------------------------------
def _sigmoid(x):
    return 1.0 / (1.0 + jnp.exp(-x))


def _softmax_axis0(x):
    x = x - jnp.max(x, axis=0, keepdims=True)
    e = jnp.exp(x)
    return e / jnp.sum(e, axis=0, keepdims=True)


def _mm(a, b):
    return jnp.dot(a, b, preferred_element_type=jnp.float32)


# ----------------------------------------------------------------------------
# one ASTGCN block (TAt + SAt + cheb conv + time/residual conv + LayerNorm)
# operating on a single batch element held entirely as jnp values in registers.
# ----------------------------------------------------------------------------
def _block_forward(xv, p, stride):
    """xv: (T, N, Fin) value -> (T_out, N, Ft) value."""
    T, N, Fin = xv.shape
    f32 = jnp.float32
    chebT = p["chebT"][...]               # (K, N, N)   pre-transposed T_k^T
    K = chebT.shape[0]
    theta_cat = p["theta_cat"][...]       # (K*Fin, Fc)
    Fc = theta_cat.shape[1]
    wt = p["wt"][...]                     # (3, Fc, Ft)
    Ft = wt.shape[2]

    # two 2-D views of x: rows (t, n) and node-major (n, t*Fin)
    xf = xv.reshape(T * N, Fin)                                    # (T*N, Fin)
    xmat = jnp.concatenate([xv[t] for t in range(T)], axis=1)      # (N, T*Fin)

    # ---- temporal attention: single batched matmuls over all timesteps -----
    xu1 = _mm(p["u1blk"][...], xf)                                 # (T, Fin)
    part1_t = _mm(xu1, p["u2"][...])                               # (T, N)
    p2t = _mm(xmat, p["u3blk"][...])                               # (N, T)
    product_t = _mm(part1_t, p2t)                                  # (T, T)
    E = _mm(p["ve"][...], _sigmoid(product_t + p["be"][...]))
    E_norm = _softmax_axis0(E)                                     # (T, T)

    # ---- spatial attention on x_TAt (x_TAt never materialized) -------------
    w1e = _mm(E_norm, p["w1"][...])                                # (T, 1)
    tmp2 = jnp.sum(xv * w1e.reshape(T, 1, 1), axis=0)              # (N, Fin)
    part1_s = _mm(tmp2, p["w2"][...])                              # (N, T)
    p2wt = _mm(xmat, p["w3blk"][...])                              # (N, T)
    p2_s = _mm(p2wt, E_norm)                                       # (N, T)
    product_s = _mm(part1_s, p2_s.T)                               # (N, N)
    S = _mm(p["vs"][...], _sigmoid(product_s + p["bs"][...]))
    S_norm = _softmax_axis0(S)                                     # (N, N)
    S_norm_T = S_norm.T

    # ---- K-order Chebyshev graph conv, all T timesteps batched -------------
    rhs_cols = []
    for k in range(K):
        ak = chebT[k] * S_norm_T                                   # (N, N)
        rhs_k = _mm(ak, xmat)                                      # (N, T*Fin)
        # lanes (t, f) -> rows (t, n): T cheap lane-slices + one concat
        rhs_k = jnp.concatenate(
            [rhs_k[:, t * Fin:(t + 1) * Fin] for t in range(T)], axis=0)
        rhs_cols.append(rhs_k)                                     # (T*N, Fin)
    rhs_cat = jnp.concatenate(rhs_cols, axis=1)                    # (T*N, K*Fin)
    gcn = jnp.maximum(_mm(rhs_cat, theta_cat), 0.0)                # (T*N, Fc)

    # ---- 1x3 time conv + 1x1 residual conv (stride) + LayerNorm ------------
    T_out = (T - 1) // stride + 1
    zero_slab = jnp.zeros((N, Fc), f32)
    tc = p["bt"][...]                                              # (1, Ft)
    for kt in range(3):
        pieces = []
        for to in range(T_out):
            ti = to * stride + kt - 1                              # trace-time
            pieces.append(gcn[ti * N:(ti + 1) * N, :]
                          if 0 <= ti < T else zero_slab)
        tap = jnp.concatenate(pieces, axis=0)                      # (T_out*N, Fc)
        tc = tc + _mm(tap, wt[kt])                                 # (T_out*N, Ft)
    if stride == 1:
        xres = xf
    else:
        xres = jnp.concatenate([xv[to * stride] for to in range(T_out)], axis=0)
    res = _mm(xres, p["rw"][...]) + p["rb"][...]                   # (T_out*N, Ft)
    y = jnp.maximum(res + tc, 0.0)
    mu = jnp.mean(y, axis=1, keepdims=True)
    var = jnp.mean((y - mu) ** 2, axis=1, keepdims=True)
    yn = (y - mu) * lax.rsqrt(var + 1e-5)
    out = yn * p["gamma"][...] + p["beta"][...]                    # (T_out*N, Ft)
    return out.reshape(T_out, N, Ft)


# ----------------------------------------------------------------------------
# fused kernel: all blocks + final Conv2d(T', P, kernel=(1, Ft)) in one call
# ----------------------------------------------------------------------------
def make_fused_kernel(nb_block, strides):
    def kernel(x_ref, *refs):
        out_ref = refs[-1]
        fw_ref, fb_ref = refs[-3], refs[-2]
        block_refs = refs[:-3]

        xv = x_ref[0]                                              # (T, N, Fin)
        for i in range(nb_block):
            p = dict(zip(PARAM_KEYS,
                         block_refs[i * NPARAM:(i + 1) * NPARAM]))
            xv = _block_forward(xv, p, strides[i])

        # final conv: one 128-deep, lane-aligned matmul
        Tp = xv.shape[0]
        xfin = jnp.concatenate([xv[t] for t in range(Tp)], axis=1)  # (N, Tp*Ft)
        out_ref[0] = _mm(xfin, fw_ref[...]) + fb_ref[...]           # (N, P)
    return kernel


def astgcn_forward(x, block_params, final_w, final_b, time_strides):
    """x: (B, N, F_in, T) torch layout -> (B, N, num_for_predict)."""
    B, N, F_in, T = x.shape
    xa = jnp.transpose(x, (0, 3, 1, 2)).astype(jnp.float32)        # (B, T, N, F)
    nb = len(block_params)
    strides = tuple(time_strides if i == 0 else 1 for i in range(nb))

    flat_params = []
    for tp in block_params:
        kp = to_kernel_params(tp)
        flat_params.extend(kp[k] for k in PARAM_KEYS)

    Tp = T
    for s in strides:
        Tp = (Tp - 1) // s + 1
    P = final_w.shape[0]
    Ft = final_w.shape[3]
    fw = final_w[:, :, 0, :].reshape(P, Tp * Ft).T                 # (Tp*Ft, P)
    fb = final_b.reshape(1, P)

    args = (xa, *flat_params, fw, fb)
    in_specs = [pl.BlockSpec((1, T, N, F_in), lambda b: (b, 0, 0, 0))]
    in_specs += [pl.BlockSpec(a.shape, lambda b, _nd=a.ndim: (0,) * _nd)
                 for a in args[1:]]
    out_specs = pl.BlockSpec((1, N, P), lambda b: (b, 0, 0))

    return pl.pallas_call(
        make_fused_kernel(nb, strides),
        out_shape=jax.ShapeDtypeStruct((B, N, P), jnp.float32),
        grid_spec=pltpu.PrefetchScalarGridSpec(
            num_scalar_prefetch=0,
            grid=(B,),
            in_specs=in_specs,
            out_specs=out_specs),
        compiler_params=pltpu.CompilerParams(
            dimension_semantics=("parallel",)),
    )(*args)


# ----------------------------------------------------------------------------
# parameter setup (deterministic, torch layout) + kernel-layout glue
# ----------------------------------------------------------------------------
def init_params(key, nb_block, in_channels, K, Fc, Ft, time_strides,
                num_for_predict, len_input, N):
    keys = jax.random.split(key, 128)
    ki = iter(keys)

    def rnd(shape, scale=0.1):
        return jax.random.normal(next(ki), shape, jnp.float32) * scale

    # Chebyshev polynomials (shared by every block)
    A = rnd((N, N), 1.0)
    L = (A + A.T) * 0.1
    cheb_list = [jnp.eye(N, dtype=jnp.float32)]
    if K > 1:
        cheb_list.append(L)
    for _ in range(2, K):
        cheb_list.append(2.0 * L @ cheb_list[-1] - cheb_list[-2])
    cheb = jnp.stack(cheb_list[:K], axis=0)                   # (K, N, N)

    blocks = []
    for i in range(nb_block):
        cin = in_channels if i == 0 else Ft
        Ti = len_input if i == 0 else len_input // time_strides
        blocks.append(dict(
            U1=rnd((N,)), U2=rnd((cin, N)), U3=rnd((cin,)),
            be=rnd((1, Ti, Ti)), Ve=rnd((Ti, Ti)),
            W1=rnd((Ti,)), W2=rnd((cin, Ti)), W3=rnd((cin,)),
            bs=rnd((1, N, Ti)), Vs=rnd((N, N)),
            Theta=jnp.stack([rnd((cin, Fc)) for _ in range(K)], axis=0),
            tw=rnd((Ft, Fc, 1, 3)), tb=rnd((Ft,)),
            rw=rnd((Ft, cin, 1, 1)), rb=rnd((Ft,)),
            gamma=jnp.ones((Ft,), jnp.float32),
            beta=jnp.zeros((Ft,), jnp.float32),
            cheb=cheb,
        ))
    final_w = rnd((num_for_predict, len_input // time_strides, 1, Ft))
    final_b = rnd((num_for_predict,))
    return blocks, final_w, final_b


def to_kernel_params(tp):
    """Torch-layout params -> matmul-friendly kernel params (incl. kron folds)."""
    cin = tp["U2"].shape[0]
    Ti = tp["Ve"].shape[0]
    N = tp["Vs"].shape[0]
    Ft = tp["tw"].shape[0]
    K = tp["Theta"].shape[0]
    Fc = tp["Theta"].shape[2]
    eye_t = jnp.eye(Ti, dtype=jnp.float32)
    return dict(
        u1blk=jnp.kron(eye_t, tp["U1"].reshape(1, N)),          # (Ti, Ti*N)
        u2=tp["U2"],                                            # (cin, N)
        u3blk=jnp.kron(eye_t, tp["U3"].reshape(cin, 1)),        # (Ti*cin, Ti)
        be=tp["be"].reshape(Ti, Ti),
        ve=tp["Ve"],
        w1=tp["W1"].reshape(Ti, 1),
        w2=tp["W2"],                                            # (cin, Ti)
        w3blk=jnp.kron(eye_t, tp["W3"].reshape(cin, 1)),        # (Ti*cin, Ti)
        bs=tp["bs"].reshape(N, Ti),
        vs=tp["Vs"],
        chebT=jnp.transpose(tp["cheb"], (0, 2, 1)),             # (K, N, N)
        theta_cat=tp["Theta"].reshape(K * cin, Fc),             # (K*cin, Fc)
        wt=jnp.transpose(tp["tw"][:, :, 0, :], (2, 1, 0)),      # (3, Fc, Ft)
        bt=tp["tb"].reshape(1, Ft),
        rw=jnp.transpose(tp["rw"][:, :, 0, 0], (1, 0)),         # (cin, Ft)
        rb=tp["rb"].reshape(1, Ft),
        gamma=tp["gamma"].reshape(1, Ft),
        beta=tp["beta"].reshape(1, Ft),
    )


# ----------------------------------------------------------------------------
# pure-JAX reference (mirrors the torch module op-by-op) for validation
# ----------------------------------------------------------------------------
HP = lax.Precision.HIGHEST


def ref_block(x, tp, stride):
    B, N, Fin, T = x.shape
    K = tp["cheb"].shape[0]
    xp = jnp.transpose(x, (0, 3, 2, 1))
    p1 = jnp.einsum("btfn,n->btf", xp, tp["U1"], precision=HP)
    p1 = jnp.einsum("btf,fn->btn", p1, tp["U2"], precision=HP)
    p2 = jnp.einsum("f,bnft->bnt", tp["U3"], x, precision=HP)
    E = jnp.matmul(tp["Ve"],
                   jax.nn.sigmoid(jnp.matmul(p1, p2, precision=HP) + tp["be"]),
                   precision=HP)
    E_norm = jax.nn.softmax(E, axis=1)
    x_TAt = jnp.matmul(x.reshape(B, -1, T), E_norm,
                       precision=HP).reshape(B, N, Fin, T)
    s1 = jnp.einsum("bnft,t->bnf", x_TAt, tp["W1"], precision=HP)
    s1 = jnp.einsum("bnf,ft->bnt", s1, tp["W2"], precision=HP)
    s2 = jnp.swapaxes(jnp.einsum("f,bnft->bnt", tp["W3"], x_TAt, precision=HP),
                      -1, -2)
    S = jnp.matmul(tp["Vs"],
                   jax.nn.sigmoid(jnp.matmul(s1, s2, precision=HP) + tp["bs"]),
                   precision=HP)
    S_norm = jax.nn.softmax(S, axis=1)
    outs = []
    for t in range(T):
        gs = x[:, :, :, t]
        acc = jnp.zeros((B, N, tp["Theta"].shape[2]), jnp.float32)
        for k in range(K):
            Tk_at = tp["cheb"][k] * S_norm
            rhs = jnp.matmul(jnp.swapaxes(Tk_at, 1, 2), gs, precision=HP)
            acc = acc + jnp.matmul(rhs, tp["Theta"][k], precision=HP)
        outs.append(acc[..., None])
    gcn = jax.nn.relu(jnp.concatenate(outs, axis=-1))
    tc = lax.conv_general_dilated(jnp.transpose(gcn, (0, 2, 1, 3)), tp["tw"],
                                  window_strides=(1, stride),
                                  padding=((0, 0), (1, 1)),
                                  dimension_numbers=("NCHW", "OIHW", "NCHW"),
                                  precision=HP)
    tc = tc + tp["tb"].reshape(1, -1, 1, 1)
    res = lax.conv_general_dilated(jnp.transpose(x, (0, 2, 1, 3)), tp["rw"],
                                   window_strides=(1, stride),
                                   padding=((0, 0), (0, 0)),
                                   dimension_numbers=("NCHW", "OIHW", "NCHW"),
                                   precision=HP)
    res = res + tp["rb"].reshape(1, -1, 1, 1)
    y = jnp.transpose(jax.nn.relu(res + tc), (0, 3, 2, 1))
    mu = jnp.mean(y, axis=-1, keepdims=True)
    var = jnp.mean((y - mu) ** 2, axis=-1, keepdims=True)
    y = (y - mu) / jnp.sqrt(var + 1e-5) * tp["gamma"] + tp["beta"]
    return jnp.transpose(y, (0, 2, 3, 1))


def ref_forward(x, block_params, final_w, final_b, time_strides):
    for i, tp in enumerate(block_params):
        x = ref_block(x, tp, time_strides if i == 0 else 1)
    xp = jnp.transpose(x, (0, 3, 1, 2))
    return jnp.einsum("btnf,ptf->bnp", xp, final_w[:, :, 0, :],
                      precision=HP) + final_b


# ----------------------------------------------------------------------------
if __name__ == "__main__":
    # N must equal T (see NOTE at top); time_strides=1 keeps it true per block.
    B, N, F_in, T = 2, 8, 4, 8
    K, nb_chev_filter, nb_time_filter = 3, 16, 16
    nb_block, time_strides, num_for_predict = 2, 1, 4

    key = jax.random.PRNGKey(0)
    kx, kp = jax.random.split(key)
    x = jax.random.normal(kx, (B, N, F_in, T), jnp.float32)
    blocks, final_w, final_b = init_params(
        kp, nb_block, F_in, K, nb_chev_filter, nb_time_filter,
        time_strides, num_for_predict, T, N)

    out = astgcn_forward(x, blocks, final_w, final_b, time_strides)
    out = jax.block_until_ready(out)
    assert out.shape == (B, N, num_for_predict)

    ref = ref_forward(x, blocks, final_w, final_b, time_strides)
    err = float(jnp.max(jnp.abs(out - ref)))
    assert err < 2e-2, f"kernel/reference mismatch: max abs err = {err}"

    print("KERNEL_OK")
</pallas_src>

<mosaic_0001>
module attributes {stable_mosaic.version = 11 : i64} {
  func.func @kernel(%arg0: i32, %arg1: memref<1x8x8x4xf32, #tpu.memory_space<vmem>>, %arg2: memref<8x64xf32, #tpu.memory_space<vmem>>, %arg3: memref<4x8xf32, #tpu.memory_space<vmem>>, %arg4: memref<32x8xf32, #tpu.memory_space<vmem>>, %arg5: memref<8x8xf32, #tpu.memory_space<vmem>>, %arg6: memref<8x8xf32, #tpu.memory_space<vmem>>, %arg7: memref<8x1xf32, #tpu.memory_space<vmem>>, %arg8: memref<4x8xf32, #tpu.memory_space<vmem>>, %arg9: memref<32x8xf32, #tpu.memory_space<vmem>>, %arg10: memref<8x8xf32, #tpu.memory_space<vmem>>, %arg11: memref<8x8xf32, #tpu.memory_space<vmem>>, %arg12: memref<3x8x8xf32, #tpu.memory_space<vmem>>, %arg13: memref<12x16xf32, #tpu.memory_space<vmem>>, %arg14: memref<3x16x16xf32, #tpu.memory_space<vmem>>, %arg15: memref<1x16xf32, #tpu.memory_space<vmem>>, %arg16: memref<4x16xf32, #tpu.memory_space<vmem>>, %arg17: memref<1x16xf32, #tpu.memory_space<vmem>>, %arg18: memref<1x16xf32, #tpu.memory_space<vmem>>, %arg19: memref<1x16xf32, #tpu.memory_space<vmem>>, %arg20: memref<8x64xf32, #tpu.memory_space<vmem>>, %arg21: memref<16x8xf32, #tpu.memory_space<vmem>>, %arg22: memref<128x8xf32, #tpu.memory_space<vmem>>, %arg23: memref<8x8xf32, #tpu.memory_space<vmem>>, %arg24: memref<8x8xf32, #tpu.memory_space<vmem>>, %arg25: memref<8x1xf32, #tpu.memory_space<vmem>>, %arg26: memref<16x8xf32, #tpu.memory_space<vmem>>, %arg27: memref<128x8xf32, #tpu.memory_space<vmem>>, %arg28: memref<8x8xf32, #tpu.memory_space<vmem>>, %arg29: memref<8x8xf32, #tpu.memory_space<vmem>>, %arg30: memref<3x8x8xf32, #tpu.memory_space<vmem>>, %arg31: memref<48x16xf32, #tpu.memory_space<vmem>>, %arg32: memref<3x16x16xf32, #tpu.memory_space<vmem>>, %arg33: memref<1x16xf32, #tpu.memory_space<vmem>>, %arg34: memref<16x16xf32, #tpu.memory_space<vmem>>, %arg35: memref<1x16xf32, #tpu.memory_space<vmem>>, %arg36: memref<1x16xf32, #tpu.memory_space<vmem>>, %arg37: memref<1x16xf32, #tpu.memory_space<vmem>>, %arg38: memref<128x4xf32, #tpu.memory_space<vmem>>, %arg39: memref<1x4xf32, #tpu.memory_space<vmem>>, %arg40: memref<1x8x4xf32, #tpu.memory_space<vmem>>) attributes {dimension_semantics = [#tpu.dimension_semantics<parallel>], iteration_bounds = array<i64: 2>, scalar_prefetch = 0 : i64, scratch_operands = 0 : i64, tpu.core_type = #tpu.core_type<tc>, window_params = [{transform_indices = @transform_0, window_bounds = array<i64: 1, 8, 8, 4>}, {pipeline_mode = #tpu.pipeline_mode<synchronous>, transform_indices = @transform_1, window_bounds = array<i64: 8, 64>}, {pipeline_mode = #tpu.pipeline_mode<synchronous>, transform_indices = @transform_2, window_bounds = array<i64: 4, 8>}, {pipeline_mode = #tpu.pipeline_mode<synchronous>, transform_indices = @transform_3, window_bounds = array<i64: 32, 8>}, {pipeline_mode = #tpu.pipeline_mode<synchronous>, transform_indices = @transform_4, window_bounds = array<i64: 8, 8>}, {pipeline_mode = #tpu.pipeline_mode<synchronous>, transform_indices = @transform_5, window_bounds = array<i64: 8, 8>}, {pipeline_mode = #tpu.pipeline_mode<synchronous>, transform_indices = @transform_6, window_bounds = array<i64: 8, 1>}, {pipeline_mode = #tpu.pipeline_mode<synchronous>, transform_indices = @transform_7, window_bounds = array<i64: 4, 8>}, {pipeline_mode = #tpu.pipeline_mode<synchronous>, transform_indices = @transform_8, window_bounds = array<i64: 32, 8>}, {pipeline_mode = #tpu.pipeline_mode<synchronous>, transform_indices = @transform_9, window_bounds = array<i64: 8, 8>}, {pipeline_mode = #tpu.pipeline_mode<synchronous>, transform_indices = @transform_10, window_bounds = array<i64: 8, 8>}, {pipeline_mode = #tpu.pipeline_mode<synchronous>, transform_indices = @transform_11, window_bounds = array<i64: 3, 8, 8>}, {pipeline_mode = #tpu.pipeline_mode<synchronous>, transform_indices = @transform_12, window_bounds = array<i64: 12, 16>}, {pipeline_mode = #tpu.pipeline_mode<synchronous>, transform_indices = @transform_13, window_bounds = array<i64: 3, 16, 16>}, {pipeline_mode = #tpu.pipeline_mode<synchronous>, transform_indices = @transform_14, window_bounds = array<i64: 1, 16>}, {pipeline_mode = #tpu.pipeline_mode<synchronous>, transform_indices = @transform_15, window_bounds = array<i64: 4, 16>}, {pipeline_mode = #tpu.pipeline_mode<synchronous>, transform_indices = @transform_16, window_bounds = array<i64: 1, 16>}, {pipeline_mode = #tpu.pipeline_mode<synchronous>, transform_indices = @transform_17, window_bounds = array<i64: 1, 16>}, {pipeline_mode = #tpu.pipeline_mode<synchronous>, transform_indices = @transform_18, window_bounds = array<i64: 1, 16>}, {pipeline_mode = #tpu.pipeline_mode<synchronous>, transform_indices = @transform_19, window_bounds = array<i64: 8, 64>}, {pipeline_mode = #tpu.pipeline_mode<synchronous>, transform_indices = @transform_20, window_bounds = array<i64: 16, 8>}, {pipeline_mode = #tpu.pipeline_mode<synchronous>, transform_indices = @transform_21, window_bounds = array<i64: 128, 8>}, {pipeline_mode = #tpu.pipeline_mode<synchronous>, transform_indices = @transform_22, window_bounds = array<i64: 8, 8>}, {pipeline_mode = #tpu.pipeline_mode<synchronous>, transform_indices = @transform_23, window_bounds = array<i64: 8, 8>}, {pipeline_mode = #tpu.pipeline_mode<synchronous>, transform_indices = @transform_24, window_bounds = array<i64: 8, 1>}, {pipeline_mode = #tpu.pipeline_mode<synchronous>, transform_indices = @transform_25, window_bounds = array<i64: 16, 8>}, {pipeline_mode = #tpu.pipeline_mode<synchronous>, transform_indices = @transform_26, window_bounds = array<i64: 128, 8>}, {pipeline_mode = #tpu.pipeline_mode<synchronous>, transform_indices = @transform_27, window_bounds = array<i64: 8, 8>}, {pipeline_mode = #tpu.pipeline_mode<synchronous>, transform_indices = @transform_28, window_bounds = array<i64: 8, 8>}, {pipeline_mode = #tpu.pipeline_mode<synchronous>, transform_indices = @transform_29, window_bounds = array<i64: 3, 8, 8>}, {pipeline_mode = #tpu.pipeline_mode<synchronous>, transform_indices = @transform_30, window_bounds = array<i64: 48, 16>}, {pipeline_mode = #tpu.pipeline_mode<synchronous>, transform_indices = @transform_31, window_bounds = array<i64: 3, 16, 16>}, {pipeline_mode = #tpu.pipeline_mode<synchronous>, transform_indices = @transform_32, window_bounds = array<i64: 1, 16>}, {pipeline_mode = #tpu.pipeline_mode<synchronous>, transform_indices = @transform_33, window_bounds = array<i64: 16, 16>}, {pipeline_mode = #tpu.pipeline_mode<synchronous>, transform_indices = @transform_34, window_bounds = array<i64: 1, 16>}, {pipeline_mode = #tpu.pipeline_mode<synchronous>, transform_indices = @transform_35, window_bounds = array<i64: 1, 16>}, {pipeline_mode = #tpu.pipeline_mode<synchronous>, transform_indices = @transform_36, window_bounds = array<i64: 1, 16>}, {pipeline_mode = #tpu.pipeline_mode<synchronous>, transform_indices = @transform_37, window_bounds = array<i64: 128, 4>}, {pipeline_mode = #tpu.pipeline_mode<synchronous>, transform_indices = @transform_38, window_bounds = array<i64: 1, 4>}, {transform_indices = @transform_39, window_bounds = array<i64: 1, 8, 4>}]} {
    %c0 = arith.constant 0 : index
    %c0_0 = arith.constant 0 : index
    %c0_1 = arith.constant 0 : index
    %c0_2 = arith.constant 0 : index
    %0 = vector.load %arg1[%c0, %c0_0, %c0_1, %c0_2] : memref<1x8x8x4xf32, #tpu.memory_space<vmem>>, vector<1x8x8x4xf32>
    %1 = vector.shape_cast %0 : vector<1x8x8x4xf32> to vector<8x8x4xf32>
    %c0_3 = arith.constant 0 : index
    %c0_4 = arith.constant 0 : index
    %c0_5 = arith.constant 0 : index
    %2 = vector.load %arg12[%c0_3, %c0_4, %c0_5] : memref<3x8x8xf32, #tpu.memory_space<vmem>>, vector<3x8x8xf32>
    %c0_6 = arith.constant 0 : index
    %c0_7 = arith.constant 0 : index
    %3 = vector.load %arg13[%c0_6, %c0_7] : memref<12x16xf32, #tpu.memory_space<vmem>>, vector<12x16xf32>
    %c0_8 = arith.constant 0 : index
    %c0_9 = arith.constant 0 : index
    %c0_10 = arith.constant 0 : index
    %4 = vector.load %arg14[%c0_8, %c0_9, %c0_10] : memref<3x16x16xf32, #tpu.memory_space<vmem>>, vector<3x16x16xf32>
    %5 = vector.shape_cast %1 : vector<8x8x4xf32> to vector<64x4xf32>
    %6 = vector.extract_strided_slice %1 {offsets = [0, 0, 0], sizes = [1, 8, 4], strides = [1, 1, 1]} : vector<8x8x4xf32> to vector<1x8x4xf32>
    %7 = vector.shape_cast %6 : vector<1x8x4xf32> to vector<8x4xf32>
    %8 = vector.extract_strided_slice %1 {offsets = [1, 0, 0], sizes = [1, 8, 4], strides = [1, 1, 1]} : vector<8x8x4xf32> to vector<1x8x4xf32>
    %9 = vector.shape_cast %8 : vector<1x8x4xf32> to vector<8x4xf32>
    %10 = vector.extract_strided_slice %1 {offsets = [2, 0, 0], sizes = [1, 8, 4], strides = [1, 1, 1]} : vector<8x8x4xf32> to vector<1x8x4xf32>
    %11 = vector.shape_cast %10 : vector<1x8x4xf32> to vector<8x4xf32>
    %12 = vector.extract_strided_slice %1 {offsets = [3, 0, 0], sizes = [1, 8, 4], strides = [1, 1, 1]} : vector<8x8x4xf32> to vector<1x8x4xf32>
    %13 = vector.shape_cast %12 : vector<1x8x4xf32> to vector<8x4xf32>
    %14 = vector.extract_strided_slice %1 {offsets = [4, 0, 0], sizes = [1, 8, 4], strides = [1, 1, 1]} : vector<8x8x4xf32> to vector<1x8x4xf32>
    %15 = vector.shape_cast %14 : vector<1x8x4xf32> to vector<8x4xf32>
    %16 = vector.extract_strided_slice %1 {offsets = [5, 0, 0], sizes = [1, 8, 4], strides = [1, 1, 1]} : vector<8x8x4xf32> to vector<1x8x4xf32>
    %17 = vector.shape_cast %16 : vector<1x8x4xf32> to vector<8x4xf32>
    %18 = vector.extract_strided_slice %1 {offsets = [6, 0, 0], sizes = [1, 8, 4], strides = [1, 1, 1]} : vector<8x8x4xf32> to vector<1x8x4xf32>
    %19 = vector.shape_cast %18 : vector<1x8x4xf32> to vector<8x4xf32>
    %20 = vector.extract_strided_slice %1 {offsets = [7, 0, 0], sizes = [1, 8, 4], strides = [1, 1, 1]} : vector<8x8x4xf32> to vector<1x8x4xf32>
    %21 = vector.shape_cast %20 : vector<1x8x4xf32> to vector<8x4xf32>
    %22 = tpu.concatenate %7, %9, %11, %13, %15, %17, %19, %21 in 1 : vector<8x4xf32>, vector<8x4xf32>, vector<8x4xf32>, vector<8x4xf32>, vector<8x4xf32>, vector<8x4xf32>, vector<8x4xf32>, vector<8x4xf32> -> vector<8x32xf32>
    %c0_11 = arith.constant 0 : index
    %c0_12 = arith.constant 0 : index
    %23 = vector.load %arg2[%c0_11, %c0_12] : memref<8x64xf32, #tpu.memory_space<vmem>>, vector<8x64xf32>
    %cst = arith.constant dense<0.000000e+00> : vector<8x4xf32>
    %24 = tpu.matmul %23, %5, %cst {dimension_numbers = #tpu.dot_dimension_numbers<[1], [0], [0], [1], [0, 0, 1, 1], [], []>} : vector<8x64xf32>, vector<64x4xf32>, vector<8x4xf32> -> vector<8x4xf32>
    %c0_13 = arith.constant 0 : index
    %c0_14 = arith.constant 0 : index
    %25 = vector.load %arg3[%c0_13, %c0_14] : memref<4x8xf32, #tpu.memory_space<vmem>>, vector<4x8xf32>
    %cst_15 = arith.constant dense<0.000000e+00> : vector<8x8xf32>
    %26 = tpu.matmul %24, %25, %cst_15 {dimension_numbers = #tpu.dot_dimension_numbers<[1], [0], [0], [1], [0, 0, 1, 1], [], []>} : vector<8x4xf32>, vector<4x8xf32>, vector<8x8xf32> -> vector<8x8xf32>
    %c0_16 = arith.constant 0 : index
    %c0_17 = arith.constant 0 : index
    %27 = vector.load %arg4[%c0_16, %c0_17] : memref<32x8xf32, #tpu.memory_space<vmem>>, vector<32x8xf32>
    %cst_18 = arith.constant dense<0.000000e+00> : vector<8x8xf32>
    %28 = tpu.matmul %22, %27, %cst_18 {dimension_numbers = #tpu.dot_dimension_numbers<[1], [0], [0], [1], [0, 0, 1, 1], [], []>} : vector<8x32xf32>, vector<32x8xf32>, vector<8x8xf32> -> vector<8x8xf32>
    %cst_19 = arith.constant dense<0.000000e+00> : vector<8x8xf32>
    %29 = tpu.matmul %26, %28, %cst_19 {dimension_numbers = #tpu.dot_dimension_numbers<[1], [0], [0], [1], [0, 0, 1, 1], [], []>} : vector<8x8xf32>, vector<8x8xf32>, vector<8x8xf32> -> vector<8x8xf32>
    %c0_20 = arith.constant 0 : index
    %c0_21 = arith.constant 0 : index
    %30 = vector.load %arg6[%c0_20, %c0_21] : memref<8x8xf32, #tpu.memory_space<vmem>>, vector<8x8xf32>
    %c0_22 = arith.constant 0 : index
    %c0_23 = arith.constant 0 : index
    %31 = vector.load %arg5[%c0_22, %c0_23] : memref<8x8xf32, #tpu.memory_space<vmem>>, vector<8x8xf32>
    %32 = arith.addf %29, %31 : vector<8x8xf32>
    %cst_24 = arith.constant 0.000000e+00 : f32
    %33 = vector.broadcast %cst_24 : f32 to vector<8x8xf32>
    %34 = arith.subf %33, %32 : vector<8x8xf32>
    %35 = math.exp %34 : vector<8x8xf32>
    %cst_25 = arith.constant 1.000000e+00 : f32
    %36 = vector.broadcast %cst_25 : f32 to vector<8x8xf32>
    %37 = arith.addf %36, %35 : vector<8x8xf32>
    %cst_26 = arith.constant 1.000000e+00 : f32
    %38 = vector.broadcast %cst_26 : f32 to vector<8x8xf32>
    %39 = arith.divf %38, %37 : vector<8x8xf32>
    %cst_27 = arith.constant dense<0.000000e+00> : vector<8x8xf32>
    %40 = tpu.matmul %30, %39, %cst_27 {dimension_numbers = #tpu.dot_dimension_numbers<[1], [0], [0], [1], [0, 0, 1, 1], [], []>} : vector<8x8xf32>, vector<8x8xf32>, vector<8x8xf32> -> vector<8x8xf32>
    %cst_28 = arith.constant dense<0xFF800000> : vector<8xf32>
    %41 = vector.multi_reduction <maximumf>, %40, %cst_28 [0] : vector<8x8xf32> to vector<8xf32>
    %42 = vector.shape_cast %41 : vector<8xf32> to vector<1x8xf32>
    %43 = vector.broadcast %42 : vector<1x8xf32> to vector<8x8xf32>
    %44 = arith.subf %40, %43 : vector<8x8xf32>
    %45 = math.exp %44 : vector<8x8xf32>
    %cst_29 = arith.constant dense<0.000000e+00> : vector<8xf32>
    %46 = vector.multi_reduction <add>, %45, %cst_29 [0] : vector<8x8xf32> to vector<8xf32>
    %47 = vector.shape_cast %46 : vector<8xf32> to vector<1x8xf32>
    %48 = vector.broadcast %47 : vector<1x8xf32> to vector<8x8xf32>
    %49 = arith.divf %45, %48 : vector<8x8xf32>
    %c0_30 = arith.constant 0 : index
    %c0_31 = arith.constant 0 : index
    %50 = vector.load %arg7[%c0_30, %c0_31] : memref<8x1xf32, #tpu.memory_space<vmem>>, vector<8x1xf32>
    %cst_32 = arith.constant dense<0.000000e+00> : vector<8x1xf32>
    %51 = tpu.matmul %49, %50, %cst_32 {dimension_numbers = #tpu.dot_dimension_numbers<[1], [0], [0], [1], [0, 0, 1, 1], [], []>} : vector<8x8xf32>, vector<8x1xf32>, vector<8x1xf32> -> vector<8x1xf32>
    %52 = vector.shape_cast %51 : vector<8x1xf32> to vector<8x1x1xf32>
    %53 = vector.broadcast %52 : vector<8x1x1xf32> to vector<8x8x4xf32>
    %54 = arith.mulf %1, %53 : vector<8x8x4xf32>
    %cst_33 = arith.constant dense<0.000000e+00> : vector<8x4xf32>
    %55 = vector.multi_reduction <add>, %54, %cst_33 [0] : vector<8x8x4xf32> to vector<8x4xf32>
    %c0_34 = arith.constant 0 : index
    %c0_35 = arith.constant 0 : index
    %56 = vector.load %arg8[%c0_34, %c0_35] : memref<4x8xf32, #tpu.memory_space<vmem>>, vector<4x8xf32>
    %cst_36 = arith.constant dense<0.000000e+00> : vector<8x8xf32>
    %57 = tpu.matmul %55, %56, %cst_36 {dimension_numbers = #tpu.dot_dimension_numbers<[1], [0], [0], [1], [0, 0, 1, 1], [], []>} : vector<8x4xf32>, vector<4x8xf32>, vector<8x8xf32> -> vector<8x8xf32>
    %c0_37 = arith.constant 0 : index
    %c0_38 = arith.constant 0 : index
    %58 = vector.load %arg9[%c0_37, %c0_38] : memref<32x8xf32, #tpu.memory_space<vmem>>, vector<32x8xf32>
    %cst_39 = arith.constant dense<0.000000e+00> : vector<8x8xf32>
    %59 = tpu.matmul %22, %58, %cst_39 {dimension_numbers = #tpu.dot_dimension_numbers<[1], [0], [0], [1], [0, 0, 1, 1], [], []>} : vector<8x32xf32>, vector<32x8xf32>, vector<8x8xf32> -> vector<8x8xf32>
    %cst_40 = arith.constant dense<0.000000e+00> : vector<8x8xf32>
    %60 = tpu.matmul %59, %49, %cst_40 {dimension_numbers = #tpu.dot_dimension_numbers<[1], [0], [0], [1], [0, 0, 1, 1], [], []>} : vector<8x8xf32>, vector<8x8xf32>, vector<8x8xf32> -> vector<8x8xf32>
    %61 = tpu.transpose %60, [1, 0] : vector<8x8xf32> -> vector<8x8xf32>
    %cst_41 = arith.constant dense<0.000000e+00> : vector<8x8xf32>
    %62 = tpu.matmul %57, %61, %cst_41 {dimension_numbers = #tpu.dot_dimension_numbers<[1], [0], [0], [1], [0, 0, 1, 1], [], []>} : vector<8x8xf32>, vector<8x8xf32>, vector<8x8xf32> -> vector<8x8xf32>
    %c0_42 = arith.constant 0 : index
    %c0_43 = arith.constant 0 : index
    %63 = vector.load %arg11[%c0_42, %c0_43] : memref<8x8xf32, #tpu.memory_space<vmem>>, vector<8x8xf32>
    %c0_44 = arith.constant 0 : index
    %c0_45 = arith.constant 0 : index
    %64 = vector.load %arg10[%c0_44, %c0_45] : memref<8x8xf32, #tpu.memory_space<vmem>>, vector<8x8xf32>
    %65 = arith.addf %62, %64 : vector<8x8xf32>
    %cst_46 = arith.constant 0.000000e+00 : f32
    %66 = vector.broadcast %cst_46 : f32 to vector<8x8xf32>
    %67 = arith.subf %66, %65 : vector<8x8xf32>
    %68 = math.exp %67 : vector<8x8xf32>
    %cst_47 = arith.constant 1.000000e+00 : f32
    %69 = vector.broadcast %cst_47 : f32 to vector<8x8xf32>
    %70 = arith.addf %69, %68 : vector<8x8xf32>
    %cst_48 = arith.constant 1.000000e+00 : f32
    %71 = vector.broadcast %cst_48 : f32 to vector<8x8xf32>
    %72 = arith.divf %71, %70 : vector<8x8xf32>
    %cst_49 = arith.constant dense<0.000000e+00> : vector<8x8xf32>
    %73 = tpu.matmul %63, %72, %cst_49 {dimension_numbers = #tpu.dot_dimension_numbers<[1], [0], [0], [1], [0, 0, 1, 1], [], []>} : vector<8x8xf32>, vector<8x8xf32>, vector<8x8xf32> -> vector<8x8xf32>
    %cst_50 = arith.constant dense<0xFF800000> : vector<8xf32>
    %74 = vector.multi_reduction <maximumf>, %73, %cst_50 [0] : vector<8x8xf32> to vector<8xf32>
    %75 = vector.shape_cast %74 : vector<8xf32> to vector<1x8xf32>
    %76 = vector.broadcast %75 : vector<1x8xf32> to vector<8x8xf32>
    %77 = arith.subf %73, %76 : vector<8x8xf32>
    %78 = math.exp %77 : vector<8x8xf32>
    %cst_51 = arith.constant dense<0.000000e+00> : vector<8xf32>
    %79 = vector.multi_reduction <add>, %78, %cst_51 [0] : vector<8x8xf32> to vector<8xf32>
    %80 = vector.shape_cast %79 : vector<8xf32> to vector<1x8xf32>
    %81 = vector.broadcast %80 : vector<1x8xf32> to vector<8x8xf32>
    %82 = arith.divf %78, %81 : vector<8x8xf32>
    %83 = tpu.transpose %82, [1, 0] : vector<8x8xf32> -> vector<8x8xf32>
    %84 = vector.extract_strided_slice %2 {offsets = [0, 0, 0], sizes = [1, 8, 8], strides = [1, 1, 1]} : vector<3x8x8xf32> to vector<1x8x8xf32>
    %85 = vector.shape_cast %84 : vector<1x8x8xf32> to vector<8x8xf32>
    %86 = arith.mulf %85, %83 : vector<8x8xf32>
    %cst_52 = arith.constant dense<0.000000e+00> : vector<8x32xf32>
    %87 = tpu.matmul %86, %22, %cst_52 {dimension_numbers = #tpu.dot_dimension_numbers<[1], [0], [0], [1], [0, 0, 1, 1], [], []>} : vector<8x8xf32>, vector<8x32xf32>, vector<8x32xf32> -> vector<8x32xf32>
    %88 = vector.extract_strided_slice %87 {offsets = [0, 0], sizes = [8, 4], strides = [1, 1]} : vector<8x32xf32> to vector<8x4xf32>
    %89 = vector.extract_strided_slice %87 {offsets = [0, 4], sizes = [8, 4], strides = [1, 1]} : vector<8x32xf32> to vector<8x4xf32>
    %90 = vector.extract_strided_slice %87 {offsets = [0, 8], sizes = [8, 4], strides = [1, 1]} : vector<8x32xf32> to vector<8x4xf32>
    %91 = vector.extract_strided_slice %87 {offsets = [0, 12], sizes = [8, 4], strides = [1, 1]} : vector<8x32xf32> to vector<8x4xf32>
    %92 = vector.extract_strided_slice %87 {offsets = [0, 16], sizes = [8, 4], strides = [1, 1]} : vector<8x32xf32> to vector<8x4xf32>
    %93 = vector.extract_strided_slice %87 {offsets = [0, 20], sizes = [8, 4], strides = [1, 1]} : vector<8x32xf32> to vector<8x4xf32>
    %94 = vector.extract_strided_slice %87 {offsets = [0, 24], sizes = [8, 4], strides = [1, 1]} : vector<8x32xf32> to vector<8x4xf32>
    %95 = vector.extract_strided_slice %87 {offsets = [0, 28], sizes = [8, 4], strides = [1, 1]} : vector<8x32xf32> to vector<8x4xf32>
    %96 = tpu.concatenate %88, %89, %90, %91, %92, %93, %94, %95 in 0 : vector<8x4xf32>, vector<8x4xf32>, vector<8x4xf32>, vector<8x4xf32>, vector<8x4xf32>, vector<8x4xf32>, vector<8x4xf32>, vector<8x4xf32> -> vector<64x4xf32>
    %97 = vector.extract_strided_slice %2 {offsets = [1, 0, 0], sizes = [1, 8, 8], strides = [1, 1, 1]} : vector<3x8x8xf32> to vector<1x8x8xf32>
    %98 = vector.shape_cast %97 : vector<1x8x8xf32> to vector<8x8xf32>
    %99 = arith.mulf %98, %83 : vector<8x8xf32>
    %cst_53 = arith.constant dense<0.000000e+00> : vector<8x32xf32>
    %100 = tpu.matmul %99, %22, %cst_53 {dimension_numbers = #tpu.dot_dimension_numbers<[1], [0], [0], [1], [0, 0, 1, 1], [], []>} : vector<8x8xf32>, vector<8x32xf32>, vector<8x32xf32> -> vector<8x32xf32>
    %101 = vector.extract_strided_slice %100 {offsets = [0, 0], sizes = [8, 4], strides = [1, 1]} : vector<8x32xf32> to vector<8x4xf32>
    %102 = vector.extract_strided_slice %100 {offsets = [0, 4], sizes = [8, 4], strides = [1, 1]} : vector<8x32xf32> to vector<8x4xf32>
    %103 = vector.extract_strided_slice %100 {offsets = [0, 8], sizes = [8, 4], strides = [1, 1]} : vector<8x32xf32> to vector<8x4xf32>
    %104 = vector.extract_strided_slice %100 {offsets = [0, 12], sizes = [8, 4], strides = [1, 1]} : vector<8x32xf32> to vector<8x4xf32>
    %105 = vector.extract_strided_slice %100 {offsets = [0, 16], sizes = [8, 4], strides = [1, 1]} : vector<8x32xf32> to vector<8x4xf32>
    %106 = vector.extract_strided_slice %100 {offsets = [0, 20], sizes = [8, 4], strides = [1, 1]} : vector<8x32xf32> to vector<8x4xf32>
    %107 = vector.extract_strided_slice %100 {offsets = [0, 24], sizes = [8, 4], strides = [1, 1]} : vector<8x32xf32> to vector<8x4xf32>
    %108 = vector.extract_strided_slice %100 {offsets = [0, 28], sizes = [8, 4], strides = [1, 1]} : vector<8x32xf32> to vector<8x4xf32>
    %109 = tpu.concatenate %101, %102, %103, %104, %105, %106, %107, %108 in 0 : vector<8x4xf32>, vector<8x4xf32>, vector<8x4xf32>, vector<8x4xf32>, vector<8x4xf32>, vector<8x4xf32>, vector<8x4xf32>, vector<8x4xf32> -> vector<64x4xf32>
    %110 = vector.extract_strided_slice %2 {offsets = [2, 0, 0], sizes = [1, 8, 8], strides = [1, 1, 1]} : vector<3x8x8xf32> to vector<1x8x8xf32>
    %111 = vector.shape_cast %110 : vector<1x8x8xf32> to vector<8x8xf32>
    %112 = arith.mulf %111, %83 : vector<8x8xf32>
    %cst_54 = arith.constant dense<0.000000e+00> : vector<8x32xf32>
    %113 = tpu.matmul %112, %22, %cst_54 {dimension_numbers = #tpu.dot_dimension_numbers<[1], [0], [0], [1], [0, 0, 1, 1], [], []>} : vector<8x8xf32>, vector<8x32xf32>, vector<8x32xf32> -> vector<8x32xf32>
    %114 = vector.extract_strided_slice %113 {offsets = [0, 0], sizes = [8, 4], strides = [1, 1]} : vector<8x32xf32> to vector<8x4xf32>
    %115 = vector.extract_strided_slice %113 {offsets = [0, 4], sizes = [8, 4], strides = [1, 1]} : vector<8x32xf32> to vector<8x4xf32>
    %116 = vector.extract_strided_slice %113 {offsets = [0, 8], sizes = [8, 4], strides = [1, 1]} : vector<8x32xf32> to vector<8x4xf32>
    %117 = vector.extract_strided_slice %113 {offsets = [0, 12], sizes = [8, 4], strides = [1, 1]} : vector<8x32xf32> to vector<8x4xf32>
    %118 = vector.extract_strided_slice %113 {offsets = [0, 16], sizes = [8, 4], strides = [1, 1]} : vector<8x32xf32> to vector<8x4xf32>
    %119 = vector.extract_strided_slice %113 {offsets = [0, 20], sizes = [8, 4], strides = [1, 1]} : vector<8x32xf32> to vector<8x4xf32>
    %120 = vector.extract_strided_slice %113 {offsets = [0, 24], sizes = [8, 4], strides = [1, 1]} : vector<8x32xf32> to vector<8x4xf32>
    %121 = vector.extract_strided_slice %113 {offsets = [0, 28], sizes = [8, 4], strides = [1, 1]} : vector<8x32xf32> to vector<8x4xf32>
    %122 = tpu.concatenate %114, %115, %116, %117, %118, %119, %120, %121 in 0 : vector<8x4xf32>, vector<8x4xf32>, vector<8x4xf32>, vector<8x4xf32>, vector<8x4xf32>, vector<8x4xf32>, vector<8x4xf32>, vector<8x4xf32> -> vector<64x4xf32>
    %123 = tpu.concatenate %96, %109, %122 in 1 : vector<64x4xf32>, vector<64x4xf32>, vector<64x4xf32> -> vector<64x12xf32>
    %cst_55 = arith.constant dense<0.000000e+00> : vector<64x16xf32>
    %124 = tpu.matmul %123, %3, %cst_55 {dimension_numbers = #tpu.dot_dimension_numbers<[1], [0], [0], [1], [0, 0, 1, 1], [], []>} : vector<64x12xf32>, vector<12x16xf32>, vector<64x16xf32> -> vector<64x16xf32>
    %cst_56 = arith.constant 0.000000e+00 : f32
    %125 = vector.broadcast %cst_56 : f32 to vector<64x16xf32>
    %126 = arith.maximumf %124, %125 : vector<64x16xf32>
    %cst_57 = arith.constant 0.000000e+00 : f32
    %127 = vector.broadcast %cst_57 : f32 to vector<8x16xf32>
    %c0_58 = arith.constant 0 : index
    %c0_59 = arith.constant 0 : index
    %128 = vector.load %arg15[%c0_58, %c0_59] : memref<1x16xf32, #tpu.memory_space<vmem>>, vector<1x16xf32>
    %129 = vector.extract_strided_slice %126 {offsets = [0, 0], sizes = [8, 16], strides = [1, 1]} : vector<64x16xf32> to vector<8x16xf32>
    %130 = vector.extract_strided_slice %126 {offsets = [8, 0], sizes = [8, 16], strides = [1, 1]} : vector<64x16xf32> to vector<8x16xf32>
    %131 = vector.extract_strided_slice %126 {offsets = [16, 0], sizes = [8, 16], strides = [1, 1]} : vector<64x16xf32> to vector<8x16xf32>
    %132 = vector.extract_strided_slice %126 {offsets = [24, 0], sizes = [8, 16], strides = [1, 1]} : vector<64x16xf32> to vector<8x16xf32>
    %133 = vector.extract_strided_slice %126 {offsets = [32, 0], sizes = [8, 16], strides = [1, 1]} : vector<64x16xf32> to vector<8x16xf32>
    %134 = vector.extract_strided_slice %126 {offsets = [40, 0], sizes = [8, 16], strides = [1, 1]} : vector<64x16xf32> to vector<8x16xf32>
    %135 = vector.extract_strided_slice %126 {offsets = [48, 0], sizes = [8, 16], strides = [1, 1]} : vector<64x16xf32> to vector<8x16xf32>
    %136 = tpu.concatenate %127, %129, %130, %131, %132, %133, %134, %135 in 0 : vector<8x16xf32>, vector<8x16xf32>, vector<8x16xf32>, vector<8x16xf32>, vector<8x16xf32>, vector<8x16xf32>, vector<8x16xf32>, vector<8x16xf32> -> vector<64x16xf32>
    %137 = vector.extract_strided_slice %4 {offsets = [0, 0, 0], sizes = [1, 16, 16], strides = [1, 1, 1]} : vector<3x16x16xf32> to vector<1x16x16xf32>
    %138 = vector.shape_cast %137 : vector<1x16x16xf32> to vector<16x16xf32>
    %cst_60 = arith.constant dense<0.000000e+00> : vector<64x16xf32>
    %139 = tpu.matmul %136, %138, %cst_60 {dimension_numbers = #tpu.dot_dimension_numbers<[1], [0], [0], [1], [0, 0, 1, 1], [], []>} : vector<64x16xf32>, vector<16x16xf32>, vector<64x16xf32> -> vector<64x16xf32>
    %140 = vector.broadcast %128 : vector<1x16xf32> to vector<64x16xf32>
    %141 = arith.addf %140, %139 : vector<64x16xf32>
    %142 = vector.extract_strided_slice %126 {offsets = [0, 0], sizes = [8, 16], strides = [1, 1]} : vector<64x16xf32> to vector<8x16xf32>
    %143 = vector.extract_strided_slice %126 {offsets = [8, 0], sizes = [8, 16], strides = [1, 1]} : vector<64x16xf32> to vector<8x16xf32>
    %144 = vector.extract_strided_slice %126 {offsets = [16, 0], sizes = [8, 16], strides = [1, 1]} : vector<64x16xf32> to vector<8x16xf32>
    %145 = vector.extract_strided_slice %126 {offsets = [24, 0], sizes = [8, 16], strides = [1, 1]} : vector<64x16xf32> to vector<8x16xf32>
    %146 = vector.extract_strided_slice %126 {offsets = [32, 0], sizes = [8, 16], strides = [1, 1]} : vector<64x16xf32> to vector<8x16xf32>
    %147 = vector.extract_strided_slice %126 {offsets = [40, 0], sizes = [8, 16], strides = [1, 1]} : vector<64x16xf32> to vector<8x16xf32>
    %148 = vector.extract_strided_slice %126 {offsets = [48, 0], sizes = [8, 16], strides = [1, 1]} : vector<64x16xf32> to vector<8x16xf32>
    %149 = vector.extract_strided_slice %126 {offsets = [56, 0], sizes = [8, 16], strides = [1, 1]} : vector<64x16xf32> to vector<8x16xf32>
    %150 = tpu.concatenate %142, %143, %144, %145, %146, %147, %148, %149 in 0 : vector<8x16xf32>, vector<8x16xf32>, vector<8x16xf32>, vector<8x16xf32>, vector<8x16xf32>, vector<8x16xf32>, vector<8x16xf32>, vector<8x16xf32> -> vector<64x16xf32>
    %151 = vector.extract_strided_slice %4 {offsets = [1, 0, 0], sizes = [1, 16, 16], strides = [1, 1, 1]} : vector<3x16x16xf32> to vector<1x16x16xf32>
    %152 = vector.shape_cast %151 : vector<1x16x16xf32> to vector<16x16xf32>
    %cst_61 = arith.constant dense<0.000000e+00> : vector<64x16xf32>
    %153 = tpu.matmul %150, %152, %cst_61 {dimension_numbers = #tpu.dot_dimension_numbers<[1], [0], [0], [1], [0, 0, 1, 1], [], []>} : vector<64x16xf32>, vector<16x16xf32>, vector<64x16xf32> -> vector<64x16xf32>
    %154 = arith.addf %141, %153 : vector<64x16xf32>
    %155 = vector.extract_strided_slice %126 {offsets = [8, 0], sizes = [8, 16], strides = [1, 1]} : vector<64x16xf32> to vector<8x16xf32>
    %156 = vector.extract_strided_slice %126 {offsets = [16, 0], sizes = [8, 16], strides = [1, 1]} : vector<64x16xf32> to vector<8x16xf32>
    %157 = vector.extract_strided_slice %126 {offsets = [24, 0], sizes = [8, 16], strides = [1, 1]} : vector<64x16xf32> to vector<8x16xf32>
    %158 = vector.extract_strided_slice %126 {offsets = [32, 0], sizes = [8, 16], strides = [1, 1]} : vector<64x16xf32> to vector<8x16xf32>
    %159 = vector.extract_strided_slice %126 {offsets = [40, 0], sizes = [8, 16], strides = [1, 1]} : vector<64x16xf32> to vector<8x16xf32>
    %160 = vector.extract_strided_slice %126 {offsets = [48, 0], sizes = [8, 16], strides = [1, 1]} : vector<64x16xf32> to vector<8x16xf32>
    %161 = vector.extract_strided_slice %126 {offsets = [56, 0], sizes = [8, 16], strides = [1, 1]} : vector<64x16xf32> to vector<8x16xf32>
    %162 = tpu.concatenate %155, %156, %157, %158, %159, %160, %161, %127 in 0 : vector<8x16xf32>, vector<8x16xf32>, vector<8x16xf32>, vector<8x16xf32>, vector<8x16xf32>, vector<8x16xf32>, vector<8x16xf32>, vector<8x16xf32> -> vector<64x16xf32>
    %163 = vector.extract_strided_slice %4 {offsets = [2, 0, 0], sizes = [1, 16, 16], strides = [1, 1, 1]} : vector<3x16x16xf32> to vector<1x16x16xf32>
    %164 = vector.shape_cast %163 : vector<1x16x16xf32> to vector<16x16xf32>
    %cst_62 = arith.constant dense<0.000000e+00> : vector<64x16xf32>
    %165 = tpu.matmul %162, %164, %cst_62 {dimension_numbers = #tpu.dot_dimension_numbers<[1], [0], [0], [1], [0, 0, 1, 1], [], []>} : vector<64x16xf32>, vector<16x16xf32>, vector<64x16xf32> -> vector<64x16xf32>
    %166 = arith.addf %154, %165 : vector<64x16xf32>
    %c0_63 = arith.constant 0 : index
    %c0_64 = arith.constant 0 : index
    %167 = vector.load %arg16[%c0_63, %c0_64] : memref<4x16xf32, #tpu.memory_space<vmem>>, vector<4x16xf32>
    %cst_65 = arith.constant dense<0.000000e+00> : vector<64x16xf32>
    %168 = tpu.matmul %5, %167, %cst_65 {dimension_numbers = #tpu.dot_dimension_numbers<[1], [0], [0], [1], [0, 0, 1, 1], [], []>} : vector<64x4xf32>, vector<4x16xf32>, vector<64x16xf32> -> vector<64x16xf32>
    %c0_66 = arith.constant 0 : index
    %c0_67 = arith.constant 0 : index
    %169 = vector.load %arg17[%c0_66, %c0_67] : memref<1x16xf32, #tpu.memory_space<vmem>>, vector<1x16xf32>
    %170 = vector.broadcast %169 : vector<1x16xf32> to vector<64x16xf32>
    %171 = arith.addf %168, %170 : vector<64x16xf32>
    %172 = arith.addf %171, %166 : vector<64x16xf32>
    %cst_68 = arith.constant 0.000000e+00 : f32
    %173 = vector.broadcast %cst_68 : f32 to vector<64x16xf32>
    %174 = arith.maximumf %172, %173 : vector<64x16xf32>
    %cst_69 = arith.constant dense<0.000000e+00> : vector<64xf32>
    %175 = vector.multi_reduction <add>, %174, %cst_69 [1] : vector<64x16xf32> to vector<64xf32>
    %176 = vector.shape_cast %175 : vector<64xf32> to vector<64x1xf32>
    %cst_70 = arith.constant 1.600000e+01 : f32
    %177 = vector.broadcast %cst_70 : f32 to vector<64x1xf32>
    %178 = arith.divf %176, %177 : vector<64x1xf32>
    %179 = vector.broadcast %178 : vector<64x1xf32> to vector<64x16xf32>
    %180 = arith.subf %174, %179 : vector<64x16xf32>
    %181 = arith.mulf %180, %180 : vector<64x16xf32>
    %cst_71 = arith.constant dense<0.000000e+00> : vector<64xf32>
    %182 = vector.multi_reduction <add>, %181, %cst_71 [1] : vector<64x16xf32> to vector<64xf32>
    %183 = vector.shape_cast %182 : vector<64xf32> to vector<64x1xf32>
    %cst_72 = arith.constant 1.600000e+01 : f32
    %184 = vector.broadcast %cst_72 : f32 to vector<64x1xf32>
    %185 = arith.divf %183, %184 : vector<64x1xf32>
    %186 = vector.broadcast %178 : vector<64x1xf32> to vector<64x16xf32>
    %187 = arith.subf %174, %186 : vector<64x16xf32>
    %cst_73 = arith.constant 9.99999974E-6 : f32
    %188 = vector.broadcast %cst_73 : f32 to vector<64x1xf32>
    %189 = arith.addf %185, %188 : vector<64x1xf32>
    %190 = math.rsqrt %189 : vector<64x1xf32>
    %191 = vector.broadcast %190 : vector<64x1xf32> to vector<64x16xf32>
    %192 = arith.mulf %187, %191 : vector<64x16xf32>
    %c0_74 = arith.constant 0 : index
    %c0_75 = arith.constant 0 : index
    %193 = vector.load %arg18[%c0_74, %c0_75] : memref<1x16xf32, #tpu.memory_space<vmem>>, vector<1x16xf32>
    %194 = vector.broadcast %193 : vector<1x16xf32> to vector<64x16xf32>
    %195 = arith.mulf %192, %194 : vector<64x16xf32>
    %c0_76 = arith.constant 0 : index
    %c0_77 = arith.constant 0 : index
    %196 = vector.load %arg19[%c0_76, %c0_77] : memref<1x16xf32, #tpu.memory_space<vmem>>, vector<1x16xf32>
    %197 = vector.broadcast %196 : vector<1x16xf32> to vector<64x16xf32>
    %198 = arith.addf %195, %197 : vector<64x16xf32>
    %199 = vector.shape_cast %198 : vector<64x16xf32> to vector<8x8x16xf32>
    %c0_78 = arith.constant 0 : index
    %c0_79 = arith.constant 0 : index
    %c0_80 = arith.constant 0 : index
    %200 = vector.load %arg30[%c0_78, %c0_79, %c0_80] : memref<3x8x8xf32, #tpu.memory_space<vmem>>, vector<3x8x8xf32>
    %c0_81 = arith.constant 0 : index
    %c0_82 = arith.constant 0 : index
    %201 = vector.load %arg31[%c0_81, %c0_82] : memref<48x16xf32, #tpu.memory_space<vmem>>, vector<48x16xf32>
    %c0_83 = arith.constant 0 : index
    %c0_84 = arith.constant 0 : index
    %c0_85 = arith.constant 0 : index
    %202 = vector.load %arg32[%c0_83, %c0_84, %c0_85] : memref<3x16x16xf32, #tpu.memory_space<vmem>>, vector<3x16x16xf32>
    %203 = vector.shape_cast %199 : vector<8x8x16xf32> to vector<64x16xf32>
    %204 = vector.extract_strided_slice %199 {offsets = [0, 0, 0], sizes = [1, 8, 16], strides = [1, 1, 1]} : vector<8x8x16xf32> to vector<1x8x16xf32>
    %205 = vector.shape_cast %204 : vector<1x8x16xf32> to vector<8x16xf32>
    %206 = vector.extract_strided_slice %199 {offsets = [1, 0, 0], sizes = [1, 8, 16], strides = [1, 1, 1]} : vector<8x8x16xf32> to vector<1x8x16xf32>
    %207 = vector.shape_cast %206 : vector<1x8x16xf32> to vector<8x16xf32>
    %208 = vector.extract_strided_slice %199 {offsets = [2, 0, 0], sizes = [1, 8, 16], strides = [1, 1, 1]} : vector<8x8x16xf32> to vector<1x8x16xf32>
    %209 = vector.shape_cast %208 : vector<1x8x16xf32> to vector<8x16xf32>
    %210 = vector.extract_strided_slice %199 {offsets = [3, 0, 0], sizes = [1, 8, 16], strides = [1, 1, 1]} : vector<8x8x16xf32> to vector<1x8x16xf32>
    %211 = vector.shape_cast %210 : vector<1x8x16xf32> to vector<8x16xf32>
    %212 = vector.extract_strided_slice %199 {offsets = [4, 0, 0], sizes = [1, 8, 16], strides = [1, 1, 1]} : vector<8x8x16xf32> to vector<1x8x16xf32>
    %213 = vector.shape_cast %212 : vector<1x8x16xf32> to vector<8x16xf32>
    %214 = vector.extract_strided_slice %199 {offsets = [5, 0, 0], sizes = [1, 8, 16], strides = [1, 1, 1]} : vector<8x8x16xf32> to vector<1x8x16xf32>
    %215 = vector.shape_cast %214 : vector<1x8x16xf32> to vector<8x16xf32>
    %216 = vector.extract_strided_slice %199 {offsets = [6, 0, 0], sizes = [1, 8, 16], strides = [1, 1, 1]} : vector<8x8x16xf32> to vector<1x8x16xf32>
    %217 = vector.shape_cast %216 : vector<1x8x16xf32> to vector<8x16xf32>
    %218 = vector.extract_strided_slice %199 {offsets = [7, 0, 0], sizes = [1, 8, 16], strides = [1, 1, 1]} : vector<8x8x16xf32> to vector<1x8x16xf32>
    %219 = vector.shape_cast %218 : vector<1x8x16xf32> to vector<8x16xf32>
    %220 = tpu.concatenate %205, %207, %209, %211, %213, %215, %217, %219 in 1 : vector<8x16xf32>, vector<8x16xf32>, vector<8x16xf32>, vector<8x16xf32>, vector<8x16xf32>, vector<8x16xf32>, vector<8x16xf32>, vector<8x16xf32> -> vector<8x128xf32>
    %c0_86 = arith.constant 0 : index
    %c0_87 = arith.constant 0 : index
    %221 = vector.load %arg20[%c0_86, %c0_87] : memref<8x64xf32, #tpu.memory_space<vmem>>, vector<8x64xf32>
    %cst_88 = arith.constant dense<0.000000e+00> : vector<8x16xf32>
    %222 = tpu.matmul %221, %203, %cst_88 {dimension_numbers = #tpu.dot_dimension_numbers<[1], [0], [0], [1], [0, 0, 1, 1], [], []>} : vector<8x64xf32>, vector<64x16xf32>, vector<8x16xf32> -> vector<8x16xf32>
    %c0_89 = arith.constant 0 : index
    %c0_90 = arith.constant 0 : index
    %223 = vector.load %arg21[%c0_89, %c0_90] : memref<16x8xf32, #tpu.memory_space<vmem>>, vector<16x8xf32>
    %cst_91 = arith.constant dense<0.000000e+00> : vector<8x8xf32>
    %224 = tpu.matmul %222, %223, %cst_91 {dimension_numbers = #tpu.dot_dimension_numbers<[1], [0], [0], [1], [0, 0, 1, 1], [], []>} : vector<8x16xf32>, vector<16x8xf32>, vector<8x8xf32> -> vector<8x8xf32>
    %c0_92 = arith.constant 0 : index
    %c0_93 = arith.constant 0 : index
    %225 = vector.load %arg22[%c0_92, %c0_93] : memref<128x8xf32, #tpu.memory_space<vmem>>, vector<128x8xf32>
    %cst_94 = arith.constant dense<0.000000e+00> : vector<8x8xf32>
    %226 = tpu.matmul %220, %225, %cst_94 {dimension_numbers = #tpu.dot_dimension_numbers<[1], [0], [0], [1], [0, 0, 1, 1], [], []>} : vector<8x128xf32>, vector<128x8xf32>, vector<8x8xf32> -> vector<8x8xf32>
    %cst_95 = arith.constant dense<0.000000e+00> : vector<8x8xf32>
    %227 = tpu.matmul %224, %226, %cst_95 {dimension_numbers = #tpu.dot_dimension_numbers<[1], [0], [0], [1], [0, 0, 1, 1], [], []>} : vector<8x8xf32>, vector<8x8xf32>, vector<8x8xf32> -> vector<8x8xf32>
    %c0_96 = arith.constant 0 : index
    %c0_97 = arith.constant 0 : index
    %228 = vector.load %arg24[%c0_96, %c0_97] : memref<8x8xf32, #tpu.memory_space<vmem>>, vector<8x8xf32>
    %c0_98 = arith.constant 0 : index
    %c0_99 = arith.constant 0 : index
    %229 = vector.load %arg23[%c0_98, %c0_99] : memref<8x8xf32, #tpu.memory_space<vmem>>, vector<8x8xf32>
    %230 = arith.addf %227, %229 : vector<8x8xf32>
    %cst_100 = arith.constant 0.000000e+00 : f32
    %231 = vector.broadcast %cst_100 : f32 to vector<8x8xf32>
    %232 = arith.subf %231, %230 : vector<8x8xf32>
    %233 = math.exp %232 : vector<8x8xf32>
    %cst_101 = arith.constant 1.000000e+00 : f32
    %234 = vector.broadcast %cst_101 : f32 to vector<8x8xf32>
    %235 = arith.addf %234, %233 : vector<8x8xf32>
    %cst_102 = arith.constant 1.000000e+00 : f32
    %236 = vector.broadcast %cst_102 : f32 to vector<8x8xf32>
    %237 = arith.divf %236, %235 : vector<8x8xf32>
    %cst_103 = arith.constant dense<0.000000e+00> : vector<8x8xf32>
    %238 = tpu.matmul %228, %237, %cst_103 {dimension_numbers = #tpu.dot_dimension_numbers<[1], [0], [0], [1], [0, 0, 1, 1], [], []>} : vector<8x8xf32>, vector<8x8xf32>, vector<8x8xf32> -> vector<8x8xf32>
    %cst_104 = arith.constant dense<0xFF800000> : vector<8xf32>
    %239 = vector.multi_reduction <maximumf>, %238, %cst_104 [0] : vector<8x8xf32> to vector<8xf32>
    %240 = vector.shape_cast %239 : vector<8xf32> to vector<1x8xf32>
    %241 = vector.broadcast %240 : vector<1x8xf32> to vector<8x8xf32>
    %242 = arith.subf %238, %241 : vector<8x8xf32>
    %243 = math.exp %242 : vector<8x8xf32>
    %cst_105 = arith.constant dense<0.000000e+00> : vector<8xf32>
    %244 = vector.multi_reduction <add>, %243, %cst_105 [0] : vector<8x8xf32> to vector<8xf32>
    %245 = vector.shape_cast %244 : vector<8xf32> to vector<1x8xf32>
    %246 = vector.broadcast %245 : vector<1x8xf32> to vector<8x8xf32>
    %247 = arith.divf %243, %246 : vector<8x8xf32>
    %c0_106 = arith.constant 0 : index
    %c0_107 = arith.constant 0 : index
    %248 = vector.load %arg25[%c0_106, %c0_107] : memref<8x1xf32, #tpu.memory_space<vmem>>, vector<8x1xf32>
    %cst_108 = arith.constant dense<0.000000e+00> : vector<8x1xf32>
    %249 = tpu.matmul %247, %248, %cst_108 {dimension_numbers = #tpu.dot_dimension_numbers<[1], [0], [0], [1], [0, 0, 1, 1], [], []>} : vector<8x8xf32>, vector<8x1xf32>, vector<8x1xf32> -> vector<8x1xf32>
    %250 = vector.shape_cast %249 : vector<8x1xf32> to vector<8x1x1xf32>
    %251 = vector.broadcast %250 : vector<8x1x1xf32> to vector<8x8x16xf32>
    %252 = arith.mulf %199, %251 : vector<8x8x16xf32>
    %cst_109 = arith.constant dense<0.000000e+00> : vector<8x16xf32>
    %253 = vector.multi_reduction <add>, %252, %cst_109 [0] : vector<8x8x16xf32> to vector<8x16xf32>
    %c0_110 = arith.constant 0 : index
    %c0_111 = arith.constant 0 : index
    %254 = vector.load %arg26[%c0_110, %c0_111] : memref<16x8xf32, #tpu.memory_space<vmem>>, vector<16x8xf32>
    %cst_112 = arith.constant dense<0.000000e+00> : vector<8x8xf32>
    %255 = tpu.matmul %253, %254, %cst_112 {dimension_numbers = #tpu.dot_dimension_numbers<[1], [0], [0], [1], [0, 0, 1, 1], [], []>} : vector<8x16xf32>, vector<16x8xf32>, vector<8x8xf32> -> vector<8x8xf32>
    %c0_113 = arith.constant 0 : index
    %c0_114 = arith.constant 0 : index
    %256 = vector.load %arg27[%c0_113, %c0_114] : memref<128x8xf32, #tpu.memory_space<vmem>>, vector<128x8xf32>
    %cst_115 = arith.constant dense<0.000000e+00> : vector<8x8xf32>
    %257 = tpu.matmul %220, %256, %cst_115 {dimension_numbers = #tpu.dot_dimension_numbers<[1], [0], [0], [1], [0, 0, 1, 1], [], []>} : vector<8x128xf32>, vector<128x8xf32>, vector<8x8xf32> -> vector<8x8xf32>
    %cst_116 = arith.constant dense<0.000000e+00> : vector<8x8xf32>
    %258 = tpu.matmul %257, %247, %cst_116 {dimension_numbers = #tpu.dot_dimension_numbers<[1], [0], [0], [1], [0, 0, 1, 1], [], []>} : vector<8x8xf32>, vector<8x8xf32>, vector<8x8xf32> -> vector<8x8xf32>
    %259 = tpu.transpose %258, [1, 0] : vector<8x8xf32> -> vector<8x8xf32>
    %cst_117 = arith.constant dense<0.000000e+00> : vector<8x8xf32>
    %260 = tpu.matmul %255, %259, %cst_117 {dimension_numbers = #tpu.dot_dimension_numbers<[1], [0], [0], [1], [0, 0, 1, 1], [], []>} : vector<8x8xf32>, vector<8x8xf32>, vector<8x8xf32> -> vector<8x8xf32>
    %c0_118 = arith.constant 0 : index
    %c0_119 = arith.constant 0 : index
    %261 = vector.load %arg29[%c0_118, %c0_119] : memref<8x8xf32, #tpu.memory_space<vmem>>, vector<8x8xf32>
    %c0_120 = arith.constant 0 : index
    %c0_121 = arith.constant 0 : index
    %262 = vector.load %arg28[%c0_120, %c0_121] : memref<8x8xf32, #tpu.memory_space<vmem>>, vector<8x8xf32>
    %263 = arith.addf %260, %262 : vector<8x8xf32>
    %cst_122 = arith.constant 0.000000e+00 : f32
    %264 = vector.broadcast %cst_122 : f32 to vector<8x8xf32>
    %265 = arith.subf %264, %263 : vector<8x8xf32>
    %266 = math.exp %265 : vector<8x8xf32>
    %cst_123 = arith.constant 1.000000e+00 : f32
    %267 = vector.broadcast %cst_123 : f32 to vector<8x8xf32>
    %268 = arith.addf %267, %266 : vector<8x8xf32>
    %cst_124 = arith.constant 1.000000e+00 : f32
    %269 = vector.broadcast %cst_124 : f32 to vector<8x8xf32>
    %270 = arith.divf %269, %268 : vector<8x8xf32>
    %cst_125 = arith.constant dense<0.000000e+00> : vector<8x8xf32>
    %271 = tpu.matmul %261, %270, %cst_125 {dimension_numbers = #tpu.dot_dimension_numbers<[1], [0], [0], [1], [0, 0, 1, 1], [], []>} : vector<8x8xf32>, vector<8x8xf32>, vector<8x8xf32> -> vector<8x8xf32>
    %cst_126 = arith.constant dense<0xFF800000> : vector<8xf32>
    %272 = vector.multi_reduction <maximumf>, %271, %cst_126 [0] : vector<8x8xf32> to vector<8xf32>
    %273 = vector.shape_cast %272 : vector<8xf32> to vector<1x8xf32>
    %274 = vector.broadcast %273 : vector<1x8xf32> to vector<8x8xf32>
    %275 = arith.subf %271, %274 : vector<8x8xf32>
    %276 = math.exp %275 : vector<8x8xf32>
    %cst_127 = arith.constant dense<0.000000e+00> : vector<8xf32>
    %277 = vector.multi_reduction <add>, %276, %cst_127 [0] : vector<8x8xf32> to vector<8xf32>
    %278 = vector.shape_cast %277 : vector<8xf32> to vector<1x8xf32>
    %279 = vector.broadcast %278 : vector<1x8xf32> to vector<8x8xf32>
    %280 = arith.divf %276, %279 : vector<8x8xf32>
    %281 = tpu.transpose %280, [1, 0] : vector<8x8xf32> -> vector<8x8xf32>
    %282 = vector.extract_strided_slice %200 {offsets = [0, 0, 0], sizes = [1, 8, 8], strides = [1, 1, 1]} : vector<3x8x8xf32> to vector<1x8x8xf32>
    %283 = vector.shape_cast %282 : vector<1x8x8xf32> to vector<8x8xf32>
    %284 = arith.mulf %283, %281 : vector<8x8xf32>
    %cst_128 = arith.constant dense<0.000000e+00> : vector<8x128xf32>
    %285 = tpu.matmul %284, %220, %cst_128 {dimension_numbers = #tpu.dot_dimension_numbers<[1], [0], [0], [1], [0, 0, 1, 1], [], []>} : vector<8x8xf32>, vector<8x128xf32>, vector<8x128xf32> -> vector<8x128xf32>
    %286 = vector.extract_strided_slice %285 {offsets = [0, 0], sizes = [8, 16], strides = [1, 1]} : vector<8x128xf32> to vector<8x16xf32>
    %287 = vector.extract_strided_slice %285 {offsets = [0, 16], sizes = [8, 16], strides = [1, 1]} : vector<8x128xf32> to vector<8x16xf32>
    %288 = vector.extract_strided_slice %285 {offsets = [0, 32], sizes = [8, 16], strides = [1, 1]} : vector<8x128xf32> to vector<8x16xf32>
    %289 = vector.extract_strided_slice %285 {offsets = [0, 48], sizes = [8, 16], strides = [1, 1]} : vector<8x128xf32> to vector<8x16xf32>
    %290 = vector.extract_strided_slice %285 {offsets = [0, 64], sizes = [8, 16], strides = [1, 1]} : vector<8x128xf32> to vector<8x16xf32>
    %291 = vector.extract_strided_slice %285 {offsets = [0, 80], sizes = [8, 16], strides = [1, 1]} : vector<8x128xf32> to vector<8x16xf32>
    %292 = vector.extract_strided_slice %285 {offsets = [0, 96], sizes = [8, 16], strides = [1, 1]} : vector<8x128xf32> to vector<8x16xf32>
    %293 = vector.extract_strided_slice %285 {offsets = [0, 112], sizes = [8, 16], strides = [1, 1]} : vector<8x128xf32> to vector<8x16xf32>
    %294 = tpu.concatenate %286, %287, %288, %289, %290, %291, %292, %293 in 0 : vector<8x16xf32>, vector<8x16xf32>, vector<8x16xf32>, vector<8x16xf32>, vector<8x16xf32>, vector<8x16xf32>, vector<8x16xf32>, vector<8x16xf32> -> vector<64x16xf32>
    %295 = vector.extract_strided_slice %200 {offsets = [1, 0, 0], sizes = [1, 8, 8], strides = [1, 1, 1]} : vector<3x8x8xf32> to vector<1x8x8xf32>
    %296 = vector.shape_cast %295 : vector<1x8x8xf32> to vector<8x8xf32>
    %297 = arith.mulf %296, %281 : vector<8x8xf32>
    %cst_129 = arith.constant dense<0.000000e+00> : vector<8x128xf32>
    %298 = tpu.matmul %297, %220, %cst_129 {dimension_numbers = #tpu.dot_dimension_numbers<[1], [0], [0], [1], [0, 0, 1, 1], [], []>} : vector<8x8xf32>, vector<8x128xf32>, vector<8x128xf32> -> vector<8x128xf32>
    %299 = vector.extract_strided_slice %298 {offsets = [0, 0], sizes = [8, 16], strides = [1, 1]} : vector<8x128xf32> to vector<8x16xf32>
    %300 = vector.extract_strided_slice %298 {offsets = [0, 16], sizes = [8, 16], strides = [1, 1]} : vector<8x128xf32> to vector<8x16xf32>
    %301 = vector.extract_strided_slice %298 {offsets = [0, 32], sizes = [8, 16], strides = [1, 1]} : vector<8x128xf32> to vector<8x16xf32>
    %302 = vector.extract_strided_slice %298 {offsets = [0, 48], sizes = [8, 16], strides = [1, 1]} : vector<8x128xf32> to vector<8x16xf32>
    %303 = vector.extract_strided_slice %298 {offsets = [0, 64], sizes = [8, 16], strides = [1, 1]} : vector<8x128xf32> to vector<8x16xf32>
    %304 = vector.extract_strided_slice %298 {offsets = [0, 80], sizes = [8, 16], strides = [1, 1]} : vector<8x128xf32> to vector<8x16xf32>
    %305 = vector.extract_strided_slice %298 {offsets = [0, 96], sizes = [8, 16], strides = [1, 1]} : vector<8x128xf32> to vector<8x16xf32>
    %306 = vector.extract_strided_slice %298 {offsets = [0, 112], sizes = [8, 16], strides = [1, 1]} : vector<8x128xf32> to vector<8x16xf32>
    %307 = tpu.concatenate %299, %300, %301, %302, %303, %304, %305, %306 in 0 : vector<8x16xf32>, vector<8x16xf32>, vector<8x16xf32>, vector<8x16xf32>, vector<8x16xf32>, vector<8x16xf32>, vector<8x16xf32>, vector<8x16xf32> -> vector<64x16xf32>
    %308 = vector.extract_strided_slice %200 {offsets = [2, 0, 0], sizes = [1, 8, 8], strides = [1, 1, 1]} : vector<3x8x8xf32> to vector<1x8x8xf32>
    %309 = vector.shape_cast %308 : vector<1x8x8xf32> to vector<8x8xf32>
    %310 = arith.mulf %309, %281 : vector<8x8xf32>
    %cst_130 = arith.constant dense<0.000000e+00> : vector<8x128xf32>
    %311 = tpu.matmul %310, %220, %cst_130 {dimension_numbers = #tpu.dot_dimension_numbers<[1], [0], [0], [1], [0, 0, 1, 1], [], []>} : vector<8x8xf32>, vector<8x128xf32>, vector<8x128xf32> -> vector<8x128xf32>
    %312 = vector.extract_strided_slice %311 {offsets = [0, 0], sizes = [8, 16], strides = [1, 1]} : vector<8x128xf32> to vector<8x16xf32>
    %313 = vector.extract_strided_slice %311 {offsets = [0, 16], sizes = [8, 16], strides = [1, 1]} : vector<8x128xf32> to vector<8x16xf32>
    %314 = vector.extract_strided_slice %311 {offsets = [0, 32], sizes = [8, 16], strides = [1, 1]} : vector<8x128xf32> to vector<8x16xf32>
    %315 = vector.extract_strided_slice %311 {offsets = [0, 48], sizes = [8, 16], strides = [1, 1]} : vector<8x128xf32> to vector<8x16xf32>
    %316 = vector.extract_strided_slice %311 {offsets = [0, 64], sizes = [8, 16], strides = [1, 1]} : vector<8x128xf32> to vector<8x16xf32>
    %317 = vector.extract_strided_slice %311 {offsets = [0, 80], sizes = [8, 16], strides = [1, 1]} : vector<8x128xf32> to vector<8x16xf32>
    %318 = vector.extract_strided_slice %311 {offsets = [0, 96], sizes = [8, 16], strides = [1, 1]} : vector<8x128xf32> to vector<8x16xf32>
    %319 = vector.extract_strided_slice %311 {offsets = [0, 112], sizes = [8, 16], strides = [1, 1]} : vector<8x128xf32> to vector<8x16xf32>
    %320 = tpu.concatenate %312, %313, %314, %315, %316, %317, %318, %319 in 0 : vector<8x16xf32>, vector<8x16xf32>, vector<8x16xf32>, vector<8x16xf32>, vector<8x16xf32>, vector<8x16xf32>, vector<8x16xf32>, vector<8x16xf32> -> vector<64x16xf32>
    %321 = tpu.concatenate %294, %307, %320 in 1 : vector<64x16xf32>, vector<64x16xf32>, vector<64x16xf32> -> vector<64x48xf32>
    %cst_131 = arith.constant dense<0.000000e+00> : vector<64x16xf32>
    %322 = tpu.matmul %321, %201, %cst_131 {dimension_numbers = #tpu.dot_dimension_numbers<[1], [0], [0], [1], [0, 0, 1, 1], [], []>} : vector<64x48xf32>, vector<48x16xf32>, vector<64x16xf32> -> vector<64x16xf32>
    %cst_132 = arith.constant 0.000000e+00 : f32
    %323 = vector.broadcast %cst_132 : f32 to vector<64x16xf32>
    %324 = arith.maximumf %322, %323 : vector<64x16xf32>
    %cst_133 = arith.constant 0.000000e+00 : f32
    %325 = vector.broadcast %cst_133 : f32 to vector<8x16xf32>
    %c0_134 = arith.constant 0 : index
    %c0_135 = arith.constant 0 : index
    %326 = vector.load %arg33[%c0_134, %c0_135] : memref<1x16xf32, #tpu.memory_space<vmem>>, vector<1x16xf32>
    %327 = vector.extract_strided_slice %324 {offsets = [0, 0], sizes = [8, 16], strides = [1, 1]} : vector<64x16xf32> to vector<8x16xf32>
    %328 = vector.extract_strided_slice %324 {offsets = [8, 0], sizes = [8, 16], strides = [1, 1]} : vector<64x16xf32> to vector<8x16xf32>
    %329 = vector.extract_strided_slice %324 {offsets = [16, 0], sizes = [8, 16], strides = [1, 1]} : vector<64x16xf32> to vector<8x16xf32>
    %330 = vector.extract_strided_slice %324 {offsets = [24, 0], sizes = [8, 16], strides = [1, 1]} : vector<64x16xf32> to vector<8x16xf32>
    %331 = vector.extract_strided_slice %324 {offsets = [32, 0], sizes = [8, 16], strides = [1, 1]} : vector<64x16xf32> to vector<8x16xf32>
    %332 = vector.extract_strided_slice %324 {offsets = [40, 0], sizes = [8, 16], strides = [1, 1]} : vector<64x16xf32> to vector<8x16xf32>
    %333 = vector.extract_strided_slice %324 {offsets = [48, 0], sizes = [8, 16], strides = [1, 1]} : vector<64x16xf32> to vector<8x16xf32>
    %334 = tpu.concatenate %325, %327, %328, %329, %330, %331, %332, %333 in 0 : vector<8x16xf32>, vector<8x16xf32>, vector<8x16xf32>, vector<8x16xf32>, vector<8x16xf32>, vector<8x16xf32>, vector<8x16xf32>, vector<8x16xf32> -> vector<64x16xf32>
    %335 = vector.extract_strided_slice %202 {offsets = [0, 0, 0], sizes = [1, 16, 16], strides = [1, 1, 1]} : vector<3x16x16xf32> to vector<1x16x16xf32>
    %336 = vector.shape_cast %335 : vector<1x16x16xf32> to vector<16x16xf32>
    %cst_136 = arith.constant dense<0.000000e+00> : vector<64x16xf32>
    %337 = tpu.matmul %334, %336, %cst_136 {dimension_numbers = #tpu.dot_dimension_numbers<[1], [0], [0], [1], [0, 0, 1, 1], [], []>} : vector<64x16xf32>, vector<16x16xf32>, vector<64x16xf32> -> vector<64x16xf32>
    %338 = vector.broadcast %326 : vector<1x16xf32> to vector<64x16xf32>
    %339 = arith.addf %338, %337 : vector<64x16xf32>
    %340 = vector.extract_strided_slice %324 {offsets = [0, 0], sizes = [8, 16], strides = [1, 1]} : vector<64x16xf32> to vector<8x16xf32>
    %341 = vector.extract_strided_slice %324 {offsets = [8, 0], sizes = [8, 16], strides = [1, 1]} : vector<64x16xf32> to vector<8x16xf32>
    %342 = vector.extract_strided_slice %324 {offsets = [16, 0], sizes = [8, 16], strides = [1, 1]} : vector<64x16xf32> to vector<8x16xf32>
    %343 = vector.extract_strided_slice %324 {offsets = [24, 0], sizes = [8, 16], strides = [1, 1]} : vector<64x16xf32> to vector<8x16xf32>
    %344 = vector.extract_strided_slice %324 {offsets = [32, 0], sizes = [8, 16], strides = [1, 1]} : vector<64x16xf32> to vector<8x16xf32>
    %345 = vector.extract_strided_slice %324 {offsets = [40, 0], sizes = [8, 16], strides = [1, 1]} : vector<64x16xf32> to vector<8x16xf32>
    %346 = vector.extract_strided_slice %324 {offsets = [48, 0], sizes = [8, 16], strides = [1, 1]} : vector<64x16xf32> to vector<8x16xf32>
    %347 = vector.extract_strided_slice %324 {offsets = [56, 0], sizes = [8, 16], strides = [1, 1]} : vector<64x16xf32> to vector<8x16xf32>
    %348 = tpu.concatenate %340, %341, %342, %343, %344, %345, %346, %347 in 0 : vector<8x16xf32>, vector<8x16xf32>, vector<8x16xf32>, vector<8x16xf32>, vector<8x16xf32>, vector<8x16xf32>, vector<8x16xf32>, vector<8x16xf32> -> vector<64x16xf32>
    %349 = vector.extract_strided_slice %202 {offsets = [1, 0, 0], sizes = [1, 16, 16], strides = [1, 1, 1]} : vector<3x16x16xf32> to vector<1x16x16xf32>
    %350 = vector.shape_cast %349 : vector<1x16x16xf32> to vector<16x16xf32>
    %cst_137 = arith.constant dense<0.000000e+00> : vector<64x16xf32>
    %351 = tpu.matmul %348, %350, %cst_137 {dimension_numbers = #tpu.dot_dimension_numbers<[1], [0], [0], [1], [0, 0, 1, 1], [], []>} : vector<64x16xf32>, vector<16x16xf32>, vector<64x16xf32> -> vector<64x16xf32>
    %352 = arith.addf %339, %351 : vector<64x16xf32>
    %353 = vector.extract_strided_slice %324 {offsets = [8, 0], sizes = [8, 16], strides = [1, 1]} : vector<64x16xf32> to vector<8x16xf32>
    %354 = vector.extract_strided_slice %324 {offsets = [16, 0], sizes = [8, 16], strides = [1, 1]} : vector<64x16xf32> to vector<8x16xf32>
    %355 = vector.extract_strided_slice %324 {offsets = [24, 0], sizes = [8, 16], strides = [1, 1]} : vector<64x16xf32> to vector<8x16xf32>
    %356 = vector.extract_strided_slice %324 {offsets = [32, 0], sizes = [8, 16], strides = [1, 1]} : vector<64x16xf32> to vector<8x16xf32>
    %357 = vector.extract_strided_slice %324 {offsets = [40, 0], sizes = [8, 16], strides = [1, 1]} : vector<64x16xf32> to vector<8x16xf32>
    %358 = vector.extract_strided_slice %324 {offsets = [48, 0], sizes = [8, 16], strides = [1, 1]} : vector<64x16xf32> to vector<8x16xf32>
    %359 = vector.extract_strided_slice %324 {offsets = [56, 0], sizes = [8, 16], strides = [1, 1]} : vector<64x16xf32> to vector<8x16xf32>
    %360 = tpu.concatenate %353, %354, %355, %356, %357, %358, %359, %325 in 0 : vector<8x16xf32>, vector<8x16xf32>, vector<8x16xf32>, vector<8x16xf32>, vector<8x16xf32>, vector<8x16xf32>, vector<8x16xf32>, vector<8x16xf32> -> vector<64x16xf32>
    %361 = vector.extract_strided_slice %202 {offsets = [2, 0, 0], sizes = [1, 16, 16], strides = [1, 1, 1]} : vector<3x16x16xf32> to vector<1x16x16xf32>
    %362 = vector.shape_cast %361 : vector<1x16x16xf32> to vector<16x16xf32>
    %cst_138 = arith.constant dense<0.000000e+00> : vector<64x16xf32>
    %363 = tpu.matmul %360, %362, %cst_138 {dimension_numbers = #tpu.dot_dimension_numbers<[1], [0], [0], [1], [0, 0, 1, 1], [], []>} : vector<64x16xf32>, vector<16x16xf32>, vector<64x16xf32> -> vector<64x16xf32>
    %364 = arith.addf %352, %363 : vector<64x16xf32>
    %c0_139 = arith.constant 0 : index
    %c0_140 = arith.constant 0 : index
    %365 = vector.load %arg34[%c0_139, %c0_140] : memref<16x16xf32, #tpu.memory_space<vmem>>, vector<16x16xf32>
    %cst_141 = arith.constant dense<0.000000e+00> : vector<64x16xf32>
    %366 = tpu.matmul %203, %365, %cst_141 {dimension_numbers = #tpu.dot_dimension_numbers<[1], [0], [0], [1], [0, 0, 1, 1], [], []>} : vector<64x16xf32>, vector<16x16xf32>, vector<64x16xf32> -> vector<64x16xf32>
    %c0_142 = arith.constant 0 : index
    %c0_143 = arith.constant 0 : index
    %367 = vector.load %arg35[%c0_142, %c0_143] : memref<1x16xf32, #tpu.memory_space<vmem>>, vector<1x16xf32>
    %368 = vector.broadcast %367 : vector<1x16xf32> to vector<64x16xf32>
    %369 = arith.addf %366, %368 : vector<64x16xf32>
    %370 = arith.addf %369, %364 : vector<64x16xf32>
    %cst_144 = arith.constant 0.000000e+00 : f32
    %371 = vector.broadcast %cst_144 : f32 to vector<64x16xf32>
    %372 = arith.maximumf %370, %371 : vector<64x16xf32>
    %cst_145 = arith.constant dense<0.000000e+00> : vector<64xf32>
    %373 = vector.multi_reduction <add>, %372, %cst_145 [1] : vector<64x16xf32> to vector<64xf32>
    %374 = vector.shape_cast %373 : vector<64xf32> to vector<64x1xf32>
    %cst_146 = arith.constant 1.600000e+01 : f32
    %375 = vector.broadcast %cst_146 : f32 to vector<64x1xf32>
    %376 = arith.divf %374, %375 : vector<64x1xf32>
    %377 = vector.broadcast %376 : vector<64x1xf32> to vector<64x16xf32>
    %378 = arith.subf %372, %377 : vector<64x16xf32>
    %379 = arith.mulf %378, %378 : vector<64x16xf32>
    %cst_147 = arith.constant dense<0.000000e+00> : vector<64xf32>
    %380 = vector.multi_reduction <add>, %379, %cst_147 [1] : vector<64x16xf32> to vector<64xf32>
    %381 = vector.shape_cast %380 : vector<64xf32> to vector<64x1xf32>
    %cst_148 = arith.constant 1.600000e+01 : f32
    %382 = vector.broadcast %cst_148 : f32 to vector<64x1xf32>
    %383 = arith.divf %381, %382 : vector<64x1xf32>
    %384 = vector.broadcast %376 : vector<64x1xf32> to vector<64x16xf32>
    %385 = arith.subf %372, %384 : vector<64x16xf32>
    %cst_149 = arith.constant 9.99999974E-6 : f32
    %386 = vector.broadcast %cst_149 : f32 to vector<64x1xf32>
    %387 = arith.addf %383, %386 : vector<64x1xf32>
    %388 = math.rsqrt %387 : vector<64x1xf32>
    %389 = vector.broadcast %388 : vector<64x1xf32> to vector<64x16xf32>
    %390 = arith.mulf %385, %389 : vector<64x16xf32>
    %c0_150 = arith.constant 0 : index
    %c0_151 = arith.constant 0 : index
    %391 = vector.load %arg36[%c0_150, %c0_151] : memref<1x16xf32, #tpu.memory_space<vmem>>, vector<1x16xf32>
    %392 = vector.broadcast %391 : vector<1x16xf32> to vector<64x16xf32>
    %393 = arith.mulf %390, %392 : vector<64x16xf32>
    %c0_152 = arith.constant 0 : index
    %c0_153 = arith.constant 0 : index
    %394 = vector.load %arg37[%c0_152, %c0_153] : memref<1x16xf32, #tpu.memory_space<vmem>>, vector<1x16xf32>
    %395 = vector.broadcast %394 : vector<1x16xf32> to vector<64x16xf32>
    %396 = arith.addf %393, %395 : vector<64x16xf32>
    %397 = vector.shape_cast %396 : vector<64x16xf32> to vector<8x8x16xf32>
    %398 = vector.extract_strided_slice %397 {offsets = [0, 0, 0], sizes = [1, 8, 16], strides = [1, 1, 1]} : vector<8x8x16xf32> to vector<1x8x16xf32>
    %399 = vector.shape_cast %398 : vector<1x8x16xf32> to vector<8x16xf32>
    %400 = vector.extract_strided_slice %397 {offsets = [1, 0, 0], sizes = [1, 8, 16], strides = [1, 1, 1]} : vector<8x8x16xf32> to vector<1x8x16xf32>
    %401 = vector.shape_cast %400 : vector<1x8x16xf32> to vector<8x16xf32>
    %402 = vector.extract_strided_slice %397 {offsets = [2, 0, 0], sizes = [1, 8, 16], strides = [1, 1, 1]} : vector<8x8x16xf32> to vector<1x8x16xf32>
    %403 = vector.shape_cast %402 : vector<1x8x16xf32> to vector<8x16xf32>
    %404 = vector.extract_strided_slice %397 {offsets = [3, 0, 0], sizes = [1, 8, 16], strides = [1, 1, 1]} : vector<8x8x16xf32> to vector<1x8x16xf32>
    %405 = vector.shape_cast %404 : vector<1x8x16xf32> to vector<8x16xf32>
    %406 = vector.extract_strided_slice %397 {offsets = [4, 0, 0], sizes = [1, 8, 16], strides = [1, 1, 1]} : vector<8x8x16xf32> to vector<1x8x16xf32>
    %407 = vector.shape_cast %406 : vector<1x8x16xf32> to vector<8x16xf32>
    %408 = vector.extract_strided_slice %397 {offsets = [5, 0, 0], sizes = [1, 8, 16], strides = [1, 1, 1]} : vector<8x8x16xf32> to vector<1x8x16xf32>
    %409 = vector.shape_cast %408 : vector<1x8x16xf32> to vector<8x16xf32>
    %410 = vector.extract_strided_slice %397 {offsets = [6, 0, 0], sizes = [1, 8, 16], strides = [1, 1, 1]} : vector<8x8x16xf32> to vector<1x8x16xf32>
    %411 = vector.shape_cast %410 : vector<1x8x16xf32> to vector<8x16xf32>
    %412 = vector.extract_strided_slice %397 {offsets = [7, 0, 0], sizes = [1, 8, 16], strides = [1, 1, 1]} : vector<8x8x16xf32> to vector<1x8x16xf32>
    %413 = vector.shape_cast %412 : vector<1x8x16xf32> to vector<8x16xf32>
    %414 = tpu.concatenate %399, %401, %403, %405, %407, %409, %411, %413 in 1 : vector<8x16xf32>, vector<8x16xf32>, vector<8x16xf32>, vector<8x16xf32>, vector<8x16xf32>, vector<8x16xf32>, vector<8x16xf32>, vector<8x16xf32> -> vector<8x128xf32>
    %c0_154 = arith.constant 0 : index
    %c0_155 = arith.constant 0 : index
    %415 = vector.load %arg38[%c0_154, %c0_155] : memref<128x4xf32, #tpu.memory_space<vmem>>, vector<128x4xf32>
    %cst_156 = arith.constant dense<0.000000e+00> : vector<8x4xf32>
    %416 = tpu.matmul %414, %415, %cst_156 {dimension_numbers = #tpu.dot_dimension_numbers<[1], [0], [0], [1], [0, 0, 1, 1], [], []>} : vector<8x128xf32>, vector<128x4xf32>, vector<8x4xf32> -> vector<8x4xf32>
    %c0_157 = arith.constant 0 : index
    %c0_158 = arith.constant 0 : index
    %417 = vector.load %arg39[%c0_157, %c0_158] : memref<1x4xf32, #tpu.memory_space<vmem>>, vector<1x4xf32>
    %418 = vector.broadcast %417 : vector<1x4xf32> to vector<8x4xf32>
    %419 = arith.addf %416, %418 : vector<8x4xf32>
    %c0_159 = arith.constant 0 : index
    %c0_160 = arith.constant 0 : index
    %c0_161 = arith.constant 0 : index
    %420 = vector.load %arg40[%c0_159, %c0_160, %c0_161] : memref<1x8x4xf32, #tpu.memory_space<vmem>>, vector<1x8x4xf32>
    %421 = vector.shape_cast %420 : vector<1x8x4xf32> to vector<8x4xf32>
    %422 = vector.shape_cast %419 : vector<8x4xf32> to vector<1x8x4xf32>
    tpu.vector_store %arg40[%c0_159, %c0_160, %c0_161], %422 {strides = array<i32>} : memref<1x8x4xf32, #tpu.memory_space<vmem>>, vector<1x8x4xf32>,
    return
  }
  func.func @transform_0(%arg0: i32) -> (i32, i32, i32, i32) {
    %c0_i32 = arith.constant 0 : i32
    %c0_i32_0 = arith.constant 0 : i32
    %c0_i32_1 = arith.constant 0 : i32
    %c0_i32_2 = arith.constant 0 : i32
    return %arg0, %c0_i32, %c0_i32_0, %c0_i32_1 : i32, i32, i32, i32
  }
  func.func @transform_1(%arg0: i32) -> (i32, i32) {
    %c0_i32 = arith.constant 0 : i32
    %c0_i32_0 = arith.constant 0 : i32
    %c0_i32_1 = arith.constant 0 : i32
    return %c0_i32, %c0_i32_0 : i32, i32
  }
  func.func @transform_2(%arg0: i32) -> (i32, i32) {
    %c0_i32 = arith.constant 0 : i32
    %c0_i32_0 = arith.constant 0 : i32
    %c0_i32_1 = arith.constant 0 : i32
    return %c0_i32, %c0_i32_0 : i32, i32
  }
  func.func @transform_3(%arg0: i32) -> (i32, i32) {
    %c0_i32 = arith.constant 0 : i32
    %c0_i32_0 = arith.constant 0 : i32
    %c0_i32_1 = arith.constant 0 : i32
    return %c0_i32, %c0_i32_0 : i32, i32
  }
  func.func @transform_4(%arg0: i32) -> (i32, i32) {
    %c0_i32 = arith.constant 0 : i32
    %c0_i32_0 = arith.constant 0 : i32
    %c0_i32_1 = arith.constant 0 : i32
    return %c0_i32, %c0_i32_0 : i32, i32
  }
  func.func @transform_5(%arg0: i32) -> (i32, i32) {
    %c0_i32 = arith.constant 0 : i32
    %c0_i32_0 = arith.constant 0 : i32
    %c0_i32_1 = arith.constant 0 : i32
    return %c0_i32, %c0_i32_0 : i32, i32
  }
  func.func @transform_6(%arg0: i32) -> (i32, i32) {
    %c0_i32 = arith.constant 0 : i32
    %c0_i32_0 = arith.constant 0 : i32
    %c0_i32_1 = arith.constant 0 : i32
    return %c0_i32, %c0_i32_0 : i32, i32
  }
  func.func @transform_7(%arg0: i32) -> (i32, i32) {
    %c0_i32 = arith.constant 0 : i32
    %c0_i32_0 = arith.constant 0 : i32
    %c0_i32_1 = arith.constant 0 : i32
    return %c0_i32, %c0_i32_0 : i32, i32
  }
  func.func @transform_8(%arg0: i32) -> (i32, i32) {
    %c0_i32 = arith.constant 0 : i32
    %c0_i32_0 = arith.constant 0 : i32
    %c0_i32_1 = arith.constant 0 : i32
    return %c0_i32, %c0_i32_0 : i32, i32
  }
  func.func @transform_9(%arg0: i32) -> (i32, i32) {
    %c0_i32 = arith.constant 0 : i32
    %c0_i32_0 = arith.constant 0 : i32
    %c0_i32_1 = arith.constant 0 : i32
    return %c0_i32, %c0_i32_0 : i32, i32
  }
  func.func @transform_10(%arg0: i32) -> (i32, i32) {
    %c0_i32 = arith.constant 0 : i32
    %c0_i32_0 = arith.constant 0 : i32
    %c0_i32_1 = arith.constant 0 : i32
    return %c0_i32, %c0_i32_0 : i32, i32
  }
  func.func @transform_11(%arg0: i32) -> (i32, i32, i32) {
    %c0_i32 = arith.constant 0 : i32
    %c0_i32_0 = arith.constant 0 : i32
    %c0_i32_1 = arith.constant 0 : i32
    %c0_i32_2 = arith.constant 0 : i32
    return %c0_i32, %c0_i32_0, %c0_i32_1 : i32, i32, i32
  }
  func.func @transform_12(%arg0: i32) -> (i32, i32) {
    %c0_i32 = arith.constant 0 : i32
    %c0_i32_0 = arith.constant 0 : i32
    %c0_i32_1 = arith.constant 0 : i32
    return %c0_i32, %c0_i32_0 : i32, i32
  }
  func.func @transform_13(%arg0: i32) -> (i32, i32, i32) {
    %c0_i32 = arith.constant 0 : i32
    %c0_i32_0 = arith.constant 0 : i32
    %c0_i32_1 = arith.constant 0 : i32
    %c0_i32_2 = arith.constant 0 : i32
    return %c0_i32, %c0_i32_0, %c0_i32_1 : i32, i32, i32
  }
  func.func @transform_14(%arg0: i32) -> (i32, i32) {
    %c0_i32 = arith.constant 0 : i32
    %c0_i32_0 = arith.constant 0 : i32
    %c0_i32_1 = arith.constant 0 : i32
    return %c0_i32, %c0_i32_0 : i32, i32
  }
  func.func @transform_15(%arg0: i32) -> (i32, i32) {
    %c0_i32 = arith.constant 0 : i32
    %c0_i32_0 = arith.constant 0 : i32
    %c0_i32_1 = arith.constant 0 : i32
    return %c0_i32, %c0_i32_0 : i32, i32
  }
  func.func @transform_16(%arg0: i32) -> (i32, i32) {
    %c0_i32 = arith.constant 0 : i32
    %c0_i32_0 = arith.constant 0 : i32
    %c0_i32_1 = arith.constant 0 : i32
    return %c0_i32, %c0_i32_0 : i32, i32
  }
  func.func @transform_17(%arg0: i32) -> (i32, i32) {
    %c0_i32 = arith.constant 0 : i32
    %c0_i32_0 = arith.constant 0 : i32
    %c0_i32_1 = arith.constant 0 : i32
    return %c0_i32, %c0_i32_0 : i32, i32
  }
  func.func @transform_18(%arg0: i32) -> (i32, i32) {
    %c0_i32 = arith.constant 0 : i32
    %c0_i32_0 = arith.constant 0 : i32
    %c0_i32_1 = arith.constant 0 : i32
    return %c0_i32, %c0_i32_0 : i32, i32
  }
  func.func @transform_19(%arg0: i32) -> (i32, i32) {
    %c0_i32 = arith.constant 0 : i32
    %c0_i32_0 = arith.constant 0 : i32
    %c0_i32_1 = arith.constant 0 : i32
    return %c0_i32, %c0_i32_0 : i32, i32
  }
  func.func @transform_20(%arg0: i32) -> (i32, i32) {
    %c0_i32 = arith.constant 0 : i32
    %c0_i32_0 = arith.constant 0 : i32
    %c0_i32_1 = arith.constant 0 : i32
    return %c0_i32, %c0_i32_0 : i32, i32
  }
  func.func @transform_21(%arg0: i32) -> (i32, i32) {
    %c0_i32 = arith.constant 0 : i32
    %c0_i32_0 = arith.constant 0 : i32
    %c0_i32_1 = arith.constant 0 : i32
    return %c0_i32, %c0_i32_0 : i32, i32
  }
  func.func @transform_22(%arg0: i32) -> (i32, i32) {
    %c0_i32 = arith.constant 0 : i32
    %c0_i32_0 = arith.constant 0 : i32
    %c0_i32_1 = arith.constant 0 : i32
    return %c0_i32, %c0_i32_0 : i32, i32
  }
  func.func @transform_23(%arg0: i32) -> (i32, i32) {
    %c0_i32 = arith.constant 0 : i32
    %c0_i32_0 = arith.constant 0 : i32
    %c0_i32_1 = arith.constant 0 : i32
    return %c0_i32, %c0_i32_0 : i32, i32
  }
  func.func @transform_24(%arg0: i32) -> (i32, i32) {
    %c0_i32 = arith.constant 0 : i32
    %c0_i32_0 = arith.constant 0 : i32
    %c0_i32_1 = arith.constant 0 : i32
    return %c0_i32, %c0_i32_0 : i32, i32
  }
  func.func @transform_25(%arg0: i32) -> (i32, i32) {
    %c0_i32 = arith.constant 0 : i32
    %c0_i32_0 = arith.constant 0 : i32
    %c0_i32_1 = arith.constant 0 : i32
    return %c0_i32, %c0_i32_0 : i32, i32
  }
  func.func @transform_26(%arg0: i32) -> (i32, i32) {
    %c0_i32 = arith.constant 0 : i32
    %c0_i32_0 = arith.constant 0 : i32
    %c0_i32_1 = arith.constant 0 : i32
    return %c0_i32, %c0_i32_0 : i32, i32
  }
  func.func @transform_27(%arg0: i32) -> (i32, i32) {
    %c0_i32 = arith.constant 0 : i32
    %c0_i32_0 = arith.constant 0 : i32
    %c0_i32_1 = arith.constant 0 : i32
    return %c0_i32, %c0_i32_0 : i32, i32
  }
  func.func @transform_28(%arg0: i32) -> (i32, i32) {
    %c0_i32 = arith.constant 0 : i32
    %c0_i32_0 = arith.constant 0 : i32
    %c0_i32_1 = arith.constant 0 : i32
    return %c0_i32, %c0_i32_0 : i32, i32
  }
  func.func @transform_29(%arg0: i32) -> (i32, i32, i32) {
    %c0_i32 = arith.constant 0 : i32
    %c0_i32_0 = arith.constant 0 : i32
    %c0_i32_1 = arith.constant 0 : i32
    %c0_i32_2 = arith.constant 0 : i32
    return %c0_i32, %c0_i32_0, %c0_i32_1 : i32, i32, i32
  }
  func.func @transform_30(%arg0: i32) -> (i32, i32) {
    %c0_i32 = arith.constant 0 : i32
    %c0_i32_0 = arith.constant 0 : i32
    %c0_i32_1 = arith.constant 0 : i32
    return %c0_i32, %c0_i32_0 : i32, i32
  }
  func.func @transform_31(%arg0: i32) -> (i32, i32, i32) {
    %c0_i32 = arith.constant 0 : i32
    %c0_i32_0 = arith.constant 0 : i32
    %c0_i32_1 = arith.constant 0 : i32
    %c0_i32_2 = arith.constant 0 : i32
    return %c0_i32, %c0_i32_0, %c0_i32_1 : i32, i32, i32
  }
  func.func @transform_32(%arg0: i32) -> (i32, i32) {
    %c0_i32 = arith.constant 0 : i32
    %c0_i32_0 = arith.constant 0 : i32
    %c0_i32_1 = arith.constant 0 : i32
    return %c0_i32, %c0_i32_0 : i32, i32
  }
  func.func @transform_33(%arg0: i32) -> (i32, i32) {
    %c0_i32 = arith.constant 0 : i32
    %c0_i32_0 = arith.constant 0 : i32
    %c0_i32_1 = arith.constant 0 : i32
    return %c0_i32, %c0_i32_0 : i32, i32
  }
  func.func @transform_34(%arg0: i32) -> (i32, i32) {
    %c0_i32 = arith.constant 0 : i32
    %c0_i32_0 = arith.constant 0 : i32
    %c0_i32_1 = arith.constant 0 : i32
    return %c0_i32, %c0_i32_0 : i32, i32
  }
  func.func @transform_35(%arg0: i32) -> (i32, i32) {
    %c0_i32 = arith.constant 0 : i32
    %c0_i32_0 = arith.constant 0 : i32
    %c0_i32_1 = arith.constant 0 : i32
    return %c0_i32, %c0_i32_0 : i32, i32
  }
  func.func @transform_36(%arg0: i32) -> (i32, i32) {
    %c0_i32 = arith.constant 0 : i32
    %c0_i32_0 = arith.constant 0 : i32
    %c0_i32_1 = arith.constant 0 : i32
    return %c0_i32, %c0_i32_0 : i32, i32
  }
  func.func @transform_37(%arg0: i32) -> (i32, i32) {
    %c0_i32 = arith.constant 0 : i32
    %c0_i32_0 = arith.constant 0 : i32
    %c0_i32_1 = arith.constant 0 : i32
    return %c0_i32, %c0_i32_0 : i32, i32
  }
  func.func @transform_38(%arg0: i32) -> (i32, i32) {
    %c0_i32 = arith.constant 0 : i32
    %c0_i32_0 = arith.constant 0 : i32
    %c0_i32_1 = arith.constant 0 : i32
    return %c0_i32, %c0_i32_0 : i32, i32
  }
  func.func @transform_39(%arg0: i32) -> (i32, i32, i32) {
    %c0_i32 = arith.constant 0 : i32
    %c0_i32_0 = arith.constant 0 : i32
    %c0_i32_1 = arith.constant 0 : i32
    return %arg0, %c0_i32, %c0_i32_0 : i32, i32, i32
  }
}

</mosaic_0001>

<llo_original>
// kernel: tpu_custom_call.1
$region0: #{tpu_custom_call.1}
  #allocation0 [shape = 'u32[]', space=smem, size = 0x4, offset = 0x4, fixed_abs, tag = 'smem constant byte address 0x4 - core index']
  #allocation1 [shape = 'u32[144,128]{1,0:T(1,128)}', space=vmem, size = 0x12000, scoped, tag = 'internal scratch']
  %s0 = inlined_call_operand.smem [shape: u32[40], index: -1, kind: input, shape index: {}]
  %s1 = sld [smem:[%s0]]
  %s2 = scalar_lea.smem %s0, 1
  %s3 = sld [smem:[%s2]]
  %s4 = scalar_lea.smem %s0, 2
  %s5 = sld [smem:[%s4]]
  %s6 = scalar_lea.smem %s0, 3
  %s7 = sld [smem:[%s6]]
  %s8 = scalar_lea.smem %s0, 4
  %s9 = sld [smem:[%s8]]
  %s10 = scalar_lea.smem %s0, 5
  %s11 = sld [smem:[%s10]]
  %s12 = scalar_lea.smem %s0, 6
  %s13 = sld [smem:[%s12]]
  %s14 = scalar_lea.smem %s0, 7
  %s15 = sld [smem:[%s14]]
  %s16 = scalar_lea.smem %s0, 8
  %s17 = sld [smem:[%s16]]
  %s18 = scalar_lea.smem %s0, 9
  %s19 = sld [smem:[%s18]]
  %s20 = scalar_lea.smem %s0, 10
  %s21 = sld [smem:[%s20]]
  %s22 = scalar_lea.smem %s0, 11
  %s23 = sld [smem:[%s22]]
  %s24 = scalar_lea.smem %s0, 12
  %s25 = sld [smem:[%s24]]
  %s26 = scalar_lea.smem %s0, 13
  %s27 = sld [smem:[%s26]]
  %s28 = scalar_lea.smem %s0, 14
  %s29 = sld [smem:[%s28]]
  %s30 = scalar_lea.smem %s0, 15
  %s31 = sld [smem:[%s30]]
  %s32 = scalar_lea.smem %s0, 16
  %s33 = sld [smem:[%s32]]
  %s34 = scalar_lea.smem %s0, 17
  %s35 = sld [smem:[%s34]]
  %s36 = scalar_lea.smem %s0, 18
  %s37 = sld [smem:[%s36]]
  %s38 = scalar_lea.smem %s0, 19
  %s39 = sld [smem:[%s38]]
  %s40 = scalar_lea.smem %s0, 20
  %s41 = sld [smem:[%s40]]
  %s42 = scalar_lea.smem %s0, 21
  %s43 = sld [smem:[%s42]]
  %s44 = scalar_lea.smem %s0, 22
  %s45 = sld [smem:[%s44]]
  %s46 = scalar_lea.smem %s0, 23
  %s47 = sld [smem:[%s46]]
  %s48 = scalar_lea.smem %s0, 24
  %s49 = sld [smem:[%s48]]
  %s50 = scalar_lea.smem %s0, 25
  %s51 = sld [smem:[%s50]]
  %s52 = scalar_lea.smem %s0, 26
  %s53 = sld [smem:[%s52]]
  %s54 = scalar_lea.smem %s0, 27
  %s55 = sld [smem:[%s54]]
  %s56 = scalar_lea.smem %s0, 28
  %s57 = sld [smem:[%s56]]
  %s58 = scalar_lea.smem %s0, 29
  %s59 = sld [smem:[%s58]]
  %s60 = scalar_lea.smem %s0, 30
  %s61 = sld [smem:[%s60]]
  %s62 = scalar_lea.smem %s0, 31
  %s63 = sld [smem:[%s62]]
  %s64 = scalar_lea.smem %s0, 32
  %s65 = sld [smem:[%s64]]
  %s66 = scalar_lea.smem %s0, 33
  %s67 = sld [smem:[%s66]]
  %s68 = scalar_lea.smem %s0, 34
  %s69 = sld [smem:[%s68]]
  %s70 = scalar_lea.smem %s0, 35
  %s71 = sld [smem:[%s70]]
  %s72 = scalar_lea.smem %s0, 36
  %s73 = sld [smem:[%s72]]
  %s74 = scalar_lea.smem %s0, 37
  %s75 = sld [smem:[%s74]]
  %s76 = scalar_lea.smem %s0, 38
  %s77 = sld [smem:[%s76]]
  %s78 = scalar_lea.smem %s0, 39
  %s79 = sld [smem:[%s78]]
  %s80 = sld [smem:[#allocation0]]
  $region189: #{tpu_custom_call.1} parent=0
    _
  %s82 = ssub.s32 1, %s80
  %s83 = scalar_select 0, %s82, %s80
  loop: start=0, step=1, limit=4
  $region2: #{tpu_custom_call.1} parent=0 // loop_pre_header
    _
  $region3: #{tpu_custom_call.1} parent=0 // loop_header
    %s85 = sphi 0, %s89
    %p86 = scmp.ge.s32.totalorder %s85, 4
    %s95 = sphi 0, %s97
    %s98 = sphi 0, %s95
    %s99 = sphi 0, %s98
    %s115 = sphi 0, %s99
    %s119 = sphi 0, %s119
    %s121 = sphi 0, %s119
    %s122 = sphi 0, %s121
    %s136 = sphi 0, %s122
    %s140 = sphi 0, %s140
    %s142 = sphi 0, %s140
    %s143 = sphi 0, %s142
    %s157 = sphi 0, %s143
    %s161 = sphi 0, %s161
    %s163 = sphi 0, %s161
    %s164 = sphi 0, %s163
    %s178 = sphi 0, %s164
    %s182 = sphi 0, %s182
    %s184 = sphi 0, %s182
    %s185 = sphi 0, %s184
    %s199 = sphi 0, %s185
    %s203 = sphi 0, %s203
    %s205 = sphi 0, %s203
    %s206 = sphi 0, %s205
    %s220 = sphi 0, %s206
    %s224 = sphi 0, %s224
    %s226 = sphi 0, %s224
    %s227 = sphi 0, %s226
    %s241 = sphi 0, %s227
    %s245 = sphi 0, %s245
    %s247 = sphi 0, %s245
    %s248 = sphi 0, %s247
    %s262 = sphi 0, %s248
    %s266 = sphi 0, %s266
    %s268 = sphi 0, %s266
    %s269 = sphi 0, %s268
    %s283 = sphi 0, %s269
    %s287 = sphi 0, %s287
    %s289 = sphi 0, %s287
    %s290 = sphi 0, %s289
    %s304 = sphi 0, %s290
    %s308 = sphi 0, %s308
    %s310 = sphi 0, %s308
    %s311 = sphi 0, %s310
    %s325 = sphi 0, %s311
    %s329 = sphi 0, %s329
    %s331 = sphi 0, %s329
    %s332 = sphi 0, %s331
    %s346 = sphi 0, %s332
    %s350 = sphi 0, %s350
    %s352 = sphi 0, %s350
    %s353 = sphi 0, %s352
    %s367 = sphi 0, %s353
    %s371 = sphi 0, %s371
    %s373 = sphi 0, %s371
    %s374 = sphi 0, %s373
    %s388 = sphi 0, %s374
    %s392 = sphi 0, %s392
    %s394 = sphi 0, %s392
    %s395 = sphi 0, %s394
    %s409 = sphi 0, %s395
    %s413 = sphi 0, %s413
    %s415 = sphi 0, %s413
    %s416 = sphi 0, %s415
    %s430 = sphi 0, %s416
    %s434 = sphi 0, %s434
    %s436 = sphi 0, %s434
    %s437 = sphi 0, %s436
    %s451 = sphi 0, %s437
    %s455 = sphi 0, %s455
    %s457 = sphi 0, %s455
    %s458 = sphi 0, %s457
    %s472 = sphi 0, %s458
    %s476 = sphi 0, %s476
    %s478 = sphi 0, %s476
    %s479 = sphi 0, %s478
    %s493 = sphi 0, %s479
    %s497 = sphi 0, %s497
    %s499 = sphi 0, %s497
    %s500 = sphi 0, %s499
    %s514 = sphi 0, %s500
    %s518 = sphi 0, %s518
    %s520 = sphi 0, %s518
    %s521 = sphi 0, %s520
    %s535 = sphi 0, %s521
    %s539 = sphi 0, %s539
    %s541 = sphi 0, %s539
    %s542 = sphi 0, %s541
    %s556 = sphi 0, %s542
    %s560 = sphi 0, %s560
    %s562 = sphi 0, %s560
    %s563 = sphi 0, %s562
    %s577 = sphi 0, %s563
    %s581 = sphi 0, %s581
    %s583 = sphi 0, %s581
    %s584 = sphi 0, %s583
    %s598 = sphi 0, %s584
    %s602 = sphi 0, %s602
    %s604 = sphi 0, %s602
    %s605 = sphi 0, %s604
    %s619 = sphi 0, %s605
    %s623 = sphi 0, %s623
    %s625 = sphi 0, %s623
    %s626 = sphi 0, %s625
    %s640 = sphi 0, %s626
    %s644 = sphi 0, %s644
    %s646 = sphi 0, %s644
    %s647 = sphi 0, %s646
    %s661 = sphi 0, %s647
    %s665 = sphi 0, %s665
    %s667 = sphi 0, %s665
    %s668 = sphi 0, %s667
    %s682 = sphi 0, %s668
    %s686 = sphi 0, %s686
    %s688 = sphi 0, %s686
    %s689 = sphi 0, %s688
    %s703 = sphi 0, %s689
    %s707 = sphi 0, %s707
    %s709 = sphi 0, %s707
    %s710 = sphi 0, %s709
    %s724 = sphi 0, %s710
    %s728 = sphi 0, %s728
    %s730 = sphi 0, %s728
    %s731 = sphi 0, %s730
    %s745 = sphi 0, %s731
    %s749 = sphi 0, %s749
    %s751 = sphi 0, %s749
    %s752 = sphi 0, %s751
    %s766 = sphi 0, %s752
    %s770 = sphi 0, %s770
    %s772 = sphi 0, %s770
    %s773 = sphi 0, %s772
    %s787 = sphi 0, %s773
    %s791 = sphi 0, %s791
    %s793 = sphi 0, %s791
    %s794 = sphi 0, %s793
    %s808 = sphi 0, %s794
    %s812 = sphi 0, %s812
    %s814 = sphi 0, %s812
    %s815 = sphi 0, %s814
    %s829 = sphi 0, %s815
    %s833 = sphi 0, %s833
    %s835 = sphi 0, %s833
    %s836 = sphi 0, %s835
    %s850 = sphi 0, %s836
    %s854 = sphi 0, %s854
    %s856 = sphi 0, %s854
    %s857 = sphi 0, %s856
    %s871 = sphi 0, %s857
    %s875 = sphi 0, %s875
    %s877 = sphi 0, %s875
    %s878 = sphi 0, %s877
    %s892 = sphi 0, %s878
    %s896 = sphi 0, %s896
    %s898 = sphi 0, %s896
    %s899 = sphi 0, %s898
    %s913 = sphi 0, %s899
    %s919 = sphi 0, %s921
    %s922 = sphi 0, %s919
    %s923 = sphi 0, %s922
    %s939 = sphi 0, %s923
  $region4: #{tpu_custom_call.1} parent=0 // loop_header_branch
    %88 = sbr.rel (%p86) target = $region8
  $region5: #{tpu_custom_call.1} parent=0 // loop_body
    %s90 = ssub.s32 %s85, 1
    %s91 = ssub.s32 %s85, 2
    %s92 = sadd.s32 %s85, 1
    %s93 = ssub.s32 %s85, %s92
    %p94 = scmp.eq.s32.totalorder %s93, 0
    %s96 = sadd.s32 %s95, 1
    %s97 = scalar_select %p94, %s95, %s96
    %p100 = pneg %p94
    %p101 = scmp.eq.s32.totalorder %s85, 1
    %p102 = por %p100, %p101
    %p103 = scmp.ne.s32.totalorder %s95, %s98
    %p104 = scmp.eq.s32.totalorder %s85, 0
    %p105 = por %p103, %p104
    %p106 = scmp.ne.s32.totalorder %s95, %s98
    %p107 = scmp.eq.s32.totalorder %s90, 1
    %p108 = por %p106, %p107
    %p109 = scmp.ne.s32.totalorder %s98, %s99
    %p110 = scmp.eq.s32.totalorder %s90, 0
    %p111 = por %p109, %p110
    %p112 = scmp.ne.s32.totalorder %s98, %s99
    %p113 = scmp.eq.s32.totalorder %s91, 1
    %p114 = por %p112, %p113
    %p116 = scmp.ne.s32.totalorder %s99, %s115
    %p117 = scmp.eq.s32.totalorder %s91, 0
    %p118 = por %p116, %p117
    %s120 = sadd.s32 %s119, 1
    %p123 = scmp.eq.s32.totalorder %s85, 1
    %p124 = scmp.ne.s32.totalorder %s119, %s121
    %p125 = scmp.eq.s32.totalorder %s85, 0
    %p126 = por %p124, %p125
    %p127 = scmp.ne.s32.totalorder %s119, %s121
    %p128 = scmp.eq.s32.totalorder %s90, 1
    %p129 = por %p127, %p128
    %p130 = scmp.ne.s32.totalorder %s121, %s122
    %p131 = scmp.eq.s32.totalorder %s90, 0
    %p132 = por %p130, %p131
    %p133 = scmp.ne.s32.totalorder %s121, %s122
    %p134 = scmp.eq.s32.totalorder %s91, 1
    %p135 = por %p133, %p134
    %p137 = scmp.ne.s32.totalorder %s122, %s136
    %p138 = scmp.eq.s32.totalorder %s91, 0
    %p139 = por %p137, %p138
    %s141 = sadd.s32 %s140, 1
    %p144 = scmp.eq.s32.totalorder %s85, 1
    %p145 = scmp.ne.s32.totalorder %s140, %s142
    %p146 = scmp.eq.s32.totalorder %s85, 0
    %p147 = por %p145, %p146
    %p148 = scmp.ne.s32.totalorder %s140, %s142
    %p149 = scmp.eq.s32.totalorder %s90, 1
    %p150 = por %p148, %p149
    %p151 = scmp.ne.s32.totalorder %s142, %s143
    %p152 = scmp.eq.s32.totalorder %s90, 0
    %p153 = por %p151, %p152
    %p154 = scmp.ne.s32.totalorder %s142, %s143
    %p155 = scmp.eq.s32.totalorder %s91, 1
    %p156 = por %p154, %p155
    %p158 = scmp.ne.s32.totalorder %s143, %s157
    %p159 = scmp.eq.s32.totalorder %s91, 0
    %p160 = por %p158, %p159
    %s162 = sadd.s32 %s161, 1
    %p165 = scmp.eq.s32.totalorder %s85, 1
    %p166 = scmp.ne.s32.totalorder %s161, %s163
    %p167 = scmp.eq.s32.totalorder %s85, 0
    %p168 = por %p166, %p167
    %p169 = scmp.ne.s32.totalorder %s161, %s163
    %p170 = scmp.eq.s32.totalorder %s90, 1
    %p171 = por %p169, %p170
    %p172 = scmp.ne.s32.totalorder %s163, %s164
    %p173 = scmp.eq.s32.totalorder %s90, 0
    %p174 = por %p172, %p173
    %p175 = scmp.ne.s32.totalorder %s163, %s164
    %p176 = scmp.eq.s32.totalorder %s91, 1
    %p177 = por %p175, %p176
    %p179 = scmp.ne.s32.totalorder %s164, %s178
    %p180 = scmp.eq.s32.totalorder %s91, 0
    %p181 = por %p179, %p180
    %s183 = sadd.s32 %s182, 1
    %p186 = scmp.eq.s32.totalorder %s85, 1
    %p187 = scmp.ne.s32.totalorder %s182, %s184
    %p188 = scmp.eq.s32.totalorder %s85, 0
    %p189 = por %p187, %p188
    %p190 = scmp.ne.s32.totalorder %s182, %s184
    %p191 = scmp.eq.s32.totalorder %s90, 1
    %p192 = por %p190, %p191
    %p193 = scmp.ne.s32.totalorder %s184, %s185
    %p194 = scmp.eq.s32.totalorder %s90, 0
    %p195 = por %p193, %p194
    %p196 = scmp.ne.s32.totalorder %s184, %s185
    %p197 = scmp.eq.s32.totalorder %s91, 1
    %p198 = por %p196, %p197
    %p200 = scmp.ne.s32.totalorder %s185, %s199
    %p201 = scmp.eq.s32.totalorder %s91, 0
    %p202 = por %p200, %p201
    %s204 = sadd.s32 %s203, 1
    %p207 = scmp.eq.s32.totalorder %s85, 1
    %p208 = scmp.ne.s32.totalorder %s203, %s205
    %p209 = scmp.eq.s32.totalorder %s85, 0
    %p210 = por %p208, %p209
    %p211 = scmp.ne.s32.totalorder %s203, %s205
    %p212 = scmp.eq.s32.totalorder %s90, 1
    %p213 = por %p211, %p212
    %p214 = scmp.ne.s32.totalorder %s205, %s206
    %p215 = scmp.eq.s32.totalorder %s90, 0
    %p216 = por %p214, %p215
    %p217 = scmp.ne.s32.totalorder %s205, %s206
    %p218 = scmp.eq.s32.totalorder %s91, 1
    %p219 = por %p217, %p218
    %p221 = scmp.ne.s32.totalorder %s206, %s220
    %p222 = scmp.eq.s32.totalorder %s91, 0
    %p223 = por %p221, %p222
    %s225 = sadd.s32 %s224, 1
    %p228 = scmp.eq.s32.totalorder %s85, 1
    %p229 = scmp.ne.s32.totalorder %s224, %s226
    %p230 = scmp.eq.s32.totalorder %s85, 0
    %p231 = por %p229, %p230
    %p232 = scmp.ne.s32.totalorder %s224, %s226
    %p233 = scmp.eq.s32.totalorder %s90, 1
    %p234 = por %p232, %p233
    %p235 = scmp.ne.s32.totalorder %s226, %s227
    %p236 = scmp.eq.s32.totalorder %s90, 0
    %p237 = por %p235, %p236
    %p238 = scmp.ne.s32.totalorder %s226, %s227
    %p239 = scmp.eq.s32.totalorder %s91, 1
    %p240 = por %p238, %p239
    %p242 = scmp.ne.s32.totalorder %s227, %s241
    %p243 = scmp.eq.s32.totalorder %s91, 0
    %p244 = por %p242, %p243
    %s246 = sadd.s32 %s245, 1
    %p249 = scmp.eq.s32.totalorder %s85, 1
    %p250 = scmp.ne.s32.totalorder %s245, %s247
    %p251 = scmp.eq.s32.totalorder %s85, 0
    %p252 = por %p250, %p251
    %p253 = scmp.ne.s32.totalorder %s245, %s247
    %p254 = scmp.eq.s32.totalorder %s90, 1
    %p255 = por %p253, %p254
    %p256 = scmp.ne.s32.totalorder %s247, %s248
    %p257 = scmp.eq.s32.totalorder %s90, 0
    %p258 = por %p256, %p257
    %p259 = scmp.ne.s32.totalorder %s247, %s248
    %p260 = scmp.eq.s32.totalorder %s91, 1
    %p261 = por %p259, %p260
    %p263 = scmp.ne.s32.totalorder %s248, %s262
    %p264 = scmp.eq.s32.totalorder %s91, 0
    %p265 = por %p263, %p264
    %s267 = sadd.s32 %s266, 1
    %p270 = scmp.eq.s32.totalorder %s85, 1
    %p271 = scmp.ne.s32.totalorder %s266, %s268
    %p272 = scmp.eq.s32.totalorder %s85, 0
    %p273 = por %p271, %p272
    %p274 = scmp.ne.s32.totalorder %s266, %s268
    %p275 = scmp.eq.s32.totalorder %s90, 1
    %p276 = por %p274, %p275
    %p277 = scmp.ne.s32.totalorder %s268, %s269
    %p278 = scmp.eq.s32.totalorder %s90, 0
    %p279 = por %p277, %p278
    %p280 = scmp.ne.s32.totalorder %s268, %s269
    %p281 = scmp.eq.s32.totalorder %s91, 1
    %p282 = por %p280, %p281
    %p284 = scmp.ne.s32.totalorder %s269, %s283
    %p285 = scmp.eq.s32.totalorder %s91, 0
    %p286 = por %p284, %p285
    %s288 = sadd.s32 %s287, 1
    %p291 = scmp.eq.s32.totalorder %s85, 1
    %p292 = scmp.ne.s32.totalorder %s287, %s289
    %p293 = scmp.eq.s32.totalorder %s85, 0
    %p294 = por %p292, %p293
    %p295 = scmp.ne.s32.totalorder %s287, %s289
    %p296 = scmp.eq.s32.totalorder %s90, 1
    %p297 = por %p295, %p296
    %p298 = scmp.ne.s32.totalorder %s289, %s290
    %p299 = scmp.eq.s32.totalorder %s90, 0
    %p300 = por %p298, %p299
    %p301 = scmp.ne.s32.totalorder %s289, %s290
    %p302 = scmp.eq.s32.totalorder %s91, 1
    %p303 = por %p301, %p302
    %p305 = scmp.ne.s32.totalorder %s290, %s304
    %p306 = scmp.eq.s32.totalorder %s91, 0
    %p307 = por %p305, %p306
    %s309 = sadd.s32 %s308, 1
    %p312 = scmp.eq.s32.totalorder %s85, 1
    %p313 = scmp.ne.s32.totalorder %s308, %s310
    %p314 = scmp.eq.s32.totalorder %s85, 0
    %p315 = por %p313, %p314
    %p316 = scmp.ne.s32.totalorder %s308, %s310
    %p317 = scmp.eq.s32.totalorder %s90, 1
    %p318 = por %p316, %p317
    %p319 = scmp.ne.s32.totalorder %s310, %s311
    %p320 = scmp.eq.s32.totalorder %s90, 0
    %p321 = por %p319, %p320
    %p322 = scmp.ne.s32.totalorder %s310, %s311
    %p323 = scmp.eq.s32.totalorder %s91, 1
    %p324 = por %p322, %p323
    %p326 = scmp.ne.s32.totalorder %s311, %s325
    %p327 = scmp.eq.s32.totalorder %s91, 0
    %p328 = por %p326, %p327
    %s330 = sadd.s32 %s329, 1
    %p333 = scmp.eq.s32.totalorder %s85, 1
    %p334 = scmp.ne.s32.totalorder %s329, %s331
    %p335 = scmp.eq.s32.totalorder %s85, 0
    %p336 = por %p334, %p335
    %p337 = scmp.ne.s32.totalorder %s329, %s331
    %p338 = scmp.eq.s32.totalorder %s90, 1
    %p339 = por %p337, %p338
    %p340 = scmp.ne.s32.totalorder %s331, %s332
    %p341 = scmp.eq.s32.totalorder %s90, 0
    %p342 = por %p340, %p341
    %p343 = scmp.ne.s32.totalorder %s331, %s332
    %p344 = scmp.eq.s32.totalorder %s91, 1
    %p345 = por %p343, %p344
    %p347 = scmp.ne.s32.totalorder %s332, %s346
    %p348 = scmp.eq.s32.totalorder %s91, 0
    %p349 = por %p347, %p348
    %s351 = sadd.s32 %s350, 1
    %p354 = scmp.eq.s32.totalorder %s85, 1
    %p355 = scmp.ne.s32.totalorder %s350, %s352
    %p356 = scmp.eq.s32.totalorder %s85, 0
    %p357 = por %p355, %p356
    %p358 = scmp.ne.s32.totalorder %s350, %s352
    %p359 = scmp.eq.s32.totalorder %s90, 1
    %p360 = por %p358, %p359
    %p361 = scmp.ne.s32.totalorder %s352, %s353
    %p362 = scmp.eq.s32.totalorder %s90, 0
    %p363 = por %p361, %p362
    %p364 = scmp.ne.s32.totalorder %s352, %s353
    %p365 = scmp.eq.s32.totalorder %s91, 1
    %p366 = por %p364, %p365
    %p368 = scmp.ne.s32.totalorder %s353, %s367
    %p369 = scmp.eq.s32.totalorder %s91, 0
    %p370 = por %p368, %p369
    %s372 = sadd.s32 %s371, 1
    %p375 = scmp.eq.s32.totalorder %s85, 1
    %p376 = scmp.ne.s32.totalorder %s371, %s373
    %p377 = scmp.eq.s32.totalorder %s85, 0
    %p378 = por %p376, %p377
    %p379 = scmp.ne.s32.totalorder %s371, %s373
    %p380 = scmp.eq.s32.totalorder %s90, 1
    %p381 = por %p379, %p380
    %p382 = scmp.ne.s32.totalorder %s373, %s374
    %p383 = scmp.eq.s32.totalorder %s90, 0
    %p384 = por %p382, %p383
    %p385 = scmp.ne.s32.totalorder %s373, %s374
    %p386 = scmp.eq.s32.totalorder %s91, 1
    %p387 = por %p385, %p386
    %p389 = scmp.ne.s32.totalorder %s374, %s388
    %p390 = scmp.eq.s32.totalorder %s91, 0
    %p391 = por %p389, %p390
    %s393 = sadd.s32 %s392, 1
    %p396 = scmp.eq.s32.totalorder %s85, 1
    %p397 = scmp.ne.s32.totalorder %s392, %s394
    %p398 = scmp.eq.s32.totalorder %s85, 0
    %p399 = por %p397, %p398
    %p400 = scmp.ne.s32.totalorder %s392, %s394
    %p401 = scmp.eq.s32.totalorder %s90, 1
    %p402 = por %p400, %p401
    %p403 = scmp.ne.s32.totalorder %s394, %s395
    %p404 = scmp.eq.s32.totalorder %s90, 0
    %p405 = por %p403, %p404
    %p406 = scmp.ne.s32.totalorder %s394, %s395
    %p407 = scmp.eq.s32.totalorder %s91, 1
    %p408 = por %p406, %p407
    %p410 = scmp.ne.s32.totalorder %s395, %s409
    %p411 = scmp.eq.s32.totalorder %s91, 0
    %p412 = por %p410, %p411
    %s414 = sadd.s32 %s413, 1
    %p417 = scmp.eq.s32.totalorder %s85, 1
    %p418 = scmp.ne.s32.totalorder %s413, %s415
    %p419 = scmp.eq.s32.totalorder %s85, 0
    %p420 = por %p418, %p419
    %p421 = scmp.ne.s32.totalorder %s413, %s415
    %p422 = scmp.eq.s32.totalorder %s90, 1
    %p423 = por %p421, %p422
    %p424 = scmp.ne.s32.totalorder %s415, %s416
    %p425 = scmp.eq.s32.totalorder %s90, 0
    %p426 = por %p424, %p425
    %p427 = scmp.ne.s32.totalorder %s415, %s416
    %p428 = scmp.eq.s32.totalorder %s91, 1
    %p429 = por %p427, %p428
    %p431 = scmp.ne.s32.totalorder %s416, %s430
    %p432 = scmp.eq.s32.totalorder %s91, 0
    %p433 = por %p431, %p432
    %s435 = sadd.s32 %s434, 1
    %p438 = scmp.eq.s32.totalorder %s85, 1
    %p439 = scmp.ne.s32.totalorder %s434, %s436
    %p440 = scmp.eq.s32.totalorder %s85, 0
    %p441 = por %p439, %p440
    %p442 = scmp.ne.s32.totalorder %s434, %s436
    %p443 = scmp.eq.s32.totalorder %s90, 1
    %p444 = por %p442, %p443
    %p445 = scmp.ne.s32.totalorder %s436, %s437
    %p446 = scmp.eq.s32.totalorder %s90, 0
    %p447 = por %p445, %p446
    %p448 = scmp.ne.s32.totalorder %s436, %s437
    %p449 = scmp.eq.s32.totalorder %s91, 1
    %p450 = por %p448, %p449
    %p452 = scmp.ne.s32.totalorder %s437, %s451
    %p453 = scmp.eq.s32.totalorder %s91, 0
    %p454 = por %p452, %p453
    %s456 = sadd.s32 %s455, 1
    %p459 = scmp.eq.s32.totalorder %s85, 1
    %p460 = scmp.ne.s32.totalorder %s455, %s457
    %p461 = scmp.eq.s32.totalorder %s85, 0
    %p462 = por %p460, %p461
    %p463 = scmp.ne.s32.totalorder %s455, %s457
    %p464 = scmp.eq.s32.totalorder %s90, 1
    %p465 = por %p463, %p464
    %p466 = scmp.ne.s32.totalorder %s457, %s458
    %p467 = scmp.eq.s32.totalorder %s90, 0
    %p468 = por %p466, %p467
    %p469 = scmp.ne.s32.totalorder %s457, %s458
    %p470 = scmp.eq.s32.totalorder %s91, 1
    %p471 = por %p469, %p470
    %p473 = scmp.ne.s32.totalorder %s458, %s472
    %p474 = scmp.eq.s32.totalorder %s91, 0
    %p475 = por %p473, %p474
    %s477 = sadd.s32 %s476, 1
    %p480 = scmp.eq.s32.totalorder %s85, 1
    %p481 = scmp.ne.s32.totalorder %s476, %s478
    %p482 = scmp.eq.s32.totalorder %s85, 0
    %p483 = por %p481, %p482
    %p484 = scmp.ne.s32.totalorder %s476, %s478
    %p485 = scmp.eq.s32.totalorder %s90, 1
    %p486 = por %p484, %p485
    %p487 = scmp.ne.s32.totalorder %s478, %s479
    %p488 = scmp.eq.s32.totalorder %s90, 0
    %p489 = por %p487, %p488
    %p490 = scmp.ne.s32.totalorder %s478, %s479
    %p491 = scmp.eq.s32.totalorder %s91, 1
    %p492 = por %p490, %p491
    %p494 = scmp.ne.s32.totalorder %s479, %s493
    %p495 = scmp.eq.s32.totalorder %s91, 0
    %p496 = por %p494, %p495
    %s498 = sadd.s32 %s497, 1
    %p501 = scmp.eq.s32.totalorder %s85, 1
    %p502 = scmp.ne.s32.totalorder %s497, %s499
    %p503 = scmp.eq.s32.totalorder %s85, 0
    %p504 = por %p502, %p503
    %p505 = scmp.ne.s32.totalorder %s497, %s499
    %p506 = scmp.eq.s32.totalorder %s90, 1
    %p507 = por %p505, %p506
    %p508 = scmp.ne.s32.totalorder %s499, %s500
    %p509 = scmp.eq.s32.totalorder %s90, 0
    %p510 = por %p508, %p509
    %p511 = scmp.ne.s32.totalorder %s499, %s500
    %p512 = scmp.eq.s32.totalorder %s91, 1
    %p513 = por %p511, %p512
    %p515 = scmp.ne.s32.totalorder %s500, %s514
    %p516 = scmp.eq.s32.totalorder %s91, 0
    %p517 = por %p515, %p516
    %s519 = sadd.s32 %s518, 1
    %p522 = scmp.eq.s32.totalorder %s85, 1
    %p523 = scmp.ne.s32.totalorder %s518, %s520
    %p524 = scmp.eq.s32.totalorder %s85, 0
    %p525 = por %p523, %p524
    %p526 = scmp.ne.s32.totalorder %s518, %s520
    %p527 = scmp.eq.s32.totalorder %s90, 1
    %p528 = por %p526, %p527
    %p529 = scmp.ne.s32.totalorder %s520, %s521
    %p530 = scmp.eq.s32.totalorder %s90, 0
    %p531 = por %p529, %p530
    %p532 = scmp.ne.s32.totalorder %s520, %s521
    %p533 = scmp.eq.s32.totalorder %s91, 1
    %p534 = por %p532, %p533
    %p536 = scmp.ne.s32.totalorder %s521, %s535
    %p537 = scmp.eq.s32.totalorder %s91, 0
    %p538 = por %p536, %p537
    %s540 = sadd.s32 %s539, 1
    %p543 = scmp.eq.s32.totalorder %s85, 1
    %p544 = scmp.ne.s32.totalorder %s539, %s541
    %p545 = scmp.eq.s32.totalorder %s85, 0
    %p546 = por %p544, %p545
    %p547 = scmp.ne.s32.totalorder %s539, %s541
    %p548 = scmp.eq.s32.totalorder %s90, 1
    %p549 = por %p547, %p548
    %p550 = scmp.ne.s32.totalorder %s541, %s542
    %p551 = scmp.eq.s32.totalorder %s90, 0
    %p552 = por %p550, %p551
    %p553 = scmp.ne.s32.totalorder %s541, %s542
    %p554 = scmp.eq.s32.totalorder %s91, 1
    %p555 = por %p553, %p554
    %p557 = scmp.ne.s32.totalorder %s542, %s556
    %p558 = scmp.eq.s32.totalorder %s91, 0
    %p559 = por %p557, %p558
    %s561 = sadd.s32 %s560, 1
    %p564 = scmp.eq.s32.totalorder %s85, 1
    %p565 = scmp.ne.s32.totalorder %s560, %s562
    %p566 = scmp.eq.s32.totalorder %s85, 0
    %p567 = por %p565, %p566
    %p568 = scmp.ne.s32.totalorder %s560, %s562
    %p569 = scmp.eq.s32.totalorder %s90, 1
    %p570 = por %p568, %p569
    %p571 = scmp.ne.s32.totalorder %s562, %s563
    %p572 = scmp.eq.s32.totalorder %s90, 0
    %p573 = por %p571, %p572
    %p574 = scmp.ne.s32.totalorder %s562, %s563
    %p575 = scmp.eq.s32.totalorder %s91, 1
    %p576 = por %p574, %p575
    %p578 = scmp.ne.s32.totalorder %s563, %s577
    %p579 = scmp.eq.s32.totalorder %s91, 0
    %p580 = por %p578, %p579
    %s582 = sadd.s32 %s581, 1
    %p585 = scmp.eq.s32.totalorder %s85, 1
    %p586 = scmp.ne.s32.totalorder %s581, %s583
    %p587 = scmp.eq.s32.totalorder %s85, 0
    %p588 = por %p586, %p587
    %p589 = scmp.ne.s32.totalorder %s581, %s583
    %p590 = scmp.eq.s32.totalorder %s90, 1
    %p591 = por %p589, %p590
    %p592 = scmp.ne.s32.totalorder %s583, %s584
    %p593 = scmp.eq.s32.totalorder %s90, 0
    %p594 = por %p592, %p593
    %p595 = scmp.ne.s32.totalorder %s583, %s584
    %p596 = scmp.eq.s32.totalorder %s91, 1
    %p597 = por %p595, %p596
    %p599 = scmp.ne.s32.totalorder %s584, %s598
    %p600 = scmp.eq.s32.totalorder %s91, 0
    %p601 = por %p599, %p600
    %s603 = sadd.s32 %s602, 1
    %p606 = scmp.eq.s32.totalorder %s85, 1
    %p607 = scmp.ne.s32.totalorder %s602, %s604
    %p608 = scmp.eq.s32.totalorder %s85, 0
    %p609 = por %p607, %p608
    %p610 = scmp.ne.s32.totalorder %s602, %s604
    %p611 = scmp.eq.s32.totalorder %s90, 1
    %p612 = por %p610, %p611
    %p613 = scmp.ne.s32.totalorder %s604, %s605
    %p614 = scmp.eq.s32.totalorder %s90, 0
    %p615 = por %p613, %p614
    %p616 = scmp.ne.s32.totalorder %s604, %s605
    %p617 = scmp.eq.s32.totalorder %s91, 1
    %p618 = por %p616, %p617
    %p620 = scmp.ne.s32.totalorder %s605, %s619
    %p621 = scmp.eq.s32.totalorder %s91, 0
    %p622 = por %p620, %p621
    %s624 = sadd.s32 %s623, 1
    %p627 = scmp.eq.s32.totalorder %s85, 1
    %p628 = scmp.ne.s32.totalorder %s623, %s625
    %p629 = scmp.eq.s32.totalorder %s85, 0
    %p630 = por %p628, %p629
    %p631 = scmp.ne.s32.totalorder %s623, %s625
    %p632 = scmp.eq.s32.totalorder %s90, 1
    %p633 = por %p631, %p632
    %p634 = scmp.ne.s32.totalorder %s625, %s626
    %p635 = scmp.eq.s32.totalorder %s90, 0
    %p636 = por %p634, %p635
    %p637 = scmp.ne.s32.totalorder %s625, %s626
    %p638 = scmp.eq.s32.totalorder %s91, 1
    %p639 = por %p637, %p638
    %p641 = scmp.ne.s32.totalorder %s626, %s640
    %p642 = scmp.eq.s32.totalorder %s91, 0
    %p643 = por %p641, %p642
    %s645 = sadd.s32 %s644, 1
    %p648 = scmp.eq.s32.totalorder %s85, 1
    %p649 = scmp.ne.s32.totalorder %s644, %s646
    %p650 = scmp.eq.s32.totalorder %s85, 0
    %p651 = por %p649, %p650
    %p652 = scmp.ne.s32.totalorder %s644, %s646
    %p653 = scmp.eq.s32.totalorder %s90, 1
    %p654 = por %p652, %p653
    %p655 = scmp.ne.s32.totalorder %s646, %s647
    %p656 = scmp.eq.s32.totalorder %s90, 0
    %p657 = por %p655, %p656
    %p658 = scmp.ne.s32.totalorder %s646, %s647
    %p659 = scmp.eq.s32.totalorder %s91, 1
    %p660 = por %p658, %p659
    %p662 = scmp.ne.s32.totalorder %s647, %s661
    %p663 = scmp.eq.s32.totalorder %s91, 0
    %p664 = por %p662, %p663
    %s666 = sadd.s32 %s665, 1
    %p669 = scmp.eq.s32.totalorder %s85, 1
    %p670 = scmp.ne.s32.totalorder %s665, %s667
    %p671 = scmp.eq.s32.totalorder %s85, 0
    %p672 = por %p670, %p671
    %p673 = scmp.ne.s32.totalorder %s665, %s667
    %p674 = scmp.eq.s32.totalorder %s90, 1
    %p675 = por %p673, %p674
    %p676 = scmp.ne.s32.totalorder %s667, %s668
    %p677 = scmp.eq.s32.totalorder %s90, 0
    %p678 = por %p676, %p677
    %p679 = scmp.ne.s32.totalorder %s667, %s668
    %p680 = scmp.eq.s32.totalorder %s91, 1
    %p681 = por %p679, %p680
    %p683 = scmp.ne.s32.totalorder %s668, %s682
    %p684 = scmp.eq.s32.totalorder %s91, 0
    %p685 = por %p683, %p684
    %s687 = sadd.s32 %s686, 1
    %p690 = scmp.eq.s32.totalorder %s85, 1
    %p691 = scmp.ne.s32.totalorder %s686, %s688
    %p692 = scmp.eq.s32.totalorder %s85, 0
    %p693 = por %p691, %p692
    %p694 = scmp.ne.s32.totalorder %s686, %s688
    %p695 = scmp.eq.s32.totalorder %s90, 1
    %p696 = por %p694, %p695
    %p697 = scmp.ne.s32.totalorder %s688, %s689
    %p698 = scmp.eq.s32.totalorder %s90, 0
    %p699 = por %p697, %p698
    %p700 = scmp.ne.s32.totalorder %s688, %s689
    %p701 = scmp.eq.s32.totalorder %s91, 1
    %p702 = por %p700, %p701
    %p704 = scmp.ne.s32.totalorder %s689, %s703
    %p705 = scmp.eq.s32.totalorder %s91, 0
    %p706 = por %p704, %p705
    %s708 = sadd.s32 %s707, 1
    %p711 = scmp.eq.s32.totalorder %s85, 1
    %p712 = scmp.ne.s32.totalorder %s707, %s709
    %p713 = scmp.eq.s32.totalorder %s85, 0
    %p714 = por %p712, %p713
    %p715 = scmp.ne.s32.totalorder %s707, %s709
    %p716 = scmp.eq.s32.totalorder %s90, 1
    %p717 = por %p715, %p716
    %p718 = scmp.ne.s32.totalorder %s709, %s710
    %p719 = scmp.eq.s32.totalorder %s90, 0
    %p720 = por %p718, %p719
    %p721 = scmp.ne.s32.totalorder %s709, %s710
    %p722 = scmp.eq.s32.totalorder %s91, 1
    %p723 = por %p721, %p722
    %p725 = scmp.ne.s32.totalorder %s710, %s724
    %p726 = scmp.eq.s32.totalorder %s91, 0
    %p727 = por %p725, %p726
    %s729 = sadd.s32 %s728, 1
    %p732 = scmp.eq.s32.totalorder %s85, 1
    %p733 = scmp.ne.s32.totalorder %s728, %s730
    %p734 = scmp.eq.s32.totalorder %s85, 0
    %p735 = por %p733, %p734
    %p736 = scmp.ne.s32.totalorder %s728, %s730
    %p737 = scmp.eq.s32.totalorder %s90, 1
    %p738 = por %p736, %p737
    %p739 = scmp.ne.s32.totalorder %s730, %s731
    %p740 = scmp.eq.s32.totalorder %s90, 0
    %p741 = por %p739, %p740
    %p742 = scmp.ne.s32.totalorder %s730, %s731
    %p743 = scmp.eq.s32.totalorder %s91, 1
    %p744 = por %p742, %p743
    %p746 = scmp.ne.s32.totalorder %s731, %s745
    %p747 = scmp.eq.s32.totalorder %s91, 0
    %p748 = por %p746, %p747
    %s750 = sadd.s32 %s749, 1
    %p753 = scmp.eq.s32.totalorder %s85, 1
    %p754 = scmp.ne.s32.totalorder %s749, %s751
    %p755 = scmp.eq.s32.totalorder %s85, 0
    %p756 = por %p754, %p755
    %p757 = scmp.ne.s32.totalorder %s749, %s751
    %p758 = scmp.eq.s32.totalorder %s90, 1
    %p759 = por %p757, %p758
    %p760 = scmp.ne.s32.totalorder %s751, %s752
    %p761 = scmp.eq.s32.totalorder %s90, 0
    %p762 = por %p760, %p761
    %p763 = scmp.ne.s32.totalorder %s751, %s752
    %p764 = scmp.eq.s32.totalorder %s91, 1
    %p765 = por %p763, %p764
    %p767 = scmp.ne.s32.totalorder %s752, %s766
    %p768 = scmp.eq.s32.totalorder %s91, 0
    %p769 = por %p767, %p768
    %s771 = sadd.s32 %s770, 1
    %p774 = scmp.eq.s32.totalorder %s85, 1
    %p775 = scmp.ne.s32.totalorder %s770, %s772
    %p776 = scmp.eq.s32.totalorder %s85, 0
    %p777 = por %p775, %p776
    %p778 = scmp.ne.s32.totalorder %s770, %s772
    %p779 = scmp.eq.s32.totalorder %s90, 1
    %p780 = por %p778, %p779
    %p781 = scmp.ne.s32.totalorder %s772, %s773
    %p782 = scmp.eq.s32.totalorder %s90, 0
    %p783 = por %p781, %p782
    %p784 = scmp.ne.s32.totalorder %s772, %s773
    %p785 = scmp.eq.s32.totalorder %s91, 1
    %p786 = por %p784, %p785
    %p788 = scmp.ne.s32.totalorder %s773, %s787
    %p789 = scmp.eq.s32.totalorder %s91, 0
    %p790 = por %p788, %p789
    %s792 = sadd.s32 %s791, 1
    %p795 = scmp.eq.s32.totalorder %s85, 1
    %p796 = scmp.ne.s32.totalorder %s791, %s793
    %p797 = scmp.eq.s32.totalorder %s85, 0
    %p798 = por %p796, %p797
    %p799 = scmp.ne.s32.totalorder %s791, %s793
    %p800 = scmp.eq.s32.totalorder %s90, 1
    %p801 = por %p799, %p800
    %p802 = scmp.ne.s32.totalorder %s793, %s794
    %p803 = scmp.eq.s32.totalorder %s90, 0
    %p804 = por %p802, %p803
    %p805 = scmp.ne.s32.totalorder %s793, %s794
    %p806 = scmp.eq.s32.totalorder %s91, 1
    %p807 = por %p805, %p806
    %p809 = scmp.ne.s32.totalorder %s794, %s808
    %p810 = scmp.eq.s32.totalorder %s91, 0
    %p811 = por %p809, %p810
    %s813 = sadd.s32 %s812, 1
    %p816 = scmp.eq.s32.totalorder %s85, 1
    %p817 = scmp.ne.s32.totalorder %s812, %s814
    %p818 = scmp.eq.s32.totalorder %s85, 0
    %p819 = por %p817, %p818
    %p820 = scmp.ne.s32.totalorder %s812, %s814
    %p821 = scmp.eq.s32.totalorder %s90, 1
    %p822 = por %p820, %p821
    %p823 = scmp.ne.s32.totalorder %s814, %s815
    %p824 = scmp.eq.s32.totalorder %s90, 0
    %p825 = por %p823, %p824
    %p826 = scmp.ne.s32.totalorder %s814, %s815
    %p827 = scmp.eq.s32.totalorder %s91, 1
    %p828 = por %p826, %p827
    %p830 = scmp.ne.s32.totalorder %s815, %s829
    %p831 = scmp.eq.s32.totalorder %s91, 0
    %p832 = por %p830, %p831
    %s834 = sadd.s32 %s833, 1
    %p837 = scmp.eq.s32.totalorder %s85, 1
    %p838 = scmp.ne.s32.totalorder %s833, %s835
    %p839 = scmp.eq.s32.totalorder %s85, 0
    %p840 = por %p838, %p839
    %p841 = scmp.ne.s32.totalorder %s833, %s835
    %p842 = scmp.eq.s32.totalorder %s90, 1
    %p843 = por %p841, %p842
    %p844 = scmp.ne.s32.totalorder %s835, %s836
    %p845 = scmp.eq.s32.totalorder %s90, 0
    %p846 = por %p844, %p845
    %p847 = scmp.ne.s32.totalorder %s835, %s836
    %p848 = scmp.eq.s32.totalorder %s91, 1
    %p849 = por %p847, %p848
    %p851 = scmp.ne.s32.totalorder %s836, %s850
    %p852 = scmp.eq.s32.totalorder %s91, 0
    %p853 = por %p851, %p852
    %s855 = sadd.s32 %s854, 1
    %p858 = scmp.eq.s32.totalorder %s85, 1
    %p859 = scmp.ne.s32.totalorder %s854, %s856
    %p860 = scmp.eq.s32.totalorder %s85, 0
    %p861 = por %p859, %p860
    %p862 = scmp.ne.s32.totalorder %s854, %s856
    %p863 = scmp.eq.s32.totalorder %s90, 1
    %p864 = por %p862, %p863
    %p865 = scmp.ne.s32.totalorder %s856, %s857
    %p866 = scmp.eq.s32.totalorder %s90, 0
    %p867 = por %p865, %p866
    %p868 = scmp.ne.s32.totalorder %s856, %s857
    %p869 = scmp.eq.s32.totalorder %s91, 1
    %p870 = por %p868, %p869
    %p872 = scmp.ne.s32.totalorder %s857, %s871
    %p873 = scmp.eq.s32.totalorder %s91, 0
    %p874 = por %p872, %p873
    %s876 = sadd.s32 %s875, 1
    %p879 = scmp.eq.s32.totalorder %s85, 1
    %p880 = scmp.ne.s32.totalorder %s875, %s877
    %p881 = scmp.eq.s32.totalorder %s85, 0
    %p882 = por %p880, %p881
    %p883 = scmp.ne.s32.totalorder %s875, %s877
    %p884 = scmp.eq.s32.totalorder %s90, 1
    %p885 = por %p883, %p884
    %p886 = scmp.ne.s32.totalorder %s877, %s878
    %p887 = scmp.eq.s32.totalorder %s90, 0
    %p888 = por %p886, %p887
    %p889 = scmp.ne.s32.totalorder %s877, %s878
    %p890 = scmp.eq.s32.totalorder %s91, 1
    %p891 = por %p889, %p890
    %p893 = scmp.ne.s32.totalorder %s878, %s892
    %p894 = scmp.eq.s32.totalorder %s91, 0
    %p895 = por %p893, %p894
    %s897 = sadd.s32 %s896, 1
    %p900 = scmp.eq.s32.totalorder %s85, 1
    %p901 = scmp.ne.s32.totalorder %s896, %s898
    %p902 = scmp.eq.s32.totalorder %s85, 0
    %p903 = por %p901, %p902
    %p904 = scmp.ne.s32.totalorder %s896, %s898
    %p905 = scmp.eq.s32.totalorder %s90, 1
    %p906 = por %p904, %p905
    %p907 = scmp.ne.s32.totalorder %s898, %s899
    %p908 = scmp.eq.s32.totalorder %s90, 0
    %p909 = por %p907, %p908
    %p910 = scmp.ne.s32.totalorder %s898, %s899
    %p911 = scmp.eq.s32.totalorder %s91, 1
    %p912 = por %p910, %p911
    %p914 = scmp.ne.s32.totalorder %s899, %s913
    %p915 = scmp.eq.s32.totalorder %s91, 0
    %p916 = por %p914, %p915
    %s917 = ssub.s32 %s85, %s92
    %p918 = scmp.eq.s32.totalorder %s917, 0
    %s920 = sadd.s32 %s919, 1
    %s921 = scalar_select %p918, %s919, %s920
    %p924 = pneg %p918
    %p925 = scmp.eq.s32.totalorder %s85, 1
    %p926 = por %p924, %p925
    %p927 = scmp.ne.s32.totalorder %s919, %s922
    %p928 = scmp.eq.s32.totalorder %s85, 0
    %p929 = por %p927, %p928
    %p930 = scmp.ne.s32.totalorder %s919, %s922
    %p931 = scmp.eq.s32.totalorder %s90, 1
    %p932 = por %p930, %p931
    %p933 = scmp.ne.s32.totalorder %s922, %s923
    %p934 = scmp.eq.s32.totalorder %s90, 0
    %p935 = por %p933, %p934
    %p936 = scmp.ne.s32.totalorder %s922, %s923
    %p937 = scmp.eq.s32.totalorder %s91, 1
    %p938 = por %p936, %p937
    %p940 = scmp.ne.s32.totalorder %s923, %s939
    %p941 = scmp.eq.s32.totalorder %s91, 0
    %p942 = por %p940, %p941
    %p943 = scmp.le.s32.totalorder 1, %s85
    %p944 = scmp.lt.s32.totalorder %s85, 3
    %p945 = pnand %p943, %p944
    %p946 = pneg %p945
    // Predicated region
    $region9: #{tpu_custom_call.1} parent=5 // pred_check
      _
    $region10: #{tpu_custom_call.1} parent=5 // pred_check_branch
      %948 = sbr.rel (%p945) target = $region12
    $region11: #{tpu_custom_call.1} parent=5 // pred_region
      %s949 = ssub.s32 %s85, 1
      // Predicated region
      $region13: #{tpu_custom_call.1} parent=11 // pred_check
        %p950 = pneg %p132
      $region14: #{tpu_custom_call.1} parent=11 // pred_check_branch
        %952 = sbr.rel (%p950) target = $region16
      $region15: #{tpu_custom_call.1} parent=11 // pred_region
        _
      $region16: #{tpu_custom_call.1} parent=11 // pred_fallthru
        _
      // Predicated region
      $region17: #{tpu_custom_call.1} parent=11 // pred_check
        %p953 = pneg %p153
      $region18: #{tpu_custom_call.1} parent=11 // pred_check_branch
        %955 = sbr.rel (%p953) target = $region20
      $region19: #{tpu_custom_call.1} parent=11 // pred_region
        _
      $region20: #{tpu_custom_call.1} parent=11 // pred_fallthru
        _
      // Predicated region
      $region21: #{tpu_custom_call.1} parent=11 // pred_check
        %p956 = pneg %p174
      $region22: #{tpu_custom_call.1} parent=11 // pred_check_branch
        %958 = sbr.rel (%p956) target = $region24
      $region23: #{tpu_custom_call.1} parent=11 // pred_region
        _
      $region24: #{tpu_custom_call.1} parent=11 // pred_fallthru
        _
      // Predicated region
      $region25: #{tpu_custom_call.1} parent=11 // pred_check
        %p959 = pneg %p195
      $region26: #{tpu_custom_call.1} parent=11 // pred_check_branch
        %961 = sbr.rel (%p959) target = $region28
      $region27: #{tpu_custom_call.1} parent=11 // pred_region
        _
      $region28: #{tpu_custom_call.1} parent=11 // pred_fallthru
        _
      // Predicated region
      $region29: #{tpu_custom_call.1} parent=11 // pred_check
        %p962 = pneg %p216
      $region30: #{tpu_custom_call.1} parent=11 // pred_check_branch
        %964 = sbr.rel (%p962) target = $region32
      $region31: #{tpu_custom_call.1} parent=11 // pred_region
        _
      $region32: #{tpu_custom_call.1} parent=11 // pred_fallthru
        _
      // Predicated region
      $region33: #{tpu_custom_call.1} parent=11 // pred_check
        %p965 = pneg %p237
      $region34: #{tpu_custom_call.1} parent=11 // pred_check_branch
        %967 = sbr.rel (%p965) target = $region36
      $region35: #{tpu_custom_call.1} parent=11 // pred_region
        _
      $region36: #{tpu_custom_call.1} parent=11 // pred_fallthru
        _
      // Predicated region
      $region37: #{tpu_custom_call.1} parent=11 // pred_check
        %p968 = pneg %p258
      $region38: #{tpu_custom_call.1} parent=11 // pred_check_branch
        %970 = sbr.rel (%p968) target = $region40
      $region39: #{tpu_custom_call.1} parent=11 // pred_region
        _
      $region40: #{tpu_custom_call.1} parent=11 // pred_fallthru
        _
      // Predicated region
      $region41: #{tpu_custom_call.1} parent=11 // pred_check
        %p971 = pneg %p279
      $region42: #{tpu_custom_call.1} parent=11 // pred_check_branch
        %973 = sbr.rel (%p971) target = $region44
      $region43: #{tpu_custom_call.1} parent=11 // pred_region
        _
      $region44: #{tpu_custom_call.1} parent=11 // pred_fallthru
        _
      // Predicated region
      $region45: #{tpu_custom_call.1} parent=11 // pred_check
        %p974 = pneg %p300
      $region46: #{tpu_custom_call.1} parent=11 // pred_check_branch
        %976 = sbr.rel (%p974) target = $region48
      $region47: #{tpu_custom_call.1} parent=11 // pred_region
        _
      $region48: #{tpu_custom_call.1} parent=11 // pred_fallthru
        _
      // Predicated region
      $region49: #{tpu_custom_call.1} parent=11 // pred_check
        %p977 = pneg %p321
      $region50: #{tpu_custom_call.1} parent=11 // pred_check_branch
        %979 = sbr.rel (%p977) target = $region52
      $region51: #{tpu_custom_call.1} parent=11 // pred_region
        _
      $region52: #{tpu_custom_call.1} parent=11 // pred_fallthru
        _
      // Predicated region
      $region53: #{tpu_custom_call.1} parent=11 // pred_check
        %p980 = pneg %p342
      $region54: #{tpu_custom_call.1} parent=11 // pred_check_branch
        %982 = sbr.rel (%p980) target = $region56
      $region55: #{tpu_custom_call.1} parent=11 // pred_region
        _
      $region56: #{tpu_custom_call.1} parent=11 // pred_fallthru
        _
      // Predicated region
      $region57: #{tpu_custom_call.1} parent=11 // pred_check
        %p983 = pneg %p363
      $region58: #{tpu_custom_call.1} parent=11 // pred_check_branch
        %985 = sbr.rel (%p983) target = $region60
      $region59: #{tpu_custom_call.1} parent=11 // pred_region
        _
      $region60: #{tpu_custom_call.1} parent=11 // pred_fallthru
        _
      // Predicated region
      $region61: #{tpu_custom_call.1} parent=11 // pred_check
        %p986 = pneg %p384
      $region62: #{tpu_custom_call.1} parent=11 // pred_check_branch
        %988 = sbr.rel (%p986) target = $region64
      $region63: #{tpu_custom_call.1} parent=11 // pred_region
        _
      $region64: #{tpu_custom_call.1} parent=11 // pred_fallthru
        _
      // Predicated region
      $region65: #{tpu_custom_call.1} parent=11 // pred_check
        %p989 = pneg %p405
      $region66: #{tpu_custom_call.1} parent=11 // pred_check_branch
        %991 = sbr.rel (%p989) target = $region68
      $region67: #{tpu_custom_call.1} parent=11 // pred_region
        _
      $region68: #{tpu_custom_call.1} parent=11 // pred_fallthru
        _
      // Predicated region
      $region69: #{tpu_custom_call.1} parent=11 // pred_check
        %p992 = pneg %p426
      $region70: #{tpu_custom_call.1} parent=11 // pred_check_branch
        %994 = sbr.rel (%p992) target = $region72
      $region71: #{tpu_custom_call.1} parent=11 // pred_region
        _
      $region72: #{tpu_custom_call.1} parent=11 // pred_fallthru
        _
      // Predicated region
      $region73: #{tpu_custom_call.1} parent=11 // pred_check
        %p995 = pneg %p447
      $region74: #{tpu_custom_call.1} parent=11 // pred_check_branch
        %997 = sbr.rel (%p995) target = $region76
      $region75: #{tpu_custom_call.1} parent=11 // pred_region
        _
      $region76: #{tpu_custom_call.1} parent=11 // pred_fallthru
        _
      // Predicated region
      $region77: #{tpu_custom_call.1} parent=11 // pred_check
        %p998 = pneg %p468
      $region78: #{tpu_custom_call.1} parent=11 // pred_check_branch
        %1000 = sbr.rel (%p998) target = $region80
      $region79: #{tpu_custom_call.1} parent=11 // pred_region
        _
      $region80: #{tpu_custom_call.1} parent=11 // pred_fallthru
        _
      // Predicated region
      $region81: #{tpu_custom_call.1} parent=11 // pred_check
        %p1001 = pneg %p489
      $region82: #{tpu_custom_call.1} parent=11 // pred_check_branch
        %1003 = sbr.rel (%p1001) target = $region84
      $region83: #{tpu_custom_call.1} parent=11 // pred_region
        _
      $region84: #{tpu_custom_call.1} parent=11 // pred_fallthru
        _
      // Predicated region
      $region85: #{tpu_custom_call.1} parent=11 // pred_check
        %p1004 = pneg %p510
      $region86: #{tpu_custom_call.1} parent=11 // pred_check_branch
        %1006 = sbr.rel (%p1004) target = $region88
      $region87: #{tpu_custom_call.1} parent=11 // pred_region
        _
      $region88: #{tpu_custom_call.1} parent=11 // pred_fallthru
        _
      // Predicated region
      $region89: #{tpu_custom_call.1} parent=11 // pred_check
        %p1007 = pneg %p531
      $region90: #{tpu_custom_call.1} parent=11 // pred_check_branch
        %1009 = sbr.rel (%p1007) target = $region92
      $region91: #{tpu_custom_call.1} parent=11 // pred_region
        _
      $region92: #{tpu_custom_call.1} parent=11 // pred_fallthru
        _
      // Predicated region
      $region93: #{tpu_custom_call.1} parent=11 // pred_check
        %p1010 = pneg %p552
      $region94: #{tpu_custom_call.1} parent=11 // pred_check_branch
        %1012 = sbr.rel (%p1010) target = $region96
      $region95: #{tpu_custom_call.1} parent=11 // pred_region
        _
      $region96: #{tpu_custom_call.1} parent=11 // pred_fallthru
        _
      // Predicated region
      $region97: #{tpu_custom_call.1} parent=11 // pred_check
        %p1013 = pneg %p573
      $region98: #{tpu_custom_call.1} parent=11 // pred_check_branch
        %1015 = sbr.rel (%p1013) target = $region100
      $region99: #{tpu_custom_call.1} parent=11 // pred_region
        _
      $region100: #{tpu_custom_call.1} parent=11 // pred_fallthru
        _
      // Predicated region
      $region101: #{tpu_custom_call.1} parent=11 // pred_check
        %p1016 = pneg %p594
      $region102: #{tpu_custom_call.1} parent=11 // pred_check_branch
        %1018 = sbr.rel (%p1016) target = $region104
      $region103: #{tpu_custom_call.1} parent=11 // pred_region
        _
      $region104: #{tpu_custom_call.1} parent=11 // pred_fallthru
        _
      // Predicated region
      $region105: #{tpu_custom_call.1} parent=11 // pred_check
        %p1019 = pneg %p615
      $region106: #{tpu_custom_call.1} parent=11 // pred_check_branch
        %1021 = sbr.rel (%p1019) target = $region108
      $region107: #{tpu_custom_call.1} parent=11 // pred_region
        _
      $region108: #{tpu_custom_call.1} parent=11 // pred_fallthru
        _
      // Predicated region
      $region109: #{tpu_custom_call.1} parent=11 // pred_check
        %p1022 = pneg %p636
      $region110: #{tpu_custom_call.1} parent=11 // pred_check_branch
        %1024 = sbr.rel (%p1022) target = $region112
      $region111: #{tpu_custom_call.1} parent=11 // pred_region
        _
      $region112: #{tpu_custom_call.1} parent=11 // pred_fallthru
        _
      // Predicated region
      $region113: #{tpu_custom_call.1} parent=11 // pred_check
        %p1025 = pneg %p657
      $region114: #{tpu_custom_call.1} parent=11 // pred_check_branch
        %1027 = sbr.rel (%p1025) target = $region116
      $region115: #{tpu_custom_call.1} parent=11 // pred_region
        _
      $region116: #{tpu_custom_call.1} parent=11 // pred_fallthru
        _
      // Predicated region
      $region117: #{tpu_custom_call.1} parent=11 // pred_check
        %p1028 = pneg %p678
      $region118: #{tpu_custom_call.1} parent=11 // pred_check_branch
        %1030 = sbr.rel (%p1028) target = $region120
      $region119: #{tpu_custom_call.1} parent=11 // pred_region
        _
      $region120: #{tpu_custom_call.1} parent=11 // pred_fallthru
        _
      // Predicated region
      $region121: #{tpu_custom_call.1} parent=11 // pred_check
        %p1031 = pneg %p699
      $region122: #{tpu_custom_call.1} parent=11 // pred_check_branch
        %1033 = sbr.rel (%p1031) target = $region124
      $region123: #{tpu_custom_call.1} parent=11 // pred_region
        _
      $region124: #{tpu_custom_call.1} parent=11 // pred_fallthru
        _
      // Predicated region
      $region125: #{tpu_custom_call.1} parent=11 // pred_check
        %p1034 = pneg %p720
      $region126: #{tpu_custom_call.1} parent=11 // pred_check_branch
        %1036 = sbr.rel (%p1034) target = $region128
      $region127: #{tpu_custom_call.1} parent=11 // pred_region
        _
      $region128: #{tpu_custom_call.1} parent=11 // pred_fallthru
        _
      // Predicated region
      $region129: #{tpu_custom_call.1} parent=11 // pred_check
        %p1037 = pneg %p741
      $region130: #{tpu_custom_call.1} parent=11 // pred_check_branch
        %1039 = sbr.rel (%p1037) target = $region132
      $region131: #{tpu_custom_call.1} parent=11 // pred_region
        _
      $region132: #{tpu_custom_call.1} parent=11 // pred_fallthru
        _
      // Predicated region
      $region133: #{tpu_custom_call.1} parent=11 // pred_check
        %p1040 = pneg %p762
      $region134: #{tpu_custom_call.1} parent=11 // pred_check_branch
        %1042 = sbr.rel (%p1040) target = $region136
      $region135: #{tpu_custom_call.1} parent=11 // pred_region
        _
      $region136: #{tpu_custom_call.1} parent=11 // pred_fallthru
        _
      // Predicated region
      $region137: #{tpu_custom_call.1} parent=11 // pred_check
        %p1043 = pneg %p783
      $region138: #{tpu_custom_call.1} parent=11 // pred_check_branch
        %1045 = sbr.rel (%p1043) target = $region140
      $region139: #{tpu_custom_call.1} parent=11 // pred_region
        _
      $region140: #{tpu_custom_call.1} parent=11 // pred_fallthru
        _
      // Predicated region
      $region141: #{tpu_custom_call.1} parent=11 // pred_check
        %p1046 = pneg %p804
      $region142: #{tpu_custom_call.1} parent=11 // pred_check_branch
        %1048 = sbr.rel (%p1046) target = $region144
      $region143: #{tpu_custom_call.1} parent=11 // pred_region
        _
      $region144: #{tpu_custom_call.1} parent=11 // pred_fallthru
        _
      // Predicated region
      $region145: #{tpu_custom_call.1} parent=11 // pred_check
        %p1049 = pneg %p825
      $region146: #{tpu_custom_call.1} parent=11 // pred_check_branch
        %1051 = sbr.rel (%p1049) target = $region148
      $region147: #{tpu_custom_call.1} parent=11 // pred_region
        _
      $region148: #{tpu_custom_call.1} parent=11 // pred_fallthru
        _
      // Predicated region
      $region149: #{tpu_custom_call.1} parent=11 // pred_check
        %p1052 = pneg %p846
      $region150: #{tpu_custom_call.1} parent=11 // pred_check_branch
        %1054 = sbr.rel (%p1052) target = $region152
      $region151: #{tpu_custom_call.1} parent=11 // pred_region
        _
      $region152: #{tpu_custom_call.1} parent=11 // pred_fallthru
        _
      // Predicated region
      $region153: #{tpu_custom_call.1} parent=11 // pred_check
        %p1055 = pneg %p867
      $region154: #{tpu_custom_call.1} parent=11 // pred_check_branch
        %1057 = sbr.rel (%p1055) target = $region156
      $region155: #{tpu_custom_call.1} parent=11 // pred_region
        _
      $region156: #{tpu_custom_call.1} parent=11 // pred_fallthru
        _
      // Predicated region
      $region157: #{tpu_custom_call.1} parent=11 // pred_check
        %p1058 = pneg %p888
      $region158: #{tpu_custom_call.1} parent=11 // pred_check_branch
        %1060 = sbr.rel (%p1058) target = $region160
      $region159: #{tpu_custom_call.1} parent=11 // pred_region
        _
      $region160: #{tpu_custom_call.1} parent=11 // pred_fallthru
        _
      // Predicated region
      $region161: #{tpu_custom_call.1} parent=11 // pred_check
        %p1061 = pneg %p909
      $region162: #{tpu_custom_call.1} parent=11 // pred_check_branch
        %1063 = sbr.rel (%p1061) target = $region164
      $region163: #{tpu_custom_call.1} parent=11 // pred_region
        _
      $region164: #{tpu_custom_call.1} parent=11 // pred_fallthru
        _
    $region12: #{tpu_custom_call.1} parent=5 // pred_fallthru
      _
    %p1064 = scmp.lt.s32.totalorder %s85, 2
    // Predicated region
    $region165: #{tpu_custom_call.1} parent=5 // pred_check
      %p1065 = pneg %p1064
    $region166: #{tpu_custom_call.1} parent=5 // pred_check_branch
      %1067 = sbr.rel (%p1065) target = $region168
    $region167: #{tpu_custom_call.1} parent=5 // pred_region
      // Predicated region
      $region169: #{tpu_custom_call.1} parent=167 // pred_check
        %p1068 = pneg %p105
      $region170: #{tpu_custom_call.1} parent=167 // pred_check_branch
        %1070 = sbr.rel (%p1068) target = $region172
      $region171: #{tpu_custom_call.1} parent=167 // pred_region
        %p1071 = scmp.lt.s32.totalorder %s85, 1
        %s1072 = scalar_select %p1071, %s85, 1
        %s1073 = smul.addr %s1072, 8
        %s1074 = smul.addr %s1073, 8
        %s1075 = scalar_lea.vmem %s1, %s1074
      $region172: #{tpu_custom_call.1} parent=167 // pred_fallthru
        _
    $region168: #{tpu_custom_call.1} parent=5 // pred_fallthru
      _
    %p1076 = scmp.le.s32.totalorder 1, %s85
    %p1077 = scmp.lt.s32.totalorder %s85, 3
    %p1078 = pnand %p1076, %p1077
    %p1079 = pneg %p1078
    // Predicated region
    $region173: #{tpu_custom_call.1} parent=5 // pred_check
      _
    $region174: #{tpu_custom_call.1} parent=5 // pred_check_branch
      %1081 = sbr.rel (%p1078) target = $region176
    $region175: #{tpu_custom_call.1} parent=5 // pred_region
      %s1082 = ssub.s32 %s85, 1
      %p1083 = scmp.lt.s32.totalorder %s90, 1
      %s1084 = scalar_select %p1083, %s90, 1
      %s1085 = smul.addr %s1084, 8
      %s1086 = smul.addr %s1085, 8
      %s1087 = scalar_lea.vmem %s1, %s1086
      %p1088 = pneg %p111
      %p1089 = pneg %p108
      %p1090 = pneg %p132
      %p1091 = pneg %p129
      %p1092 = pneg %p153
      %p1093 = pneg %p150
      %p1094 = pneg %p174
      %p1095 = pneg %p171
      %p1096 = pneg %p195
      %p1097 = pneg %p192
      %p1098 = pneg %p216
      %p1099 = pneg %p213
      %p1100 = pneg %p237
      %p1101 = pneg %p234
      %p1102 = pneg %p258
      %p1103 = pneg %p255
      %p1104 = pneg %p279
      %p1105 = pneg %p276
      %p1106 = pneg %p300
      %p1107 = pneg %p297
      %p1108 = pneg %p321
      %p1109 = pneg %p318
      %p1110 = pneg %p342
      %p1111 = pneg %p339
      %p1112 = pneg %p363
      %p1113 = pneg %p360
      %p1114 = pneg %p384
      %p1115 = pneg %p381
      %p1116 = pneg %p405
      %p1117 = pneg %p402
      %p1118 = pneg %p426
      %p1119 = pneg %p423
      %p1120 = pneg %p447
      %p1121 = pneg %p444
      %p1122 = pneg %p468
      %p1123 = pneg %p465
      %p1124 = pneg %p489
      %p1125 = pneg %p486
      %p1126 = pneg %p510
      %p1127 = pneg %p507
      %p1128 = pneg %p531
      %p1129 = pneg %p528
      %p1130 = pneg %p552
      %p1131 = pneg %p549
      %p1132 = pneg %p573
      %p1133 = pneg %p570
      %p1134 = pneg %p594
      %p1135 = pneg %p591
      %p1136 = pneg %p615
      %p1137 = pneg %p612
      %p1138 = pneg %p636
      %p1139 = pneg %p633
      %p1140 = pneg %p657
      %p1141 = pneg %p654
      %p1142 = pneg %p678
      %p1143 = pneg %p675
      %p1144 = pneg %p699
      %p1145 = pneg %p696
      %p1146 = pneg %p720
      %p1147 = pneg %p717
      %p1148 = pneg %p741
      %p1149 = pneg %p738
      %p1150 = pneg %p762
      %p1151 = pneg %p759
      %p1152 = pneg %p783
      %p1153 = pneg %p780
      %p1154 = pneg %p804
      %p1155 = pneg %p801
      %p1156 = pneg %p825
      %p1157 = pneg %p822
      %p1158 = pneg %p846
      %p1159 = pneg %p843
      %p1160 = pneg %p867
      %p1161 = pneg %p864
      %p1162 = pneg %p888
      %p1163 = pneg %p885
      %p1164 = pneg %p909
      %p1165 = pneg %p906
      %p1166 = pneg %p935
      %p1167 = pneg %p932
      %p1168 = scmp.lt.s32.totalorder %s90, 1
      %s1169 = scalar_select %p1168, %s90, 1
      %s1170 = smul.addr %s1169, 8
      %s1171 = scalar_lea.vmem %s79, %s1170
      %p1172 = scmp.lt.s32.totalorder %s90, 1
      %s1173 = scalar_select %p1172, %s90, 1
      %s1174 = smul.addr %s1173, 8
      %s1175 = smul.addr %s1174, 8
      %s1176 = scalar_lea.vmem %s1, %s1175
      %p1177 = scmp.lt.s32.totalorder %s90, 1
      %s1178 = scalar_select %p1177, %s90, 1
      %s1179 = smul.addr %s1178, 8
      %s1180 = scalar_lea.vmem %s79, %s1179
      %v1181 = vld [vmem:[%s1176] sm:$0xff]
      %v1182 = vld [vmem:[%s1176 + $0x8] sm:$0xff]
      %v1183 = vld [vmem:[%s1176 + $0x10] sm:$0xff]
      %v1184 = vld [vmem:[%s1176 + $0x18] sm:$0xff]
      %v1185 = vld [vmem:[%s1176 + $0x20] sm:$0xff]
      %v1186 = vld [vmem:[%s1176 + $0x28] sm:$0xff]
      %v1187 = vld [vmem:[%s1176 + $0x30] sm:$0xff]
      %v1188 = vld [vmem:[%s1176 + $0x38] sm:$0xff]
      %v1189 = vld [vmem:[%s23] sm:$0xff]
      %v1190 = vld [vmem:[%s23 + $0x8] sm:$0xff]
      %v1191 = vld [vmem:[%s23 + $0x10] sm:$0xff]
      %v1192 = vld [vmem:[%s25] sm:$0xff]
      %v1193 = vld [vmem:[%s25 + $0x8] sm:$0xf]
      %v1194 = vld [vmem:[%s27] sm:$0xff]
      %v1195 = vld [vmem:[%s27 + $0x8] sm:$0xff]
      %v1196 = vld [vmem:[%s27 + $0x10] sm:$0xff]
      %v1197 = vld [vmem:[%s27 + $0x18] sm:$0xff]
      %v1198 = vld [vmem:[%s27 + $0x20] sm:$0xff]
      %v1199 = vld [vmem:[%s27 + $0x28] sm:$0xff]
      %1201 = vrot.lane.b32.xlu0 %v1182, 4
      %v1202 = vpop.permute.xlu0 %1201
      %1205 = vrot.lane.b32.xlu0 %v1183, 8
      %v1206 = vpop.permute.xlu0 %1205
      %1209 = vrot.lane.b32.xlu0 %v1184, 12
      %v1210 = vpop.permute.xlu0 %1209
      %1213 = vrot.lane.b32.xlu0 %v1185, 16
      %v1214 = vpop.permute.xlu0 %1213
      %1217 = vrot.lane.b32.xlu0 %v1186, 20
      %v1218 = vpop.permute.xlu0 %1217
      %1221 = vrot.lane.b32.xlu0 %v1187, 24
      %v1222 = vpop.permute.xlu0 %1221
      %1225 = vrot.lane.b32.xlu0 %v1188, 28
      %v1226 = vpop.permute.xlu0 %1225
      %vm1228 = vcmask 31744
      %v1229 = vsel %vm1228, %v1181, %v1202
      %vm1230 = vcmask 64512
      %v1231 = vsel %vm1230, %v1229, %v1206
      %vm1232 = vcmask 97280
      %v1233 = vsel %vm1232, %v1231, %v1210
      %vm1234 = vcmask 130048
      %v1235 = vsel %vm1234, %v1233, %v1214
      %vm1236 = vcmask 162816
      %v1237 = vsel %vm1236, %v1235, %v1218
      %vm1238 = vcmask 195584
      %v1239 = vsel %vm1238, %v1237, %v1222
      %vm1240 = vcmask 228352
      %v1241 = vsel %vm1240, %v1239, %v1226
      %v1242 = vld [vmem:[%s3] sm:$0xff]
      %vm1243 = vcmask 523264
      %v1245 = vsel %vm1243, %v1242, 0
      %1247 = vmatprep.subr.mxu0 0.0
      %1248 = vmatpush1.msra.mxu0 %v1181
      %1249 = vmatprep.subr.mxu0 0.0
      %1250 = vmatpush1.msra.mxu0 %v1182
      %1251 = vmatprep.subr.mxu0 0.0
      %1252 = vmatpush1.msra.mxu0 %v1183
      %1253 = vmatprep.subr.mxu0 0.0
      %1254 = vmatpush1.msra.mxu0 %v1184
      %1255 = vmatprep.subr.mxu0 0.0
      %1256 = vmatpush1.msra.mxu0 %v1185
      %1257 = vmatprep.subr.mxu0 0.0
      %1258 = vmatpush1.msra.mxu0 %v1186
      %1259 = vmatprep.subr.mxu0 0.0
      %1260 = vmatpush1.msra.mxu0 %v1187
      %1261 = vmatprep.subr.mxu0 0.0
      %1262 = vmatpush1.msra.mxu0 %v1188
      %1263 = vmatprep.subr.mxu0 0.0
      %1264 = vmatpush1.msra.mxu0 0.0
      %1265 = vmatprep.subr.mxu0 0.0
      %1266 = vmatpush1.msra.mxu0 0.0
      %1267 = vmatprep.subr.mxu0 0.0
      %1268 = vmatpush1.msra.mxu0 0.0
      %1269 = vmatprep.subr.mxu0 0.0
      %1270 = vmatpush1.msra.mxu0 0.0
      %1271 = vmatprep.subr.mxu0 0.0
      %1272 = vmatpush1.msra.mxu0 0.0
      %1273 = vmatprep.subr.mxu0 0.0
      %1274 = vmatpush1.msra.mxu0 0.0
      %1275 = vmatprep.subr.mxu0 0.0
      %1276 = vmatpush1.msra.mxu0 0.0
      %1277 = vmatprep.subr.mxu0 0.0
      %1278 = vmatpush1.msra.mxu0 0.0
      %1279 = vmatprep.subr.mxu0 0.0
      %1280 = vmatpush1.msra.mxu0 0.0
      %1281 = vmatprep.subr.mxu0 0.0
      %1282 = vmatpush1.msra.mxu0 0.0
      %1283 = vmatprep.subr.mxu0 0.0
      %1284 = vmatpush1.msra.mxu0 0.0
      %1285 = vmatprep.subr.mxu0 0.0
      %1286 = vmatpush1.msra.mxu0 0.0
      %1287 = vmatprep.subr.mxu0 0.0
      %1288 = vmatpush1.msra.mxu0 0.0
      %1289 = vmatprep.subr.mxu0 0.0
      %1290 = vmatpush1.msra.mxu0 0.0
      %1291 = vmatprep.subr.mxu0 0.0
      %1292 = vmatpush1.msra.mxu0 0.0
      %1293 = vmatprep.subr.mxu0 0.0
      %1294 = vmatpush1.msra.mxu0 0.0
      %1295 = vmatprep.subr.mxu0 0.0
      %1296 = vmatpush1.msra.mxu0 0.0
      %1297 = vmatprep.subr.mxu0 0.0
      %1298 = vmatpush1.msra.mxu0 0.0
      %1299 = vmatprep.subr.mxu0 0.0
      %1300 = vmatpush1.msra.mxu0 0.0
      %1301 = vmatprep.subr.mxu0 0.0
      %1302 = vmatpush1.msra.mxu0 0.0
      %1303 = vmatprep.subr.mxu0 0.0
      %1304 = vmatpush1.msra.mxu0 0.0
      %1305 = vmatprep.subr.mxu0 0.0
      %1306 = vmatpush1.msra.mxu0 0.0
      %1307 = vmatprep.subr.mxu0 0.0
      %1308 = vmatpush1.msra.mxu0 0.0
      %1309 = vmatprep.subr.mxu0 0.0
      %1310 = vmatpush1.msra.mxu0 0.0
      %1311 = vmatprep.mubr.f32.mxu0 0.0
      %1312 = vmatmul.mubr.f32.gmra.mrb[0].mxu0 %v1245
      %v1313 = vpop.f32.mrb[0].mxu0
      %v1314 = vadd.f32 0.0, %v1313
      %v1315 = vpop.f32.mrb[0].mxu0
      %1316 = vdwg.mxu0
      %v1317 = vld [vmem:[%s5] sm:$0xf]
      %v1319 = vsel %vm1228, %v1314, 0
      %vm1321 = vcmask 1043456
      %v1323 = vsel %vm1321, %v1317, 0
      %1325 = vmatprep.subr.mxu0 0.0
      %1326 = vmatpush1.msra.mxu0 %v1323
      %1327 = vmatprep.subr.mxu0 0.0
      %1328 = vmatpush1.msra.mxu0 0.0
      %1329 = vmatprep.subr.mxu0 0.0
      %1330 = vmatpush1.msra.mxu0 0.0
      %1331 = vmatprep.subr.mxu0 0.0
      %1332 = vmatpush1.msra.mxu0 0.0
      %1333 = vmatprep.subr.mxu0 0.0
      %1334 = vmatpush1.msra.mxu0 0.0
      %1335 = vmatprep.subr.mxu0 0.0
      %1336 = vmatpush1.msra.mxu0 0.0
      %1337 = vmatprep.subr.mxu0 0.0
      %1338 = vmatpush1.msra.mxu0 0.0
      %1339 = vmatprep.subr.mxu0 0.0
      %1340 = vmatpush1.msra.mxu0 0.0
      %1341 = vmatprep.subr.mxu0 0.0
      %1342 = vmatpush1.msra.mxu0 0.0
      %1343 = vmatprep.subr.mxu0 0.0
      %1344 = vmatpush1.msra.mxu0 0.0
      %1345 = vmatprep.subr.mxu0 0.0
      %1346 = vmatpush1.msra.mxu0 0.0
      %1347 = vmatprep.subr.mxu0 0.0
      %1348 = vmatpush1.msra.mxu0 0.0
      %1349 = vmatprep.subr.mxu0 0.0
      %1350 = vmatpush1.msra.mxu0 0.0
      %1351 = vmatprep.subr.mxu0 0.0
      %1352 = vmatpush1.msra.mxu0 0.0
      %1353 = vmatprep.subr.mxu0 0.0
      %1354 = vmatpush1.msra.mxu0 0.0
      %1355 = vmatprep.subr.mxu0 0.0
      %1356 = vmatpush1.msra.mxu0 0.0
      %1357 = vmatprep.subr.mxu0 0.0
      %1358 = vmatpush1.msra.mxu0 0.0
      %1359 = vmatprep.subr.mxu0 0.0
      %1360 = vmatpush1.msra.mxu0 0.0
      %1361 = vmatprep.subr.mxu0 0.0
      %1362 = vmatpush1.msra.mxu0 0.0
      %1363 = vmatprep.subr.mxu0 0.0
      %1364 = vmatpush1.msra.mxu0 0.0
      %1365 = vmatprep.subr.mxu0 0.0
      %1366 = vmatpush1.msra.mxu0 0.0
      %1367 = vmatprep.subr.mxu0 0.0
      %1368 = vmatpush1.msra.mxu0 0.0
      %1369 = vmatprep.subr.mxu0 0.0
      %1370 = vmatpush1.msra.mxu0 0.0
      %1371 = vmatprep.subr.mxu0 0.0
      %1372 = vmatpush1.msra.mxu0 0.0
      %1373 = vmatprep.subr.mxu0 0.0
      %1374 = vmatpush1.msra.mxu0 0.0
      %1375 = vmatprep.subr.mxu0 0.0
      %1376 = vmatpush1.msra.mxu0 0.0
      %1377 = vmatprep.subr.mxu0 0.0
      %1378 = vmatpush1.msra.mxu0 0.0
      %1379 = vmatprep.subr.mxu0 0.0
      %1380 = vmatpush1.msra.mxu0 0.0
      %1381 = vmatprep.subr.mxu0 0.0
      %1382 = vmatpush1.msra.mxu0 0.0
      %1383 = vmatprep.subr.mxu0 0.0
      %1384 = vmatpush1.msra.mxu0 0.0
      %1385 = vmatprep.subr.mxu0 0.0
      %1386 = vmatpush1.msra.mxu0 0.0
      %1387 = vmatprep.subr.mxu0 0.0
      %1388 = vmatpush1.msra.mxu0 0.0
      %1389 = vmatprep.mubr.f32.mxu0 0.0
      %1390 = vmatmul.mubr.f32.gmra.mrb[0].mxu0 %v1319
      %v1391 = vpop.f32.mrb[0].mxu0
      %v1392 = vadd.f32 0.0, %v1391
      %v1393 = vpop.f32.mrb[0].mxu0
      %1394 = vdwg.mxu0
      %v1395 = vld [vmem:[%s7] sm:$0xff]
      %v1396 = vld [vmem:[%s7 + $0x8] sm:$0xff]
      %v1397 = vld [vmem:[%s7 + $0x10] sm:$0xff]
      %v1398 = vld [vmem:[%s7 + $0x18] sm:$0xff]
      %vm1399 = vcmask 261120
      %v1401 = vsel %vm1399, %v1241, 0
      %1403 = vmatprep.subr.mxu0 0.0
      %1404 = vmatpush1.msra.mxu0 %v1395
      %1405 = vmatprep.subr.mxu0 0.0
      %1406 = vmatpush1.msra.mxu0 %v1396
      %1407 = vmatprep.subr.mxu0 0.0
      %1408 = vmatpush1.msra.mxu0 %v1397
      %1409 = vmatprep.subr.mxu0 0.0
      %1410 = vmatpush1.msra.mxu0 %v1398
      %1411 = vmatprep.subr.mxu0 0.0
      %1412 = vmatpush1.msra.mxu0 0.0
      %1413 = vmatprep.subr.mxu0 0.0
      %1414 = vmatpush1.msra.mxu0 0.0
      %1415 = vmatprep.subr.mxu0 0.0
      %1416 = vmatpush1.msra.mxu0 0.0
      %1417 = vmatprep.subr.mxu0 0.0
      %1418 = vmatpush1.msra.mxu0 0.0
      %1419 = vmatprep.subr.mxu0 0.0
      %1420 = vmatpush1.msra.mxu0 0.0
      %1421 = vmatprep.subr.mxu0 0.0
      %1422 = vmatpush1.msra.mxu0 0.0
      %1423 = vmatprep.subr.mxu0 0.0
      %1424 = vmatpush1.msra.mxu0 0.0
      %1425 = vmatprep.subr.mxu0 0.0
      %1426 = vmatpush1.msra.mxu0 0.0
      %1427 = vmatprep.subr.mxu0 0.0
      %1428 = vmatpush1.msra.mxu0 0.0
      %1429 = vmatprep.subr.mxu0 0.0
      %1430 = vmatpush1.msra.mxu0 0.0
      %1431 = vmatprep.subr.mxu0 0.0
      %1432 = vmatpush1.msra.mxu0 0.0
      %1433 = vmatprep.subr.mxu0 0.0
      %1434 = vmatpush1.msra.mxu0 0.0
      %1435 = vmatprep.subr.mxu0 0.0
      %1436 = vmatpush1.msra.mxu0 0.0
      %1437 = vmatprep.subr.mxu0 0.0
      %1438 = vmatpush1.msra.mxu0 0.0
      %1439 = vmatprep.subr.mxu0 0.0
      %1440 = vmatpush1.msra.mxu0 0.0
      %1441 = vmatprep.subr.mxu0 0.0
      %1442 = vmatpush1.msra.mxu0 0.0
      %1443 = vmatprep.subr.mxu0 0.0
      %1444 = vmatpush1.msra.mxu0 0.0
      %1445 = vmatprep.subr.mxu0 0.0
      %1446 = vmatpush1.msra.mxu0 0.0
      %1447 = vmatprep.subr.mxu0 0.0
      %1448 = vmatpush1.msra.mxu0 0.0
      %1449 = vmatprep.subr.mxu0 0.0
      %1450 = vmatpush1.msra.mxu0 0.0
      %1451 = vmatprep.subr.mxu0 0.0
      %1452 = vmatpush1.msra.mxu0 0.0
      %1453 = vmatprep.subr.mxu0 0.0
      %1454 = vmatpush1.msra.mxu0 0.0
      %1455 = vmatprep.subr.mxu0 0.0
      %1456 = vmatpush1.msra.mxu0 0.0
      %1457 = vmatprep.subr.mxu0 0.0
      %1458 = vmatpush1.msra.mxu0 0.0
      %1459 = vmatprep.subr.mxu0 0.0
      %1460 = vmatpush1.msra.mxu0 0.0
      %1461 = vmatprep.subr.mxu0 0.0
      %1462 = vmatpush1.msra.mxu0 0.0
      %1463 = vmatprep.subr.mxu0 0.0
      %1464 = vmatpush1.msra.mxu0 0.0
      %1465 = vmatprep.subr.mxu0 0.0
      %1466 = vmatpush1.msra.mxu0 0.0
      %1467 = vmatprep.mubr.f32.mxu0 0.0
      %1468 = vmatmul.mubr.f32.gmra.mrb[0].mxu0 %v1401
      %v1469 = vpop.f32.mrb[0].mxu0
      %v1470 = vadd.f32 0.0, %v1469
      %v1471 = vpop.f32.mrb[0].mxu0
      %1472 = vdwg.mxu0
      %v1473 = vld [vmem:[%s11] sm:$0xff]
      %v1474 = vld [vmem:[%s9] sm:$0xff]
      %v1476 = vsel %vm1230, %v1392, 0
      %1478 = vmatprep.subr.mxu0 0.0
      %1479 = vmatpush1.msra.mxu0 %v1470
      %1480 = vmatprep.subr.mxu0 0.0
      %1481 = vmatpush1.msra.mxu0 0.0
      %1482 = vmatprep.subr.mxu0 0.0
      %1483 = vmatpush1.msra.mxu0 0.0
      %1484 = vmatprep.subr.mxu0 0.0
      %1485 = vmatpush1.msra.mxu0 0.0
      %1486 = vmatprep.subr.mxu0 0.0
      %1487 = vmatpush1.msra.mxu0 0.0
      %1488 = vmatprep.subr.mxu0 0.0
      %1489 = vmatpush1.msra.mxu0 0.0
      %1490 = vmatprep.subr.mxu0 0.0
      %1491 = vmatpush1.msra.mxu0 0.0
      %1492 = vmatprep.subr.mxu0 0.0
      %1493 = vmatpush1.msra.mxu0 0.0
      %1494 = vmatprep.subr.mxu0 0.0
      %1495 = vmatpush1.msra.mxu0 0.0
      %1496 = vmatprep.subr.mxu0 0.0
      %1497 = vmatpush1.msra.mxu0 0.0
      %1498 = vmatprep.subr.mxu0 0.0
      %1499 = vmatpush1.msra.mxu0 0.0
      %1500 = vmatprep.subr.mxu0 0.0
      %1501 = vmatpush1.msra.mxu0 0.0
      %1502 = vmatprep.subr.mxu0 0.0
      %1503 = vmatpush1.msra.mxu0 0.0
      %1504 = vmatprep.subr.mxu0 0.0
      %1505 = vmatpush1.msra.mxu0 0.0
      %1506 = vmatprep.subr.mxu0 0.0
      %1507 = vmatpush1.msra.mxu0 0.0
      %1508 = vmatprep.subr.mxu0 0.0
      %1509 = vmatpush1.msra.mxu0 0.0
      %1510 = vmatprep.subr.mxu0 0.0
      %1511 = vmatpush1.msra.mxu0 0.0
      %1512 = vmatprep.subr.mxu0 0.0
      %1513 = vmatpush1.msra.mxu0 0.0
      %1514 = vmatprep.subr.mxu0 0.0
      %1515 = vmatpush1.msra.mxu0 0.0
      %1516 = vmatprep.subr.mxu0 0.0
      %1517 = vmatpush1.msra.mxu0 0.0
      %1518 = vmatprep.subr.mxu0 0.0
      %1519 = vmatpush1.msra.mxu0 0.0
      %1520 = vmatprep.subr.mxu0 0.0
      %1521 = vmatpush1.msra.mxu0 0.0
      %1522 = vmatprep.subr.mxu0 0.0
      %1523 = vmatpush1.msra.mxu0 0.0
      %1524 = vmatprep.subr.mxu0 0.0
      %1525 = vmatpush1.msra.mxu0 0.0
      %1526 = vmatprep.subr.mxu0 0.0
      %1527 = vmatpush1.msra.mxu0 0.0
      %1528 = vmatprep.subr.mxu0 0.0
      %1529 = vmatpush1.msra.mxu0 0.0
      %1530 = vmatprep.subr.mxu0 0.0
      %1531 = vmatpush1.msra.mxu0 0.0
      %1532 = vmatprep.subr.mxu0 0.0
      %1533 = vmatpush1.msra.mxu0 0.0
      %1534 = vmatprep.subr.mxu0 0.0
      %1535 = vmatpush1.msra.mxu0 0.0
      %1536 = vmatprep.subr.mxu0 0.0
      %1537 = vmatpush1.msra.mxu0 0.0
      %1538 = vmatprep.subr.mxu0 0.0
      %1539 = vmatpush1.msra.mxu0 0.0
      %1540 = vmatprep.subr.mxu0 0.0
      %1541 = vmatpush1.msra.mxu0 0.0
      %1542 = vmatprep.mubr.f32.mxu0 0.0
      %1543 = vmatmul.mubr.f32.gmra.mrb[0].mxu0 %v1476
      %v1544 = vpop.f32.mrb[0].mxu0
      %v1545 = vadd.f32 %v1474, %v1544
      %v1546 = vpop.f32.mrb[0].mxu0
      %1547 = vdwg.mxu0
      %v1548 = vsub.f32 0.0, %v1545
      %v1549 = vmul.f32 %v1548, 1.442695
      %v1550 = vpow.pop %v1549
      %v1551 = vadd.f32 %v1550, 1.0
      %v1552 = vrcp.pop %v1551
      %v1553 = vmul.f32 1.0, %v1552
      %v1555 = vsel %vm1230, %v1473, 0
      %1557 = vmatprep.subr.mxu0 0.0
      %1558 = vmatpush1.msra.mxu0 %v1553
      %1559 = vmatprep.subr.mxu0 0.0
      %1560 = vmatpush1.msra.mxu0 0.0
      %1561 = vmatprep.subr.mxu0 0.0
      %1562 = vmatpush1.msra.mxu0 0.0
      %1563 = vmatprep.subr.mxu0 0.0
      %1564 = vmatpush1.msra.mxu0 0.0
      %1565 = vmatprep.subr.mxu0 0.0
      %1566 = vmatpush1.msra.mxu0 0.0
      %1567 = vmatprep.subr.mxu0 0.0
      %1568 = vmatpush1.msra.mxu0 0.0
      %1569 = vmatprep.subr.mxu0 0.0
      %1570 = vmatpush1.msra.mxu0 0.0
      %1571 = vmatprep.subr.mxu0 0.0
      %1572 = vmatpush1.msra.mxu0 0.0
      %1573 = vmatprep.subr.mxu0 0.0
      %1574 = vmatpush1.msra.mxu0 0.0
      %1575 = vmatprep.subr.mxu0 0.0
      %1576 = vmatpush1.msra.mxu0 0.0
      %1577 = vmatprep.subr.mxu0 0.0
      %1578 = vmatpush1.msra.mxu0 0.0
      %1579 = vmatprep.subr.mxu0 0.0
      %1580 = vmatpush1.msra.mxu0 0.0
      %1581 = vmatprep.subr.mxu0 0.0
      %1582 = vmatpush1.msra.mxu0 0.0
      %1583 = vmatprep.subr.mxu0 0.0
      %1584 = vmatpush1.msra.mxu0 0.0
      %1585 = vmatprep.subr.mxu0 0.0
      %1586 = vmatpush1.msra.mxu0 0.0
      %1587 = vmatprep.subr.mxu0 0.0
      %1588 = vmatpush1.msra.mxu0 0.0
      %1589 = vmatprep.subr.mxu0 0.0
      %1590 = vmatpush1.msra.mxu0 0.0
      %1591 = vmatprep.subr.mxu0 0.0
      %1592 = vmatpush1.msra.mxu0 0.0
      %1593 = vmatprep.subr.mxu0 0.0
      %1594 = vmatpush1.msra.mxu0 0.0
      %1595 = vmatprep.subr.mxu0 0.0
      %1596 = vmatpush1.msra.mxu0 0.0
      %1597 = vmatprep.subr.mxu0 0.0
      %1598 = vmatpush1.msra.mxu0 0.0
      %1599 = vmatprep.subr.mxu0 0.0
      %1600 = vmatpush1.msra.mxu0 0.0
      %1601 = vmatprep.subr.mxu0 0.0
      %1602 = vmatpush1.msra.mxu0 0.0
      %1603 = vmatprep.subr.mxu0 0.0
      %1604 = vmatpush1.msra.mxu0 0.0
      %1605 = vmatprep.subr.mxu0 0.0
      %1606 = vmatpush1.msra.mxu0 0.0
      %1607 = vmatprep.subr.mxu0 0.0
      %1608 = vmatpush1.msra.mxu0 0.0
      %1609 = vmatprep.subr.mxu0 0.0
      %1610 = vmatpush1.msra.mxu0 0.0
      %1611 = vmatprep.subr.mxu0 0.0
      %1612 = vmatpush1.msra.mxu0 0.0
      %1613 = vmatprep.subr.mxu0 0.0
      %1614 = vmatpush1.msra.mxu0 0.0
      %1615 = vmatprep.subr.mxu0 0.0
      %1616 = vmatpush1.msra.mxu0 0.0
      %1617 = vmatprep.subr.mxu0 0.0
      %1618 = vmatpush1.msra.mxu0 0.0
      %1619 = vmatprep.subr.mxu0 0.0
      %1620 = vmatpush1.msra.mxu0 0.0
      %1621 = vmatprep.mubr.f32.mxu0 0.0
      %1622 = vmatmul.mubr.f32.gmra.mrb[0].mxu0 %v1555
      %v1623 = vpop.f32.mrb[0].mxu0
      %v1624 = vadd.f32 0.0, %v1623
      %v1625 = vpop.f32.mrb[0].mxu0
      %1626 = vdwg.mxu0
      %v1627 = vsel %vm1230, %v1624, -inf
      %v1628 = vrot.slane %v1627, 4
      %v1629 = vmax.f32 %v1627, %v1628
      %v1630 = vrot.slane %v1629, 2
      %v1631 = vmax.f32 %v1629, %v1630
      %v1632 = vrot.slane %v1631, 1
      %v1633 = vmax.f32 %v1631, %v1632
      %v1634 = vsub.f32 %v1624, %v1633
      %v1635 = vmul.f32 %v1634, 1.442695
      %v1636 = vpow.pop %v1635
      %v1637 = vsel %vm1230, %v1636, 0.0
      %v1638 = vrot.slane %v1637, 4
      %v1639 = vadd.f32 %v1637, %v1638
      %v1640 = vrot.slane %v1639, 2
      %v1641 = vadd.f32 %v1639, %v1640
      %v1642 = vrot.slane %v1641, 1
      %v1643 = vadd.f32 %v1641, %v1642
      %v1644 = vrcp.pop %v1643
      %v1645 = vmul.f32 %v1636, %v1644
      %v1646 = vld [vmem:[%s13] sm:$0xff]
      %v1648 = vsel %vm1230, %v1645, 0
      %1650 = vmatprep.subr.mxu0 0.0
      %1651 = vmatpush1.msra.mxu0 %v1646
      %1652 = vmatprep.subr.mxu0 0.0
      %1653 = vmatpush1.msra.mxu0 0.0
      %1654 = vmatprep.subr.mxu0 0.0
      %1655 = vmatpush1.msra.mxu0 0.0
      %1656 = vmatprep.subr.mxu0 0.0
      %1657 = vmatpush1.msra.mxu0 0.0
      %1658 = vmatprep.subr.mxu0 0.0
      %1659 = vmatpush1.msra.mxu0 0.0
      %1660 = vmatprep.subr.mxu0 0.0
      %1661 = vmatpush1.msra.mxu0 0.0
      %1662 = vmatprep.subr.mxu0 0.0
      %1663 = vmatpush1.msra.mxu0 0.0
      %1664 = vmatprep.subr.mxu0 0.0
      %1665 = vmatpush1.msra.mxu0 0.0
      %1666 = vmatprep.subr.mxu0 0.0
      %1667 = vmatpush1.msra.mxu0 0.0
      %1668 = vmatprep.subr.mxu0 0.0
      %1669 = vmatpush1.msra.mxu0 0.0
      %1670 = vmatprep.subr.mxu0 0.0
      %1671 = vmatpush1.msra.mxu0 0.0
      %1672 = vmatprep.subr.mxu0 0.0
      %1673 = vmatpush1.msra.mxu0 0.0
      %1674 = vmatprep.subr.mxu0 0.0
      %1675 = vmatpush1.msra.mxu0 0.0
      %1676 = vmatprep.subr.mxu0 0.0
      %1677 = vmatpush1.msra.mxu0 0.0
      %1678 = vmatprep.subr.mxu0 0.0
      %1679 = vmatpush1.msra.mxu0 0.0
      %1680 = vmatprep.subr.mxu0 0.0
      %1681 = vmatpush1.msra.mxu0 0.0
      %1682 = vmatprep.subr.mxu0 0.0
      %1683 = vmatpush1.msra.mxu0 0.0
      %1684 = vmatprep.subr.mxu0 0.0
      %1685 = vmatpush1.msra.mxu0 0.0
      %1686 = vmatprep.subr.mxu0 0.0
      %1687 = vmatpush1.msra.mxu0 0.0
      %1688 = vmatprep.subr.mxu0 0.0
      %1689 = vmatpush1.msra.mxu0 0.0
      %1690 = vmatprep.subr.mxu0 0.0
      %1691 = vmatpush1.msra.mxu0 0.0
      %1692 = vmatprep.subr.mxu0 0.0
      %1693 = vmatpush1.msra.mxu0 0.0
      %1694 = vmatprep.subr.mxu0 0.0
      %1695 = vmatpush1.msra.mxu0 0.0
      %1696 = vmatprep.subr.mxu0 0.0
      %1697 = vmatpush1.msra.mxu0 0.0
      %1698 = vmatprep.subr.mxu0 0.0
      %1699 = vmatpush1.msra.mxu0 0.0
      %1700 = vmatprep.subr.mxu0 0.0
      %1701 = vmatpush1.msra.mxu0 0.0
      %1702 = vmatprep.subr.mxu0 0.0
      %1703 = vmatpush1.msra.mxu0 0.0
      %1704 = vmatprep.subr.mxu0 0.0
      %1705 = vmatpush1.msra.mxu0 0.0
      %1706 = vmatprep.subr.mxu0 0.0
      %1707 = vmatpush1.msra.mxu0 0.0
      %1708 = vmatprep.subr.mxu0 0.0
      %1709 = vmatpush1.msra.mxu0 0.0
      %1710 = vmatprep.subr.mxu0 0.0
      %1711 = vmatpush1.msra.mxu0 0.0
      %1712 = vmatprep.subr.mxu0 0.0
      %1713 = vmatpush1.msra.mxu0 0.0
      %1714 = vmatprep.mubr.f32.mxu0 0.0
      %1715 = vmatmul.mubr.f32.gmra.mrb[0].mxu0 %v1648
      %v1716 = vpop.f32.mrb[0].mxu0
      %v1717 = vadd.f32 0.0, %v1716
      %v1718 = vpop.f32.mrb[0].mxu0
      %1719 = vdwg.mxu0
      %v1721 = vcombine.high %v1717, %v1717
      %v1723 = vunpack.c.l.s4 1966171168
      %v1724 = vunpack.c.0.s8 %v1723
      %v1725 = vlaneseq
      %v1726 = vshrl.u32 %v1725, 7
      %v1727 = vsub.s32 %v1724, %v1726
      %v1728 = vrot.slane %v1717, %v1727
      %v1730 = vunpack.c.l.s4 1966171168
      %v1731 = vunpack.c.0.s8 %v1730
      %v1732 = vlaneseq
      %v1733 = vshrl.u32 %v1732, 7
      %v1734 = vsub.s32 %v1731, %v1733
      %v1735 = vrot.slane %v1721, %v1734
      %v1736 = vcombine.high %v1728, %v1728
      %v1737 = vcombine.high %v1735, %v1735
      %v1739 = vunpack.c.l.s4 1966171168
      %v1740 = vunpack.c.0.s8 %v1739
      %v1741 = vlaneseq
      %v1742 = vshrl.u32 %v1741, 7
      %v1743 = vsub.s32 %v1740, %v1742
      %v1744 = vrot.slane %v1728, %v1743
      %v1746 = vunpack.c.l.s4 1966171168
      %v1747 = vunpack.c.0.s8 %v1746
      %v1748 = vlaneseq
      %v1749 = vshrl.u32 %v1748, 7
      %v1750 = vsub.s32 %v1747, %v1749
      %v1751 = vrot.slane %v1735, %v1750
      %v1753 = vunpack.c.l.s4 1966171168
      %v1754 = vunpack.c.0.s8 %v1753
      %v1755 = vlaneseq
      %v1756 = vshrl.u32 %v1755, 7
      %v1757 = vsub.s32 %v1754, %v1756
      %v1758 = vrot.slane %v1736, %v1757
      %v1760 = vunpack.c.l.s4 1966171168
      %v1761 = vunpack.c.0.s8 %v1760
      %v1762 = vlaneseq
      %v1763 = vshrl.u32 %v1762, 7
      %v1764 = vsub.s32 %v1761, %v1763
      %v1765 = vrot.slane %v1737, %v1764
      %v1766 = vcombine.high %v1744, %v1744
      %v1767 = vcombine.high %v1751, %v1751
      %v1768 = vcombine.high %v1758, %v1758
      %v1769 = vcombine.high %v1765, %v1765
      %v1770 = vlaneseq
      %v1771 = vshrl.u32 %v1770, 7
      %v1772 = vsub.s32 0, %v1771
      %v1773 = vrot.slane %v1744, %v1772
      %v1774 = vlaneseq
      %v1775 = vshrl.u32 %v1774, 7
      %v1776 = vsub.s32 0, %v1775
      %v1777 = vrot.slane %v1758, %v1776
      %v1778 = vlaneseq
      %v1779 = vshrl.u32 %v1778, 7
      %v1780 = vsub.s32 0, %v1779
      %v1781 = vrot.slane %v1766, %v1780
      %v1782 = vlaneseq
      %v1783 = vshrl.u32 %v1782, 7
      %v1784 = vsub.s32 0, %v1783
      %v1785 = vrot.slane %v1768, %v1784
      %v1786 = vlaneseq
      %v1787 = vshrl.u32 %v1786, 7
      %v1788 = vsub.s32 0, %v1787
      %v1789 = vrot.slane %v1751, %v1788
      %v1790 = vlaneseq
      %v1791 = vshrl.u32 %v1790, 7
      %v1792 = vsub.s32 0, %v1791
      %v1793 = vrot.slane %v1765, %v1792
      %v1794 = vlaneseq
      %v1795 = vshrl.u32 %v1794, 7
      %v1796 = vsub.s32 0, %v1795
      %v1797 = vrot.slane %v1767, %v1796
      %v1798 = vlaneseq
      %v1799 = vshrl.u32 %v1798, 7
      %v1800 = vsub.s32 0, %v1799
      %v1801 = vrot.slane %v1769, %v1800
      %1802 = vset.pattern.permute.xlu0 0
      %1803 = vperm.xlu0 %1802, %v1773
      %v1804 = vpop.permute.xlu0 %1803
      %1806 = vset.pattern.permute.xlu0 0
      %1807 = vperm.xlu0 %1806, %v1777
      %v1808 = vpop.permute.xlu0 %1807
      %1810 = vset.pattern.permute.xlu0 0
      %1811 = vperm.xlu0 %1810, %v1781
      %v1812 = vpop.permute.xlu0 %1811
      %1814 = vset.pattern.permute.xlu0 0
      %1815 = vperm.xlu0 %1814, %v1785
      %v1816 = vpop.permute.xlu0 %1815
      %1818 = vset.pattern.permute.xlu0 0
      %1819 = vperm.xlu0 %1818, %v1789
      %v1820 = vpop.permute.xlu0 %1819
      %1822 = vset.pattern.permute.xlu0 0
      %1823 = vperm.xlu0 %1822, %v1793
      %v1824 = vpop.permute.xlu0 %1823
      %1826 = vset.pattern.permute.xlu0 0
      %1827 = vperm.xlu0 %1826, %v1797
      %v1828 = vpop.permute.xlu0 %1827
      %1830 = vset.pattern.permute.xlu0 0
      %1831 = vperm.xlu0 %1830, %v1801
      %v1832 = vpop.permute.xlu0 %1831
      %v1834 = vmul.f32 %v1181, %v1804
      %v1835 = vmul.f32 %v1182, %v1808
      %v1836 = vmul.f32 %v1183, %v1812
      %v1837 = vmul.f32 %v1184, %v1816
      %v1838 = vmul.f32 %v1185, %v1820
      %v1839 = vmul.f32 %v1186, %v1824
      %v1840 = vmul.f32 %v1187, %v1828
      %v1841 = vmul.f32 %v1188, %v1832
      %v1842 = vsel %vm1228, %v1834, 0.0
      %v1843 = vsel %vm1228, %v1835, 0.0
      %v1844 = vadd.f32 %v1842, %v1843
      %v1845 = vsel %vm1228, %v1836, 0.0
      %v1846 = vadd.f32 %v1844, %v1845
      %v1847 = vsel %vm1228, %v1837, 0.0
      %v1848 = vadd.f32 %v1846, %v1847
      %v1849 = vsel %vm1228, %v1838, 0.0
      %v1850 = vadd.f32 %v1848, %v1849
      %v1851 = vsel %vm1228, %v1839, 0.0
      %v1852 = vadd.f32 %v1850, %v1851
      %v1853 = vsel %vm1228, %v1840, 0.0
      %v1854 = vadd.f32 %v1852, %v1853
      %v1855 = vsel %vm1228, %v1841, 0.0
      %v1856 = vadd.f32 %v1854, %v1855
      %v1857 = vld [vmem:[%s15] sm:$0xf]
      %v1859 = vsel %vm1228, %v1856, 0
      %v1862 = vsel %vm1321, %v1857, 0
      %1864 = vmatprep.subr.mxu0 0.0
      %1865 = vmatpush1.msra.mxu0 %v1862
      %1866 = vmatprep.subr.mxu0 0.0
      %1867 = vmatpush1.msra.mxu0 0.0
      %1868 = vmatprep.subr.mxu0 0.0
      %1869 = vmatpush1.msra.mxu0 0.0
      %1870 = vmatprep.subr.mxu0 0.0
      %1871 = vmatpush1.msra.mxu0 0.0
      %1872 = vmatprep.subr.mxu0 0.0
      %1873 = vmatpush1.msra.mxu0 0.0
      %1874 = vmatprep.subr.mxu0 0.0
      %1875 = vmatpush1.msra.mxu0 0.0
      %1876 = vmatprep.subr.mxu0 0.0
      %1877 = vmatpush1.msra.mxu0 0.0
      %1878 = vmatprep.subr.mxu0 0.0
      %1879 = vmatpush1.msra.mxu0 0.0
      %1880 = vmatprep.subr.mxu0 0.0
      %1881 = vmatpush1.msra.mxu0 0.0
      %1882 = vmatprep.subr.mxu0 0.0
      %1883 = vmatpush1.msra.mxu0 0.0
      %1884 = vmatprep.subr.mxu0 0.0
      %1885 = vmatpush1.msra.mxu0 0.0
      %1886 = vmatprep.subr.mxu0 0.0
      %1887 = vmatpush1.msra.mxu0 0.0
      %1888 = vmatprep.subr.mxu0 0.0
      %1889 = vmatpush1.msra.mxu0 0.0
      %1890 = vmatprep.subr.mxu0 0.0
      %1891 = vmatpush1.msra.mxu0 0.0
      %1892 = vmatprep.subr.mxu0 0.0
      %1893 = vmatpush1.msra.mxu0 0.0
      %1894 = vmatprep.subr.mxu0 0.0
      %1895 = vmatpush1.msra.mxu0 0.0
      %1896 = vmatprep.subr.mxu0 0.0
      %1897 = vmatpush1.msra.mxu0 0.0
      %1898 = vmatprep.subr.mxu0 0.0
      %1899 = vmatpush1.msra.mxu0 0.0
      %1900 = vmatprep.subr.mxu0 0.0
      %1901 = vmatpush1.msra.mxu0 0.0
      %1902 = vmatprep.subr.mxu0 0.0
      %1903 = vmatpush1.msra.mxu0 0.0
      %1904 = vmatprep.subr.mxu0 0.0
      %1905 = vmatpush1.msra.mxu0 0.0
      %1906 = vmatprep.subr.mxu0 0.0
      %1907 = vmatpush1.msra.mxu0 0.0
      %1908 = vmatprep.subr.mxu0 0.0
      %1909 = vmatpush1.msra.mxu0 0.0
      %1910 = vmatprep.subr.mxu0 0.0
      %1911 = vmatpush1.msra.mxu0 0.0
      %1912 = vmatprep.subr.mxu0 0.0
      %1913 = vmatpush1.msra.mxu0 0.0
      %1914 = vmatprep.subr.mxu0 0.0
      %1915 = vmatpush1.msra.mxu0 0.0
      %1916 = vmatprep.subr.mxu0 0.0
      %1917 = vmatpush1.msra.mxu0 0.0
      %1918 = vmatprep.subr.mxu0 0.0
      %1919 = vmatpush1.msra.mxu0 0.0
      %1920 = vmatprep.subr.mxu0 0.0
      %1921 = vmatpush1.msra.mxu0 0.0
      %1922 = vmatprep.subr.mxu0 0.0
      %1923 = vmatpush1.msra.mxu0 0.0
      %1924 = vmatprep.subr.mxu0 0.0
      %1925 = vmatpush1.msra.mxu0 0.0
      %1926 = vmatprep.subr.mxu0 0.0
      %1927 = vmatpush1.msra.mxu0 0.0
      %1928 = vmatprep.mubr.f32.mxu0 0.0
      %1929 = vmatmul.mubr.f32.gmra.mrb[0].mxu0 %v1859
      %v1930 = vpop.f32.mrb[0].mxu0
      %v1931 = vadd.f32 0.0, %v1930
      %v1932 = vpop.f32.mrb[0].mxu0
      %1933 = vdwg.mxu0
      %v1934 = vld [vmem:[%s17] sm:$0xff]
      %v1935 = vld [vmem:[%s17 + $0x8] sm:$0xff]
      %v1936 = vld [vmem:[%s17 + $0x10] sm:$0xff]
      %v1937 = vld [vmem:[%s17 + $0x18] sm:$0xff]
      %1938 = vmatprep.subr.mxu0 0.0
      %1939 = vmatpush1.msra.mxu0 %v1934
      %1940 = vmatprep.subr.mxu0 0.0
      %1941 = vmatpush1.msra.mxu0 %v1935
      %1942 = vmatprep.subr.mxu0 0.0
      %1943 = vmatpush1.msra.mxu0 %v1936
      %1944 = vmatprep.subr.mxu0 0.0
      %1945 = vmatpush1.msra.mxu0 %v1937
      %1946 = vmatprep.subr.mxu0 0.0
      %1947 = vmatpush1.msra.mxu0 0.0
      %1948 = vmatprep.subr.mxu0 0.0
      %1949 = vmatpush1.msra.mxu0 0.0
      %1950 = vmatprep.subr.mxu0 0.0
      %1951 = vmatpush1.msra.mxu0 0.0
      %1952 = vmatprep.subr.mxu0 0.0
      %1953 = vmatpush1.msra.mxu0 0.0
      %1954 = vmatprep.subr.mxu0 0.0
      %1955 = vmatpush1.msra.mxu0 0.0
      %1956 = vmatprep.subr.mxu0 0.0
      %1957 = vmatpush1.msra.mxu0 0.0
      %1958 = vmatprep.subr.mxu0 0.0
      %1959 = vmatpush1.msra.mxu0 0.0
      %1960 = vmatprep.subr.mxu0 0.0
      %1961 = vmatpush1.msra.mxu0 0.0
      %1962 = vmatprep.subr.mxu0 0.0
      %1963 = vmatpush1.msra.mxu0 0.0
      %1964 = vmatprep.subr.mxu0 0.0
      %1965 = vmatpush1.msra.mxu0 0.0
      %1966 = vmatprep.subr.mxu0 0.0
      %1967 = vmatpush1.msra.mxu0 0.0
      %1968 = vmatprep.subr.mxu0 0.0
      %1969 = vmatpush1.msra.mxu0 0.0
      %1970 = vmatprep.subr.mxu0 0.0
      %1971 = vmatpush1.msra.mxu0 0.0
      %1972 = vmatprep.subr.mxu0 0.0
      %1973 = vmatpush1.msra.mxu0 0.0
      %1974 = vmatprep.subr.mxu0 0.0
      %1975 = vmatpush1.msra.mxu0 0.0
      %1976 = vmatprep.subr.mxu0 0.0
      %1977 = vmatpush1.msra.mxu0 0.0
      %1978 = vmatprep.subr.mxu0 0.0
      %1979 = vmatpush1.msra.mxu0 0.0
      %1980 = vmatprep.subr.mxu0 0.0
      %1981 = vmatpush1.msra.mxu0 0.0
      %1982 = vmatprep.subr.mxu0 0.0
      %1983 = vmatpush1.msra.mxu0 0.0
      %1984 = vmatprep.subr.mxu0 0.0
      %1985 = vmatpush1.msra.mxu0 0.0
      %1986 = vmatprep.subr.mxu0 0.0
      %1987 = vmatpush1.msra.mxu0 0.0
      %1988 = vmatprep.subr.mxu0 0.0
      %1989 = vmatpush1.msra.mxu0 0.0
      %1990 = vmatprep.subr.mxu0 0.0
      %1991 = vmatpush1.msra.mxu0 0.0
      %1992 = vmatprep.subr.mxu0 0.0
      %1993 = vmatpush1.msra.mxu0 0.0
      %1994 = vmatprep.subr.mxu0 0.0
      %1995 = vmatpush1.msra.mxu0 0.0
      %1996 = vmatprep.subr.mxu0 0.0
      %1997 = vmatpush1.msra.mxu0 0.0
      %1998 = vmatprep.subr.mxu0 0.0
      %1999 = vmatpush1.msra.mxu0 0.0
      %2000 = vmatprep.subr.mxu0 0.0
      %2001 = vmatpush1.msra.mxu0 0.0
      %2002 = vmatprep.mubr.f32.mxu0 0.0
      %2003 = vmatmul.mubr.f32.gmra.mrb[0].mxu0 %v1401
      %v2004 = vpop.f32.mrb[0].mxu0
      %v2005 = vadd.f32 0.0, %v2004
      %v2006 = vpop.f32.mrb[0].mxu0
      %2007 = vdwg.mxu0
      %v2009 = vsel %vm1230, %v2005, 0
      %2011 = vmatprep.subr.mxu0 0.0
      %2012 = vmatpush1.msra.mxu0 %v1645
      %2013 = vmatprep.subr.mxu0 0.0
      %2014 = vmatpush1.msra.mxu0 0.0
      %2015 = vmatprep.subr.mxu0 0.0
      %2016 = vmatpush1.msra.mxu0 0.0
      %2017 = vmatprep.subr.mxu0 0.0
      %2018 = vmatpush1.msra.mxu0 0.0
      %2019 = vmatprep.subr.mxu0 0.0
      %2020 = vmatpush1.msra.mxu0 0.0
      %2021 = vmatprep.subr.mxu0 0.0
      %2022 = vmatpush1.msra.mxu0 0.0
      %2023 = vmatprep.subr.mxu0 0.0
      %2024 = vmatpush1.msra.mxu0 0.0
      %2025 = vmatprep.subr.mxu0 0.0
      %2026 = vmatpush1.msra.mxu0 0.0
      %2027 = vmatprep.subr.mxu0 0.0
      %2028 = vmatpush1.msra.mxu0 0.0
      %2029 = vmatprep.subr.mxu0 0.0
      %2030 = vmatpush1.msra.mxu0 0.0
      %2031 = vmatprep.subr.mxu0 0.0
      %2032 = vmatpush1.msra.mxu0 0.0
      %2033 = vmatprep.subr.mxu0 0.0
      %2034 = vmatpush1.msra.mxu0 0.0
      %2035 = vmatprep.subr.mxu0 0.0
      %2036 = vmatpush1.msra.mxu0 0.0
      %2037 = vmatprep.subr.mxu0 0.0
      %2038 = vmatpush1.msra.mxu0 0.0
      %2039 = vmatprep.subr.mxu0 0.0
      %2040 = vmatpush1.msra.mxu0 0.0
      %2041 = vmatprep.subr.mxu0 0.0
      %2042 = vmatpush1.msra.mxu0 0.0
      %2043 = vmatprep.subr.mxu0 0.0
      %2044 = vmatpush1.msra.mxu0 0.0
      %2045 = vmatprep.subr.mxu0 0.0
      %2046 = vmatpush1.msra.mxu0 0.0
      %2047 = vmatprep.subr.mxu0 0.0
      %2048 = vmatpush1.msra.mxu0 0.0
      %2049 = vmatprep.subr.mxu0 0.0
      %2050 = vmatpush1.msra.mxu0 0.0
      %2051 = vmatprep.subr.mxu0 0.0
      %2052 = vmatpush1.msra.mxu0 0.0
      %2053 = vmatprep.subr.mxu0 0.0
      %2054 = vmatpush1.msra.mxu0 0.0
      %2055 = vmatprep.subr.mxu0 0.0
      %2056 = vmatpush1.msra.mxu0 0.0
      %2057 = vmatprep.subr.mxu0 0.0
      %2058 = vmatpush1.msra.mxu0 0.0
      %2059 = vmatprep.subr.mxu0 0.0
      %2060 = vmatpush1.msra.mxu0 0.0
      %2061 = vmatprep.subr.mxu0 0.0
      %2062 = vmatpush1.msra.mxu0 0.0
      %2063 = vmatprep.subr.mxu0 0.0
      %2064 = vmatpush1.msra.mxu0 0.0
      %2065 = vmatprep.subr.mxu0 0.0
      %2066 = vmatpush1.msra.mxu0 0.0
      %2067 = vmatprep.subr.mxu0 0.0
      %2068 = vmatpush1.msra.mxu0 0.0
      %2069 = vmatprep.subr.mxu0 0.0
      %2070 = vmatpush1.msra.mxu0 0.0
      %2071 = vmatprep.subr.mxu0 0.0
      %2072 = vmatpush1.msra.mxu0 0.0
      %2073 = vmatprep.subr.mxu0 0.0
      %2074 = vmatpush1.msra.mxu0 0.0
      %2075 = vmatprep.mubr.f32.mxu0 0.0
      %2076 = vmatmul.mubr.f32.gmra.mrb[0].mxu0 %v2009
      %v2077 = vpop.f32.mrb[0].mxu0
      %v2078 = vadd.f32 0.0, %v2077
      %v2079 = vpop.f32.mrb[0].mxu0
      %2080 = vdwg.mxu0
      %v2081 = vld [vmem:[%s21] sm:$0xff]
      %v2082 = vld [vmem:[%s19] sm:$0xff]
      %v2084 = vsel %vm1230, %v1931, 0
      %v2087 = vsel %vm1230, %v2078, 0
      %2089 = vmatprep.subr.mxu0 0.0
      %2090 = vmatpush1.xpose.msra.mxu0 %v2087
      %2091 = vmatprep.subr.mxu0 0.0
      %2092 = vmatpush1.xpose.msra.mxu0 0.0
      %2093 = vmatprep.subr.mxu0 0.0
      %2094 = vmatpush1.xpose.msra.mxu0 0.0
      %2095 = vmatprep.subr.mxu0 0.0
      %2096 = vmatpush1.xpose.msra.mxu0 0.0
      %2097 = vmatprep.subr.mxu0 0.0
      %2098 = vmatpush1.xpose.msra.mxu0 0.0
      %2099 = vmatprep.subr.mxu0 0.0
      %2100 = vmatpush1.xpose.msra.mxu0 0.0
      %2101 = vmatprep.subr.mxu0 0.0
      %2102 = vmatpush1.xpose.msra.mxu0 0.0
      %2103 = vmatprep.subr.mxu0 0.0
      %2104 = vmatpush1.xpose.msra.mxu0 0.0
      %2105 = vmatprep.subr.mxu0 0.0
      %2106 = vmatpush1.xpose.msra.mxu0 0.0
      %2107 = vmatprep.subr.mxu0 0.0
      %2108 = vmatpush1.xpose.msra.mxu0 0.0
      %2109 = vmatprep.subr.mxu0 0.0
      %2110 = vmatpush1.xpose.msra.mxu0 0.0
      %2111 = vmatprep.subr.mxu0 0.0
      %2112 = vmatpush1.xpose.msra.mxu0 0.0
      %2113 = vmatprep.subr.mxu0 0.0
      %2114 = vmatpush1.xpose.msra.mxu0 0.0
      %2115 = vmatprep.subr.mxu0 0.0
      %2116 = vmatpush1.xpose.msra.mxu0 0.0
      %2117 = vmatprep.subr.mxu0 0.0
      %2118 = vmatpush1.xpose.msra.mxu0 0.0
      %2119 = vmatprep.subr.mxu0 0.0
      %2120 = vmatpush1.xpose.msra.mxu0 0.0
      %2121 = vmatprep.subr.mxu0 0.0
      %2122 = vmatpush1.xpose.msra.mxu0 0.0
      %2123 = vmatprep.subr.mxu0 0.0
      %2124 = vmatpush1.xpose.msra.mxu0 0.0
      %2125 = vmatprep.subr.mxu0 0.0
      %2126 = vmatpush1.xpose.msra.mxu0 0.0
      %2127 = vmatprep.subr.mxu0 0.0
      %2128 = vmatpush1.xpose.msra.mxu0 0.0
      %2129 = vmatprep.subr.mxu0 0.0
      %2130 = vmatpush1.xpose.msra.mxu0 0.0
      %2131 = vmatprep.subr.mxu0 0.0
      %2132 = vmatpush1.xpose.msra.mxu0 0.0
      %2133 = vmatprep.subr.mxu0 0.0
      %2134 = vmatpush1.xpose.msra.mxu0 0.0
      %2135 = vmatprep.subr.mxu0 0.0
      %2136 = vmatpush1.xpose.msra.mxu0 0.0
      %2137 = vmatprep.subr.mxu0 0.0
      %2138 = vmatpush1.xpose.msra.mxu0 0.0
      %2139 = vmatprep.subr.mxu0 0.0
      %2140 = vmatpush1.xpose.msra.mxu0 0.0
      %2141 = vmatprep.subr.mxu0 0.0
      %2142 = vmatpush1.xpose.msra.mxu0 0.0
      %2143 = vmatprep.subr.mxu0 0.0
      %2144 = vmatpush1.xpose.msra.mxu0 0.0
      %2145 = vmatprep.subr.mxu0 0.0
      %2146 = vmatpush1.xpose.msra.mxu0 0.0
      %2147 = vmatprep.subr.mxu0 0.0
      %2148 = vmatpush1.xpose.msra.mxu0 0.0
      %2149 = vmatprep.subr.mxu0 0.0
      %2150 = vmatpush1.xpose.msra.mxu0 0.0
      %2151 = vmatprep.subr.mxu0 0.0
      %2152 = vmatpush1.xpose.msra.mxu0 0.0
      %2153 = vmatprep.mubr.f32.mxu0 0.0
      %2154 = vmatmul.mubr.f32.gmra.mrb[0].mxu0 %v2084
      %v2155 = vpop.f32.mrb[0].mxu0
      %v2156 = vadd.f32 %v2082, %v2155
      %v2157 = vpop.f32.mrb[0].mxu0
      %2158 = vdwg.mxu0
      %v2159 = vsub.f32 0.0, %v2156
      %v2160 = vmul.f32 %v2159, 1.442695
      %v2161 = vpow.pop %v2160
      %v2162 = vadd.f32 %v2161, 1.0
      %v2163 = vrcp.pop %v2162
      %v2164 = vmul.f32 1.0, %v2163
      %v2166 = vsel %vm1230, %v2081, 0
      %2168 = vmatprep.subr.mxu0 0.0
      %2169 = vmatpush1.msra.mxu0 %v2164
      %2170 = vmatprep.subr.mxu0 0.0
      %2171 = vmatpush1.msra.mxu0 0.0
      %2172 = vmatprep.subr.mxu0 0.0
      %2173 = vmatpush1.msra.mxu0 0.0
      %2174 = vmatprep.subr.mxu0 0.0
      %2175 = vmatpush1.msra.mxu0 0.0
      %2176 = vmatprep.subr.mxu0 0.0
      %2177 = vmatpush1.msra.mxu0 0.0
      %2178 = vmatprep.subr.mxu0 0.0
      %2179 = vmatpush1.msra.mxu0 0.0
      %2180 = vmatprep.subr.mxu0 0.0
      %2181 = vmatpush1.msra.mxu0 0.0
      %2182 = vmatprep.subr.mxu0 0.0
      %2183 = vmatpush1.msra.mxu0 0.0
      %2184 = vmatprep.subr.mxu0 0.0
      %2185 = vmatpush1.msra.mxu0 0.0
      %2186 = vmatprep.subr.mxu0 0.0
      %2187 = vmatpush1.msra.mxu0 0.0
      %2188 = vmatprep.subr.mxu0 0.0
      %2189 = vmatpush1.msra.mxu0 0.0
      %2190 = vmatprep.subr.mxu0 0.0
      %2191 = vmatpush1.msra.mxu0 0.0
      %2192 = vmatprep.subr.mxu0 0.0
      %2193 = vmatpush1.msra.mxu0 0.0
      %2194 = vmatprep.subr.mxu0 0.0
      %2195 = vmatpush1.msra.mxu0 0.0
      %2196 = vmatprep.subr.mxu0 0.0
      %2197 = vmatpush1.msra.mxu0 0.0
      %2198 = vmatprep.subr.mxu0 0.0
      %2199 = vmatpush1.msra.mxu0 0.0
      %2200 = vmatprep.subr.mxu0 0.0
      %2201 = vmatpush1.msra.mxu0 0.0
      %2202 = vmatprep.subr.mxu0 0.0
      %2203 = vmatpush1.msra.mxu0 0.0
      %2204 = vmatprep.subr.mxu0 0.0
      %2205 = vmatpush1.msra.mxu0 0.0
      %2206 = vmatprep.subr.mxu0 0.0
      %2207 = vmatpush1.msra.mxu0 0.0
      %2208 = vmatprep.subr.mxu0 0.0
      %2209 = vmatpush1.msra.mxu0 0.0
      %2210 = vmatprep.subr.mxu0 0.0
      %2211 = vmatpush1.msra.mxu0 0.0
      %2212 = vmatprep.subr.mxu0 0.0
      %2213 = vmatpush1.msra.mxu0 0.0
      %2214 = vmatprep.subr.mxu0 0.0
      %2215 = vmatpush1.msra.mxu0 0.0
      %2216 = vmatprep.subr.mxu0 0.0
      %2217 = vmatpush1.msra.mxu0 0.0
      %2218 = vmatprep.subr.mxu0 0.0
      %2219 = vmatpush1.msra.mxu0 0.0
      %2220 = vmatprep.subr.mxu0 0.0
      %2221 = vmatpush1.msra.mxu0 0.0
      %2222 = vmatprep.subr.mxu0 0.0
      %2223 = vmatpush1.msra.mxu0 0.0
      %2224 = vmatprep.subr.mxu0 0.0
      %2225 = vmatpush1.msra.mxu0 0.0
      %2226 = vmatprep.subr.mxu0 0.0
      %2227 = vmatpush1.msra.mxu0 0.0
      %2228 = vmatprep.subr.mxu0 0.0
      %2229 = vmatpush1.msra.mxu0 0.0
      %2230 = vmatprep.subr.mxu0 0.0
      %2231 = vmatpush1.msra.mxu0 0.0
      %2232 = vmatprep.mubr.f32.mxu0 0.0
      %2233 = vmatmul.mubr.f32.gmra.mrb[0].mxu0 %v2166
      %v2234 = vpop.f32.mrb[0].mxu0
      %v2235 = vadd.f32 0.0, %v2234
      %v2236 = vpop.f32.mrb[0].mxu0
      %2237 = vdwg.mxu0
      %v2238 = vsel %vm1230, %v2235, -inf
      %v2239 = vrot.slane %v2238, 4
      %v2240 = vmax.f32 %v2238, %v2239
      %v2241 = vrot.slane %v2240, 2
      %v2242 = vmax.f32 %v2240, %v2241
      %v2243 = vrot.slane %v2242, 1
      %v2244 = vmax.f32 %v2242, %v2243
      %v2245 = vsub.f32 %v2235, %v2244
      %v2246 = vmul.f32 %v2245, 1.442695
      %v2247 = vpow.pop %v2246
      %v2248 = vsel %vm1230, %v2247, 0.0
      %v2249 = vrot.slane %v2248, 4
      %v2250 = vadd.f32 %v2248, %v2249
      %v2251 = vrot.slane %v2250, 2
      %v2252 = vadd.f32 %v2250, %v2251
      %v2253 = vrot.slane %v2252, 1
      %v2254 = vadd.f32 %v2252, %v2253
      %v2255 = vrcp.pop %v2254
      %v2256 = vmul.f32 %v2247, %v2255
      %2257 = vxpose.xlu0.b32.start [1/16] %v2256, 128
      %2258 = vxpose.xlu0.b32.cont [2/16] 0.0, 128
      %2259 = vxpose.xlu0.b32.cont [3/16] 0.0, 128
      %2260 = vxpose.xlu0.b32.cont [4/16] 0.0, 128
      %2261 = vxpose.xlu0.b32.cont [5/16] 0.0, 128
      %2262 = vxpose.xlu0.b32.cont [6/16] 0.0, 128
      %2263 = vxpose.xlu0.b32.cont [7/16] 0.0, 128
      %2264 = vxpose.xlu0.b32.cont [8/16] 0.0, 128
      %2265 = vxpose.xlu0.b32.cont [9/16] 0.0, 128
      %2266 = vxpose.xlu0.b32.cont [10/16] 0.0, 128
      %2267 = vxpose.xlu0.b32.cont [11/16] 0.0, 128
      %2268 = vxpose.xlu0.b32.cont [12/16] 0.0, 128
      %2269 = vxpose.xlu0.b32.cont [13/16] 0.0, 128
      %2270 = vxpose.xlu0.b32.cont [14/16] 0.0, 128
      %2271 = vxpose.xlu0.b32.cont [15/16] 0.0, 128
      %2272 = vxpose.xlu0.b32.end [16/16] 0.0, 128
      %v2273 = vpop.trf.xlu0
      %v2274 = vpop.trf.xlu0
      %v2275 = vpop.trf.xlu0
      %v2276 = vpop.trf.xlu0
      %v2277 = vpop.trf.xlu0
      %v2278 = vpop.trf.xlu0
      %v2279 = vpop.trf.xlu0
      %v2280 = vpop.trf.xlu0
      %v2281 = vpop.trf.xlu0
      %v2282 = vpop.trf.xlu0
      %v2283 = vpop.trf.xlu0
      %v2284 = vpop.trf.xlu0
      %v2285 = vpop.trf.xlu0
      %v2286 = vpop.trf.xlu0
      %v2287 = vpop.trf.xlu0
      %v2288 = vpop.trf.xlu0
      %v2289 = vmul.f32 %v1189, %v2273
      %v2291 = vsel %vm1230, %v2289, 0
      %2293 = vmatprep.subr.mxu0 0.0
      %2294 = vmatpush1.msra.mxu0 %v1241
      %2295 = vmatprep.subr.mxu0 0.0
      %2296 = vmatpush1.msra.mxu0 0.0
      %2297 = vmatprep.subr.mxu0 0.0
      %2298 = vmatpush1.msra.mxu0 0.0
      %2299 = vmatprep.subr.mxu0 0.0
      %2300 = vmatpush1.msra.mxu0 0.0
      %2301 = vmatprep.subr.mxu0 0.0
      %2302 = vmatpush1.msra.mxu0 0.0
      %2303 = vmatprep.subr.mxu0 0.0
      %2304 = vmatpush1.msra.mxu0 0.0
      %2305 = vmatprep.subr.mxu0 0.0
      %2306 = vmatpush1.msra.mxu0 0.0
      %2307 = vmatprep.subr.mxu0 0.0
      %2308 = vmatpush1.msra.mxu0 0.0
      %2309 = vmatprep.subr.mxu0 0.0
      %2310 = vmatpush1.msra.mxu0 0.0
      %2311 = vmatprep.subr.mxu0 0.0
      %2312 = vmatpush1.msra.mxu0 0.0
      %2313 = vmatprep.subr.mxu0 0.0
      %2314 = vmatpush1.msra.mxu0 0.0
      %2315 = vmatprep.subr.mxu0 0.0
      %2316 = vmatpush1.msra.mxu0 0.0
      %2317 = vmatprep.subr.mxu0 0.0
      %2318 = vmatpush1.msra.mxu0 0.0
      %2319 = vmatprep.subr.mxu0 0.0
      %2320 = vmatpush1.msra.mxu0 0.0
      %2321 = vmatprep.subr.mxu0 0.0
      %2322 = vmatpush1.msra.mxu0 0.0
      %2323 = vmatprep.subr.mxu0 0.0
      %2324 = vmatpush1.msra.mxu0 0.0
      %2325 = vmatprep.subr.mxu0 0.0
      %2326 = vmatpush1.msra.mxu0 0.0
      %2327 = vmatprep.subr.mxu0 0.0
      %2328 = vmatpush1.msra.mxu0 0.0
      %2329 = vmatprep.subr.mxu0 0.0
      %2330 = vmatpush1.msra.mxu0 0.0
      %2331 = vmatprep.subr.mxu0 0.0
      %2332 = vmatpush1.msra.mxu0 0.0
      %2333 = vmatprep.subr.mxu0 0.0
      %2334 = vmatpush1.msra.mxu0 0.0
      %2335 = vmatprep.subr.mxu0 0.0
      %2336 = vmatpush1.msra.mxu0 0.0
      %2337 = vmatprep.subr.mxu0 0.0
      %2338 = vmatpush1.msra.mxu0 0.0
      %2339 = vmatprep.subr.mxu0 0.0
      %2340 = vmatpush1.msra.mxu0 0.0
      %2341 = vmatprep.subr.mxu0 0.0
      %2342 = vmatpush1.msra.mxu0 0.0
      %2343 = vmatprep.subr.mxu0 0.0
      %2344 = vmatpush1.msra.mxu0 0.0
      %2345 = vmatprep.subr.mxu0 0.0
      %2346 = vmatpush1.msra.mxu0 0.0
      %2347 = vmatprep.subr.mxu0 0.0
      %2348 = vmatpush1.msra.mxu0 0.0
      %2349 = vmatprep.subr.mxu0 0.0
      %2350 = vmatpush1.msra.mxu0 0.0
      %2351 = vmatprep.subr.mxu0 0.0
      %2352 = vmatpush1.msra.mxu0 0.0
      %2353 = vmatprep.subr.mxu0 0.0
      %2354 = vmatpush1.msra.mxu0 0.0
      %2355 = vmatprep.subr.mxu0 0.0
      %2356 = vmatpush1.msra.mxu0 0.0
      %2357 = vmatprep.mubr.f32.mxu0 0.0
      %2358 = vmatmul.mubr.f32.gmra.mrb[0].mxu0 %v2291
      %v2359 = vpop.f32.mrb[0].mxu0
      %v2360 = vadd.f32 0.0, %v2359
      %v2361 = vpop.f32.mrb[0].mxu0
      %2362 = vdwg.mxu0
      %2364 = vrot.lane.b32.xlu0 %v2360, 124
      %v2365 = vpop.permute.xlu0 %2364
      %2367 = vrot.lane.b32.xlu0 %v2360, 120
      %v2368 = vpop.permute.xlu0 %2367
      %2370 = vrot.lane.b32.xlu0 %v2360, 116
      %v2371 = vpop.permute.xlu0 %2370
      %2373 = vrot.lane.b32.xlu0 %v2360, 112
      %v2374 = vpop.permute.xlu0 %2373
      %2376 = vrot.lane.b32.xlu0 %v2360, 108
      %v2377 = vpop.permute.xlu0 %2376
      %2379 = vrot.lane.b32.xlu0 %v2360, 104
      %v2380 = vpop.permute.xlu0 %2379
      %2382 = vrot.lane.b32.xlu0 %v2360, 100
      %v2383 = vpop.permute.xlu0 %2382
      %v2385 = vmul.f32 %v1190, %v2273
      %v2387 = vsel %vm1230, %v2385, 0
      %2389 = vmatprep.subr.mxu0 0.0
      %2390 = vmatpush1.msra.mxu0 %v1241
      %2391 = vmatprep.subr.mxu0 0.0
      %2392 = vmatpush1.msra.mxu0 0.0
      %2393 = vmatprep.subr.mxu0 0.0
      %2394 = vmatpush1.msra.mxu0 0.0
      %2395 = vmatprep.subr.mxu0 0.0
      %2396 = vmatpush1.msra.mxu0 0.0
      %2397 = vmatprep.subr.mxu0 0.0
      %2398 = vmatpush1.msra.mxu0 0.0
      %2399 = vmatprep.subr.mxu0 0.0
      %2400 = vmatpush1.msra.mxu0 0.0
      %2401 = vmatprep.subr.mxu0 0.0
      %2402 = vmatpush1.msra.mxu0 0.0
      %2403 = vmatprep.subr.mxu0 0.0
      %2404 = vmatpush1.msra.mxu0 0.0
      %2405 = vmatprep.subr.mxu0 0.0
      %2406 = vmatpush1.msra.mxu0 0.0
      %2407 = vmatprep.subr.mxu0 0.0
      %2408 = vmatpush1.msra.mxu0 0.0
      %2409 = vmatprep.subr.mxu0 0.0
      %2410 = vmatpush1.msra.mxu0 0.0
      %2411 = vmatprep.subr.mxu0 0.0
      %2412 = vmatpush1.msra.mxu0 0.0
      %2413 = vmatprep.subr.mxu0 0.0
      %2414 = vmatpush1.msra.mxu0 0.0
      %2415 = vmatprep.subr.mxu0 0.0
      %2416 = vmatpush1.msra.mxu0 0.0
      %2417 = vmatprep.subr.mxu0 0.0
      %2418 = vmatpush1.msra.mxu0 0.0
      %2419 = vmatprep.subr.mxu0 0.0
      %2420 = vmatpush1.msra.mxu0 0.0
      %2421 = vmatprep.subr.mxu0 0.0
      %2422 = vmatpush1.msra.mxu0 0.0
      %2423 = vmatprep.subr.mxu0 0.0
      %2424 = vmatpush1.msra.mxu0 0.0
      %2425 = vmatprep.subr.mxu0 0.0
      %2426 = vmatpush1.msra.mxu0 0.0
      %2427 = vmatprep.subr.mxu0 0.0
      %2428 = vmatpush1.msra.mxu0 0.0
      %2429 = vmatprep.subr.mxu0 0.0
      %2430 = vmatpush1.msra.mxu0 0.0
      %2431 = vmatprep.subr.mxu0 0.0
      %2432 = vmatpush1.msra.mxu0 0.0
      %2433 = vmatprep.subr.mxu0 0.0
      %2434 = vmatpush1.msra.mxu0 0.0
      %2435 = vmatprep.subr.mxu0 0.0
      %2436 = vmatpush1.msra.mxu0 0.0
      %2437 = vmatprep.subr.mxu0 0.0
      %2438 = vmatpush1.msra.mxu0 0.0
      %2439 = vmatprep.subr.mxu0 0.0
      %2440 = vmatpush1.msra.mxu0 0.0
      %2441 = vmatprep.subr.mxu0 0.0
      %2442 = vmatpush1.msra.mxu0 0.0
      %2443 = vmatprep.subr.mxu0 0.0
      %2444 = vmatpush1.msra.mxu0 0.0
      %2445 = vmatprep.subr.mxu0 0.0
      %2446 = vmatpush1.msra.mxu0 0.0
      %2447 = vmatprep.subr.mxu0 0.0
      %2448 = vmatpush1.msra.mxu0 0.0
      %2449 = vmatprep.subr.mxu0 0.0
      %2450 = vmatpush1.msra.mxu0 0.0
      %2451 = vmatprep.subr.mxu0 0.0
      %2452 = vmatpush1.msra.mxu0 0.0
      %2453 = vmatprep.mubr.f32.mxu0 0.0
      %2454 = vmatmul.mubr.f32.gmra.mrb[0].mxu0 %v2387
      %v2455 = vpop.f32.mrb[0].mxu0
      %v2456 = vadd.f32 0.0, %v2455
      %v2457 = vpop.f32.mrb[0].mxu0
      %2458 = vdwg.mxu0
      %2460 = vrot.lane.b32.xlu0 %v2456, 124
      %v2461 = vpop.permute.xlu0 %2460
      %2462 = vrot.lane.b32.xlu0 %v2456, 120
      %v2463 = vpop.permute.xlu0 %2462
      %2464 = vrot.lane.b32.xlu0 %v2456, 116
      %v2465 = vpop.permute.xlu0 %2464
      %2466 = vrot.lane.b32.xlu0 %v2456, 112
      %v2467 = vpop.permute.xlu0 %2466
      %2468 = vrot.lane.b32.xlu0 %v2456, 108
      %v2469 = vpop.permute.xlu0 %2468
      %2470 = vrot.lane.b32.xlu0 %v2456, 104
      %v2471 = vpop.permute.xlu0 %2470
      %2472 = vrot.lane.b32.xlu0 %v2456, 100
      %v2473 = vpop.permute.xlu0 %2472
      %v2474 = vmul.f32 %v1191, %v2273
      %v2476 = vsel %vm1230, %v2474, 0
      %2478 = vmatprep.subr.mxu0 0.0
      %2479 = vmatpush1.msra.mxu0 %v1241
      %2480 = vmatprep.subr.mxu0 0.0
      %2481 = vmatpush1.msra.mxu0 0.0
      %2482 = vmatprep.subr.mxu0 0.0
      %2483 = vmatpush1.msra.mxu0 0.0
      %2484 = vmatprep.subr.mxu0 0.0
      %2485 = vmatpush1.msra.mxu0 0.0
      %2486 = vmatprep.subr.mxu0 0.0
      %2487 = vmatpush1.msra.mxu0 0.0
      %2488 = vmatprep.subr.mxu0 0.0
      %2489 = vmatpush1.msra.mxu0 0.0
      %2490 = vmatprep.subr.mxu0 0.0
      %2491 = vmatpush1.msra.mxu0 0.0
      %2492 = vmatprep.subr.mxu0 0.0
      %2493 = vmatpush1.msra.mxu0 0.0
      %2494 = vmatprep.subr.mxu0 0.0
      %2495 = vmatpush1.msra.mxu0 0.0
      %2496 = vmatprep.subr.mxu0 0.0
      %2497 = vmatpush1.msra.mxu0 0.0
      %2498 = vmatprep.subr.mxu0 0.0
      %2499 = vmatpush1.msra.mxu0 0.0
      %2500 = vmatprep.subr.mxu0 0.0
      %2501 = vmatpush1.msra.mxu0 0.0
      %2502 = vmatprep.subr.mxu0 0.0
      %2503 = vmatpush1.msra.mxu0 0.0
      %2504 = vmatprep.subr.mxu0 0.0
      %2505 = vmatpush1.msra.mxu0 0.0
      %2506 = vmatprep.subr.mxu0 0.0
      %2507 = vmatpush1.msra.mxu0 0.0
      %2508 = vmatprep.subr.mxu0 0.0
      %2509 = vmatpush1.msra.mxu0 0.0
      %2510 = vmatprep.subr.mxu0 0.0
      %2511 = vmatpush1.msra.mxu0 0.0
      %2512 = vmatprep.subr.mxu0 0.0
      %2513 = vmatpush1.msra.mxu0 0.0
      %2514 = vmatprep.subr.mxu0 0.0
      %2515 = vmatpush1.msra.mxu0 0.0
      %2516 = vmatprep.subr.mxu0 0.0
      %2517 = vmatpush1.msra.mxu0 0.0
      %2518 = vmatprep.subr.mxu0 0.0
      %2519 = vmatpush1.msra.mxu0 0.0
      %2520 = vmatprep.subr.mxu0 0.0
      %2521 = vmatpush1.msra.mxu0 0.0
      %2522 = vmatprep.subr.mxu0 0.0
      %2523 = vmatpush1.msra.mxu0 0.0
      %2524 = vmatprep.subr.mxu0 0.0
      %2525 = vmatpush1.msra.mxu0 0.0
      %2526 = vmatprep.subr.mxu0 0.0
      %2527 = vmatpush1.msra.mxu0 0.0
      %2528 = vmatprep.subr.mxu0 0.0
      %2529 = vmatpush1.msra.mxu0 0.0
      %2530 = vmatprep.subr.mxu0 0.0
      %2531 = vmatpush1.msra.mxu0 0.0
      %2532 = vmatprep.subr.mxu0 0.0
      %2533 = vmatpush1.msra.mxu0 0.0
      %2534 = vmatprep.subr.mxu0 0.0
      %2535 = vmatpush1.msra.mxu0 0.0
      %2536 = vmatprep.subr.mxu0 0.0
      %2537 = vmatpush1.msra.mxu0 0.0
      %2538 = vmatprep.subr.mxu0 0.0
      %2539 = vmatpush1.msra.mxu0 0.0
      %2540 = vmatprep.subr.mxu0 0.0
      %2541 = vmatpush1.msra.mxu0 0.0
      %2542 = vmatprep.mubr.f32.mxu0 0.0
      %2543 = vmatmul.mubr.f32.gmra.mrb[0].mxu0 %v2476
      %v2544 = vpop.f32.mrb[0].mxu0
      %v2545 = vadd.f32 0.0, %v2544
      %v2546 = vpop.f32.mrb[0].mxu0
      %2547 = vdwg.mxu0
      %2549 = vrot.lane.b32.xlu0 %v2545, 124
      %v2550 = vpop.permute.xlu0 %2549
      %2551 = vrot.lane.b32.xlu0 %v2545, 120
      %v2552 = vpop.permute.xlu0 %2551
      %2553 = vrot.lane.b32.xlu0 %v2545, 116
      %v2554 = vpop.permute.xlu0 %2553
      %2555 = vrot.lane.b32.xlu0 %v2545, 112
      %v2556 = vpop.permute.xlu0 %2555
      %2557 = vrot.lane.b32.xlu0 %v2545, 108
      %v2558 = vpop.permute.xlu0 %2557
      %2559 = vrot.lane.b32.xlu0 %v2545, 104
      %v2560 = vpop.permute.xlu0 %2559
      %2561 = vrot.lane.b32.xlu0 %v2545, 100
      %v2562 = vpop.permute.xlu0 %2561
      %2563 = vrot.lane.b32.xlu0 %v2456, 4
      %v2564 = vpop.permute.xlu0 %2563
      %2565 = vrot.lane.b32.xlu0 %v2461, 4
      %v2566 = vpop.permute.xlu0 %2565
      %2567 = vrot.lane.b32.xlu0 %v2463, 4
      %v2568 = vpop.permute.xlu0 %2567
      %2569 = vrot.lane.b32.xlu0 %v2465, 4
      %v2570 = vpop.permute.xlu0 %2569
      %2571 = vrot.lane.b32.xlu0 %v2467, 4
      %v2572 = vpop.permute.xlu0 %2571
      %2573 = vrot.lane.b32.xlu0 %v2469, 4
      %v2574 = vpop.permute.xlu0 %2573
      %2575 = vrot.lane.b32.xlu0 %v2471, 4
      %v2576 = vpop.permute.xlu0 %2575
      %2577 = vrot.lane.b32.xlu0 %v2473, 4
      %v2578 = vpop.permute.xlu0 %2577
      %2587 = vrot.lane.b32.xlu0 %v2545, 8
      %v2588 = vpop.permute.xlu0 %2587
      %2589 = vrot.lane.b32.xlu0 %v2550, 8
      %v2590 = vpop.permute.xlu0 %2589
      %2591 = vrot.lane.b32.xlu0 %v2552, 8
      %v2592 = vpop.permute.xlu0 %2591
      %2593 = vrot.lane.b32.xlu0 %v2554, 8
      %v2594 = vpop.permute.xlu0 %2593
      %2595 = vrot.lane.b32.xlu0 %v2556, 8
      %v2596 = vpop.permute.xlu0 %2595
      %2597 = vrot.lane.b32.xlu0 %v2558, 8
      %v2598 = vpop.permute.xlu0 %2597
      %2599 = vrot.lane.b32.xlu0 %v2560, 8
      %v2600 = vpop.permute.xlu0 %2599
      %2601 = vrot.lane.b32.xlu0 %v2562, 8
      %v2602 = vpop.permute.xlu0 %2601
      %v2611 = vsel %vm1228, %v2360, %v2564
      %v2612 = vsel %vm1228, %v2365, %v2566
      %v2613 = vsel %vm1228, %v2368, %v2568
      %v2614 = vsel %vm1228, %v2371, %v2570
      %v2615 = vsel %vm1228, %v2374, %v2572
      %v2616 = vsel %vm1228, %v2377, %v2574
      %v2617 = vsel %vm1228, %v2380, %v2576
      %v2618 = vsel %vm1228, %v2383, %v2578
      %v2619 = vsel %vm1230, %v2611, %v2588
      %v2620 = vsel %vm1230, %v2612, %v2590
      %v2621 = vsel %vm1230, %v2613, %v2592
      %v2622 = vsel %vm1230, %v2614, %v2594
      %v2623 = vsel %vm1230, %v2615, %v2596
      %v2624 = vsel %vm1230, %v2616, %v2598
      %v2625 = vsel %vm1230, %v2617, %v2600
      %v2626 = vsel %vm1230, %v2618, %v2602
      %v2628 = vsel %vm1232, %v2619, 0
      %v2631 = vsel %vm1232, %v2620, 0
      %v2634 = vsel %vm1232, %v2621, 0
      %v2637 = vsel %vm1232, %v2622, 0
      %v2640 = vsel %vm1232, %v2623, 0
      %v2643 = vsel %vm1232, %v2624, 0
      %v2646 = vsel %vm1232, %v2625, 0
      %v2649 = vsel %vm1232, %v2626, 0
      %v2652 = vsel %vm1321, %v1193, 0
      %2654 = vmatprep.subr.mxu0 0.0
      %2655 = vmatpush1.msra.mxu0 %v1192
      %2656 = vmatprep.subr.mxu0 0.0
      %2657 = vmatpush1.msra.mxu0 %v2652
      %2658 = vmatprep.subr.mxu0 0.0
      %2659 = vmatpush1.msra.mxu0 0.0
      %2660 = vmatprep.subr.mxu0 0.0
      %2661 = vmatpush1.msra.mxu0 0.0
      %2662 = vmatprep.subr.mxu0 0.0
      %2663 = vmatpush1.msra.mxu0 0.0
      %2664 = vmatprep.subr.mxu0 0.0
      %2665 = vmatpush1.msra.mxu0 0.0
      %2666 = vmatprep.subr.mxu0 0.0
      %2667 = vmatpush1.msra.mxu0 0.0
      %2668 = vmatprep.subr.mxu0 0.0
      %2669 = vmatpush1.msra.mxu0 0.0
      %2670 = vmatprep.subr.mxu0 0.0
      %2671 = vmatpush1.msra.mxu0 0.0
      %2672 = vmatprep.subr.mxu0 0.0
      %2673 = vmatpush1.msra.mxu0 0.0
      %2674 = vmatprep.subr.mxu0 0.0
      %2675 = vmatpush1.msra.mxu0 0.0
      %2676 = vmatprep.subr.mxu0 0.0
      %2677 = vmatpush1.msra.mxu0 0.0
      %2678 = vmatprep.subr.mxu0 0.0
      %2679 = vmatpush1.msra.mxu0 0.0
      %2680 = vmatprep.subr.mxu0 0.0
      %2681 = vmatpush1.msra.mxu0 0.0
      %2682 = vmatprep.subr.mxu0 0.0
      %2683 = vmatpush1.msra.mxu0 0.0
      %2684 = vmatprep.subr.mxu0 0.0
      %2685 = vmatpush1.msra.mxu0 0.0
      %2686 = vmatprep.subr.mxu0 0.0
      %2687 = vmatpush1.msra.mxu0 0.0
      %2688 = vmatprep.subr.mxu0 0.0
      %2689 = vmatpush1.msra.mxu0 0.0
      %2690 = vmatprep.subr.mxu0 0.0
      %2691 = vmatpush1.msra.mxu0 0.0
      %2692 = vmatprep.subr.mxu0 0.0
      %2693 = vmatpush1.msra.mxu0 0.0
      %2694 = vmatprep.subr.mxu0 0.0
      %2695 = vmatpush1.msra.mxu0 0.0
      %2696 = vmatprep.subr.mxu0 0.0
      %2697 = vmatpush1.msra.mxu0 0.0
      %2698 = vmatprep.subr.mxu0 0.0
      %2699 = vmatpush1.msra.mxu0 0.0
      %2700 = vmatprep.subr.mxu0 0.0
      %2701 = vmatpush1.msra.mxu0 0.0
      %2702 = vmatprep.subr.mxu0 0.0
      %2703 = vmatpush1.msra.mxu0 0.0
      %2704 = vmatprep.subr.mxu0 0.0
      %2705 = vmatpush1.msra.mxu0 0.0
      %2706 = vmatprep.subr.mxu0 0.0
      %2707 = vmatpush1.msra.mxu0 0.0
      %2708 = vmatprep.subr.mxu0 0.0
      %2709 = vmatpush1.msra.mxu0 0.0
      %2710 = vmatprep.subr.mxu0 0.0
      %2711 = vmatpush1.msra.mxu0 0.0
      %2712 = vmatprep.subr.mxu0 0.0
      %2713 = vmatpush1.msra.mxu0 0.0
      %2714 = vmatprep.subr.mxu0 0.0
      %2715 = vmatpush1.msra.mxu0 0.0
      %2716 = vmatprep.subr.mxu0 0.0
      %2717 = vmatpush1.msra.mxu0 0.0
      %2718 = vmatprep.mubr.f32.mxu0 0.0
      %2719 = vmatmul.mubr.f32.gmra.mrb[0].mxu0 %v2628
      %v2720 = vpop.f32.mrb[0].mxu0
      %v2721 = vadd.f32 0.0, %v2720
      %v2722 = vpop.f32.mrb[0].mxu0
      %2723 = vmatprep.mubr.f32.mxu0 0.0
      %2724 = vmatmul.mubr.f32.gmra.mrb[0].mxu0 %v2631
      %v2725 = vpop.f32.mrb[0].mxu0
      %v2726 = vadd.f32 0.0, %v2725
      %v2727 = vpop.f32.mrb[0].mxu0
      %2728 = vmatprep.mubr.f32.mxu0 0.0
      %2729 = vmatmul.mubr.f32.gmra.mrb[0].mxu0 %v2634
      %v2730 = vpop.f32.mrb[0].mxu0
      %v2731 = vadd.f32 0.0, %v2730
      %v2732 = vpop.f32.mrb[0].mxu0
      %2733 = vmatprep.mubr.f32.mxu0 0.0
      %2734 = vmatmul.mubr.f32.gmra.mrb[0].mxu0 %v2637
      %v2735 = vpop.f32.mrb[0].mxu0
      %v2736 = vadd.f32 0.0, %v2735
      %v2737 = vpop.f32.mrb[0].mxu0
      %2738 = vmatprep.mubr.f32.mxu0 0.0
      %2739 = vmatmul.mubr.f32.gmra.mrb[0].mxu0 %v2640
      %v2740 = vpop.f32.mrb[0].mxu0
      %v2741 = vadd.f32 0.0, %v2740
      %v2742 = vpop.f32.mrb[0].mxu0
      %2743 = vmatprep.mubr.f32.mxu0 0.0
      %2744 = vmatmul.mubr.f32.gmra.mrb[0].mxu0 %v2643
      %v2745 = vpop.f32.mrb[0].mxu0
      %v2746 = vadd.f32 0.0, %v2745
      %v2747 = vpop.f32.mrb[0].mxu0
      %2748 = vmatprep.mubr.f32.mxu0 0.0
      %2749 = vmatmul.mubr.f32.gmra.mrb[0].mxu0 %v2646
      %v2750 = vpop.f32.mrb[0].mxu0
      %v2751 = vadd.f32 0.0, %v2750
      %v2752 = vpop.f32.mrb[0].mxu0
      %2753 = vmatprep.mubr.f32.mxu0 0.0
      %2754 = vmatmul.mubr.f32.gmra.mrb[0].mxu0 %v2649
      %v2755 = vpop.f32.mrb[0].mxu0
      %v2756 = vadd.f32 0.0, %v2755
      %v2757 = vpop.f32.mrb[0].mxu0
      %2758 = vdwg.mxu0
      %v2759 = vmax.f32 %v2721, 0.0
      %v2760 = vmax.f32 %v2726, 0.0
      %v2761 = vmax.f32 %v2731, 0.0
      %v2762 = vmax.f32 %v2736, 0.0
      %v2763 = vmax.f32 %v2741, 0.0
      %v2764 = vmax.f32 %v2746, 0.0
      %v2765 = vmax.f32 %v2751, 0.0
      %v2766 = vmax.f32 %v2756, 0.0
      %v2767 = vld [vmem:[%s29] sm:$0x1]
      %v2769 = vsel %vm1234, 0.0, 0
      %v2772 = vsel %vm1234, %v2759, 0
      %v2775 = vsel %vm1234, %v2760, 0
      %v2778 = vsel %vm1234, %v2761, 0
      %v2781 = vsel %vm1234, %v2762, 0
      %v2784 = vsel %vm1234, %v2763, 0
      %v2787 = vsel %vm1234, %v2764, 0
      %v2790 = vsel %vm1234, %v2765, 0
      %2792 = vmatprep.subr.mxu0 0.0
      %2793 = vmatpush1.msra.mxu0 %v1194
      %2794 = vmatprep.subr.mxu0 0.0
      %2795 = vmatpush1.msra.mxu0 %v1195
      %2796 = vmatprep.subr.mxu0 0.0
      %2797 = vmatpush1.msra.mxu0 0.0
      %2798 = vmatprep.subr.mxu0 0.0
      %2799 = vmatpush1.msra.mxu0 0.0
      %2800 = vmatprep.subr.mxu0 0.0
      %2801 = vmatpush1.msra.mxu0 0.0
      %2802 = vmatprep.subr.mxu0 0.0
      %2803 = vmatpush1.msra.mxu0 0.0
      %2804 = vmatprep.subr.mxu0 0.0
      %2805 = vmatpush1.msra.mxu0 0.0
      %2806 = vmatprep.subr.mxu0 0.0
      %2807 = vmatpush1.msra.mxu0 0.0
      %2808 = vmatprep.subr.mxu0 0.0
      %2809 = vmatpush1.msra.mxu0 0.0
      %2810 = vmatprep.subr.mxu0 0.0
      %2811 = vmatpush1.msra.mxu0 0.0
      %2812 = vmatprep.subr.mxu0 0.0
      %2813 = vmatpush1.msra.mxu0 0.0
      %2814 = vmatprep.subr.mxu0 0.0
      %2815 = vmatpush1.msra.mxu0 0.0
      %2816 = vmatprep.subr.mxu0 0.0
      %2817 = vmatpush1.msra.mxu0 0.0
      %2818 = vmatprep.subr.mxu0 0.0
      %2819 = vmatpush1.msra.mxu0 0.0
      %2820 = vmatprep.subr.mxu0 0.0
      %2821 = vmatpush1.msra.mxu0 0.0
      %2822 = vmatprep.subr.mxu0 0.0
      %2823 = vmatpush1.msra.mxu0 0.0
      %2824 = vmatprep.subr.mxu0 0.0
      %2825 = vmatpush1.msra.mxu0 0.0
      %2826 = vmatprep.subr.mxu0 0.0
      %2827 = vmatpush1.msra.mxu0 0.0
      %2828 = vmatprep.subr.mxu0 0.0
      %2829 = vmatpush1.msra.mxu0 0.0
      %2830 = vmatprep.subr.mxu0 0.0
      %2831 = vmatpush1.msra.mxu0 0.0
      %2832 = vmatprep.subr.mxu0 0.0
      %2833 = vmatpush1.msra.mxu0 0.0
      %2834 = vmatprep.subr.mxu0 0.0
      %2835 = vmatpush1.msra.mxu0 0.0
      %2836 = vmatprep.subr.mxu0 0.0
      %2837 = vmatpush1.msra.mxu0 0.0
      %2838 = vmatprep.subr.mxu0 0.0
      %2839 = vmatpush1.msra.mxu0 0.0
      %2840 = vmatprep.subr.mxu0 0.0
      %2841 = vmatpush1.msra.mxu0 0.0
      %2842 = vmatprep.subr.mxu0 0.0
      %2843 = vmatpush1.msra.mxu0 0.0
      %2844 = vmatprep.subr.mxu0 0.0
      %2845 = vmatpush1.msra.mxu0 0.0
      %2846 = vmatprep.subr.mxu0 0.0
      %2847 = vmatpush1.msra.mxu0 0.0
      %2848 = vmatprep.subr.mxu0 0.0
      %2849 = vmatpush1.msra.mxu0 0.0
      %2850 = vmatprep.subr.mxu0 0.0
      %2851 = vmatpush1.msra.mxu0 0.0
      %2852 = vmatprep.subr.mxu0 0.0
      %2853 = vmatpush1.msra.mxu0 0.0
      %2854 = vmatprep.subr.mxu0 0.0
      %2855 = vmatpush1.msra.mxu0 0.0
      %2856 = vmatprep.mubr.f32.mxu0 0.0
      %2857 = vmatmul.mubr.f32.gmra.mrb[0].mxu0 %v2769
      %v2858 = vpop.f32.mrb[0].mxu0
      %v2859 = vadd.f32 0.0, %v2858
      %v2860 = vpop.f32.mrb[0].mxu0
      %2861 = vmatprep.mubr.f32.mxu0 0.0
      %2862 = vmatmul.mubr.f32.gmra.mrb[0].mxu0 %v2772
      %v2863 = vpop.f32.mrb[0].mxu0
      %v2864 = vadd.f32 0.0, %v2863
      %v2865 = vpop.f32.mrb[0].mxu0
      %2866 = vmatprep.mubr.f32.mxu0 0.0
      %2867 = vmatmul.mubr.f32.gmra.mrb[0].mxu0 %v2775
      %v2868 = vpop.f32.mrb[0].mxu0
      %v2869 = vadd.f32 0.0, %v2868
      %v2870 = vpop.f32.mrb[0].mxu0
      %2871 = vmatprep.mubr.f32.mxu0 0.0
      %2872 = vmatmul.mubr.f32.gmra.mrb[0].mxu0 %v2778
      %v2873 = vpop.f32.mrb[0].mxu0
      %v2874 = vadd.f32 0.0, %v2873
      %v2875 = vpop.f32.mrb[0].mxu0
      %2876 = vmatprep.mubr.f32.mxu0 0.0
      %2877 = vmatmul.mubr.f32.gmra.mrb[0].mxu0 %v2781
      %v2878 = vpop.f32.mrb[0].mxu0
      %v2879 = vadd.f32 0.0, %v2878
      %v2880 = vpop.f32.mrb[0].mxu0
      %2881 = vmatprep.mubr.f32.mxu0 0.0
      %2882 = vmatmul.mubr.f32.gmra.mrb[0].mxu0 %v2784
      %v2883 = vpop.f32.mrb[0].mxu0
      %v2884 = vadd.f32 0.0, %v2883
      %v2885 = vpop.f32.mrb[0].mxu0
      %2886 = vmatprep.mubr.f32.mxu0 0.0
      %2887 = vmatmul.mubr.f32.gmra.mrb[0].mxu0 %v2787
      %v2888 = vpop.f32.mrb[0].mxu0
      %v2889 = vadd.f32 0.0, %v2888
      %v2890 = vpop.f32.mrb[0].mxu0
      %2891 = vmatprep.mubr.f32.mxu0 0.0
      %2892 = vmatmul.mubr.f32.gmra.mrb[0].mxu0 %v2790
      %v2893 = vpop.f32.mrb[0].mxu0
      %v2894 = vadd.f32 0.0, %v2893
      %v2895 = vpop.f32.mrb[0].mxu0
      %2896 = vdwg.mxu0
      %v2898 = vlaneseq
      %v2899 = vshrl.u32 %v2898, 7
      %v2900 = vsub.s32 0, %v2899
      %v2901 = vrot.slane %v2767, %v2900
      %v2903 = vadd.f32 %v2901, %v2859
      %v2904 = vadd.f32 %v2901, %v2864
      %v2905 = vadd.f32 %v2901, %v2869
      %v2906 = vadd.f32 %v2901, %v2874
      %v2907 = vadd.f32 %v2901, %v2879
      %v2908 = vadd.f32 %v2901, %v2884
      %v2909 = vadd.f32 %v2901, %v2889
      %v2910 = vadd.f32 %v2901, %v2894
      %v2912 = vsel %vm1234, %v2766, 0
      %2914 = vmatprep.subr.mxu0 0.0
      %2915 = vmatpush1.msra.mxu0 %v1196
      %2916 = vmatprep.subr.mxu0 0.0
      %2917 = vmatpush1.msra.mxu0 %v1197
      %2918 = vmatprep.subr.mxu0 0.0
      %2919 = vmatpush1.msra.mxu0 0.0
      %2920 = vmatprep.subr.mxu0 0.0
      %2921 = vmatpush1.msra.mxu0 0.0
      %2922 = vmatprep.subr.mxu0 0.0
      %2923 = vmatpush1.msra.mxu0 0.0
      %2924 = vmatprep.subr.mxu0 0.0
      %2925 = vmatpush1.msra.mxu0 0.0
      %2926 = vmatprep.subr.mxu0 0.0
      %2927 = vmatpush1.msra.mxu0 0.0
      %2928 = vmatprep.subr.mxu0 0.0
      %2929 = vmatpush1.msra.mxu0 0.0
      %2930 = vmatprep.subr.mxu0 0.0
      %2931 = vmatpush1.msra.mxu0 0.0
      %2932 = vmatprep.subr.mxu0 0.0
      %2933 = vmatpush1.msra.mxu0 0.0
      %2934 = vmatprep.subr.mxu0 0.0
      %2935 = vmatpush1.msra.mxu0 0.0
      %2936 = vmatprep.subr.mxu0 0.0
      %2937 = vmatpush1.msra.mxu0 0.0
      %2938 = vmatprep.subr.mxu0 0.0
      %2939 = vmatpush1.msra.mxu0 0.0
      %2940 = vmatprep.subr.mxu0 0.0
      %2941 = vmatpush1.msra.mxu0 0.0
      %2942 = vmatprep.subr.mxu0 0.0
      %2943 = vmatpush1.msra.mxu0 0.0
      %2944 = vmatprep.subr.mxu0 0.0
      %2945 = vmatpush1.msra.mxu0 0.0
      %2946 = vmatprep.subr.mxu0 0.0
      %2947 = vmatpush1.msra.mxu0 0.0
      %2948 = vmatprep.subr.mxu0 0.0
      %2949 = vmatpush1.msra.mxu0 0.0
      %2950 = vmatprep.subr.mxu0 0.0
      %2951 = vmatpush1.msra.mxu0 0.0
      %2952 = vmatprep.subr.mxu0 0.0
      %2953 = vmatpush1.msra.mxu0 0.0
      %2954 = vmatprep.subr.mxu0 0.0
      %2955 = vmatpush1.msra.mxu0 0.0
      %2956 = vmatprep.subr.mxu0 0.0
      %2957 = vmatpush1.msra.mxu0 0.0
      %2958 = vmatprep.subr.mxu0 0.0
      %2959 = vmatpush1.msra.mxu0 0.0
      %2960 = vmatprep.subr.mxu0 0.0
      %2961 = vmatpush1.msra.mxu0 0.0
      %2962 = vmatprep.subr.mxu0 0.0
      %2963 = vmatpush1.msra.mxu0 0.0
      %2964 = vmatprep.subr.mxu0 0.0
      %2965 = vmatpush1.msra.mxu0 0.0
      %2966 = vmatprep.subr.mxu0 0.0
      %2967 = vmatpush1.msra.mxu0 0.0
      %2968 = vmatprep.subr.mxu0 0.0
      %2969 = vmatpush1.msra.mxu0 0.0
      %2970 = vmatprep.subr.mxu0 0.0
      %2971 = vmatpush1.msra.mxu0 0.0
      %2972 = vmatprep.subr.mxu0 0.0
      %2973 = vmatpush1.msra.mxu0 0.0
      %2974 = vmatprep.subr.mxu0 0.0
      %2975 = vmatpush1.msra.mxu0 0.0
      %2976 = vmatprep.subr.mxu0 0.0
      %2977 = vmatpush1.msra.mxu0 0.0
      %2978 = vmatprep.mubr.f32.mxu0 0.0
      %2979 = vmatmul.mubr.f32.gmra.mrb[0].mxu0 %v2772
      %v2980 = vpop.f32.mrb[0].mxu0
      %v2981 = vadd.f32 0.0, %v2980
      %v2982 = vpop.f32.mrb[0].mxu0
      %2983 = vmatprep.mubr.f32.mxu0 0.0
      %2984 = vmatmul.mubr.f32.gmra.mrb[0].mxu0 %v2775
      %v2985 = vpop.f32.mrb[0].mxu0
      %v2986 = vadd.f32 0.0, %v2985
      %v2987 = vpop.f32.mrb[0].mxu0
      %2988 = vmatprep.mubr.f32.mxu0 0.0
      %2989 = vmatmul.mubr.f32.gmra.mrb[0].mxu0 %v2778
      %v2990 = vpop.f32.mrb[0].mxu0
      %v2991 = vadd.f32 0.0, %v2990
      %v2992 = vpop.f32.mrb[0].mxu0
      %2993 = vmatprep.mubr.f32.mxu0 0.0
      %2994 = vmatmul.mubr.f32.gmra.mrb[0].mxu0 %v2781
      %v2995 = vpop.f32.mrb[0].mxu0
      %v2996 = vadd.f32 0.0, %v2995
      %v2997 = vpop.f32.mrb[0].mxu0
      %2998 = vmatprep.mubr.f32.mxu0 0.0
      %2999 = vmatmul.mubr.f32.gmra.mrb[0].mxu0 %v2784
      %v3000 = vpop.f32.mrb[0].mxu0
      %v3001 = vadd.f32 0.0, %v3000
      %v3002 = vpop.f32.mrb[0].mxu0
      %3003 = vmatprep.mubr.f32.mxu0 0.0
      %3004 = vmatmul.mubr.f32.gmra.mrb[0].mxu0 %v2787
      %v3005 = vpop.f32.mrb[0].mxu0
      %v3006 = vadd.f32 0.0, %v3005
      %v3007 = vpop.f32.mrb[0].mxu0
      %3008 = vmatprep.mubr.f32.mxu0 0.0
      %3009 = vmatmul.mubr.f32.gmra.mrb[0].mxu0 %v2790
      %v3010 = vpop.f32.mrb[0].mxu0
      %v3011 = vadd.f32 0.0, %v3010
      %v3012 = vpop.f32.mrb[0].mxu0
      %3013 = vmatprep.mubr.f32.mxu0 0.0
      %3014 = vmatmul.mubr.f32.gmra.mrb[0].mxu0 %v2912
      %v3015 = vpop.f32.mrb[0].mxu0
      %v3016 = vadd.f32 0.0, %v3015
      %v3017 = vpop.f32.mrb[0].mxu0
      %3018 = vdwg.mxu0
      %v3019 = vadd.f32 %v2903, %v2981
      %v3020 = vadd.f32 %v2904, %v2986
      %v3021 = vadd.f32 %v2905, %v2991
      %v3022 = vadd.f32 %v2906, %v2996
      %v3023 = vadd.f32 %v2907, %v3001
      %v3024 = vadd.f32 %v2908, %v3006
      %v3025 = vadd.f32 %v2909, %v3011
      %v3026 = vadd.f32 %v2910, %v3016
      %3027 = vmatprep.subr.mxu0 0.0
      %3028 = vmatpush1.msra.mxu0 %v1198
      %3029 = vmatprep.subr.mxu0 0.0
      %3030 = vmatpush1.msra.mxu0 %v1199
      %3031 = vmatprep.subr.mxu0 0.0
      %3032 = vmatpush1.msra.mxu0 0.0
      %3033 = vmatprep.subr.mxu0 0.0
      %3034 = vmatpush1.msra.mxu0 0.0
      %3035 = vmatprep.subr.mxu0 0.0
      %3036 = vmatpush1.msra.mxu0 0.0
      %3037 = vmatprep.subr.mxu0 0.0
      %3038 = vmatpush1.msra.mxu0 0.0
      %3039 = vmatprep.subr.mxu0 0.0
      %3040 = vmatpush1.msra.mxu0 0.0
      %3041 = vmatprep.subr.mxu0 0.0
      %3042 = vmatpush1.msra.mxu0 0.0
      %3043 = vmatprep.subr.mxu0 0.0
      %3044 = vmatpush1.msra.mxu0 0.0
      %3045 = vmatprep.subr.mxu0 0.0
      %3046 = vmatpush1.msra.mxu0 0.0
      %3047 = vmatprep.subr.mxu0 0.0
      %3048 = vmatpush1.msra.mxu0 0.0
      %3049 = vmatprep.subr.mxu0 0.0
      %3050 = vmatpush1.msra.mxu0 0.0
      %3051 = vmatprep.subr.mxu0 0.0
      %3052 = vmatpush1.msra.mxu0 0.0
      %3053 = vmatprep.subr.mxu0 0.0
      %3054 = vmatpush1.msra.mxu0 0.0
      %3055 = vmatprep.subr.mxu0 0.0
      %3056 = vmatpush1.msra.mxu0 0.0
      %3057 = vmatprep.subr.mxu0 0.0
      %3058 = vmatpush1.msra.mxu0 0.0
      %3059 = vmatprep.subr.mxu0 0.0
      %3060 = vmatpush1.msra.mxu0 0.0
      %3061 = vmatprep.subr.mxu0 0.0
      %3062 = vmatpush1.msra.mxu0 0.0
      %3063 = vmatprep.subr.mxu0 0.0
      %3064 = vmatpush1.msra.mxu0 0.0
      %3065 = vmatprep.subr.mxu0 0.0
      %3066 = vmatpush1.msra.mxu0 0.0
      %3067 = vmatprep.subr.mxu0 0.0
      %3068 = vmatpush1.msra.mxu0 0.0
      %3069 = vmatprep.subr.mxu0 0.0
      %3070 = vmatpush1.msra.mxu0 0.0
      %3071 = vmatprep.subr.mxu0 0.0
      %3072 = vmatpush1.msra.mxu0 0.0
      %3073 = vmatprep.subr.mxu0 0.0
      %3074 = vmatpush1.msra.mxu0 0.0
      %3075 = vmatprep.subr.mxu0 0.0
      %3076 = vmatpush1.msra.mxu0 0.0
      %3077 = vmatprep.subr.mxu0 0.0
      %3078 = vmatpush1.msra.mxu0 0.0
      %3079 = vmatprep.subr.mxu0 0.0
      %3080 = vmatpush1.msra.mxu0 0.0
      %3081 = vmatprep.subr.mxu0 0.0
      %3082 = vmatpush1.msra.mxu0 0.0
      %3083 = vmatprep.subr.mxu0 0.0
      %3084 = vmatpush1.msra.mxu0 0.0
      %3085 = vmatprep.subr.mxu0 0.0
      %3086 = vmatpush1.msra.mxu0 0.0
      %3087 = vmatprep.subr.mxu0 0.0
      %3088 = vmatpush1.msra.mxu0 0.0
      %3089 = vmatprep.subr.mxu0 0.0
      %3090 = vmatpush1.msra.mxu0 0.0
      %3091 = vmatprep.mubr.f32.mxu0 0.0
      %3092 = vmatmul.mubr.f32.gmra.mrb[0].mxu0 %v2775
      %v3093 = vpop.f32.mrb[0].mxu0
      %v3094 = vadd.f32 0.0, %v3093
      %v3095 = vpop.f32.mrb[0].mxu0
      %3096 = vmatprep.mubr.f32.mxu0 0.0
      %3097 = vmatmul.mubr.f32.gmra.mrb[0].mxu0 %v2778
      %v3098 = vpop.f32.mrb[0].mxu0
      %v3099 = vadd.f32 0.0, %v3098
      %v3100 = vpop.f32.mrb[0].mxu0
      %3101 = vmatprep.mubr.f32.mxu0 0.0
      %3102 = vmatmul.mubr.f32.gmra.mrb[0].mxu0 %v2781
      %v3103 = vpop.f32.mrb[0].mxu0
      %v3104 = vadd.f32 0.0, %v3103
      %v3105 = vpop.f32.mrb[0].mxu0
      %3106 = vmatprep.mubr.f32.mxu0 0.0
      %3107 = vmatmul.mubr.f32.gmra.mrb[0].mxu0 %v2784
      %v3108 = vpop.f32.mrb[0].mxu0
      %v3109 = vadd.f32 0.0, %v3108
      %v3110 = vpop.f32.mrb[0].mxu0
      %3111 = vmatprep.mubr.f32.mxu0 0.0
      %3112 = vmatmul.mubr.f32.gmra.mrb[0].mxu0 %v2787
      %v3113 = vpop.f32.mrb[0].mxu0
      %v3114 = vadd.f32 0.0, %v3113
      %v3115 = vpop.f32.mrb[0].mxu0
      %3116 = vmatprep.mubr.f32.mxu0 0.0
      %3117 = vmatmul.mubr.f32.gmra.mrb[0].mxu0 %v2790
      %v3118 = vpop.f32.mrb[0].mxu0
      %v3119 = vadd.f32 0.0, %v3118
      %v3120 = vpop.f32.mrb[0].mxu0
      %3121 = vmatprep.mubr.f32.mxu0 0.0
      %3122 = vmatmul.mubr.f32.gmra.mrb[0].mxu0 %v2912
      %v3123 = vpop.f32.mrb[0].mxu0
      %v3124 = vadd.f32 0.0, %v3123
      %v3125 = vpop.f32.mrb[0].mxu0
      %3126 = vmatprep.mubr.f32.mxu0 0.0
      %3127 = vmatmul.mubr.f32.gmra.mrb[0].mxu0 %v2769
      %v3128 = vpop.f32.mrb[0].mxu0
      %v3129 = vadd.f32 0.0, %v3128
      %v3130 = vpop.f32.mrb[0].mxu0
      %3131 = vdwg.mxu0
      %v3132 = vadd.f32 %v3019, %v3094
      %v3133 = vadd.f32 %v3020, %v3099
      %v3134 = vadd.f32 %v3021, %v3104
      %v3135 = vadd.f32 %v3022, %v3109
      %v3136 = vadd.f32 %v3023, %v3114
      %v3137 = vadd.f32 %v3024, %v3119
      %v3138 = vadd.f32 %v3025, %v3124
      %v3139 = vadd.f32 %v3026, %v3129
      %v3140 = vld [vmem:[%s31] sm:$0xf]
      %v3141 = vld [vmem:[%s33] sm:$0x1]
      %v3143 = vlaneseq
      %v3144 = vshrl.u32 %v3143, 7
      %v3145 = vsub.s32 0, %v3144
      %v3146 = vrot.slane %v3141, %v3145
      %v3149 = vsel %vm1228, %v1181, 0
      %v3151 = vsel %vm1228, %v1182, 0
      %v3153 = vsel %vm1228, %v1183, 0
      %v3155 = vsel %vm1228, %v1184, 0
      %v3157 = vsel %vm1228, %v1185, 0
      %v3159 = vsel %vm1228, %v1186, 0
      %v3161 = vsel %vm1228, %v1187, 0
      %v3163 = vsel %vm1228, %v1188, 0
      %v3166 = vsel %vm1321, %v3140, 0
      %3168 = vmatprep.subr.mxu0 0.0
      %3169 = vmatpush1.msra.mxu0 %v3166
      %3170 = vmatprep.subr.mxu0 0.0
      %3171 = vmatpush1.msra.mxu0 0.0
      %3172 = vmatprep.subr.mxu0 0.0
      %3173 = vmatpush1.msra.mxu0 0.0
      %3174 = vmatprep.subr.mxu0 0.0
      %3175 = vmatpush1.msra.mxu0 0.0
      %3176 = vmatprep.subr.mxu0 0.0
      %3177 = vmatpush1.msra.mxu0 0.0
      %3178 = vmatprep.subr.mxu0 0.0
      %3179 = vmatpush1.msra.mxu0 0.0
      %3180 = vmatprep.subr.mxu0 0.0
      %3181 = vmatpush1.msra.mxu0 0.0
      %3182 = vmatprep.subr.mxu0 0.0
      %3183 = vmatpush1.msra.mxu0 0.0
      %3184 = vmatprep.subr.mxu0 0.0
      %3185 = vmatpush1.msra.mxu0 0.0
      %3186 = vmatprep.subr.mxu0 0.0
      %3187 = vmatpush1.msra.mxu0 0.0
      %3188 = vmatprep.subr.mxu0 0.0
      %3189 = vmatpush1.msra.mxu0 0.0
      %3190 = vmatprep.subr.mxu0 0.0
      %3191 = vmatpush1.msra.mxu0 0.0
      %3192 = vmatprep.subr.mxu0 0.0
      %3193 = vmatpush1.msra.mxu0 0.0
      %3194 = vmatprep.subr.mxu0 0.0
      %3195 = vmatpush1.msra.mxu0 0.0
      %3196 = vmatprep.subr.mxu0 0.0
      %3197 = vmatpush1.msra.mxu0 0.0
      %3198 = vmatprep.subr.mxu0 0.0
      %3199 = vmatpush1.msra.mxu0 0.0
      %3200 = vmatprep.subr.mxu0 0.0
      %3201 = vmatpush1.msra.mxu0 0.0
      %3202 = vmatprep.subr.mxu0 0.0
      %3203 = vmatpush1.msra.mxu0 0.0
      %3204 = vmatprep.subr.mxu0 0.0
      %3205 = vmatpush1.msra.mxu0 0.0
      %3206 = vmatprep.subr.mxu0 0.0
      %3207 = vmatpush1.msra.mxu0 0.0
      %3208 = vmatprep.subr.mxu0 0.0
      %3209 = vmatpush1.msra.mxu0 0.0
      %3210 = vmatprep.subr.mxu0 0.0
      %3211 = vmatpush1.msra.mxu0 0.0
      %3212 = vmatprep.subr.mxu0 0.0
      %3213 = vmatpush1.msra.mxu0 0.0
      %3214 = vmatprep.subr.mxu0 0.0
      %3215 = vmatpush1.msra.mxu0 0.0
      %3216 = vmatprep.subr.mxu0 0.0
      %3217 = vmatpush1.msra.mxu0 0.0
      %3218 = vmatprep.subr.mxu0 0.0
      %3219 = vmatpush1.msra.mxu0 0.0
      %3220 = vmatprep.subr.mxu0 0.0
      %3221 = vmatpush1.msra.mxu0 0.0
      %3222 = vmatprep.subr.mxu0 0.0
      %3223 = vmatpush1.msra.mxu0 0.0
      %3224 = vmatprep.subr.mxu0 0.0
      %3225 = vmatpush1.msra.mxu0 0.0
      %3226 = vmatprep.subr.mxu0 0.0
      %3227 = vmatpush1.msra.mxu0 0.0
      %3228 = vmatprep.subr.mxu0 0.0
      %3229 = vmatpush1.msra.mxu0 0.0
      %3230 = vmatprep.subr.mxu0 0.0
      %3231 = vmatpush1.msra.mxu0 0.0
      %3232 = vmatprep.mubr.f32.mxu0 0.0
      %3233 = vmatmul.mubr.f32.gmra.mrb[0].mxu0 %v3149
      %v3234 = vpop.f32.mrb[0].mxu0
      %v3235 = vadd.f32 %v3146, %v3234
      %v3236 = vpop.f32.mrb[0].mxu0
      %3237 = vmatprep.mubr.f32.mxu0 0.0
      %3238 = vmatmul.mubr.f32.gmra.mrb[0].mxu0 %v3151
      %v3239 = vpop.f32.mrb[0].mxu0
      %v3240 = vadd.f32 %v3146, %v3239
      %v3241 = vpop.f32.mrb[0].mxu0
      %3242 = vmatprep.mubr.f32.mxu0 0.0
      %3243 = vmatmul.mubr.f32.gmra.mrb[0].mxu0 %v3153
      %v3244 = vpop.f32.mrb[0].mxu0
      %v3245 = vadd.f32 %v3146, %v3244
      %v3246 = vpop.f32.mrb[0].mxu0
      %3247 = vmatprep.mubr.f32.mxu0 0.0
      %3248 = vmatmul.mubr.f32.gmra.mrb[0].mxu0 %v3155
      %v3249 = vpop.f32.mrb[0].mxu0
      %v3250 = vadd.f32 %v3146, %v3249
      %v3251 = vpop.f32.mrb[0].mxu0
      %3252 = vmatprep.mubr.f32.mxu0 0.0
      %3253 = vmatmul.mubr.f32.gmra.mrb[0].mxu0 %v3157
      %v3254 = vpop.f32.mrb[0].mxu0
      %v3255 = vadd.f32 %v3146, %v3254
      %v3256 = vpop.f32.mrb[0].mxu0
      %3257 = vmatprep.mubr.f32.mxu0 0.0
      %3258 = vmatmul.mubr.f32.gmra.mrb[0].mxu0 %v3159
      %v3259 = vpop.f32.mrb[0].mxu0
      %v3260 = vadd.f32 %v3146, %v3259
      %v3261 = vpop.f32.mrb[0].mxu0
      %3262 = vmatprep.mubr.f32.mxu0 0.0
      %3263 = vmatmul.mubr.f32.gmra.mrb[0].mxu0 %v3161
      %v3264 = vpop.f32.mrb[0].mxu0
      %v3265 = vadd.f32 %v3146, %v3264
      %v3266 = vpop.f32.mrb[0].mxu0
      %3267 = vmatprep.mubr.f32.mxu0 0.0
      %3268 = vmatmul.mubr.f32.gmra.mrb[0].mxu0 %v3163
      %v3269 = vpop.f32.mrb[0].mxu0
      %v3270 = vadd.f32 %v3146, %v3269
      %v3271 = vpop.f32.mrb[0].mxu0
      %3272 = vdwg.mxu0
      %v3273 = vadd.f32 %v3235, %v3132
      %v3274 = vadd.f32 %v3240, %v3133
      %v3275 = vadd.f32 %v3245, %v3134
      %v3276 = vadd.f32 %v3250, %v3135
      %v3277 = vadd.f32 %v3255, %v3136
      %v3278 = vadd.f32 %v3260, %v3137
      %v3279 = vadd.f32 %v3265, %v3138
      %v3280 = vadd.f32 %v3270, %v3139
      %v3281 = vmax.f32 %v3273, 0.0
      %v3282 = vmax.f32 %v3274, 0.0
      %v3283 = vmax.f32 %v3275, 0.0
      %v3284 = vmax.f32 %v3276, 0.0
      %v3285 = vmax.f32 %v3277, 0.0
      %v3286 = vmax.f32 %v3278, 0.0
      %v3287 = vmax.f32 %v3279, 0.0
      %v3288 = vmax.f32 %v3280, 0.0
      %v3289 = vsel %vm1234, %v3281, 0.0
      %3290 = vadd.xlane.f32.xlu0 %v3289
      %v3291 = vpop.xlane.xlu0 %3290
      %v3292 = vsel %vm1234, %v3282, 0.0
      %3293 = vadd.xlane.f32.xlu0 %v3292
      %v3294 = vpop.xlane.xlu0 %3293
      %v3295 = vsel %vm1234, %v3283, 0.0
      %3296 = vadd.xlane.f32.xlu0 %v3295
      %v3297 = vpop.xlane.xlu0 %3296
      %v3298 = vsel %vm1234, %v3284, 0.0
      %3299 = vadd.xlane.f32.xlu0 %v3298
      %v3300 = vpop.xlane.xlu0 %3299
      %v3301 = vsel %vm1234, %v3285, 0.0
      %3302 = vadd.xlane.f32.xlu0 %v3301
      %v3303 = vpop.xlane.xlu0 %3302
      %v3304 = vsel %vm1234, %v3286, 0.0
      %3305 = vadd.xlane.f32.xlu0 %v3304
      %v3306 = vpop.xlane.xlu0 %3305
      %v3307 = vsel %vm1234, %v3287, 0.0
      %3308 = vadd.xlane.f32.xlu0 %v3307
      %v3309 = vpop.xlane.xlu0 %3308
      %v3310 = vsel %vm1234, %v3288, 0.0
      %3311 = vadd.xlane.f32.xlu0 %v3310
      %v3312 = vpop.xlane.xlu0 %3311
      %v3313 = vrcp.pop 16.0
      %v3314 = vmul.f32 %v3291, %v3313
      %v3315 = vmul.f32 %v3294, %v3313
      %v3316 = vmul.f32 %v3297, %v3313
      %v3317 = vmul.f32 %v3300, %v3313
      %v3318 = vmul.f32 %v3303, %v3313
      %v3319 = vmul.f32 %v3306, %v3313
      %v3320 = vmul.f32 %v3309, %v3313
      %v3321 = vmul.f32 %v3312, %v3313
      %v3322 = vsub.f32 %v3281, %v3314
      %v3323 = vsub.f32 %v3282, %v3315
      %v3324 = vsub.f32 %v3283, %v3316
      %v3325 = vsub.f32 %v3284, %v3317
      %v3326 = vsub.f32 %v3285, %v3318
      %v3327 = vsub.f32 %v3286, %v3319
      %v3328 = vsub.f32 %v3287, %v3320
      %v3329 = vsub.f32 %v3288, %v3321
      %v3330 = vmul.f32 %v3322, %v3322
      %v3331 = vmul.f32 %v3323, %v3323
      %v3332 = vmul.f32 %v3324, %v3324
      %v3333 = vmul.f32 %v3325, %v3325
      %v3334 = vmul.f32 %v3326, %v3326
      %v3335 = vmul.f32 %v3327, %v3327
      %v3336 = vmul.f32 %v3328, %v3328
      %v3337 = vmul.f32 %v3329, %v3329
      %v3338 = vsel %vm1234, %v3330, 0.0
      %3339 = vadd.xlane.f32.xlu0 %v3338
      %v3340 = vpop.xlane.xlu0 %3339
      %v3341 = vsel %vm1234, %v3331, 0.0
      %3342 = vadd.xlane.f32.xlu0 %v3341
      %v3343 = vpop.xlane.xlu0 %3342
      %v3344 = vsel %vm1234, %v3332, 0.0
      %3345 = vadd.xlane.f32.xlu0 %v3344
      %v3346 = vpop.xlane.xlu0 %3345
      %v3347 = vsel %vm1234, %v3333, 0.0
      %3348 = vadd.xlane.f32.xlu0 %v3347
      %v3349 = vpop.xlane.xlu0 %3348
      %v3350 = vsel %vm1234, %v3334, 0.0
      %3351 = vadd.xlane.f32.xlu0 %v3350
      %v3352 = vpop.xlane.xlu0 %3351
      %v3353 = vsel %vm1234, %v3335, 0.0
      %3354 = vadd.xlane.f32.xlu0 %v3353
      %v3355 = vpop.xlane.xlu0 %3354
      %v3356 = vsel %vm1234, %v3336, 0.0
      %3357 = vadd.xlane.f32.xlu0 %v3356
      %v3358 = vpop.xlane.xlu0 %3357
      %v3359 = vsel %vm1234, %v3337, 0.0
      %3360 = vadd.xlane.f32.xlu0 %v3359
      %v3361 = vpop.xlane.xlu0 %3360
      %v3362 = vmul.f32 %v3340, %v3313
      %v3363 = vmul.f32 %v3343, %v3313
      %v3364 = vmul.f32 %v3346, %v3313
      %v3365 = vmul.f32 %v3349, %v3313
      %v3366 = vmul.f32 %v3352, %v3313
      %v3367 = vmul.f32 %v3355, %v3313
      %v3368 = vmul.f32 %v3358, %v3313
      %v3369 = vmul.f32 %v3361, %v3313
      %v3370 = vadd.f32 %v3362, 1e-05
      %v3371 = vadd.f32 %v3363, 1e-05
      %v3372 = vadd.f32 %v3364, 1e-05
      %v3373 = vadd.f32 %v3365, 1e-05
      %v3374 = vadd.f32 %v3366, 1e-05
      %v3375 = vadd.f32 %v3367, 1e-05
      %v3376 = vadd.f32 %v3368, 1e-05
      %v3377 = vadd.f32 %v3369, 1e-05
      %v3378 = vrsqrt.pop %v3370
      %v3379 = vrsqrt.pop %v3371
      %v3380 = vrsqrt.pop %v3372
      %v3381 = vrsqrt.pop %v3373
      %v3382 = vrsqrt.pop %v3374
      %v3383 = vrsqrt.pop %v3375
      %v3384 = vrsqrt.pop %v3376
      %v3385 = vrsqrt.pop %v3377
      %v3386 = vmul.f32 %v3322, %v3378
      %v3387 = vmul.f32 %v3323, %v3379
      %v3388 = vmul.f32 %v3324, %v3380
      %v3389 = vmul.f32 %v3325, %v3381
      %v3390 = vmul.f32 %v3326, %v3382
      %v3391 = vmul.f32 %v3327, %v3383
      %v3392 = vmul.f32 %v3328, %v3384
      %v3393 = vmul.f32 %v3329, %v3385
      %v3394 = vld [vmem:[%s35] sm:$0x1]
      %v3396 = vlaneseq
      %v3397 = vshrl.u32 %v3396, 7
      %v3398 = vsub.s32 0, %v3397
      %v3399 = vrot.slane %v3394, %v3398
      %v3401 = vmul.f32 %v3386, %v3399
      %v3402 = vmul.f32 %v3387, %v3399
      %v3403 = vmul.f32 %v3388, %v3399
      %v3404 = vmul.f32 %v3389, %v3399
      %v3405 = vmul.f32 %v3390, %v3399
      %v3406 = vmul.f32 %v3391, %v3399
      %v3407 = vmul.f32 %v3392, %v3399
      %v3408 = vmul.f32 %v3393, %v3399
      %v3409 = vld [vmem:[%s37] sm:$0x1]
      %v3411 = vlaneseq
      %v3412 = vshrl.u32 %v3411, 7
      %v3413 = vsub.s32 0, %v3412
      %v3414 = vrot.slane %v3409, %v3413
      %v3416 = vadd.f32 %v3401, %v3414
      %v3417 = vadd.f32 %v3402, %v3414
      %v3418 = vadd.f32 %v3403, %v3414
      %v3419 = vadd.f32 %v3404, %v3414
      %v3420 = vadd.f32 %v3405, %v3414
      %v3421 = vadd.f32 %v3406, %v3414
      %v3422 = vadd.f32 %v3407, %v3414
      %v3423 = vadd.f32 %v3408, %v3414
      %v3424 = vld [vmem:[%s59] sm:$0xff]
      %v3425 = vld [vmem:[%s59 + $0x8] sm:$0xff]
      %v3426 = vld [vmem:[%s59 + $0x10] sm:$0xff]
      %v3427 = vld [vmem:[%s61] sm:$0xff]
      %v3428 = vld [vmem:[%s61 + $0x8] sm:$0xff]
      %v3429 = vld [vmem:[%s61 + $0x10] sm:$0xff]
      %v3430 = vld [vmem:[%s61 + $0x18] sm:$0xff]
      %v3431 = vld [vmem:[%s61 + $0x20] sm:$0xff]
      %v3432 = vld [vmem:[%s61 + $0x28] sm:$0xff]
      %v3433 = vld [vmem:[%s63] sm:$0xff]
      %v3434 = vld [vmem:[%s63 + $0x8] sm:$0xff]
      %v3435 = vld [vmem:[%s63 + $0x10] sm:$0xff]
      %v3436 = vld [vmem:[%s63 + $0x18] sm:$0xff]
      %v3437 = vld [vmem:[%s63 + $0x20] sm:$0xff]
      %v3438 = vld [vmem:[%s63 + $0x28] sm:$0xff]
      %3440 = vrot.lane.b32.xlu0 %v3417, 16
      %v3441 = vpop.permute.xlu0 %3440
      %3444 = vrot.lane.b32.xlu0 %v3418, 32
      %v3445 = vpop.permute.xlu0 %3444
      %3448 = vrot.lane.b32.xlu0 %v3419, 48
      %v3449 = vpop.permute.xlu0 %3448
      %3452 = vrot.lane.b32.xlu0 %v3420, 64
      %v3453 = vpop.permute.xlu0 %3452
      %3456 = vrot.lane.b32.xlu0 %v3421, 80
      %v3457 = vpop.permute.xlu0 %3456
      %3460 = vrot.lane.b32.xlu0 %v3422, 96
      %v3461 = vpop.permute.xlu0 %3460
      %3464 = vrot.lane.b32.xlu0 %v3423, 112
      %v3465 = vpop.permute.xlu0 %3464
      %v3467 = vsel %vm1234, %v3416, %v3441
      %v3468 = vsel %vm1399, %v3467, %v3445
      %vm3469 = vcmask 392192
      %v3470 = vsel %vm3469, %v3468, %v3449
      %v3471 = vsel %vm1243, %v3470, %v3453
      %vm3472 = vcmask 654336
      %v3473 = vsel %vm3472, %v3471, %v3457
      %vm3474 = vcmask 785408
      %v3475 = vsel %vm3474, %v3473, %v3461
      %vm3476 = vcmask 916480
      %v3477 = vsel %vm3476, %v3475, %v3465
      %v3478 = vld [vmem:[%s39] sm:$0xff]
      %v3480 = vsel %vm1243, %v3478, 0
      %3482 = vmatprep.subr.mxu0 0.0
      %3483 = vmatpush1.msra.mxu0 %v3416
      %3484 = vmatprep.subr.mxu0 0.0
      %3485 = vmatpush1.msra.mxu0 %v3417
      %3486 = vmatprep.subr.mxu0 0.0
      %3487 = vmatpush1.msra.mxu0 %v3418
      %3488 = vmatprep.subr.mxu0 0.0
      %3489 = vmatpush1.msra.mxu0 %v3419
      %3490 = vmatprep.subr.mxu0 0.0
      %3491 = vmatpush1.msra.mxu0 %v3420
      %3492 = vmatprep.subr.mxu0 0.0
      %3493 = vmatpush1.msra.mxu0 %v3421
      %3494 = vmatprep.subr.mxu0 0.0
      %3495 = vmatpush1.msra.mxu0 %v3422
      %3496 = vmatprep.subr.mxu0 0.0
      %3497 = vmatpush1.msra.mxu0 %v3423
      %3498 = vmatprep.subr.mxu0 0.0
      %3499 = vmatpush1.msra.mxu0 0.0
      %3500 = vmatprep.subr.mxu0 0.0
      %3501 = vmatpush1.msra.mxu0 0.0
      %3502 = vmatprep.subr.mxu0 0.0
      %3503 = vmatpush1.msra.mxu0 0.0
      %3504 = vmatprep.subr.mxu0 0.0
      %3505 = vmatpush1.msra.mxu0 0.0
      %3506 = vmatprep.subr.mxu0 0.0
      %3507 = vmatpush1.msra.mxu0 0.0
      %3508 = vmatprep.subr.mxu0 0.0
      %3509 = vmatpush1.msra.mxu0 0.0
      %3510 = vmatprep.subr.mxu0 0.0
      %3511 = vmatpush1.msra.mxu0 0.0
      %3512 = vmatprep.subr.mxu0 0.0
      %3513 = vmatpush1.msra.mxu0 0.0
      %3514 = vmatprep.subr.mxu0 0.0
      %3515 = vmatpush1.msra.mxu0 0.0
      %3516 = vmatprep.subr.mxu0 0.0
      %3517 = vmatpush1.msra.mxu0 0.0
      %3518 = vmatprep.subr.mxu0 0.0
      %3519 = vmatpush1.msra.mxu0 0.0
      %3520 = vmatprep.subr.mxu0 0.0
      %3521 = vmatpush1.msra.mxu0 0.0
      %3522 = vmatprep.subr.mxu0 0.0
      %3523 = vmatpush1.msra.mxu0 0.0
      %3524 = vmatprep.subr.mxu0 0.0
      %3525 = vmatpush1.msra.mxu0 0.0
      %3526 = vmatprep.subr.mxu0 0.0
      %3527 = vmatpush1.msra.mxu0 0.0
      %3528 = vmatprep.subr.mxu0 0.0
      %3529 = vmatpush1.msra.mxu0 0.0
      %3530 = vmatprep.subr.mxu0 0.0
      %3531 = vmatpush1.msra.mxu0 0.0
      %3532 = vmatprep.subr.mxu0 0.0
      %3533 = vmatpush1.msra.mxu0 0.0
      %3534 = vmatprep.subr.mxu0 0.0
      %3535 = vmatpush1.msra.mxu0 0.0
      %3536 = vmatprep.subr.mxu0 0.0
      %3537 = vmatpush1.msra.mxu0 0.0
      %3538 = vmatprep.subr.mxu0 0.0
      %3539 = vmatpush1.msra.mxu0 0.0
      %3540 = vmatprep.subr.mxu0 0.0
      %3541 = vmatpush1.msra.mxu0 0.0
      %3542 = vmatprep.subr.mxu0 0.0
      %3543 = vmatpush1.msra.mxu0 0.0
      %3544 = vmatprep.subr.mxu0 0.0
      %3545 = vmatpush1.msra.mxu0 0.0
      %3546 = vmatprep.mubr.f32.mxu0 0.0
      %3547 = vmatmul.mubr.f32.gmra.mrb[0].mxu0 %v3480
      %v3548 = vpop.f32.mrb[0].mxu0
      %v3549 = vadd.f32 0.0, %v3548
      %v3550 = vpop.f32.mrb[0].mxu0
      %3551 = vdwg.mxu0
      %v3552 = vld [vmem:[%s41] sm:$0xff]
      %v3553 = vld [vmem:[%s41 + $0x8] sm:$0xff]
      %v3555 = vsel %vm1234, %v3549, 0
      %3557 = vmatprep.subr.mxu0 0.0
      %3558 = vmatpush1.msra.mxu0 %v3552
      %3559 = vmatprep.subr.mxu0 0.0
      %3560 = vmatpush1.msra.mxu0 %v3553
      %3561 = vmatprep.subr.mxu0 0.0
      %3562 = vmatpush1.msra.mxu0 0.0
      %3563 = vmatprep.subr.mxu0 0.0
      %3564 = vmatpush1.msra.mxu0 0.0
      %3565 = vmatprep.subr.mxu0 0.0
      %3566 = vmatpush1.msra.mxu0 0.0
      %3567 = vmatprep.subr.mxu0 0.0
      %3568 = vmatpush1.msra.mxu0 0.0
      %3569 = vmatprep.subr.mxu0 0.0
      %3570 = vmatpush1.msra.mxu0 0.0
      %3571 = vmatprep.subr.mxu0 0.0
      %3572 = vmatpush1.msra.mxu0 0.0
      %3573 = vmatprep.subr.mxu0 0.0
      %3574 = vmatpush1.msra.mxu0 0.0
      %3575 = vmatprep.subr.mxu0 0.0
      %3576 = vmatpush1.msra.mxu0 0.0
      %3577 = vmatprep.subr.mxu0 0.0
      %3578 = vmatpush1.msra.mxu0 0.0
      %3579 = vmatprep.subr.mxu0 0.0
      %3580 = vmatpush1.msra.mxu0 0.0
      %3581 = vmatprep.subr.mxu0 0.0
      %3582 = vmatpush1.msra.mxu0 0.0
      %3583 = vmatprep.subr.mxu0 0.0
      %3584 = vmatpush1.msra.mxu0 0.0
      %3585 = vmatprep.subr.mxu0 0.0
      %3586 = vmatpush1.msra.mxu0 0.0
      %3587 = vmatprep.subr.mxu0 0.0
      %3588 = vmatpush1.msra.mxu0 0.0
      %3589 = vmatprep.subr.mxu0 0.0
      %3590 = vmatpush1.msra.mxu0 0.0
      %3591 = vmatprep.subr.mxu0 0.0
      %3592 = vmatpush1.msra.mxu0 0.0
      %3593 = vmatprep.subr.mxu0 0.0
      %3594 = vmatpush1.msra.mxu0 0.0
      %3595 = vmatprep.subr.mxu0 0.0
      %3596 = vmatpush1.msra.mxu0 0.0
      %3597 = vmatprep.subr.mxu0 0.0
      %3598 = vmatpush1.msra.mxu0 0.0
      %3599 = vmatprep.subr.mxu0 0.0
      %3600 = vmatpush1.msra.mxu0 0.0
      %3601 = vmatprep.subr.mxu0 0.0
      %3602 = vmatpush1.msra.mxu0 0.0
      %3603 = vmatprep.subr.mxu0 0.0
      %3604 = vmatpush1.msra.mxu0 0.0
      %3605 = vmatprep.subr.mxu0 0.0
      %3606 = vmatpush1.msra.mxu0 0.0
      %3607 = vmatprep.subr.mxu0 0.0
      %3608 = vmatpush1.msra.mxu0 0.0
      %3609 = vmatprep.subr.mxu0 0.0
      %3610 = vmatpush1.msra.mxu0 0.0
      %3611 = vmatprep.subr.mxu0 0.0
      %3612 = vmatpush1.msra.mxu0 0.0
      %3613 = vmatprep.subr.mxu0 0.0
      %3614 = vmatpush1.msra.mxu0 0.0
      %3615 = vmatprep.subr.mxu0 0.0
      %3616 = vmatpush1.msra.mxu0 0.0
      %3617 = vmatprep.subr.mxu0 0.0
      %3618 = vmatpush1.msra.mxu0 0.0
      %3619 = vmatprep.subr.mxu0 0.0
      %3620 = vmatpush1.msra.mxu0 0.0
      %3621 = vmatprep.mubr.f32.mxu0 0.0
      %3622 = vmatmul.mubr.f32.gmra.mrb[0].mxu0 %v3555
      %v3623 = vpop.f32.mrb[0].mxu0
      %v3624 = vadd.f32 0.0, %v3623
      %v3625 = vpop.f32.mrb[0].mxu0
      %3626 = vdwg.mxu0
      %v3627 = vld [vmem:[%s43] sm:$0xff]
      %v3628 = vld [vmem:[%s43 + $0x8] sm:$0xff]
      %v3629 = vld [vmem:[%s43 + $0x10] sm:$0xff]
      %v3630 = vld [vmem:[%s43 + $0x18] sm:$0xff]
      %v3631 = vld [vmem:[%s43 + $0x20] sm:$0xff]
      %v3632 = vld [vmem:[%s43 + $0x28] sm:$0xff]
      %v3633 = vld [vmem:[%s43 + $0x30] sm:$0xff]
      %v3634 = vld [vmem:[%s43 + $0x38] sm:$0xff]
      %v3635 = vld [vmem:[%s43 + $0x40] sm:$0xff]
      %v3636 = vld [vmem:[%s43 + $0x48] sm:$0xff]
      %v3637 = vld [vmem:[%s43 + $0x50] sm:$0xff]
      %v3638 = vld [vmem:[%s43 + $0x58] sm:$0xff]
      %v3639 = vld [vmem:[%s43 + $0x60] sm:$0xff]
      %v3640 = vld [vmem:[%s43 + $0x68] sm:$0xff]
      %v3641 = vld [vmem:[%s43 + $0x70] sm:$0xff]
      %v3642 = vld [vmem:[%s43 + $0x78] sm:$0xff]
      %3643 = vmatprep.subr.mxu0 0.0
      %3644 = vmatpush1.msra.mxu0 %v3627
      %3645 = vmatprep.subr.mxu0 0.0
      %3646 = vmatpush1.msra.mxu0 %v3628
      %3647 = vmatprep.subr.mxu0 0.0
      %3648 = vmatpush1.msra.mxu0 %v3629
      %3649 = vmatprep.subr.mxu0 0.0
      %3650 = vmatpush1.msra.mxu0 %v3630
      %3651 = vmatprep.subr.mxu0 0.0
      %3652 = vmatpush1.msra.mxu0 %v3631
      %3653 = vmatprep.subr.mxu0 0.0
      %3654 = vmatpush1.msra.mxu0 %v3632
      %3655 = vmatprep.subr.mxu0 0.0
      %3656 = vmatpush1.msra.mxu0 %v3633
      %3657 = vmatprep.subr.mxu0 0.0
      %3658 = vmatpush1.msra.mxu0 %v3634
      %3659 = vmatprep.subr.mxu0 0.0
      %3660 = vmatpush1.msra.mxu0 %v3635
      %3661 = vmatprep.subr.mxu0 0.0
      %3662 = vmatpush1.msra.mxu0 %v3636
      %3663 = vmatprep.subr.mxu0 0.0
      %3664 = vmatpush1.msra.mxu0 %v3637
      %3665 = vmatprep.subr.mxu0 0.0
      %3666 = vmatpush1.msra.mxu0 %v3638
      %3667 = vmatprep.subr.mxu0 0.0
      %3668 = vmatpush1.msra.mxu0 %v3639
      %3669 = vmatprep.subr.mxu0 0.0
      %3670 = vmatpush1.msra.mxu0 %v3640
      %3671 = vmatprep.subr.mxu0 0.0
      %3672 = vmatpush1.msra.mxu0 %v3641
      %3673 = vmatprep.subr.mxu0 0.0
      %3674 = vmatpush1.msra.mxu0 %v3642
      %3675 = vmatprep.subr.mxu0 0.0
      %3676 = vmatpush1.msra.mxu0 0.0
      %3677 = vmatprep.subr.mxu0 0.0
      %3678 = vmatpush1.msra.mxu0 0.0
      %3679 = vmatprep.subr.mxu0 0.0
      %3680 = vmatpush1.msra.mxu0 0.0
      %3681 = vmatprep.subr.mxu0 0.0
      %3682 = vmatpush1.msra.mxu0 0.0
      %3683 = vmatprep.subr.mxu0 0.0
      %3684 = vmatpush1.msra.mxu0 0.0
      %3685 = vmatprep.subr.mxu0 0.0
      %3686 = vmatpush1.msra.mxu0 0.0
      %3687 = vmatprep.subr.mxu0 0.0
      %3688 = vmatpush1.msra.mxu0 0.0
      %3689 = vmatprep.subr.mxu0 0.0
      %3690 = vmatpush1.msra.mxu0 0.0
      %3691 = vmatprep.subr.mxu0 0.0
      %3692 = vmatpush1.msra.mxu0 0.0
      %3693 = vmatprep.subr.mxu0 0.0
      %3694 = vmatpush1.msra.mxu0 0.0
      %3695 = vmatprep.subr.mxu0 0.0
      %3696 = vmatpush1.msra.mxu0 0.0
      %3697 = vmatprep.subr.mxu0 0.0
      %3698 = vmatpush1.msra.mxu0 0.0
      %3699 = vmatprep.subr.mxu0 0.0
      %3700 = vmatpush1.msra.mxu0 0.0
      %3701 = vmatprep.subr.mxu0 0.0
      %3702 = vmatpush1.msra.mxu0 0.0
      %3703 = vmatprep.subr.mxu0 0.0
      %3704 = vmatpush1.msra.mxu0 0.0
      %3705 = vmatprep.subr.mxu0 0.0
      %3706 = vmatpush1.msra.mxu0 0.0
      %3707 = vmatprep.mubr.f32.mxu0 0.0
      %3708 = vmatmul.mubr.f32.gmra.mrb[0].mxu0 %v3477
      %v3709 = vpop.f32.mrb[0].mxu0
      %v3710 = vadd.f32 0.0, %v3709
      %v3711 = vpop.f32.mrb[0].mxu0
      %3712 = vdwg.mxu0
      %v3713 = vld [vmem:[%s47] sm:$0xff]
      %v3714 = vld [vmem:[%s45] sm:$0xff]
      %v3716 = vsel %vm1230, %v3624, 0
      %3718 = vmatprep.subr.mxu0 0.0
      %3719 = vmatpush1.msra.mxu0 %v3710
      %3720 = vmatprep.subr.mxu0 0.0
      %3721 = vmatpush1.msra.mxu0 0.0
      %3722 = vmatprep.subr.mxu0 0.0
      %3723 = vmatpush1.msra.mxu0 0.0
      %3724 = vmatprep.subr.mxu0 0.0
      %3725 = vmatpush1.msra.mxu0 0.0
      %3726 = vmatprep.subr.mxu0 0.0
      %3727 = vmatpush1.msra.mxu0 0.0
      %3728 = vmatprep.subr.mxu0 0.0
      %3729 = vmatpush1.msra.mxu0 0.0
      %3730 = vmatprep.subr.mxu0 0.0
      %3731 = vmatpush1.msra.mxu0 0.0
      %3732 = vmatprep.subr.mxu0 0.0
      %3733 = vmatpush1.msra.mxu0 0.0
      %3734 = vmatprep.subr.mxu0 0.0
      %3735 = vmatpush1.msra.mxu0 0.0
      %3736 = vmatprep.subr.mxu0 0.0
      %3737 = vmatpush1.msra.mxu0 0.0
      %3738 = vmatprep.subr.mxu0 0.0
      %3739 = vmatpush1.msra.mxu0 0.0
      %3740 = vmatprep.subr.mxu0 0.0
      %3741 = vmatpush1.msra.mxu0 0.0
      %3742 = vmatprep.subr.mxu0 0.0
      %3743 = vmatpush1.msra.mxu0 0.0
      %3744 = vmatprep.subr.mxu0 0.0
      %3745 = vmatpush1.msra.mxu0 0.0
      %3746 = vmatprep.subr.mxu0 0.0
      %3747 = vmatpush1.msra.mxu0 0.0
      %3748 = vmatprep.subr.mxu0 0.0
      %3749 = vmatpush1.msra.mxu0 0.0
      %3750 = vmatprep.subr.mxu0 0.0
      %3751 = vmatpush1.msra.mxu0 0.0
      %3752 = vmatprep.subr.mxu0 0.0
      %3753 = vmatpush1.msra.mxu0 0.0
      %3754 = vmatprep.subr.mxu0 0.0
      %3755 = vmatpush1.msra.mxu0 0.0
      %3756 = vmatprep.subr.mxu0 0.0
      %3757 = vmatpush1.msra.mxu0 0.0
      %3758 = vmatprep.subr.mxu0 0.0
      %3759 = vmatpush1.msra.mxu0 0.0
      %3760 = vmatprep.subr.mxu0 0.0
      %3761 = vmatpush1.msra.mxu0 0.0
      %3762 = vmatprep.subr.mxu0 0.0
      %3763 = vmatpush1.msra.mxu0 0.0
      %3764 = vmatprep.subr.mxu0 0.0
      %3765 = vmatpush1.msra.mxu0 0.0
      %3766 = vmatprep.subr.mxu0 0.0
      %3767 = vmatpush1.msra.mxu0 0.0
      %3768 = vmatprep.subr.mxu0 0.0
      %3769 = vmatpush1.msra.mxu0 0.0
      %3770 = vmatprep.subr.mxu0 0.0
      %3771 = vmatpush1.msra.mxu0 0.0
      %3772 = vmatprep.subr.mxu0 0.0
      %3773 = vmatpush1.msra.mxu0 0.0
      %3774 = vmatprep.subr.mxu0 0.0
      %3775 = vmatpush1.msra.mxu0 0.0
      %3776 = vmatprep.subr.mxu0 0.0
      %3777 = vmatpush1.msra.mxu0 0.0
      %3778 = vmatprep.subr.mxu0 0.0
      %3779 = vmatpush1.msra.mxu0 0.0
      %3780 = vmatprep.subr.mxu0 0.0
      %3781 = vmatpush1.msra.mxu0 0.0
      %3782 = vmatprep.mubr.f32.mxu0 0.0
      %3783 = vmatmul.mubr.f32.gmra.mrb[0].mxu0 %v3716
      %v3784 = vpop.f32.mrb[0].mxu0
      %v3785 = vadd.f32 %v3714, %v3784
      %v3786 = vpop.f32.mrb[0].mxu0
      %3787 = vdwg.mxu0
      %v3788 = vsub.f32 0.0, %v3785
      %v3789 = vmul.f32 %v3788, 1.442695
      %v3790 = vpow.pop %v3789
      %v3791 = vadd.f32 %v3790, 1.0
      %v3792 = vrcp.pop %v3791
      %v3793 = vmul.f32 1.0, %v3792
      %v3795 = vsel %vm1230, %v3713, 0
      %3797 = vmatprep.subr.mxu0 0.0
      %3798 = vmatpush1.msra.mxu0 %v3793
      %3799 = vmatprep.subr.mxu0 0.0
      %3800 = vmatpush1.msra.mxu0 0.0
      %3801 = vmatprep.subr.mxu0 0.0
      %3802 = vmatpush1.msra.mxu0 0.0
      %3803 = vmatprep.subr.mxu0 0.0
      %3804 = vmatpush1.msra.mxu0 0.0
      %3805 = vmatprep.subr.mxu0 0.0
      %3806 = vmatpush1.msra.mxu0 0.0
      %3807 = vmatprep.subr.mxu0 0.0
      %3808 = vmatpush1.msra.mxu0 0.0
      %3809 = vmatprep.subr.mxu0 0.0
      %3810 = vmatpush1.msra.mxu0 0.0
      %3811 = vmatprep.subr.mxu0 0.0
      %3812 = vmatpush1.msra.mxu0 0.0
      %3813 = vmatprep.subr.mxu0 0.0
      %3814 = vmatpush1.msra.mxu0 0.0
      %3815 = vmatprep.subr.mxu0 0.0
      %3816 = vmatpush1.msra.mxu0 0.0
      %3817 = vmatprep.subr.mxu0 0.0
      %3818 = vmatpush1.msra.mxu0 0.0
      %3819 = vmatprep.subr.mxu0 0.0
      %3820 = vmatpush1.msra.mxu0 0.0
      %3821 = vmatprep.subr.mxu0 0.0
      %3822 = vmatpush1.msra.mxu0 0.0
      %3823 = vmatprep.subr.mxu0 0.0
      %3824 = vmatpush1.msra.mxu0 0.0
      %3825 = vmatprep.subr.mxu0 0.0
      %3826 = vmatpush1.msra.mxu0 0.0
      %3827 = vmatprep.subr.mxu0 0.0
      %3828 = vmatpush1.msra.mxu0 0.0
      %3829 = vmatprep.subr.mxu0 0.0
      %3830 = vmatpush1.msra.mxu0 0.0
      %3831 = vmatprep.subr.mxu0 0.0
      %3832 = vmatpush1.msra.mxu0 0.0
      %3833 = vmatprep.subr.mxu0 0.0
      %3834 = vmatpush1.msra.mxu0 0.0
      %3835 = vmatprep.subr.mxu0 0.0
      %3836 = vmatpush1.msra.mxu0 0.0
      %3837 = vmatprep.subr.mxu0 0.0
      %3838 = vmatpush1.msra.mxu0 0.0
      %3839 = vmatprep.subr.mxu0 0.0
      %3840 = vmatpush1.msra.mxu0 0.0
      %3841 = vmatprep.subr.mxu0 0.0
      %3842 = vmatpush1.msra.mxu0 0.0
      %3843 = vmatprep.subr.mxu0 0.0
      %3844 = vmatpush1.msra.mxu0 0.0
      %3845 = vmatprep.subr.mxu0 0.0
      %3846 = vmatpush1.msra.mxu0 0.0
      %3847 = vmatprep.subr.mxu0 0.0
      %3848 = vmatpush1.msra.mxu0 0.0
      %3849 = vmatprep.subr.mxu0 0.0
      %3850 = vmatpush1.msra.mxu0 0.0
      %3851 = vmatprep.subr.mxu0 0.0
      %3852 = vmatpush1.msra.mxu0 0.0
      %3853 = vmatprep.subr.mxu0 0.0
      %3854 = vmatpush1.msra.mxu0 0.0
      %3855 = vmatprep.subr.mxu0 0.0
      %3856 = vmatpush1.msra.mxu0 0.0
      %3857 = vmatprep.subr.mxu0 0.0
      %3858 = vmatpush1.msra.mxu0 0.0
      %3859 = vmatprep.subr.mxu0 0.0
      %3860 = vmatpush1.msra.mxu0 0.0
      %3861 = vmatprep.mubr.f32.mxu0 0.0
      %3862 = vmatmul.mubr.f32.gmra.mrb[0].mxu0 %v3795
      %v3863 = vpop.f32.mrb[0].mxu0
      %v3864 = vadd.f32 0.0, %v3863
      %v3865 = vpop.f32.mrb[0].mxu0
      %3866 = vdwg.mxu0
      %v3867 = vsel %vm1230, %v3864, -inf
      %v3868 = vrot.slane %v3867, 4
      %v3869 = vmax.f32 %v3867, %v3868
      %v3870 = vrot.slane %v3869, 2
      %v3871 = vmax.f32 %v3869, %v3870
      %v3872 = vrot.slane %v3871, 1
      %v3873 = vmax.f32 %v3871, %v3872
      %v3874 = vsub.f32 %v3864, %v3873
      %v3875 = vmul.f32 %v3874, 1.442695
      %v3876 = vpow.pop %v3875
      %v3877 = vsel %vm1230, %v3876, 0.0
      %v3878 = vrot.slane %v3877, 4
      %v3879 = vadd.f32 %v3877, %v3878
      %v3880 = vrot.slane %v3879, 2
      %v3881 = vadd.f32 %v3879, %v3880
      %v3882 = vrot.slane %v3881, 1
      %v3883 = vadd.f32 %v3881, %v3882
      %v3884 = vrcp.pop %v3883
      %v3885 = vmul.f32 %v3876, %v3884
      %v3886 = vld [vmem:[%s49] sm:$0xff]
      %v3888 = vsel %vm1230, %v3885, 0
      %3890 = vmatprep.subr.mxu0 0.0
      %3891 = vmatpush1.msra.mxu0 %v3886
      %3892 = vmatprep.subr.mxu0 0.0
      %3893 = vmatpush1.msra.mxu0 0.0
      %3894 = vmatprep.subr.mxu0 0.0
      %3895 = vmatpush1.msra.mxu0 0.0
      %3896 = vmatprep.subr.mxu0 0.0
      %3897 = vmatpush1.msra.mxu0 0.0
      %3898 = vmatprep.subr.mxu0 0.0
      %3899 = vmatpush1.msra.mxu0 0.0
      %3900 = vmatprep.subr.mxu0 0.0
      %3901 = vmatpush1.msra.mxu0 0.0
      %3902 = vmatprep.subr.mxu0 0.0
      %3903 = vmatpush1.msra.mxu0 0.0
      %3904 = vmatprep.subr.mxu0 0.0
      %3905 = vmatpush1.msra.mxu0 0.0
      %3906 = vmatprep.subr.mxu0 0.0
      %3907 = vmatpush1.msra.mxu0 0.0
      %3908 = vmatprep.subr.mxu0 0.0
      %3909 = vmatpush1.msra.mxu0 0.0
      %3910 = vmatprep.subr.mxu0 0.0
      %3911 = vmatpush1.msra.mxu0 0.0
      %3912 = vmatprep.subr.mxu0 0.0
      %3913 = vmatpush1.msra.mxu0 0.0
      %3914 = vmatprep.subr.mxu0 0.0
      %3915 = vmatpush1.msra.mxu0 0.0
      %3916 = vmatprep.subr.mxu0 0.0
      %3917 = vmatpush1.msra.mxu0 0.0
      %3918 = vmatprep.subr.mxu0 0.0
      %3919 = vmatpush1.msra.mxu0 0.0
      %3920 = vmatprep.subr.mxu0 0.0
      %3921 = vmatpush1.msra.mxu0 0.0
      %3922 = vmatprep.subr.mxu0 0.0
      %3923 = vmatpush1.msra.mxu0 0.0
      %3924 = vmatprep.subr.mxu0 0.0
      %3925 = vmatpush1.msra.mxu0 0.0
      %3926 = vmatprep.subr.mxu0 0.0
      %3927 = vmatpush1.msra.mxu0 0.0
      %3928 = vmatprep.subr.mxu0 0.0
      %3929 = vmatpush1.msra.mxu0 0.0
      %3930 = vmatprep.subr.mxu0 0.0
      %3931 = vmatpush1.msra.mxu0 0.0
      %3932 = vmatprep.subr.mxu0 0.0
      %3933 = vmatpush1.msra.mxu0 0.0
      %3934 = vmatprep.subr.mxu0 0.0
      %3935 = vmatpush1.msra.mxu0 0.0
      %3936 = vmatprep.subr.mxu0 0.0
      %3937 = vmatpush1.msra.mxu0 0.0
      %3938 = vmatprep.subr.mxu0 0.0
      %3939 = vmatpush1.msra.mxu0 0.0
      %3940 = vmatprep.subr.mxu0 0.0
      %3941 = vmatpush1.msra.mxu0 0.0
      %3942 = vmatprep.subr.mxu0 0.0
      %3943 = vmatpush1.msra.mxu0 0.0
      %3944 = vmatprep.subr.mxu0 0.0
      %3945 = vmatpush1.msra.mxu0 0.0
      %3946 = vmatprep.subr.mxu0 0.0
      %3947 = vmatpush1.msra.mxu0 0.0
      %3948 = vmatprep.subr.mxu0 0.0
      %3949 = vmatpush1.msra.mxu0 0.0
      %3950 = vmatprep.subr.mxu0 0.0
      %3951 = vmatpush1.msra.mxu0 0.0
      %3952 = vmatprep.subr.mxu0 0.0
      %3953 = vmatpush1.msra.mxu0 0.0
      %3954 = vmatprep.mubr.f32.mxu0 0.0
      %3955 = vmatmul.mubr.f32.gmra.mrb[0].mxu0 %v3888
      %v3956 = vpop.f32.mrb[0].mxu0
      %v3957 = vadd.f32 0.0, %v3956
      %v3958 = vpop.f32.mrb[0].mxu0
      %3959 = vdwg.mxu0
      %v3961 = vcombine.high %v3957, %v3957
      %v3963 = vunpack.c.l.s4 1966171168
      %v3964 = vunpack.c.0.s8 %v3963
      %v3965 = vlaneseq
      %v3966 = vshrl.u32 %v3965, 7
      %v3967 = vsub.s32 %v3964, %v3966
      %v3968 = vrot.slane %v3957, %v3967
      %v3970 = vunpack.c.l.s4 1966171168
      %v3971 = vunpack.c.0.s8 %v3970
      %v3972 = vlaneseq
      %v3973 = vshrl.u32 %v3972, 7
      %v3974 = vsub.s32 %v3971, %v3973
      %v3975 = vrot.slane %v3961, %v3974
      %v3976 = vcombine.high %v3968, %v3968
      %v3977 = vcombine.high %v3975, %v3975
      %v3979 = vunpack.c.l.s4 1966171168
      %v3980 = vunpack.c.0.s8 %v3979
      %v3981 = vlaneseq
      %v3982 = vshrl.u32 %v3981, 7
      %v3983 = vsub.s32 %v3980, %v3982
      %v3984 = vrot.slane %v3968, %v3983
      %v3986 = vunpack.c.l.s4 1966171168
      %v3987 = vunpack.c.0.s8 %v3986
      %v3988 = vlaneseq
      %v3989 = vshrl.u32 %v3988, 7
      %v3990 = vsub.s32 %v3987, %v3989
      %v3991 = vrot.slane %v3975, %v3990
      %v3993 = vunpack.c.l.s4 1966171168
      %v3994 = vunpack.c.0.s8 %v3993
      %v3995 = vlaneseq
      %v3996 = vshrl.u32 %v3995, 7
      %v3997 = vsub.s32 %v3994, %v3996
      %v3998 = vrot.slane %v3976, %v3997
      %v4000 = vunpack.c.l.s4 1966171168
      %v4001 = vunpack.c.0.s8 %v4000
      %v4002 = vlaneseq
      %v4003 = vshrl.u32 %v4002, 7
      %v4004 = vsub.s32 %v4001, %v4003
      %v4005 = vrot.slane %v3977, %v4004
      %v4006 = vcombine.high %v3984, %v3984
      %v4007 = vcombine.high %v3991, %v3991
      %v4008 = vcombine.high %v3998, %v3998
      %v4009 = vcombine.high %v4005, %v4005
      %v4010 = vlaneseq
      %v4011 = vshrl.u32 %v4010, 7
      %v4012 = vsub.s32 0, %v4011
      %v4013 = vrot.slane %v3984, %v4012
      %v4014 = vlaneseq
      %v4015 = vshrl.u32 %v4014, 7
      %v4016 = vsub.s32 0, %v4015
      %v4017 = vrot.slane %v3998, %v4016
      %v4018 = vlaneseq
      %v4019 = vshrl.u32 %v4018, 7
      %v4020 = vsub.s32 0, %v4019
      %v4021 = vrot.slane %v4006, %v4020
      %v4022 = vlaneseq
      %v4023 = vshrl.u32 %v4022, 7
      %v4024 = vsub.s32 0, %v4023
      %v4025 = vrot.slane %v4008, %v4024
      %v4026 = vlaneseq
      %v4027 = vshrl.u32 %v4026, 7
      %v4028 = vsub.s32 0, %v4027
      %v4029 = vrot.slane %v3991, %v4028
      %v4030 = vlaneseq
      %v4031 = vshrl.u32 %v4030, 7
      %v4032 = vsub.s32 0, %v4031
      %v4033 = vrot.slane %v4005, %v4032
      %v4034 = vlaneseq
      %v4035 = vshrl.u32 %v4034, 7
      %v4036 = vsub.s32 0, %v4035
      %v4037 = vrot.slane %v4007, %v4036
      %v4038 = vlaneseq
      %v4039 = vshrl.u32 %v4038, 7
      %v4040 = vsub.s32 0, %v4039
      %v4041 = vrot.slane %v4009, %v4040
      %4042 = vset.pattern.permute.xlu0 0
      %4043 = vperm.xlu0 %4042, %v4013
      %v4044 = vpop.permute.xlu0 %4043
      %4046 = vset.pattern.permute.xlu0 0
      %4047 = vperm.xlu0 %4046, %v4017
      %v4048 = vpop.permute.xlu0 %4047
      %4050 = vset.pattern.permute.xlu0 0
      %4051 = vperm.xlu0 %4050, %v4021
      %v4052 = vpop.permute.xlu0 %4051
      %4054 = vset.pattern.permute.xlu0 0
      %4055 = vperm.xlu0 %4054, %v4025
      %v4056 = vpop.permute.xlu0 %4055
      %4058 = vset.pattern.permute.xlu0 0
      %4059 = vperm.xlu0 %4058, %v4029
      %v4060 = vpop.permute.xlu0 %4059
      %4062 = vset.pattern.permute.xlu0 0
      %4063 = vperm.xlu0 %4062, %v4033
      %v4064 = vpop.permute.xlu0 %4063
      %4066 = vset.pattern.permute.xlu0 0
      %4067 = vperm.xlu0 %4066, %v4037
      %v4068 = vpop.permute.xlu0 %4067
      %4070 = vset.pattern.permute.xlu0 0
      %4071 = vperm.xlu0 %4070, %v4041
      %v4072 = vpop.permute.xlu0 %4071
      %v4074 = vmul.f32 %v3416, %v4044
      %v4075 = vmul.f32 %v3417, %v4048
      %v4076 = vmul.f32 %v3418, %v4052
      %v4077 = vmul.f32 %v3419, %v4056
      %v4078 = vmul.f32 %v3420, %v4060
      %v4079 = vmul.f32 %v3421, %v4064
      %v4080 = vmul.f32 %v3422, %v4068
      %v4081 = vmul.f32 %v3423, %v4072
      %v4082 = vsel %vm1234, %v4074, 0.0
      %v4083 = vsel %vm1234, %v4075, 0.0
      %v4084 = vadd.f32 %v4082, %v4083
      %v4085 = vsel %vm1234, %v4076, 0.0
      %v4086 = vadd.f32 %v4084, %v4085
      %v4087 = vsel %vm1234, %v4077, 0.0
      %v4088 = vadd.f32 %v4086, %v4087
      %v4089 = vsel %vm1234, %v4078, 0.0
      %v4090 = vadd.f32 %v4088, %v4089
      %v4091 = vsel %vm1234, %v4079, 0.0
      %v4092 = vadd.f32 %v4090, %v4091
      %v4093 = vsel %vm1234, %v4080, 0.0
      %v4094 = vadd.f32 %v4092, %v4093
      %v4095 = vsel %vm1234, %v4081, 0.0
      %v4096 = vadd.f32 %v4094, %v4095
      %v4097 = vld [vmem:[%s51] sm:$0xff]
      %v4098 = vld [vmem:[%s51 + $0x8] sm:$0xff]
      %v4100 = vsel %vm1234, %v4096, 0
      %4102 = vmatprep.subr.mxu0 0.0
      %4103 = vmatpush1.msra.mxu0 %v4097
      %4104 = vmatprep.subr.mxu0 0.0
      %4105 = vmatpush1.msra.mxu0 %v4098
      %4106 = vmatprep.subr.mxu0 0.0
      %4107 = vmatpush1.msra.mxu0 0.0
      %4108 = vmatprep.subr.mxu0 0.0
      %4109 = vmatpush1.msra.mxu0 0.0
      %4110 = vmatprep.subr.mxu0 0.0
      %4111 = vmatpush1.msra.mxu0 0.0
      %4112 = vmatprep.subr.mxu0 0.0
      %4113 = vmatpush1.msra.mxu0 0.0
      %4114 = vmatprep.subr.mxu0 0.0
      %4115 = vmatpush1.msra.mxu0 0.0
      %4116 = vmatprep.subr.mxu0 0.0
      %4117 = vmatpush1.msra.mxu0 0.0
      %4118 = vmatprep.subr.mxu0 0.0
      %4119 = vmatpush1.msra.mxu0 0.0
      %4120 = vmatprep.subr.mxu0 0.0
      %4121 = vmatpush1.msra.mxu0 0.0
      %4122 = vmatprep.subr.mxu0 0.0
      %4123 = vmatpush1.msra.mxu0 0.0
      %4124 = vmatprep.subr.mxu0 0.0
      %4125 = vmatpush1.msra.mxu0 0.0
      %4126 = vmatprep.subr.mxu0 0.0
      %4127 = vmatpush1.msra.mxu0 0.0
      %4128 = vmatprep.subr.mxu0 0.0
      %4129 = vmatpush1.msra.mxu0 0.0
      %4130 = vmatprep.subr.mxu0 0.0
      %4131 = vmatpush1.msra.mxu0 0.0
      %4132 = vmatprep.subr.mxu0 0.0
      %4133 = vmatpush1.msra.mxu0 0.0
      %4134 = vmatprep.subr.mxu0 0.0
      %4135 = vmatpush1.msra.mxu0 0.0
      %4136 = vmatprep.subr.mxu0 0.0
      %4137 = vmatpush1.msra.mxu0 0.0
      %4138 = vmatprep.subr.mxu0 0.0
      %4139 = vmatpush1.msra.mxu0 0.0
      %4140 = vmatprep.subr.mxu0 0.0
      %4141 = vmatpush1.msra.mxu0 0.0
      %4142 = vmatprep.subr.mxu0 0.0
      %4143 = vmatpush1.msra.mxu0 0.0
      %4144 = vmatprep.subr.mxu0 0.0
      %4145 = vmatpush1.msra.mxu0 0.0
      %4146 = vmatprep.subr.mxu0 0.0
      %4147 = vmatpush1.msra.mxu0 0.0
      %4148 = vmatprep.subr.mxu0 0.0
      %4149 = vmatpush1.msra.mxu0 0.0
      %4150 = vmatprep.subr.mxu0 0.0
      %4151 = vmatpush1.msra.mxu0 0.0
      %4152 = vmatprep.subr.mxu0 0.0
      %4153 = vmatpush1.msra.mxu0 0.0
      %4154 = vmatprep.subr.mxu0 0.0
      %4155 = vmatpush1.msra.mxu0 0.0
      %4156 = vmatprep.subr.mxu0 0.0
      %4157 = vmatpush1.msra.mxu0 0.0
      %4158 = vmatprep.subr.mxu0 0.0
      %4159 = vmatpush1.msra.mxu0 0.0
      %4160 = vmatprep.subr.mxu0 0.0
      %4161 = vmatpush1.msra.mxu0 0.0
      %4162 = vmatprep.subr.mxu0 0.0
      %4163 = vmatpush1.msra.mxu0 0.0
      %4164 = vmatprep.subr.mxu0 0.0
      %4165 = vmatpush1.msra.mxu0 0.0
      %4166 = vmatprep.mubr.f32.mxu0 0.0
      %4167 = vmatmul.mubr.f32.gmra.mrb[0].mxu0 %v4100
      %v4168 = vpop.f32.mrb[0].mxu0
      %v4169 = vadd.f32 0.0, %v4168
      %v4170 = vpop.f32.mrb[0].mxu0
      %4171 = vdwg.mxu0
      %v4172 = vld [vmem:[%s53] sm:$0xff]
      %v4173 = vld [vmem:[%s53 + $0x8] sm:$0xff]
      %v4174 = vld [vmem:[%s53 + $0x10] sm:$0xff]
      %v4175 = vld [vmem:[%s53 + $0x18] sm:$0xff]
      %v4176 = vld [vmem:[%s53 + $0x20] sm:$0xff]
      %v4177 = vld [vmem:[%s53 + $0x28] sm:$0xff]
      %v4178 = vld [vmem:[%s53 + $0x30] sm:$0xff]
      %v4179 = vld [vmem:[%s53 + $0x38] sm:$0xff]
      %v4180 = vld [vmem:[%s53 + $0x40] sm:$0xff]
      %v4181 = vld [vmem:[%s53 + $0x48] sm:$0xff]
      %v4182 = vld [vmem:[%s53 + $0x50] sm:$0xff]
      %v4183 = vld [vmem:[%s53 + $0x58] sm:$0xff]
      %v4184 = vld [vmem:[%s53 + $0x60] sm:$0xff]
      %v4185 = vld [vmem:[%s53 + $0x68] sm:$0xff]
      %v4186 = vld [vmem:[%s53 + $0x70] sm:$0xff]
      %v4187 = vld [vmem:[%s53 + $0x78] sm:$0xff]
      %4188 = vmatprep.subr.mxu0 0.0
      %4189 = vmatpush1.msra.mxu0 %v4172
      %4190 = vmatprep.subr.mxu0 0.0
      %4191 = vmatpush1.msra.mxu0 %v4173
      %4192 = vmatprep.subr.mxu0 0.0
      %4193 = vmatpush1.msra.mxu0 %v4174
      %4194 = vmatprep.subr.mxu0 0.0
      %4195 = vmatpush1.msra.mxu0 %v4175
      %4196 = vmatprep.subr.mxu0 0.0
      %4197 = vmatpush1.msra.mxu0 %v4176
      %4198 = vmatprep.subr.mxu0 0.0
      %4199 = vmatpush1.msra.mxu0 %v4177
      %4200 = vmatprep.subr.mxu0 0.0
      %4201 = vmatpush1.msra.mxu0 %v4178
      %4202 = vmatprep.subr.mxu0 0.0
      %4203 = vmatpush1.msra.mxu0 %v4179
      %4204 = vmatprep.subr.mxu0 0.0
      %4205 = vmatpush1.msra.mxu0 %v4180
      %4206 = vmatprep.subr.mxu0 0.0
      %4207 = vmatpush1.msra.mxu0 %v4181
      %4208 = vmatprep.subr.mxu0 0.0
      %4209 = vmatpush1.msra.mxu0 %v4182
      %4210 = vmatprep.subr.mxu0 0.0
      %4211 = vmatpush1.msra.mxu0 %v4183
      %4212 = vmatprep.subr.mxu0 0.0
      %4213 = vmatpush1.msra.mxu0 %v4184
      %4214 = vmatprep.subr.mxu0 0.0
      %4215 = vmatpush1.msra.mxu0 %v4185
      %4216 = vmatprep.subr.mxu0 0.0
      %4217 = vmatpush1.msra.mxu0 %v4186
      %4218 = vmatprep.subr.mxu0 0.0
      %4219 = vmatpush1.msra.mxu0 %v4187
      %4220 = vmatprep.subr.mxu0 0.0
      %4221 = vmatpush1.msra.mxu0 0.0
      %4222 = vmatprep.subr.mxu0 0.0
      %4223 = vmatpush1.msra.mxu0 0.0
      %4224 = vmatprep.subr.mxu0 0.0
      %4225 = vmatpush1.msra.mxu0 0.0
      %4226 = vmatprep.subr.mxu0 0.0
      %4227 = vmatpush1.msra.mxu0 0.0
      %4228 = vmatprep.subr.mxu0 0.0
      %4229 = vmatpush1.msra.mxu0 0.0
      %4230 = vmatprep.subr.mxu0 0.0
      %4231 = vmatpush1.msra.mxu0 0.0
      %4232 = vmatprep.subr.mxu0 0.0
      %4233 = vmatpush1.msra.mxu0 0.0
      %4234 = vmatprep.subr.mxu0 0.0
      %4235 = vmatpush1.msra.mxu0 0.0
      %4236 = vmatprep.subr.mxu0 0.0
      %4237 = vmatpush1.msra.mxu0 0.0
      %4238 = vmatprep.subr.mxu0 0.0
      %4239 = vmatpush1.msra.mxu0 0.0
      %4240 = vmatprep.subr.mxu0 0.0
      %4241 = vmatpush1.msra.mxu0 0.0
      %4242 = vmatprep.subr.mxu0 0.0
      %4243 = vmatpush1.msra.mxu0 0.0
      %4244 = vmatprep.subr.mxu0 0.0
      %4245 = vmatpush1.msra.mxu0 0.0
      %4246 = vmatprep.subr.mxu0 0.0
      %4247 = vmatpush1.msra.mxu0 0.0
      %4248 = vmatprep.subr.mxu0 0.0
      %4249 = vmatpush1.msra.mxu0 0.0
      %4250 = vmatprep.subr.mxu0 0.0
      %4251 = vmatpush1.msra.mxu0 0.0
      %4252 = vmatprep.mubr.f32.mxu0 0.0
      %4253 = vmatmul.mubr.f32.gmra.mrb[0].mxu0 %v3477
      %v4254 = vpop.f32.mrb[0].mxu0
      %v4255 = vadd.f32 0.0, %v4254
      %v4256 = vpop.f32.mrb[0].mxu0
      %4257 = vdwg.mxu0
      %v4259 = vsel %vm1230, %v4255, 0
      %4261 = vmatprep.subr.mxu0 0.0
      %4262 = vmatpush1.msra.mxu0 %v3885
      %4263 = vmatprep.subr.mxu0 0.0
      %4264 = vmatpush1.msra.mxu0 0.0
      %4265 = vmatprep.subr.mxu0 0.0
      %4266 = vmatpush1.msra.mxu0 0.0
      %4267 = vmatprep.subr.mxu0 0.0
      %4268 = vmatpush1.msra.mxu0 0.0
      %4269 = vmatprep.subr.mxu0 0.0
      %4270 = vmatpush1.msra.mxu0 0.0
      %4271 = vmatprep.subr.mxu0 0.0
      %4272 = vmatpush1.msra.mxu0 0.0
      %4273 = vmatprep.subr.mxu0 0.0
      %4274 = vmatpush1.msra.mxu0 0.0
      %4275 = vmatprep.subr.mxu0 0.0
      %4276 = vmatpush1.msra.mxu0 0.0
      %4277 = vmatprep.subr.mxu0 0.0
      %4278 = vmatpush1.msra.mxu0 0.0
      %4279 = vmatprep.subr.mxu0 0.0
      %4280 = vmatpush1.msra.mxu0 0.0
      %4281 = vmatprep.subr.mxu0 0.0
      %4282 = vmatpush1.msra.mxu0 0.0
      %4283 = vmatprep.subr.mxu0 0.0
      %4284 = vmatpush1.msra.mxu0 0.0
      %4285 = vmatprep.subr.mxu0 0.0
      %4286 = vmatpush1.msra.mxu0 0.0
      %4287 = vmatprep.subr.mxu0 0.0
      %4288 = vmatpush1.msra.mxu0 0.0
      %4289 = vmatprep.subr.mxu0 0.0
      %4290 = vmatpush1.msra.mxu0 0.0
      %4291 = vmatprep.subr.mxu0 0.0
      %4292 = vmatpush1.msra.mxu0 0.0
      %4293 = vmatprep.subr.mxu0 0.0
      %4294 = vmatpush1.msra.mxu0 0.0
      %4295 = vmatprep.subr.mxu0 0.0
      %4296 = vmatpush1.msra.mxu0 0.0
      %4297 = vmatprep.subr.mxu0 0.0
      %4298 = vmatpush1.msra.mxu0 0.0
      %4299 = vmatprep.subr.mxu0 0.0
      %4300 = vmatpush1.msra.mxu0 0.0
      %4301 = vmatprep.subr.mxu0 0.0
      %4302 = vmatpush1.msra.mxu0 0.0
      %4303 = vmatprep.subr.mxu0 0.0
      %4304 = vmatpush1.msra.mxu0 0.0
      %4305 = vmatprep.subr.mxu0 0.0
      %4306 = vmatpush1.msra.mxu0 0.0
      %4307 = vmatprep.subr.mxu0 0.0
      %4308 = vmatpush1.msra.mxu0 0.0
      %4309 = vmatprep.subr.mxu0 0.0
      %4310 = vmatpush1.msra.mxu0 0.0
      %4311 = vmatprep.subr.mxu0 0.0
      %4312 = vmatpush1.msra.mxu0 0.0
      %4313 = vmatprep.subr.mxu0 0.0
      %4314 = vmatpush1.msra.mxu0 0.0
      %4315 = vmatprep.subr.mxu0 0.0
      %4316 = vmatpush1.msra.mxu0 0.0
      %4317 = vmatprep.subr.mxu0 0.0
      %4318 = vmatpush1.msra.mxu0 0.0
      %4319 = vmatprep.subr.mxu0 0.0
      %4320 = vmatpush1.msra.mxu0 0.0
      %4321 = vmatprep.subr.mxu0 0.0
      %4322 = vmatpush1.msra.mxu0 0.0
      %4323 = vmatprep.subr.mxu0 0.0
      %4324 = vmatpush1.msra.mxu0 0.0
      %4325 = vmatprep.mubr.f32.mxu0 0.0
      %4326 = vmatmul.mubr.f32.gmra.mrb[0].mxu0 %v4259
      %v4327 = vpop.f32.mrb[0].mxu0
      %v4328 = vadd.f32 0.0, %v4327
      %v4329 = vpop.f32.mrb[0].mxu0
      %4330 = vdwg.mxu0
      %v4331 = vld [vmem:[%s57] sm:$0xff]
      %v4332 = vld [vmem:[%s55] sm:$0xff]
      %v4334 = vsel %vm1230, %v4169, 0
      %v4337 = vsel %vm1230, %v4328, 0
      %4339 = vmatprep.subr.mxu0 0.0
      %4340 = vmatpush1.xpose.msra.mxu0 %v4337
      %4341 = vmatprep.subr.mxu0 0.0
      %4342 = vmatpush1.xpose.msra.mxu0 0.0
      %4343 = vmatprep.subr.mxu0 0.0
      %4344 = vmatpush1.xpose.msra.mxu0 0.0
      %4345 = vmatprep.subr.mxu0 0.0
      %4346 = vmatpush1.xpose.msra.mxu0 0.0
      %4347 = vmatprep.subr.mxu0 0.0
      %4348 = vmatpush1.xpose.msra.mxu0 0.0
      %4349 = vmatprep.subr.mxu0 0.0
      %4350 = vmatpush1.xpose.msra.mxu0 0.0
      %4351 = vmatprep.subr.mxu0 0.0
      %4352 = vmatpush1.xpose.msra.mxu0 0.0
      %4353 = vmatprep.subr.mxu0 0.0
      %4354 = vmatpush1.xpose.msra.mxu0 0.0
      %4355 = vmatprep.subr.mxu0 0.0
      %4356 = vmatpush1.xpose.msra.mxu0 0.0
      %4357 = vmatprep.subr.mxu0 0.0
      %4358 = vmatpush1.xpose.msra.mxu0 0.0
      %4359 = vmatprep.subr.mxu0 0.0
      %4360 = vmatpush1.xpose.msra.mxu0 0.0
      %4361 = vmatprep.subr.mxu0 0.0
      %4362 = vmatpush1.xpose.msra.mxu0 0.0
      %4363 = vmatprep.subr.mxu0 0.0
      %4364 = vmatpush1.xpose.msra.mxu0 0.0
      %4365 = vmatprep.subr.mxu0 0.0
      %4366 = vmatpush1.xpose.msra.mxu0 0.0
      %4367 = vmatprep.subr.mxu0 0.0
      %4368 = vmatpush1.xpose.msra.mxu0 0.0
      %4369 = vmatprep.subr.mxu0 0.0
      %4370 = vmatpush1.xpose.msra.mxu0 0.0
      %4371 = vmatprep.subr.mxu0 0.0
      %4372 = vmatpush1.xpose.msra.mxu0 0.0
      %4373 = vmatprep.subr.mxu0 0.0
      %4374 = vmatpush1.xpose.msra.mxu0 0.0
      %4375 = vmatprep.subr.mxu0 0.0
      %4376 = vmatpush1.xpose.msra.mxu0 0.0
      %4377 = vmatprep.subr.mxu0 0.0
      %4378 = vmatpush1.xpose.msra.mxu0 0.0
      %4379 = vmatprep.subr.mxu0 0.0
      %4380 = vmatpush1.xpose.msra.mxu0 0.0
      %4381 = vmatprep.subr.mxu0 0.0
      %4382 = vmatpush1.xpose.msra.mxu0 0.0
      %4383 = vmatprep.subr.mxu0 0.0
      %4384 = vmatpush1.xpose.msra.mxu0 0.0
      %4385 = vmatprep.subr.mxu0 0.0
      %4386 = vmatpush1.xpose.msra.mxu0 0.0
      %4387 = vmatprep.subr.mxu0 0.0
      %4388 = vmatpush1.xpose.msra.mxu0 0.0
      %4389 = vmatprep.subr.mxu0 0.0
      %4390 = vmatpush1.xpose.msra.mxu0 0.0
      %4391 = vmatprep.subr.mxu0 0.0
      %4392 = vmatpush1.xpose.msra.mxu0 0.0
      %4393 = vmatprep.subr.mxu0 0.0
      %4394 = vmatpush1.xpose.msra.mxu0 0.0
      %4395 = vmatprep.subr.mxu0 0.0
      %4396 = vmatpush1.xpose.msra.mxu0 0.0
      %4397 = vmatprep.subr.mxu0 0.0
      %4398 = vmatpush1.xpose.msra.mxu0 0.0
      %4399 = vmatprep.subr.mxu0 0.0
      %4400 = vmatpush1.xpose.msra.mxu0 0.0
      %4401 = vmatprep.subr.mxu0 0.0
      %4402 = vmatpush1.xpose.msra.mxu0 0.0
      %4403 = vmatprep.mubr.f32.mxu0 0.0
      %4404 = vmatmul.mubr.f32.gmra.mrb[0].mxu0 %v4334
      %v4405 = vpop.f32.mrb[0].mxu0
      %v4406 = vadd.f32 %v4332, %v4405
      %v4407 = vpop.f32.mrb[0].mxu0
      %4408 = vdwg.mxu0
      %v4409 = vsub.f32 0.0, %v4406
      %v4410 = vmul.f32 %v4409, 1.442695
      %v4411 = vpow.pop %v4410
      %v4412 = vadd.f32 %v4411, 1.0
      %v4413 = vrcp.pop %v4412
      %v4414 = vmul.f32 1.0, %v4413
      %v4416 = vsel %vm1230, %v4331, 0
      %4418 = vmatprep.subr.mxu0 0.0
      %4419 = vmatpush1.msra.mxu0 %v4414
      %4420 = vmatprep.subr.mxu0 0.0
      %4421 = vmatpush1.msra.mxu0 0.0
      %4422 = vmatprep.subr.mxu0 0.0
      %4423 = vmatpush1.msra.mxu0 0.0
      %4424 = vmatprep.subr.mxu0 0.0
      %4425 = vmatpush1.msra.mxu0 0.0
      %4426 = vmatprep.subr.mxu0 0.0
      %4427 = vmatpush1.msra.mxu0 0.0
      %4428 = vmatprep.subr.mxu0 0.0
      %4429 = vmatpush1.msra.mxu0 0.0
      %4430 = vmatprep.subr.mxu0 0.0
      %4431 = vmatpush1.msra.mxu0 0.0
      %4432 = vmatprep.subr.mxu0 0.0
      %4433 = vmatpush1.msra.mxu0 0.0
      %4434 = vmatprep.subr.mxu0 0.0
      %4435 = vmatpush1.msra.mxu0 0.0
      %4436 = vmatprep.subr.mxu0 0.0
      %4437 = vmatpush1.msra.mxu0 0.0
      %4438 = vmatprep.subr.mxu0 0.0
      %4439 = vmatpush1.msra.mxu0 0.0
      %4440 = vmatprep.subr.mxu0 0.0
      %4441 = vmatpush1.msra.mxu0 0.0
      %4442 = vmatprep.subr.mxu0 0.0
      %4443 = vmatpush1.msra.mxu0 0.0
      %4444 = vmatprep.subr.mxu0 0.0
      %4445 = vmatpush1.msra.mxu0 0.0
      %4446 = vmatprep.subr.mxu0 0.0
      %4447 = vmatpush1.msra.mxu0 0.0
      %4448 = vmatprep.subr.mxu0 0.0
      %4449 = vmatpush1.msra.mxu0 0.0
      %4450 = vmatprep.subr.mxu0 0.0
      %4451 = vmatpush1.msra.mxu0 0.0
      %4452 = vmatprep.subr.mxu0 0.0
      %4453 = vmatpush1.msra.mxu0 0.0
      %4454 = vmatprep.subr.mxu0 0.0
      %4455 = vmatpush1.msra.mxu0 0.0
      %4456 = vmatprep.subr.mxu0 0.0
      %4457 = vmatpush1.msra.mxu0 0.0
      %4458 = vmatprep.subr.mxu0 0.0
      %4459 = vmatpush1.msra.mxu0 0.0
      %4460 = vmatprep.subr.mxu0 0.0
      %4461 = vmatpush1.msra.mxu0 0.0
      %4462 = vmatprep.subr.mxu0 0.0
      %4463 = vmatpush1.msra.mxu0 0.0
      %4464 = vmatprep.subr.mxu0 0.0
      %4465 = vmatpush1.msra.mxu0 0.0
      %4466 = vmatprep.subr.mxu0 0.0
      %4467 = vmatpush1.msra.mxu0 0.0
      %4468 = vmatprep.subr.mxu0 0.0
      %4469 = vmatpush1.msra.mxu0 0.0
      %4470 = vmatprep.subr.mxu0 0.0
      %4471 = vmatpush1.msra.mxu0 0.0
      %4472 = vmatprep.subr.mxu0 0.0
      %4473 = vmatpush1.msra.mxu0 0.0
      %4474 = vmatprep.subr.mxu0 0.0
      %4475 = vmatpush1.msra.mxu0 0.0
      %4476 = vmatprep.subr.mxu0 0.0
      %4477 = vmatpush1.msra.mxu0 0.0
      %4478 = vmatprep.subr.mxu0 0.0
      %4479 = vmatpush1.msra.mxu0 0.0
      %4480 = vmatprep.subr.mxu0 0.0
      %4481 = vmatpush1.msra.mxu0 0.0
      %4482 = vmatprep.mubr.f32.mxu0 0.0
      %4483 = vmatmul.mubr.f32.gmra.mrb[0].mxu0 %v4416
      %v4484 = vpop.f32.mrb[0].mxu0
      %v4485 = vadd.f32 0.0, %v4484
      %v4486 = vpop.f32.mrb[0].mxu0
      %4487 = vdwg.mxu0
      %v4488 = vsel %vm1230, %v4485, -inf
      %v4489 = vrot.slane %v4488, 4
      %v4490 = vmax.f32 %v4488, %v4489
      %v4491 = vrot.slane %v4490, 2
      %v4492 = vmax.f32 %v4490, %v4491
      %v4493 = vrot.slane %v4492, 1
      %v4494 = vmax.f32 %v4492, %v4493
      %v4495 = vsub.f32 %v4485, %v4494
      %v4496 = vmul.f32 %v4495, 1.442695
      %v4497 = vpow.pop %v4496
      %v4498 = vsel %vm1230, %v4497, 0.0
      %v4499 = vrot.slane %v4498, 4
      %v4500 = vadd.f32 %v4498, %v4499
      %v4501 = vrot.slane %v4500, 2
      %v4502 = vadd.f32 %v4500, %v4501
      %v4503 = vrot.slane %v4502, 1
      %v4504 = vadd.f32 %v4502, %v4503
      %v4505 = vrcp.pop %v4504
      %v4506 = vmul.f32 %v4497, %v4505
      %4507 = vxpose.xlu0.b32.start [1/16] %v4506, 128
      %4508 = vxpose.xlu0.b32.cont [2/16] 0.0, 128
      %4509 = vxpose.xlu0.b32.cont [3/16] 0.0, 128
      %4510 = vxpose.xlu0.b32.cont [4/16] 0.0, 128
      %4511 = vxpose.xlu0.b32.cont [5/16] 0.0, 128
      %4512 = vxpose.xlu0.b32.cont [6/16] 0.0, 128
      %4513 = vxpose.xlu0.b32.cont [7/16] 0.0, 128
      %4514 = vxpose.xlu0.b32.cont [8/16] 0.0, 128
      %4515 = vxpose.xlu0.b32.cont [9/16] 0.0, 128
      %4516 = vxpose.xlu0.b32.cont [10/16] 0.0, 128
      %4517 = vxpose.xlu0.b32.cont [11/16] 0.0, 128
      %4518 = vxpose.xlu0.b32.cont [12/16] 0.0, 128
      %4519 = vxpose.xlu0.b32.cont [13/16] 0.0, 128
      %4520 = vxpose.xlu0.b32.cont [14/16] 0.0, 128
      %4521 = vxpose.xlu0.b32.cont [15/16] 0.0, 128
      %4522 = vxpose.xlu0.b32.end [16/16] 0.0, 128
      %v4523 = vpop.trf.xlu0
      %v4524 = vpop.trf.xlu0
      %v4525 = vpop.trf.xlu0
      %v4526 = vpop.trf.xlu0
      %v4527 = vpop.trf.xlu0
      %v4528 = vpop.trf.xlu0
      %v4529 = vpop.trf.xlu0
      %v4530 = vpop.trf.xlu0
      %v4531 = vpop.trf.xlu0
      %v4532 = vpop.trf.xlu0
      %v4533 = vpop.trf.xlu0
      %v4534 = vpop.trf.xlu0
      %v4535 = vpop.trf.xlu0
      %v4536 = vpop.trf.xlu0
      %v4537 = vpop.trf.xlu0
      %v4538 = vpop.trf.xlu0
      %v4539 = vmul.f32 %v3424, %v4523
      %v4541 = vsel %vm1230, %v4539, 0
      %4543 = vmatprep.subr.mxu0 0.0
      %4544 = vmatpush1.msra.mxu0 %v3477
      %4545 = vmatprep.subr.mxu0 0.0
      %4546 = vmatpush1.msra.mxu0 0.0
      %4547 = vmatprep.subr.mxu0 0.0
      %4548 = vmatpush1.msra.mxu0 0.0
      %4549 = vmatprep.subr.mxu0 0.0
      %4550 = vmatpush1.msra.mxu0 0.0
      %4551 = vmatprep.subr.mxu0 0.0
      %4552 = vmatpush1.msra.mxu0 0.0
      %4553 = vmatprep.subr.mxu0 0.0
      %4554 = vmatpush1.msra.mxu0 0.0
      %4555 = vmatprep.subr.mxu0 0.0
      %4556 = vmatpush1.msra.mxu0 0.0
      %4557 = vmatprep.subr.mxu0 0.0
      %4558 = vmatpush1.msra.mxu0 0.0
      %4559 = vmatprep.subr.mxu0 0.0
      %4560 = vmatpush1.msra.mxu0 0.0
      %4561 = vmatprep.subr.mxu0 0.0
      %4562 = vmatpush1.msra.mxu0 0.0
      %4563 = vmatprep.subr.mxu0 0.0
      %4564 = vmatpush1.msra.mxu0 0.0
      %4565 = vmatprep.subr.mxu0 0.0
      %4566 = vmatpush1.msra.mxu0 0.0
      %4567 = vmatprep.subr.mxu0 0.0
      %4568 = vmatpush1.msra.mxu0 0.0
      %4569 = vmatprep.subr.mxu0 0.0
      %4570 = vmatpush1.msra.mxu0 0.0
      %4571 = vmatprep.subr.mxu0 0.0
      %4572 = vmatpush1.msra.mxu0 0.0
      %4573 = vmatprep.subr.mxu0 0.0
      %4574 = vmatpush1.msra.mxu0 0.0
      %4575 = vmatprep.subr.mxu0 0.0
      %4576 = vmatpush1.msra.mxu0 0.0
      %4577 = vmatprep.subr.mxu0 0.0
      %4578 = vmatpush1.msra.mxu0 0.0
      %4579 = vmatprep.subr.mxu0 0.0
      %4580 = vmatpush1.msra.mxu0 0.0
      %4581 = vmatprep.subr.mxu0 0.0
      %4582 = vmatpush1.msra.mxu0 0.0
      %4583 = vmatprep.subr.mxu0 0.0
      %4584 = vmatpush1.msra.mxu0 0.0
      %4585 = vmatprep.subr.mxu0 0.0
      %4586 = vmatpush1.msra.mxu0 0.0
      %4587 = vmatprep.subr.mxu0 0.0
      %4588 = vmatpush1.msra.mxu0 0.0
      %4589 = vmatprep.subr.mxu0 0.0
      %4590 = vmatpush1.msra.mxu0 0.0
      %4591 = vmatprep.subr.mxu0 0.0
      %4592 = vmatpush1.msra.mxu0 0.0
      %4593 = vmatprep.subr.mxu0 0.0
      %4594 = vmatpush1.msra.mxu0 0.0
      %4595 = vmatprep.subr.mxu0 0.0
      %4596 = vmatpush1.msra.mxu0 0.0
      %4597 = vmatprep.subr.mxu0 0.0
      %4598 = vmatpush1.msra.mxu0 0.0
      %4599 = vmatprep.subr.mxu0 0.0
      %4600 = vmatpush1.msra.mxu0 0.0
      %4601 = vmatprep.subr.mxu0 0.0
      %4602 = vmatpush1.msra.mxu0 0.0
      %4603 = vmatprep.subr.mxu0 0.0
      %4604 = vmatpush1.msra.mxu0 0.0
      %4605 = vmatprep.subr.mxu0 0.0
      %4606 = vmatpush1.msra.mxu0 0.0
      %4607 = vmatprep.mubr.f32.mxu0 0.0
      %4608 = vmatmul.mubr.f32.gmra.mrb[0].mxu0 %v4541
      %v4609 = vpop.f32.mrb[0].mxu0
      %v4610 = vadd.f32 0.0, %v4609
      %v4611 = vpop.f32.mrb[0].mxu0
      %4612 = vdwg.mxu0
      %4614 = vrot.lane.b32.xlu0 %v4610, 112
      %v4615 = vpop.permute.xlu0 %4614
      %4617 = vrot.lane.b32.xlu0 %v4610, 96
      %v4618 = vpop.permute.xlu0 %4617
      %4620 = vrot.lane.b32.xlu0 %v4610, 80
      %v4621 = vpop.permute.xlu0 %4620
      %4623 = vrot.lane.b32.xlu0 %v4610, 64
      %v4624 = vpop.permute.xlu0 %4623
      %4626 = vrot.lane.b32.xlu0 %v4610, 48
      %v4627 = vpop.permute.xlu0 %4626
      %4629 = vrot.lane.b32.xlu0 %v4610, 32
      %v4630 = vpop.permute.xlu0 %4629
      %4632 = vrot.lane.b32.xlu0 %v4610, 16
      %v4633 = vpop.permute.xlu0 %4632
      %v4635 = vmul.f32 %v3425, %v4523
      %v4637 = vsel %vm1230, %v4635, 0
      %4639 = vmatprep.subr.mxu0 0.0
      %4640 = vmatpush1.msra.mxu0 %v3477
      %4641 = vmatprep.subr.mxu0 0.0
      %4642 = vmatpush1.msra.mxu0 0.0
      %4643 = vmatprep.subr.mxu0 0.0
      %4644 = vmatpush1.msra.mxu0 0.0
      %4645 = vmatprep.subr.mxu0 0.0
      %4646 = vmatpush1.msra.mxu0 0.0
      %4647 = vmatprep.subr.mxu0 0.0
      %4648 = vmatpush1.msra.mxu0 0.0
      %4649 = vmatprep.subr.mxu0 0.0
      %4650 = vmatpush1.msra.mxu0 0.0
      %4651 = vmatprep.subr.mxu0 0.0
      %4652 = vmatpush1.msra.mxu0 0.0
      %4653 = vmatprep.subr.mxu0 0.0
      %4654 = vmatpush1.msra.mxu0 0.0
      %4655 = vmatprep.subr.mxu0 0.0
      %4656 = vmatpush1.msra.mxu0 0.0
      %4657 = vmatprep.subr.mxu0 0.0
      %4658 = vmatpush1.msra.mxu0 0.0
      %4659 = vmatprep.subr.mxu0 0.0
      %4660 = vmatpush1.msra.mxu0 0.0
      %4661 = vmatprep.subr.mxu0 0.0
      %4662 = vmatpush1.msra.mxu0 0.0
      %4663 = vmatprep.subr.mxu0 0.0
      %4664 = vmatpush1.msra.mxu0 0.0
      %4665 = vmatprep.subr.mxu0 0.0
      %4666 = vmatpush1.msra.mxu0 0.0
      %4667 = vmatprep.subr.mxu0 0.0
      %4668 = vmatpush1.msra.mxu0 0.0
      %4669 = vmatprep.subr.mxu0 0.0
      %4670 = vmatpush1.msra.mxu0 0.0
      %4671 = vmatprep.subr.mxu0 0.0
      %4672 = vmatpush1.msra.mxu0 0.0
      %4673 = vmatprep.subr.mxu0 0.0
      %4674 = vmatpush1.msra.mxu0 0.0
      %4675 = vmatprep.subr.mxu0 0.0
      %4676 = vmatpush1.msra.mxu0 0.0
      %4677 = vmatprep.subr.mxu0 0.0
      %4678 = vmatpush1.msra.mxu0 0.0
      %4679 = vmatprep.subr.mxu0 0.0
      %4680 = vmatpush1.msra.mxu0 0.0
      %4681 = vmatprep.subr.mxu0 0.0
      %4682 = vmatpush1.msra.mxu0 0.0
      %4683 = vmatprep.subr.mxu0 0.0
      %4684 = vmatpush1.msra.mxu0 0.0
      %4685 = vmatprep.subr.mxu0 0.0
      %4686 = vmatpush1.msra.mxu0 0.0
      %4687 = vmatprep.subr.mxu0 0.0
      %4688 = vmatpush1.msra.mxu0 0.0
      %4689 = vmatprep.subr.mxu0 0.0
      %4690 = vmatpush1.msra.mxu0 0.0
      %4691 = vmatprep.subr.mxu0 0.0
      %4692 = vmatpush1.msra.mxu0 0.0
      %4693 = vmatprep.subr.mxu0 0.0
      %4694 = vmatpush1.msra.mxu0 0.0
      %4695 = vmatprep.subr.mxu0 0.0
      %4696 = vmatpush1.msra.mxu0 0.0
      %4697 = vmatprep.subr.mxu0 0.0
      %4698 = vmatpush1.msra.mxu0 0.0
      %4699 = vmatprep.subr.mxu0 0.0
      %4700 = vmatpush1.msra.mxu0 0.0
      %4701 = vmatprep.subr.mxu0 0.0
      %4702 = vmatpush1.msra.mxu0 0.0
      %4703 = vmatprep.mubr.f32.mxu0 0.0
      %4704 = vmatmul.mubr.f32.gmra.mrb[0].mxu0 %v4637
      %v4705 = vpop.f32.mrb[0].mxu0
      %v4706 = vadd.f32 0.0, %v4705
      %v4707 = vpop.f32.mrb[0].mxu0
      %4708 = vdwg.mxu0
      %4710 = vrot.lane.b32.xlu0 %v4706, 112
      %v4711 = vpop.permute.xlu0 %4710
      %4712 = vrot.lane.b32.xlu0 %v4706, 96
      %v4713 = vpop.permute.xlu0 %4712
      %4714 = vrot.lane.b32.xlu0 %v4706, 80
      %v4715 = vpop.permute.xlu0 %4714
      %4716 = vrot.lane.b32.xlu0 %v4706, 64
      %v4717 = vpop.permute.xlu0 %4716
      %4718 = vrot.lane.b32.xlu0 %v4706, 48
      %v4719 = vpop.permute.xlu0 %4718
      %4720 = vrot.lane.b32.xlu0 %v4706, 32
      %v4721 = vpop.permute.xlu0 %4720
      %4722 = vrot.lane.b32.xlu0 %v4706, 16
      %v4723 = vpop.permute.xlu0 %4722
      %v4724 = vmul.f32 %v3426, %v4523
      %v4726 = vsel %vm1230, %v4724, 0
      %4728 = vmatprep.subr.mxu0 0.0
      %4729 = vmatpush1.msra.mxu0 %v3477
      %4730 = vmatprep.subr.mxu0 0.0
      %4731 = vmatpush1.msra.mxu0 0.0
      %4732 = vmatprep.subr.mxu0 0.0
      %4733 = vmatpush1.msra.mxu0 0.0
      %4734 = vmatprep.subr.mxu0 0.0
      %4735 = vmatpush1.msra.mxu0 0.0
      %4736 = vmatprep.subr.mxu0 0.0
      %4737 = vmatpush1.msra.mxu0 0.0
      %4738 = vmatprep.subr.mxu0 0.0
      %4739 = vmatpush1.msra.mxu0 0.0
      %4740 = vmatprep.subr.mxu0 0.0
      %4741 = vmatpush1.msra.mxu0 0.0
      %4742 = vmatprep.subr.mxu0 0.0
      %4743 = vmatpush1.msra.mxu0 0.0
      %4744 = vmatprep.subr.mxu0 0.0
      %4745 = vmatpush1.msra.mxu0 0.0
      %4746 = vmatprep.subr.mxu0 0.0
      %4747 = vmatpush1.msra.mxu0 0.0
      %4748 = vmatprep.subr.mxu0 0.0
      %4749 = vmatpush1.msra.mxu0 0.0
      %4750 = vmatprep.subr.mxu0 0.0
      %4751 = vmatpush1.msra.mxu0 0.0
      %4752 = vmatprep.subr.mxu0 0.0
      %4753 = vmatpush1.msra.mxu0 0.0
      %4754 = vmatprep.subr.mxu0 0.0
      %4755 = vmatpush1.msra.mxu0 0.0
      %4756 = vmatprep.subr.mxu0 0.0
      %4757 = vmatpush1.msra.mxu0 0.0
      %4758 = vmatprep.subr.mxu0 0.0
      %4759 = vmatpush1.msra.mxu0 0.0
      %4760 = vmatprep.subr.mxu0 0.0
      %4761 = vmatpush1.msra.mxu0 0.0
      %4762 = vmatprep.subr.mxu0 0.0
      %4763 = vmatpush1.msra.mxu0 0.0
      %4764 = vmatprep.subr.mxu0 0.0
      %4765 = vmatpush1.msra.mxu0 0.0
      %4766 = vmatprep.subr.mxu0 0.0
      %4767 = vmatpush1.msra.mxu0 0.0
      %4768 = vmatprep.subr.mxu0 0.0
      %4769 = vmatpush1.msra.mxu0 0.0
      %4770 = vmatprep.subr.mxu0 0.0
      %4771 = vmatpush1.msra.mxu0 0.0
      %4772 = vmatprep.subr.mxu0 0.0
      %4773 = vmatpush1.msra.mxu0 0.0
      %4774 = vmatprep.subr.mxu0 0.0
      %4775 = vmatpush1.msra.mxu0 0.0
      %4776 = vmatprep.subr.mxu0 0.0
      %4777 = vmatpush1.msra.mxu0 0.0
      %4778 = vmatprep.subr.mxu0 0.0
      %4779 = vmatpush1.msra.mxu0 0.0
      %4780 = vmatprep.subr.mxu0 0.0
      %4781 = vmatpush1.msra.mxu0 0.0
      %4782 = vmatprep.subr.mxu0 0.0
      %4783 = vmatpush1.msra.mxu0 0.0
      %4784 = vmatprep.subr.mxu0 0.0
      %4785 = vmatpush1.msra.mxu0 0.0
      %4786 = vmatprep.subr.mxu0 0.0
      %4787 = vmatpush1.msra.mxu0 0.0
      %4788 = vmatprep.subr.mxu0 0.0
      %4789 = vmatpush1.msra.mxu0 0.0
      %4790 = vmatprep.subr.mxu0 0.0
      %4791 = vmatpush1.msra.mxu0 0.0
      %4792 = vmatprep.mubr.f32.mxu0 0.0
      %4793 = vmatmul.mubr.f32.gmra.mrb[0].mxu0 %v4726
      %v4794 = vpop.f32.mrb[0].mxu0
      %v4795 = vadd.f32 0.0, %v4794
      %v4796 = vpop.f32.mrb[0].mxu0
      %4797 = vdwg.mxu0
      %4799 = vrot.lane.b32.xlu0 %v4795, 112
      %v4800 = vpop.permute.xlu0 %4799
      %4801 = vrot.lane.b32.xlu0 %v4795, 96
      %v4802 = vpop.permute.xlu0 %4801
      %4803 = vrot.lane.b32.xlu0 %v4795, 80
      %v4804 = vpop.permute.xlu0 %4803
      %4805 = vrot.lane.b32.xlu0 %v4795, 64
      %v4806 = vpop.permute.xlu0 %4805
      %4807 = vrot.lane.b32.xlu0 %v4795, 48
      %v4808 = vpop.permute.xlu0 %4807
      %4809 = vrot.lane.b32.xlu0 %v4795, 32
      %v4810 = vpop.permute.xlu0 %4809
      %4811 = vrot.lane.b32.xlu0 %v4795, 16
      %v4812 = vpop.permute.xlu0 %4811
      %4813 = vrot.lane.b32.xlu0 %v4711, 16
      %v4814 = vpop.permute.xlu0 %4813
      %4815 = vrot.lane.b32.xlu0 %v4713, 16
      %v4816 = vpop.permute.xlu0 %4815
      %4817 = vrot.lane.b32.xlu0 %v4715, 16
      %v4818 = vpop.permute.xlu0 %4817
      %4819 = vrot.lane.b32.xlu0 %v4717, 16
      %v4820 = vpop.permute.xlu0 %4819
      %4821 = vrot.lane.b32.xlu0 %v4719, 16
      %v4822 = vpop.permute.xlu0 %4821
      %4823 = vrot.lane.b32.xlu0 %v4721, 16
      %v4824 = vpop.permute.xlu0 %4823
      %4825 = vrot.lane.b32.xlu0 %v4723, 16
      %v4826 = vpop.permute.xlu0 %4825
      %4835 = vrot.lane.b32.xlu0 %v4800, 32
      %v4836 = vpop.permute.xlu0 %4835
      %4837 = vrot.lane.b32.xlu0 %v4802, 32
      %v4838 = vpop.permute.xlu0 %4837
      %4839 = vrot.lane.b32.xlu0 %v4804, 32
      %v4840 = vpop.permute.xlu0 %4839
      %4841 = vrot.lane.b32.xlu0 %v4806, 32
      %v4842 = vpop.permute.xlu0 %4841
      %4843 = vrot.lane.b32.xlu0 %v4808, 32
      %v4844 = vpop.permute.xlu0 %4843
      %4845 = vrot.lane.b32.xlu0 %v4810, 32
      %v4846 = vpop.permute.xlu0 %4845
      %4847 = vrot.lane.b32.xlu0 %v4812, 32
      %v4848 = vpop.permute.xlu0 %4847
      %v4857 = vsel %vm1234, %v4610, %v4723
      %v4858 = vsel %vm1234, %v4615, %v4814
      %v4859 = vsel %vm1234, %v4618, %v4816
      %v4860 = vsel %vm1234, %v4621, %v4818
      %v4861 = vsel %vm1234, %v4624, %v4820
      %v4862 = vsel %vm1234, %v4627, %v4822
      %v4863 = vsel %vm1234, %v4630, %v4824
      %v4864 = vsel %vm1234, %v4633, %v4826
      %v4865 = vsel %vm1399, %v4857, %v4810
      %v4866 = vsel %vm1399, %v4858, %v4836
      %v4867 = vsel %vm1399, %v4859, %v4838
      %v4868 = vsel %vm1399, %v4860, %v4840
      %v4869 = vsel %vm1399, %v4861, %v4842
      %v4870 = vsel %vm1399, %v4862, %v4844
      %v4871 = vsel %vm1399, %v4863, %v4846
      %v4872 = vsel %vm1399, %v4864, %v4848
      %v4874 = vsel %vm3469, %v4865, 0
      %v4877 = vsel %vm3469, %v4866, 0
      %v4880 = vsel %vm3469, %v4867, 0
      %v4883 = vsel %vm3469, %v4868, 0
      %v4886 = vsel %vm3469, %v4869, 0
      %v4889 = vsel %vm3469, %v4870, 0
      %v4892 = vsel %vm3469, %v4871, 0
      %v4895 = vsel %vm3469, %v4872, 0
      %4897 = vmatprep.subr.mxu0 0.0
      %4898 = vmatpush1.msra.mxu0 %v3427
      %4899 = vmatprep.subr.mxu0 0.0
      %4900 = vmatpush1.msra.mxu0 %v3428
      %4901 = vmatprep.subr.mxu0 0.0
      %4902 = vmatpush1.msra.mxu0 %v3429
      %4903 = vmatprep.subr.mxu0 0.0
      %4904 = vmatpush1.msra.mxu0 %v3430
      %4905 = vmatprep.subr.mxu0 0.0
      %4906 = vmatpush1.msra.mxu0 %v3431
      %4907 = vmatprep.subr.mxu0 0.0
      %4908 = vmatpush1.msra.mxu0 %v3432
      %4909 = vmatprep.subr.mxu0 0.0
      %4910 = vmatpush1.msra.mxu0 0.0
      %4911 = vmatprep.subr.mxu0 0.0
      %4912 = vmatpush1.msra.mxu0 0.0
      %4913 = vmatprep.subr.mxu0 0.0
      %4914 = vmatpush1.msra.mxu0 0.0
      %4915 = vmatprep.subr.mxu0 0.0
      %4916 = vmatpush1.msra.mxu0 0.0
      %4917 = vmatprep.subr.mxu0 0.0
      %4918 = vmatpush1.msra.mxu0 0.0
      %4919 = vmatprep.subr.mxu0 0.0
      %4920 = vmatpush1.msra.mxu0 0.0
      %4921 = vmatprep.subr.mxu0 0.0
      %4922 = vmatpush1.msra.mxu0 0.0
      %4923 = vmatprep.subr.mxu0 0.0
      %4924 = vmatpush1.msra.mxu0 0.0
      %4925 = vmatprep.subr.mxu0 0.0
      %4926 = vmatpush1.msra.mxu0 0.0
      %4927 = vmatprep.subr.mxu0 0.0
      %4928 = vmatpush1.msra.mxu0 0.0
      %4929 = vmatprep.subr.mxu0 0.0
      %4930 = vmatpush1.msra.mxu0 0.0
      %4931 = vmatprep.subr.mxu0 0.0
      %4932 = vmatpush1.msra.mxu0 0.0
      %4933 = vmatprep.subr.mxu0 0.0
      %4934 = vmatpush1.msra.mxu0 0.0
      %4935 = vmatprep.subr.mxu0 0.0
      %4936 = vmatpush1.msra.mxu0 0.0
      %4937 = vmatprep.subr.mxu0 0.0
      %4938 = vmatpush1.msra.mxu0 0.0
      %4939 = vmatprep.subr.mxu0 0.0
      %4940 = vmatpush1.msra.mxu0 0.0
      %4941 = vmatprep.subr.mxu0 0.0
      %4942 = vmatpush1.msra.mxu0 0.0
      %4943 = vmatprep.subr.mxu0 0.0
      %4944 = vmatpush1.msra.mxu0 0.0
      %4945 = vmatprep.subr.mxu0 0.0
      %4946 = vmatpush1.msra.mxu0 0.0
      %4947 = vmatprep.subr.mxu0 0.0
      %4948 = vmatpush1.msra.mxu0 0.0
      %4949 = vmatprep.subr.mxu0 0.0
      %4950 = vmatpush1.msra.mxu0 0.0
      %4951 = vmatprep.subr.mxu0 0.0
      %4952 = vmatpush1.msra.mxu0 0.0
      %4953 = vmatprep.subr.mxu0 0.0
      %4954 = vmatpush1.msra.mxu0 0.0
      %4955 = vmatprep.subr.mxu0 0.0
      %4956 = vmatpush1.msra.mxu0 0.0
      %4957 = vmatprep.subr.mxu0 0.0
      %4958 = vmatpush1.msra.mxu0 0.0
      %4959 = vmatprep.subr.mxu0 0.0
      %4960 = vmatpush1.msra.mxu0 0.0
      %4961 = vmatprep.mubr.f32.mxu0 0.0
      %4962 = vmatmul.mubr.f32.gmra.mrb[0].mxu0 %v4874
      %v4963 = vpop.f32.mrb[0].mxu0
      %v4964 = vadd.f32 0.0, %v4963
      %v4965 = vpop.f32.mrb[0].mxu0
      %4966 = vmatprep.mubr.f32.mxu0 0.0
      %4967 = vmatmul.mubr.f32.gmra.mrb[0].mxu0 %v4877
      %v4968 = vpop.f32.mrb[0].mxu0
      %v4969 = vadd.f32 0.0, %v4968
      %v4970 = vpop.f32.mrb[0].mxu0
      %4971 = vmatprep.mubr.f32.mxu0 0.0
      %4972 = vmatmul.mubr.f32.gmra.mrb[0].mxu0 %v4880
      %v4973 = vpop.f32.mrb[0].mxu0
      %v4974 = vadd.f32 0.0, %v4973
      %v4975 = vpop.f32.mrb[0].mxu0
      %4976 = vmatprep.mubr.f32.mxu0 0.0
      %4977 = vmatmul.mubr.f32.gmra.mrb[0].mxu0 %v4883
      %v4978 = vpop.f32.mrb[0].mxu0
      %v4979 = vadd.f32 0.0, %v4978
      %v4980 = vpop.f32.mrb[0].mxu0
      %4981 = vmatprep.mubr.f32.mxu0 0.0
      %4982 = vmatmul.mubr.f32.gmra.mrb[0].mxu0 %v4886
      %v4983 = vpop.f32.mrb[0].mxu0
      %v4984 = vadd.f32 0.0, %v4983
      %v4985 = vpop.f32.mrb[0].mxu0
      %4986 = vmatprep.mubr.f32.mxu0 0.0
      %4987 = vmatmul.mubr.f32.gmra.mrb[0].mxu0 %v4889
      %v4988 = vpop.f32.mrb[0].mxu0
      %v4989 = vadd.f32 0.0, %v4988
      %v4990 = vpop.f32.mrb[0].mxu0
      %4991 = vmatprep.mubr.f32.mxu0 0.0
      %4992 = vmatmul.mubr.f32.gmra.mrb[0].mxu0 %v4892
      %v4993 = vpop.f32.mrb[0].mxu0
      %v4994 = vadd.f32 0.0, %v4993
      %v4995 = vpop.f32.mrb[0].mxu0
      %4996 = vmatprep.mubr.f32.mxu0 0.0
      %4997 = vmatmul.mubr.f32.gmra.mrb[0].mxu0 %v4895
      %v4998 = vpop.f32.mrb[0].mxu0
      %v4999 = vadd.f32 0.0, %v4998
      %v5000 = vpop.f32.mrb[0].mxu0
      %5001 = vdwg.mxu0
      %v5002 = vmax.f32 %v4964, 0.0
      %v5003 = vmax.f32 %v4969, 0.0
      %v5004 = vmax.f32 %v4974, 0.0
      %v5005 = vmax.f32 %v4979, 0.0
      %v5006 = vmax.f32 %v4984, 0.0
      %v5007 = vmax.f32 %v4989, 0.0
      %v5008 = vmax.f32 %v4994, 0.0
      %v5009 = vmax.f32 %v4999, 0.0
      %v5010 = vld [vmem:[%s65] sm:$0x1]
      %v5012 = vsel %vm1234, %v5002, 0
      %v5015 = vsel %vm1234, %v5003, 0
      %v5018 = vsel %vm1234, %v5004, 0
      %v5021 = vsel %vm1234, %v5005, 0
      %v5024 = vsel %vm1234, %v5006, 0
      %v5027 = vsel %vm1234, %v5007, 0
      %v5030 = vsel %vm1234, %v5008, 0
      %5032 = vmatprep.subr.mxu0 0.0
      %5033 = vmatpush1.msra.mxu0 %v3433
      %5034 = vmatprep.subr.mxu0 0.0
      %5035 = vmatpush1.msra.mxu0 %v3434
      %5036 = vmatprep.subr.mxu0 0.0
      %5037 = vmatpush1.msra.mxu0 0.0
      %5038 = vmatprep.subr.mxu0 0.0
      %5039 = vmatpush1.msra.mxu0 0.0
      %5040 = vmatprep.subr.mxu0 0.0
      %5041 = vmatpush1.msra.mxu0 0.0
      %5042 = vmatprep.subr.mxu0 0.0
      %5043 = vmatpush1.msra.mxu0 0.0
      %5044 = vmatprep.subr.mxu0 0.0
      %5045 = vmatpush1.msra.mxu0 0.0
      %5046 = vmatprep.subr.mxu0 0.0
      %5047 = vmatpush1.msra.mxu0 0.0
      %5048 = vmatprep.subr.mxu0 0.0
      %5049 = vmatpush1.msra.mxu0 0.0
      %5050 = vmatprep.subr.mxu0 0.0
      %5051 = vmatpush1.msra.mxu0 0.0
      %5052 = vmatprep.subr.mxu0 0.0
      %5053 = vmatpush1.msra.mxu0 0.0
      %5054 = vmatprep.subr.mxu0 0.0
      %5055 = vmatpush1.msra.mxu0 0.0
      %5056 = vmatprep.subr.mxu0 0.0
      %5057 = vmatpush1.msra.mxu0 0.0
      %5058 = vmatprep.subr.mxu0 0.0
      %5059 = vmatpush1.msra.mxu0 0.0
      %5060 = vmatprep.subr.mxu0 0.0
      %5061 = vmatpush1.msra.mxu0 0.0
      %5062 = vmatprep.subr.mxu0 0.0
      %5063 = vmatpush1.msra.mxu0 0.0
      %5064 = vmatprep.subr.mxu0 0.0
      %5065 = vmatpush1.msra.mxu0 0.0
      %5066 = vmatprep.subr.mxu0 0.0
      %5067 = vmatpush1.msra.mxu0 0.0
      %5068 = vmatprep.subr.mxu0 0.0
      %5069 = vmatpush1.msra.mxu0 0.0
      %5070 = vmatprep.subr.mxu0 0.0
      %5071 = vmatpush1.msra.mxu0 0.0
      %5072 = vmatprep.subr.mxu0 0.0
      %5073 = vmatpush1.msra.mxu0 0.0
      %5074 = vmatprep.subr.mxu0 0.0
      %5075 = vmatpush1.msra.mxu0 0.0
      %5076 = vmatprep.subr.mxu0 0.0
      %5077 = vmatpush1.msra.mxu0 0.0
      %5078 = vmatprep.subr.mxu0 0.0
      %5079 = vmatpush1.msra.mxu0 0.0
      %5080 = vmatprep.subr.mxu0 0.0
      %5081 = vmatpush1.msra.mxu0 0.0
      %5082 = vmatprep.subr.mxu0 0.0
      %5083 = vmatpush1.msra.mxu0 0.0
      %5084 = vmatprep.subr.mxu0 0.0
      %5085 = vmatpush1.msra.mxu0 0.0
      %5086 = vmatprep.subr.mxu0 0.0
      %5087 = vmatpush1.msra.mxu0 0.0
      %5088 = vmatprep.subr.mxu0 0.0
      %5089 = vmatpush1.msra.mxu0 0.0
      %5090 = vmatprep.subr.mxu0 0.0
      %5091 = vmatpush1.msra.mxu0 0.0
      %5092 = vmatprep.subr.mxu0 0.0
      %5093 = vmatpush1.msra.mxu0 0.0
      %5094 = vmatprep.subr.mxu0 0.0
      %5095 = vmatpush1.msra.mxu0 0.0
      %5096 = vmatprep.mubr.f32.mxu0 0.0
      %5097 = vmatmul.mubr.f32.gmra.mrb[0].mxu0 %v2769
      %v5098 = vpop.f32.mrb[0].mxu0
      %v5099 = vadd.f32 0.0, %v5098
      %v5100 = vpop.f32.mrb[0].mxu0
      %5101 = vmatprep.mubr.f32.mxu0 0.0
      %5102 = vmatmul.mubr.f32.gmra.mrb[0].mxu0 %v5012
      %v5103 = vpop.f32.mrb[0].mxu0
      %v5104 = vadd.f32 0.0, %v5103
      %v5105 = vpop.f32.mrb[0].mxu0
      %5106 = vmatprep.mubr.f32.mxu0 0.0
      %5107 = vmatmul.mubr.f32.gmra.mrb[0].mxu0 %v5015
      %v5108 = vpop.f32.mrb[0].mxu0
      %v5109 = vadd.f32 0.0, %v5108
      %v5110 = vpop.f32.mrb[0].mxu0
      %5111 = vmatprep.mubr.f32.mxu0 0.0
      %5112 = vmatmul.mubr.f32.gmra.mrb[0].mxu0 %v5018
      %v5113 = vpop.f32.mrb[0].mxu0
      %v5114 = vadd.f32 0.0, %v5113
      %v5115 = vpop.f32.mrb[0].mxu0
      %5116 = vmatprep.mubr.f32.mxu0 0.0
      %5117 = vmatmul.mubr.f32.gmra.mrb[0].mxu0 %v5021
      %v5118 = vpop.f32.mrb[0].mxu0
      %v5119 = vadd.f32 0.0, %v5118
      %v5120 = vpop.f32.mrb[0].mxu0
      %5121 = vmatprep.mubr.f32.mxu0 0.0
      %5122 = vmatmul.mubr.f32.gmra.mrb[0].mxu0 %v5024
      %v5123 = vpop.f32.mrb[0].mxu0
      %v5124 = vadd.f32 0.0, %v5123
      %v5125 = vpop.f32.mrb[0].mxu0
      %5126 = vmatprep.mubr.f32.mxu0 0.0
      %5127 = vmatmul.mubr.f32.gmra.mrb[0].mxu0 %v5027
      %v5128 = vpop.f32.mrb[0].mxu0
      %v5129 = vadd.f32 0.0, %v5128
      %v5130 = vpop.f32.mrb[0].mxu0
      %5131 = vmatprep.mubr.f32.mxu0 0.0
      %5132 = vmatmul.mubr.f32.gmra.mrb[0].mxu0 %v5030
      %v5133 = vpop.f32.mrb[0].mxu0
      %v5134 = vadd.f32 0.0, %v5133
      %v5135 = vpop.f32.mrb[0].mxu0
      %5136 = vdwg.mxu0
      %v5138 = vlaneseq
      %v5139 = vshrl.u32 %v5138, 7
      %v5140 = vsub.s32 0, %v5139
      %v5141 = vrot.slane %v5010, %v5140
      %v5143 = vadd.f32 %v5141, %v5099
      %v5144 = vadd.f32 %v5141, %v5104
      %v5145 = vadd.f32 %v5141, %v5109
      %v5146 = vadd.f32 %v5141, %v5114
      %v5147 = vadd.f32 %v5141, %v5119
      %v5148 = vadd.f32 %v5141, %v5124
      %v5149 = vadd.f32 %v5141, %v5129
      %v5150 = vadd.f32 %v5141, %v5134
      %v5152 = vsel %vm1234, %v5009, 0
      %5154 = vmatprep.subr.mxu0 0.0
      %5155 = vmatpush1.msra.mxu0 %v3435
      %5156 = vmatprep.subr.mxu0 0.0
      %5157 = vmatpush1.msra.mxu0 %v3436
      %5158 = vmatprep.subr.mxu0 0.0
      %5159 = vmatpush1.msra.mxu0 0.0
      %5160 = vmatprep.subr.mxu0 0.0
      %5161 = vmatpush1.msra.mxu0 0.0
      %5162 = vmatprep.subr.mxu0 0.0
      %5163 = vmatpush1.msra.mxu0 0.0
      %5164 = vmatprep.subr.mxu0 0.0
      %5165 = vmatpush1.msra.mxu0 0.0
      %5166 = vmatprep.subr.mxu0 0.0
      %5167 = vmatpush1.msra.mxu0 0.0
      %5168 = vmatprep.subr.mxu0 0.0
      %5169 = vmatpush1.msra.mxu0 0.0
      %5170 = vmatprep.subr.mxu0 0.0
      %5171 = vmatpush1.msra.mxu0 0.0
      %5172 = vmatprep.subr.mxu0 0.0
      %5173 = vmatpush1.msra.mxu0 0.0
      %5174 = vmatprep.subr.mxu0 0.0
      %5175 = vmatpush1.msra.mxu0 0.0
      %5176 = vmatprep.subr.mxu0 0.0
      %5177 = vmatpush1.msra.mxu0 0.0
      %5178 = vmatprep.subr.mxu0 0.0
      %5179 = vmatpush1.msra.mxu0 0.0
      %5180 = vmatprep.subr.mxu0 0.0
      %5181 = vmatpush1.msra.mxu0 0.0
      %5182 = vmatprep.subr.mxu0 0.0
      %5183 = vmatpush1.msra.mxu0 0.0
      %5184 = vmatprep.subr.mxu0 0.0
      %5185 = vmatpush1.msra.mxu0 0.0
      %5186 = vmatprep.subr.mxu0 0.0
      %5187 = vmatpush1.msra.mxu0 0.0
      %5188 = vmatprep.subr.mxu0 0.0
      %5189 = vmatpush1.msra.mxu0 0.0
      %5190 = vmatprep.subr.mxu0 0.0
      %5191 = vmatpush1.msra.mxu0 0.0
      %5192 = vmatprep.subr.mxu0 0.0
      %5193 = vmatpush1.msra.mxu0 0.0
      %5194 = vmatprep.subr.mxu0 0.0
      %5195 = vmatpush1.msra.mxu0 0.0
      %5196 = vmatprep.subr.mxu0 0.0
      %5197 = vmatpush1.msra.mxu0 0.0
      %5198 = vmatprep.subr.mxu0 0.0
      %5199 = vmatpush1.msra.mxu0 0.0
      %5200 = vmatprep.subr.mxu0 0.0
      %5201 = vmatpush1.msra.mxu0 0.0
      %5202 = vmatprep.subr.mxu0 0.0
      %5203 = vmatpush1.msra.mxu0 0.0
      %5204 = vmatprep.subr.mxu0 0.0
      %5205 = vmatpush1.msra.mxu0 0.0
      %5206 = vmatprep.subr.mxu0 0.0
      %5207 = vmatpush1.msra.mxu0 0.0
      %5208 = vmatprep.subr.mxu0 0.0
      %5209 = vmatpush1.msra.mxu0 0.0
      %5210 = vmatprep.subr.mxu0 0.0
      %5211 = vmatpush1.msra.mxu0 0.0
      %5212 = vmatprep.subr.mxu0 0.0
      %5213 = vmatpush1.msra.mxu0 0.0
      %5214 = vmatprep.subr.mxu0 0.0
      %5215 = vmatpush1.msra.mxu0 0.0
      %5216 = vmatprep.subr.mxu0 0.0
      %5217 = vmatpush1.msra.mxu0 0.0
      %5218 = vmatprep.mubr.f32.mxu0 0.0
      %5219 = vmatmul.mubr.f32.gmra.mrb[0].mxu0 %v5012
      %v5220 = vpop.f32.mrb[0].mxu0
      %v5221 = vadd.f32 0.0, %v5220
      %v5222 = vpop.f32.mrb[0].mxu0
      %5223 = vmatprep.mubr.f32.mxu0 0.0
      %5224 = vmatmul.mubr.f32.gmra.mrb[0].mxu0 %v5015
      %v5225 = vpop.f32.mrb[0].mxu0
      %v5226 = vadd.f32 0.0, %v5225
      %v5227 = vpop.f32.mrb[0].mxu0
      %5228 = vmatprep.mubr.f32.mxu0 0.0
      %5229 = vmatmul.mubr.f32.gmra.mrb[0].mxu0 %v5018
      %v5230 = vpop.f32.mrb[0].mxu0
      %v5231 = vadd.f32 0.0, %v5230
      %v5232 = vpop.f32.mrb[0].mxu0
      %5233 = vmatprep.mubr.f32.mxu0 0.0
      %5234 = vmatmul.mubr.f32.gmra.mrb[0].mxu0 %v5021
      %v5235 = vpop.f32.mrb[0].mxu0
      %v5236 = vadd.f32 0.0, %v5235
      %v5237 = vpop.f32.mrb[0].mxu0
      %5238 = vmatprep.mubr.f32.mxu0 0.0
      %5239 = vmatmul.mubr.f32.gmra.mrb[0].mxu0 %v5024
      %v5240 = vpop.f32.mrb[0].mxu0
      %v5241 = vadd.f32 0.0, %v5240
      %v5242 = vpop.f32.mrb[0].mxu0
      %5243 = vmatprep.mubr.f32.mxu0 0.0
      %5244 = vmatmul.mubr.f32.gmra.mrb[0].mxu0 %v5027
      %v5245 = vpop.f32.mrb[0].mxu0
      %v5246 = vadd.f32 0.0, %v5245
      %v5247 = vpop.f32.mrb[0].mxu0
      %5248 = vmatprep.mubr.f32.mxu0 0.0
      %5249 = vmatmul.mubr.f32.gmra.mrb[0].mxu0 %v5030
      %v5250 = vpop.f32.mrb[0].mxu0
      %v5251 = vadd.f32 0.0, %v5250
      %v5252 = vpop.f32.mrb[0].mxu0
      %5253 = vmatprep.mubr.f32.mxu0 0.0
      %5254 = vmatmul.mubr.f32.gmra.mrb[0].mxu0 %v5152
      %v5255 = vpop.f32.mrb[0].mxu0
      %v5256 = vadd.f32 0.0, %v5255
      %v5257 = vpop.f32.mrb[0].mxu0
      %5258 = vdwg.mxu0
      %v5259 = vadd.f32 %v5143, %v5221
      %v5260 = vadd.f32 %v5144, %v5226
      %v5261 = vadd.f32 %v5145, %v5231
      %v5262 = vadd.f32 %v5146, %v5236
      %v5263 = vadd.f32 %v5147, %v5241
      %v5264 = vadd.f32 %v5148, %v5246
      %v5265 = vadd.f32 %v5149, %v5251
      %v5266 = vadd.f32 %v5150, %v5256
      %5267 = vmatprep.subr.mxu0 0.0
      %5268 = vmatpush1.msra.mxu0 %v3437
      %5269 = vmatprep.subr.mxu0 0.0
      %5270 = vmatpush1.msra.mxu0 %v3438
      %5271 = vmatprep.subr.mxu0 0.0
      %5272 = vmatpush1.msra.mxu0 0.0
      %5273 = vmatprep.subr.mxu0 0.0
      %5274 = vmatpush1.msra.mxu0 0.0
      %5275 = vmatprep.subr.mxu0 0.0
      %5276 = vmatpush1.msra.mxu0 0.0
      %5277 = vmatprep.subr.mxu0 0.0
      %5278 = vmatpush1.msra.mxu0 0.0
      %5279 = vmatprep.subr.mxu0 0.0
      %5280 = vmatpush1.msra.mxu0 0.0
      %5281 = vmatprep.subr.mxu0 0.0
      %5282 = vmatpush1.msra.mxu0 0.0
      %5283 = vmatprep.subr.mxu0 0.0
      %5284 = vmatpush1.msra.mxu0 0.0
      %5285 = vmatprep.subr.mxu0 0.0
      %5286 = vmatpush1.msra.mxu0 0.0
      %5287 = vmatprep.subr.mxu0 0.0
      %5288 = vmatpush1.msra.mxu0 0.0
      %5289 = vmatprep.subr.mxu0 0.0
      %5290 = vmatpush1.msra.mxu0 0.0
      %5291 = vmatprep.subr.mxu0 0.0
      %5292 = vmatpush1.msra.mxu0 0.0
      %5293 = vmatprep.subr.mxu0 0.0
      %5294 = vmatpush1.msra.mxu0 0.0
      %5295 = vmatprep.subr.mxu0 0.0
      %5296 = vmatpush1.msra.mxu0 0.0
      %5297 = vmatprep.subr.mxu0 0.0
      %5298 = vmatpush1.msra.mxu0 0.0
      %5299 = vmatprep.subr.mxu0 0.0
      %5300 = vmatpush1.msra.mxu0 0.0
      %5301 = vmatprep.subr.mxu0 0.0
      %5302 = vmatpush1.msra.mxu0 0.0
      %5303 = vmatprep.subr.mxu0 0.0
      %5304 = vmatpush1.msra.mxu0 0.0
      %5305 = vmatprep.subr.mxu0 0.0
      %5306 = vmatpush1.msra.mxu0 0.0
      %5307 = vmatprep.subr.mxu0 0.0
      %5308 = vmatpush1.msra.mxu0 0.0
      %5309 = vmatprep.subr.mxu0 0.0
      %5310 = vmatpush1.msra.mxu0 0.0
      %5311 = vmatprep.subr.mxu0 0.0
      %5312 = vmatpush1.msra.mxu0 0.0
      %5313 = vmatprep.subr.mxu0 0.0
      %5314 = vmatpush1.msra.mxu0 0.0
      %5315 = vmatprep.subr.mxu0 0.0
      %5316 = vmatpush1.msra.mxu0 0.0
      %5317 = vmatprep.subr.mxu0 0.0
      %5318 = vmatpush1.msra.mxu0 0.0
      %5319 = vmatprep.subr.mxu0 0.0
      %5320 = vmatpush1.msra.mxu0 0.0
      %5321 = vmatprep.subr.mxu0 0.0
      %5322 = vmatpush1.msra.mxu0 0.0
      %5323 = vmatprep.subr.mxu0 0.0
      %5324 = vmatpush1.msra.mxu0 0.0
      %5325 = vmatprep.subr.mxu0 0.0
      %5326 = vmatpush1.msra.mxu0 0.0
      %5327 = vmatprep.subr.mxu0 0.0
      %5328 = vmatpush1.msra.mxu0 0.0
      %5329 = vmatprep.subr.mxu0 0.0
      %5330 = vmatpush1.msra.mxu0 0.0
      %5331 = vmatprep.mubr.f32.mxu0 0.0
      %5332 = vmatmul.mubr.f32.gmra.mrb[0].mxu0 %v5015
      %v5333 = vpop.f32.mrb[0].mxu0
      %v5334 = vadd.f32 0.0, %v5333
      %v5335 = vpop.f32.mrb[0].mxu0
      %5336 = vmatprep.mubr.f32.mxu0 0.0
      %5337 = vmatmul.mubr.f32.gmra.mrb[0].mxu0 %v5018
      %v5338 = vpop.f32.mrb[0].mxu0
      %v5339 = vadd.f32 0.0, %v5338
      %v5340 = vpop.f32.mrb[0].mxu0
      %5341 = vmatprep.mubr.f32.mxu0 0.0
      %5342 = vmatmul.mubr.f32.gmra.mrb[0].mxu0 %v5021
      %v5343 = vpop.f32.mrb[0].mxu0
      %v5344 = vadd.f32 0.0, %v5343
      %v5345 = vpop.f32.mrb[0].mxu0
      %5346 = vmatprep.mubr.f32.mxu0 0.0
      %5347 = vmatmul.mubr.f32.gmra.mrb[0].mxu0 %v5024
      %v5348 = vpop.f32.mrb[0].mxu0
      %v5349 = vadd.f32 0.0, %v5348
      %v5350 = vpop.f32.mrb[0].mxu0
      %5351 = vmatprep.mubr.f32.mxu0 0.0
      %5352 = vmatmul.mubr.f32.gmra.mrb[0].mxu0 %v5027
      %v5353 = vpop.f32.mrb[0].mxu0
      %v5354 = vadd.f32 0.0, %v5353
      %v5355 = vpop.f32.mrb[0].mxu0
      %5356 = vmatprep.mubr.f32.mxu0 0.0
      %5357 = vmatmul.mubr.f32.gmra.mrb[0].mxu0 %v5030
      %v5358 = vpop.f32.mrb[0].mxu0
      %v5359 = vadd.f32 0.0, %v5358
      %v5360 = vpop.f32.mrb[0].mxu0
      %5361 = vmatprep.mubr.f32.mxu0 0.0
      %5362 = vmatmul.mubr.f32.gmra.mrb[0].mxu0 %v5152
      %v5363 = vpop.f32.mrb[0].mxu0
      %v5364 = vadd.f32 0.0, %v5363
      %v5365 = vpop.f32.mrb[0].mxu0
      %5366 = vmatprep.mubr.f32.mxu0 0.0
      %5367 = vmatmul.mubr.f32.gmra.mrb[0].mxu0 %v2769
      %v5368 = vpop.f32.mrb[0].mxu0
      %v5369 = vadd.f32 0.0, %v5368
      %v5370 = vpop.f32.mrb[0].mxu0
      %5371 = vdwg.mxu0
      %v5372 = vadd.f32 %v5259, %v5334
      %v5373 = vadd.f32 %v5260, %v5339
      %v5374 = vadd.f32 %v5261, %v5344
      %v5375 = vadd.f32 %v5262, %v5349
      %v5376 = vadd.f32 %v5263, %v5354
      %v5377 = vadd.f32 %v5264, %v5359
      %v5378 = vadd.f32 %v5265, %v5364
      %v5379 = vadd.f32 %v5266, %v5369
      %v5380 = vld [vmem:[%s67] sm:$0xff]
      %v5381 = vld [vmem:[%s67 + $0x8] sm:$0xff]
      %v5382 = vld [vmem:[%s69] sm:$0x1]
      %v5384 = vlaneseq
      %v5385 = vshrl.u32 %v5384, 7
      %v5386 = vsub.s32 0, %v5385
      %v5387 = vrot.slane %v5382, %v5386
      %v5390 = vsel %vm1234, %v3416, 0
      %v5392 = vsel %vm1234, %v3417, 0
      %v5394 = vsel %vm1234, %v3418, 0
      %v5396 = vsel %vm1234, %v3419, 0
      %v5398 = vsel %vm1234, %v3420, 0
      %v5400 = vsel %vm1234, %v3421, 0
      %v5402 = vsel %vm1234, %v3422, 0
      %v5404 = vsel %vm1234, %v3423, 0
      %5406 = vmatprep.subr.mxu0 0.0
      %5407 = vmatpush1.msra.mxu0 %v5380
      %5408 = vmatprep.subr.mxu0 0.0
      %5409 = vmatpush1.msra.mxu0 %v5381
      %5410 = vmatprep.subr.mxu0 0.0
      %5411 = vmatpush1.msra.mxu0 0.0
      %5412 = vmatprep.subr.mxu0 0.0
      %5413 = vmatpush1.msra.mxu0 0.0
      %5414 = vmatprep.subr.mxu0 0.0
      %5415 = vmatpush1.msra.mxu0 0.0
      %5416 = vmatprep.subr.mxu0 0.0
      %5417 = vmatpush1.msra.mxu0 0.0
      %5418 = vmatprep.subr.mxu0 0.0
      %5419 = vmatpush1.msra.mxu0 0.0
      %5420 = vmatprep.subr.mxu0 0.0
      %5421 = vmatpush1.msra.mxu0 0.0
      %5422 = vmatprep.subr.mxu0 0.0
      %5423 = vmatpush1.msra.mxu0 0.0
      %5424 = vmatprep.subr.mxu0 0.0
      %5425 = vmatpush1.msra.mxu0 0.0
      %5426 = vmatprep.subr.mxu0 0.0
      %5427 = vmatpush1.msra.mxu0 0.0
      %5428 = vmatprep.subr.mxu0 0.0
      %5429 = vmatpush1.msra.mxu0 0.0
      %5430 = vmatprep.subr.mxu0 0.0
      %5431 = vmatpush1.msra.mxu0 0.0
      %5432 = vmatprep.subr.mxu0 0.0
      %5433 = vmatpush1.msra.mxu0 0.0
      %5434 = vmatprep.subr.mxu0 0.0
      %5435 = vmatpush1.msra.mxu0 0.0
      %5436 = vmatprep.subr.mxu0 0.0
      %5437 = vmatpush1.msra.mxu0 0.0
      %5438 = vmatprep.subr.mxu0 0.0
      %5439 = vmatpush1.msra.mxu0 0.0
      %5440 = vmatprep.subr.mxu0 0.0
      %5441 = vmatpush1.msra.mxu0 0.0
      %5442 = vmatprep.subr.mxu0 0.0
      %5443 = vmatpush1.msra.mxu0 0.0
      %5444 = vmatprep.subr.mxu0 0.0
      %5445 = vmatpush1.msra.mxu0 0.0
      %5446 = vmatprep.subr.mxu0 0.0
      %5447 = vmatpush1.msra.mxu0 0.0
      %5448 = vmatprep.subr.mxu0 0.0
      %5449 = vmatpush1.msra.mxu0 0.0
      %5450 = vmatprep.subr.mxu0 0.0
      %5451 = vmatpush1.msra.mxu0 0.0
      %5452 = vmatprep.subr.mxu0 0.0
      %5453 = vmatpush1.msra.mxu0 0.0
      %5454 = vmatprep.subr.mxu0 0.0
      %5455 = vmatpush1.msra.mxu0 0.0
      %5456 = vmatprep.subr.mxu0 0.0
      %5457 = vmatpush1.msra.mxu0 0.0
      %5458 = vmatprep.subr.mxu0 0.0
      %5459 = vmatpush1.msra.mxu0 0.0
      %5460 = vmatprep.subr.mxu0 0.0
      %5461 = vmatpush1.msra.mxu0 0.0
      %5462 = vmatprep.subr.mxu0 0.0
      %5463 = vmatpush1.msra.mxu0 0.0
      %5464 = vmatprep.subr.mxu0 0.0
      %5465 = vmatpush1.msra.mxu0 0.0
      %5466 = vmatprep.subr.mxu0 0.0
      %5467 = vmatpush1.msra.mxu0 0.0
      %5468 = vmatprep.subr.mxu0 0.0
      %5469 = vmatpush1.msra.mxu0 0.0
      %5470 = vmatprep.mubr.f32.mxu0 0.0
      %5471 = vmatmul.mubr.f32.gmra.mrb[0].mxu0 %v5390
      %v5472 = vpop.f32.mrb[0].mxu0
      %v5473 = vadd.f32 %v5387, %v5472
      %v5474 = vpop.f32.mrb[0].mxu0
      %5475 = vmatprep.mubr.f32.mxu0 0.0
      %5476 = vmatmul.mubr.f32.gmra.mrb[0].mxu0 %v5392
      %v5477 = vpop.f32.mrb[0].mxu0
      %v5478 = vadd.f32 %v5387, %v5477
      %v5479 = vpop.f32.mrb[0].mxu0
      %5480 = vmatprep.mubr.f32.mxu0 0.0
      %5481 = vmatmul.mubr.f32.gmra.mrb[0].mxu0 %v5394
      %v5482 = vpop.f32.mrb[0].mxu0
      %v5483 = vadd.f32 %v5387, %v5482
      %v5484 = vpop.f32.mrb[0].mxu0
      %5485 = vmatprep.mubr.f32.mxu0 0.0
      %5486 = vmatmul.mubr.f32.gmra.mrb[0].mxu0 %v5396
      %v5487 = vpop.f32.mrb[0].mxu0
      %v5488 = vadd.f32 %v5387, %v5487
      %v5489 = vpop.f32.mrb[0].mxu0
      %5490 = vmatprep.mubr.f32.mxu0 0.0
      %5491 = vmatmul.mubr.f32.gmra.mrb[0].mxu0 %v5398
      %v5492 = vpop.f32.mrb[0].mxu0
      %v5493 = vadd.f32 %v5387, %v5492
      %v5494 = vpop.f32.mrb[0].mxu0
      %5495 = vmatprep.mubr.f32.mxu0 0.0
      %5496 = vmatmul.mubr.f32.gmra.mrb[0].mxu0 %v5400
      %v5497 = vpop.f32.mrb[0].mxu0
      %v5498 = vadd.f32 %v5387, %v5497
      %v5499 = vpop.f32.mrb[0].mxu0
      %5500 = vmatprep.mubr.f32.mxu0 0.0
      %5501 = vmatmul.mubr.f32.gmra.mrb[0].mxu0 %v5402
      %v5502 = vpop.f32.mrb[0].mxu0
      %v5503 = vadd.f32 %v5387, %v5502
      %v5504 = vpop.f32.mrb[0].mxu0
      %5505 = vmatprep.mubr.f32.mxu0 0.0
      %5506 = vmatmul.mubr.f32.gmra.mrb[0].mxu0 %v5404
      %v5507 = vpop.f32.mrb[0].mxu0
      %v5508 = vadd.f32 %v5387, %v5507
      %v5509 = vpop.f32.mrb[0].mxu0
      %5510 = vdwg.mxu0
      %v5511 = vadd.f32 %v5473, %v5372
      %v5512 = vadd.f32 %v5478, %v5373
      %v5513 = vadd.f32 %v5483, %v5374
      %v5514 = vadd.f32 %v5488, %v5375
      %v5515 = vadd.f32 %v5493, %v5376
      %v5516 = vadd.f32 %v5498, %v5377
      %v5517 = vadd.f32 %v5503, %v5378
      %v5518 = vadd.f32 %v5508, %v5379
      %v5519 = vmax.f32 %v5511, 0.0
      %v5520 = vmax.f32 %v5512, 0.0
      %v5521 = vmax.f32 %v5513, 0.0
      %v5522 = vmax.f32 %v5514, 0.0
      %v5523 = vmax.f32 %v5515, 0.0
      %v5524 = vmax.f32 %v5516, 0.0
      %v5525 = vmax.f32 %v5517, 0.0
      %v5526 = vmax.f32 %v5518, 0.0
      %v5527 = vsel %vm1234, %v5519, 0.0
      %5528 = vadd.xlane.f32.xlu0 %v5527
      %v5529 = vpop.xlane.xlu0 %5528
      %v5530 = vsel %vm1234, %v5520, 0.0
      %5531 = vadd.xlane.f32.xlu0 %v5530
      %v5532 = vpop.xlane.xlu0 %5531
      %v5533 = vsel %vm1234, %v5521, 0.0
      %5534 = vadd.xlane.f32.xlu0 %v5533
      %v5535 = vpop.xlane.xlu0 %5534
      %v5536 = vsel %vm1234, %v5522, 0.0
      %5537 = vadd.xlane.f32.xlu0 %v5536
      %v5538 = vpop.xlane.xlu0 %5537
      %v5539 = vsel %vm1234, %v5523, 0.0
      %5540 = vadd.xlane.f32.xlu0 %v5539
      %v5541 = vpop.xlane.xlu0 %5540
      %v5542 = vsel %vm1234, %v5524, 0.0
      %5543 = vadd.xlane.f32.xlu0 %v5542
      %v5544 = vpop.xlane.xlu0 %5543
      %v5545 = vsel %vm1234, %v5525, 0.0
      %5546 = vadd.xlane.f32.xlu0 %v5545
      %v5547 = vpop.xlane.xlu0 %5546
      %v5548 = vsel %vm1234, %v5526, 0.0
      %5549 = vadd.xlane.f32.xlu0 %v5548
      %v5550 = vpop.xlane.xlu0 %5549
      %v5551 = vmul.f32 %v5529, %v3313
      %v5552 = vmul.f32 %v5532, %v3313
      %v5553 = vmul.f32 %v5535, %v3313
      %v5554 = vmul.f32 %v5538, %v3313
      %v5555 = vmul.f32 %v5541, %v3313
      %v5556 = vmul.f32 %v5544, %v3313
      %v5557 = vmul.f32 %v5547, %v3313
      %v5558 = vmul.f32 %v5550, %v3313
      %v5559 = vsub.f32 %v5519, %v5551
      %v5560 = vsub.f32 %v5520, %v5552
      %v5561 = vsub.f32 %v5521, %v5553
      %v5562 = vsub.f32 %v5522, %v5554
      %v5563 = vsub.f32 %v5523, %v5555
      %v5564 = vsub.f32 %v5524, %v5556
      %v5565 = vsub.f32 %v5525, %v5557
      %v5566 = vsub.f32 %v5526, %v5558
      %v5567 = vmul.f32 %v5559, %v5559
      %v5568 = vmul.f32 %v5560, %v5560
      %v5569 = vmul.f32 %v5561, %v5561
      %v5570 = vmul.f32 %v5562, %v5562
      %v5571 = vmul.f32 %v5563, %v5563
      %v5572 = vmul.f32 %v5564, %v5564
      %v5573 = vmul.f32 %v5565, %v5565
      %v5574 = vmul.f32 %v5566, %v5566
      %v5575 = vsel %vm1234, %v5567, 0.0
      %5576 = vadd.xlane.f32.xlu0 %v5575
      %v5577 = vpop.xlane.xlu0 %5576
      %v5578 = vsel %vm1234, %v5568, 0.0
      %5579 = vadd.xlane.f32.xlu0 %v5578
      %v5580 = vpop.xlane.xlu0 %5579
      %v5581 = vsel %vm1234, %v5569, 0.0
      %5582 = vadd.xlane.f32.xlu0 %v5581
      %v5583 = vpop.xlane.xlu0 %5582
      %v5584 = vsel %vm1234, %v5570, 0.0
      %5585 = vadd.xlane.f32.xlu0 %v5584
      %v5586 = vpop.xlane.xlu0 %5585
      %v5587 = vsel %vm1234, %v5571, 0.0
      %5588 = vadd.xlane.f32.xlu0 %v5587
      %v5589 = vpop.xlane.xlu0 %5588
      %v5590 = vsel %vm1234, %v5572, 0.0
      %5591 = vadd.xlane.f32.xlu0 %v5590
      %v5592 = vpop.xlane.xlu0 %5591
      %v5593 = vsel %vm1234, %v5573, 0.0
      %5594 = vadd.xlane.f32.xlu0 %v5593
      %v5595 = vpop.xlane.xlu0 %5594
      %v5596 = vsel %vm1234, %v5574, 0.0
      %5597 = vadd.xlane.f32.xlu0 %v5596
      %v5598 = vpop.xlane.xlu0 %5597
      %v5599 = vmul.f32 %v5577, %v3313
      %v5600 = vmul.f32 %v5580, %v3313
      %v5601 = vmul.f32 %v5583, %v3313
      %v5602 = vmul.f32 %v5586, %v3313
      %v5603 = vmul.f32 %v5589, %v3313
      %v5604 = vmul.f32 %v5592, %v3313
      %v5605 = vmul.f32 %v5595, %v3313
      %v5606 = vmul.f32 %v5598, %v3313
      %v5607 = vadd.f32 %v5599, 1e-05
      %v5608 = vadd.f32 %v5600, 1e-05
      %v5609 = vadd.f32 %v5601, 1e-05
      %v5610 = vadd.f32 %v5602, 1e-05
      %v5611 = vadd.f32 %v5603, 1e-05
      %v5612 = vadd.f32 %v5604, 1e-05
      %v5613 = vadd.f32 %v5605, 1e-05
      %v5614 = vadd.f32 %v5606, 1e-05
      %v5615 = vrsqrt.pop %v5607
      %v5616 = vrsqrt.pop %v5608
      %v5617 = vrsqrt.pop %v5609
      %v5618 = vrsqrt.pop %v5610
      %v5619 = vrsqrt.pop %v5611
      %v5620 = vrsqrt.pop %v5612
      %v5621 = vrsqrt.pop %v5613
      %v5622 = vrsqrt.pop %v5614
      %v5623 = vmul.f32 %v5559, %v5615
      %v5624 = vmul.f32 %v5560, %v5616
      %v5625 = vmul.f32 %v5561, %v5617
      %v5626 = vmul.f32 %v5562, %v5618
      %v5627 = vmul.f32 %v5563, %v5619
      %v5628 = vmul.f32 %v5564, %v5620
      %v5629 = vmul.f32 %v5565, %v5621
      %v5630 = vmul.f32 %v5566, %v5622
      %v5631 = vld [vmem:[%s71] sm:$0x1]
      %v5633 = vlaneseq
      %v5634 = vshrl.u32 %v5633, 7
      %v5635 = vsub.s32 0, %v5634
      %v5636 = vrot.slane %v5631, %v5635
      %v5638 = vmul.f32 %v5623, %v5636
      %v5639 = vmul.f32 %v5624, %v5636
      %v5640 = vmul.f32 %v5625, %v5636
      %v5641 = vmul.f32 %v5626, %v5636
      %v5642 = vmul.f32 %v5627, %v5636
      %v5643 = vmul.f32 %v5628, %v5636
      %v5644 = vmul.f32 %v5629, %v5636
      %v5645 = vmul.f32 %v5630, %v5636
      %v5646 = vld [vmem:[%s73] sm:$0x1]
      %v5648 = vlaneseq
      %v5649 = vshrl.u32 %v5648, 7
      %v5650 = vsub.s32 0, %v5649
      %v5651 = vrot.slane %v5646, %v5650
      %v5653 = vadd.f32 %v5638, %v5651
      %v5654 = vadd.f32 %v5639, %v5651
      %v5655 = vadd.f32 %v5640, %v5651
      %v5656 = vadd.f32 %v5641, %v5651
      %v5657 = vadd.f32 %v5642, %v5651
      %v5658 = vadd.f32 %v5643, %v5651
      %v5659 = vadd.f32 %v5644, %v5651
      %v5660 = vadd.f32 %v5645, %v5651
      %5662 = vrot.lane.b32.xlu0 %v5654, 16
      %v5663 = vpop.permute.xlu0 %5662
      %5666 = vrot.lane.b32.xlu0 %v5655, 32
      %v5667 = vpop.permute.xlu0 %5666
      %5670 = vrot.lane.b32.xlu0 %v5656, 48
      %v5671 = vpop.permute.xlu0 %5670
      %5674 = vrot.lane.b32.xlu0 %v5657, 64
      %v5675 = vpop.permute.xlu0 %5674
      %5678 = vrot.lane.b32.xlu0 %v5658, 80
      %v5679 = vpop.permute.xlu0 %5678
      %5682 = vrot.lane.b32.xlu0 %v5659, 96
      %v5683 = vpop.permute.xlu0 %5682
      %5686 = vrot.lane.b32.xlu0 %v5660, 112
      %v5687 = vpop.permute.xlu0 %5686
      %v5689 = vsel %vm1234, %v5653, %v5663
      %v5690 = vsel %vm1399, %v5689, %v5667
      %v5691 = vsel %vm3469, %v5690, %v5671
      %v5692 = vsel %vm1243, %v5691, %v5675
      %v5693 = vsel %vm3472, %v5692, %v5679
      %v5694 = vsel %vm3474, %v5693, %v5683
      %v5695 = vsel %vm3476, %v5694, %v5687
      %v5696 = vld [vmem:[%s75] sm:$0xff]
      %v5697 = vld [vmem:[%s75 + $0x8] sm:$0xff]
      %v5698 = vld [vmem:[%s75 + $0x10] sm:$0xff]
      %v5699 = vld [vmem:[%s75 + $0x18] sm:$0xff]
      %v5700 = vld [vmem:[%s75 + $0x20] sm:$0xff]
      %v5701 = vld [vmem:[%s75 + $0x28] sm:$0xff]
      %v5702 = vld [vmem:[%s75 + $0x30] sm:$0xff]
      %v5703 = vld [vmem:[%s75 + $0x38] sm:$0xff]
      %v5704 = vld [vmem:[%s75 + $0x40] sm:$0xff]
      %v5705 = vld [vmem:[%s75 + $0x48] sm:$0xff]
      %v5706 = vld [vmem:[%s75 + $0x50] sm:$0xff]
      %v5707 = vld [vmem:[%s75 + $0x58] sm:$0xff]
      %v5708 = vld [vmem:[%s75 + $0x60] sm:$0xff]
      %v5709 = vld [vmem:[%s75 + $0x68] sm:$0xff]
      %v5710 = vld [vmem:[%s75 + $0x70] sm:$0xff]
      %v5711 = vld [vmem:[%s75 + $0x78] sm:$0xff]
      %v5712 = vld [vmem:[%s77] sm:$0x1]
      %v5714 = vlaneseq
      %v5715 = vshrl.u32 %v5714, 7
      %v5716 = vsub.s32 0, %v5715
      %v5717 = vrot.slane %v5712, %v5716
      %5719 = vmatprep.subr.mxu0 0.0
      %5720 = vmatpush1.msra.mxu0 %v5696
      %5721 = vmatprep.subr.mxu0 0.0
      %5722 = vmatpush1.msra.mxu0 %v5697
      %5723 = vmatprep.subr.mxu0 0.0
      %5724 = vmatpush1.msra.mxu0 %v5698
      %5725 = vmatprep.subr.mxu0 0.0
      %5726 = vmatpush1.msra.mxu0 %v5699
      %5727 = vmatprep.subr.mxu0 0.0
      %5728 = vmatpush1.msra.mxu0 %v5700
      %5729 = vmatprep.subr.mxu0 0.0
      %5730 = vmatpush1.msra.mxu0 %v5701
      %5731 = vmatprep.subr.mxu0 0.0
      %5732 = vmatpush1.msra.mxu0 %v5702
      %5733 = vmatprep.subr.mxu0 0.0
      %5734 = vmatpush1.msra.mxu0 %v5703
      %5735 = vmatprep.subr.mxu0 0.0
      %5736 = vmatpush1.msra.mxu0 %v5704
      %5737 = vmatprep.subr.mxu0 0.0
      %5738 = vmatpush1.msra.mxu0 %v5705
      %5739 = vmatprep.subr.mxu0 0.0
      %5740 = vmatpush1.msra.mxu0 %v5706
      %5741 = vmatprep.subr.mxu0 0.0
      %5742 = vmatpush1.msra.mxu0 %v5707
      %5743 = vmatprep.subr.mxu0 0.0
      %5744 = vmatpush1.msra.mxu0 %v5708
      %5745 = vmatprep.subr.mxu0 0.0
      %5746 = vmatpush1.msra.mxu0 %v5709
      %5747 = vmatprep.subr.mxu0 0.0
      %5748 = vmatpush1.msra.mxu0 %v5710
      %5749 = vmatprep.subr.mxu0 0.0
      %5750 = vmatpush1.msra.mxu0 %v5711
      %5751 = vmatprep.subr.mxu0 0.0
      %5752 = vmatpush1.msra.mxu0 0.0
      %5753 = vmatprep.subr.mxu0 0.0
      %5754 = vmatpush1.msra.mxu0 0.0
      %5755 = vmatprep.subr.mxu0 0.0
      %5756 = vmatpush1.msra.mxu0 0.0
      %5757 = vmatprep.subr.mxu0 0.0
      %5758 = vmatpush1.msra.mxu0 0.0
      %5759 = vmatprep.subr.mxu0 0.0
      %5760 = vmatpush1.msra.mxu0 0.0
      %5761 = vmatprep.subr.mxu0 0.0
      %5762 = vmatpush1.msra.mxu0 0.0
      %5763 = vmatprep.subr.mxu0 0.0
      %5764 = vmatpush1.msra.mxu0 0.0
      %5765 = vmatprep.subr.mxu0 0.0
      %5766 = vmatpush1.msra.mxu0 0.0
      %5767 = vmatprep.subr.mxu0 0.0
      %5768 = vmatpush1.msra.mxu0 0.0
      %5769 = vmatprep.subr.mxu0 0.0
      %5770 = vmatpush1.msra.mxu0 0.0
      %5771 = vmatprep.subr.mxu0 0.0
      %5772 = vmatpush1.msra.mxu0 0.0
      %5773 = vmatprep.subr.mxu0 0.0
      %5774 = vmatpush1.msra.mxu0 0.0
      %5775 = vmatprep.subr.mxu0 0.0
      %5776 = vmatpush1.msra.mxu0 0.0
      %5777 = vmatprep.subr.mxu0 0.0
      %5778 = vmatpush1.msra.mxu0 0.0
      %5779 = vmatprep.subr.mxu0 0.0
      %5780 = vmatpush1.msra.mxu0 0.0
      %5781 = vmatprep.subr.mxu0 0.0
      %5782 = vmatpush1.msra.mxu0 0.0
      %5783 = vmatprep.mubr.f32.mxu0 0.0
      %5784 = vmatmul.mubr.f32.gmra.mrb[0].mxu0 %v5695
      %v5785 = vpop.f32.mrb[0].mxu0
      %v5786 = vadd.f32 %v5717, %v5785
      %v5787 = vpop.f32.mrb[0].mxu0
      %5788 = vdwg.mxu0
      %5789 = vst.msk [vmem:[%s1180] sm:$0xff] %vm1228, %v5786
      %p5790 = scmp.lt.s32.totalorder %s90, 1
      %s5791 = scalar_select %p5790, %s90, 1
      %s5792 = smul.addr %s5791, 8
      %s5793 = scalar_lea.vmem %s79, %s5792
      // Predicated region
      $region177: #{tpu_custom_call.1} parent=175 // pred_check
        %p5794 = pneg %p932
      $region178: #{tpu_custom_call.1} parent=175 // pred_check_branch
        %5796 = sbr.rel (%p5794) target = $region180
      $region179: #{tpu_custom_call.1} parent=175 // pred_region
        _
      $region180: #{tpu_custom_call.1} parent=175 // pred_fallthru
        _
    $region176: #{tpu_custom_call.1} parent=5 // pred_fallthru
      _
    %p5797 = scmp.le.s32.totalorder 2, %s85
    // Predicated region
    $region181: #{tpu_custom_call.1} parent=5 // pred_check
      %p5798 = pneg %p5797
    $region182: #{tpu_custom_call.1} parent=5 // pred_check_branch
      %5800 = sbr.rel (%p5798) target = $region184
    $region183: #{tpu_custom_call.1} parent=5 // pred_region
      %s5801 = ssub.s32 %s85, 2
      // Predicated region
      $region185: #{tpu_custom_call.1} parent=183 // pred_check
        %p5802 = pneg %p938
      $region186: #{tpu_custom_call.1} parent=183 // pred_check_branch
        %5804 = sbr.rel (%p5802) target = $region188
      $region187: #{tpu_custom_call.1} parent=183 // pred_region
        %p5805 = scmp.lt.s32.totalorder %s91, 1
        %s5806 = scalar_select %p5805, %s91, 1
        %s5807 = smul.addr %s5806, 8
        %s5808 = scalar_lea.vmem %s79, %s5807
      $region188: #{tpu_custom_call.1} parent=183 // pred_fallthru
        _
    $region184: #{tpu_custom_call.1} parent=5 // pred_fallthru
      _
  $region6: #{tpu_custom_call.1} parent=0 // loop_footer
    %s89 = sadd.s32 1, %s85
  $region7: #{tpu_custom_call.1} parent=0 // loop_footer_branch
    %84 = sbr.rel target = $region3
  $region8: #{tpu_custom_call.1} parent=0 // loop_exit
    _

</llo_original>
